<compile_context>
chip_gen: v7x
topology: tpu7x:2x2x1
jax: 0.10.0
libtpu: 0.0.40
codegen_flags: <defaults>
</compile_context>

<pallas_src>
import jax
import jax.numpy as jnp
from jax.experimental import pallas as pl
from jax.experimental.pallas import tpu as pltpu


# ---------------------------------------------------------------------------
# Wrapper-side weight repack for conv1-as-(k=2, s=1)-conv on s2d(4) input.
# Row order (ah, aw, dy, dx, c) matches the in-kernel patch column order.
# ---------------------------------------------------------------------------
def _prep_conv1_weight(w1, scale):
    kh, kw, cin, cout = w1.shape
    assert kh == 8 and kw == 8
    w = w1.reshape(2, 4, 2, 4, cin, cout)          # (ah, dy, aw, dx, c, co)
    w = jnp.transpose(w, (0, 2, 1, 3, 4, 5))       # (ah, aw, dy, dx, c, co)
    return w.reshape(4 * 16 * cin, cout) * scale


def nature_cnn_forward(state, params):
    """state: [B, C, H, W] (uint8 or float); returns [B, features_dim] float32."""
    (w1, b1), (w2, b2), (w3, b3), (wl, bl) = params
    B, C, H, W = state.shape
    f32 = jnp.float32

    # ---- static geometry ---------------------------------------------------
    OH1, OW1 = (H - 8) // 4 + 1, (W - 8) // 4 + 1
    OH2, OW2 = (OH1 - 4) // 2 + 1, (OW1 - 4) // 2 + 1
    OH3, OW3 = OH2 - 2, OW2 - 2
    assert OH1 >= 4 and OW1 >= 4 and OH2 >= 3 and OW2 >= 3, "input too small for NatureCNN"
    F = wl.shape[1]
    conv_out = OH3 * OW3 * 64
    assert wl.shape[0] == conv_out

    H4, W4 = H // 4, W // 4
    C1 = 16 * C                       # channels after space-to-depth(4)
    NE = (OW1 + 1) // 2               # number of even conv1-output columns
    NO = OW1 // 2                     # number of odd  conv1-output columns
    PR = max(NE, NO, OW2, OW3)        # shared patch-scratch rows
    PK = max(4 * C1, 4 * 4 * 32, 3 * 3 * 64)   # shared patch-scratch cols

    # ---- wrapper-side input/weight layout plumbing (pure XLA) ---------------
    scale = (1.0 / 255.0) if state.dtype == jnp.uint8 else 1.0   # folded into w1
    x = state.astype(f32)
    # NCHW -> space-to-depth(4) NHWC: [B, H4, W4, (dy, dx, c)]
    xs = x[:, :, :4 * H4, :4 * W4].reshape(B, C, H4, 4, W4, 4)
    xs = jnp.transpose(xs, (0, 2, 4, 3, 5, 1)).reshape(B, H4, W4, C1)
    # split columns by parity so all in-kernel accesses are contiguous
    xe = xs[:, :, 0::2, :]            # [B, H4, ceil(W4/2), C1]
    xo = xs[:, :, 1::2, :]            # [B, H4, floor(W4/2), C1]
    WE, WO = xe.shape[2], xo.shape[2]

    w1f = _prep_conv1_weight(w1, scale)            # [4*C1, 32]
    w2f = w2.reshape(-1, w2.shape[-1])             # [512, 64]  rows = (kh, kw, cin)
    w3f = w3.reshape(-1, w3.shape[-1])             # [576, 64]

    # ---- fused kernel --------------------------------------------------------
    def kernel(xe_ref, xo_ref, w1_ref, b1_ref, w2_ref, b2_ref, w3_ref, b3_ref,
               wl_ref, bl_ref, o_ref, a1e_ref, a1o_ref, a2_ref, p_ref, f_ref):
        # conv1: k=2,s=1 on the s2d input; even/odd output columns computed
        # separately so conv2's stride-2 taps read contiguous slices.
        w1v, b1v = w1_ref[...], b1_ref[...]
        for oh in range(OH1):
            t = 0
            for ah in range(2):
                p_ref[0:NE, t * C1:(t + 1) * C1] = xe_ref[0, oh + ah, 0:NE, :]; t += 1
                p_ref[0:NE, t * C1:(t + 1) * C1] = xo_ref[0, oh + ah, 0:NE, :]; t += 1
            ye = jnp.dot(p_ref[0:NE, 0:4 * C1], w1v, preferred_element_type=f32) + b1v
            a1e_ref[oh] = jnp.maximum(ye, 0.0)
            t = 0
            for ah in range(2):
                p_ref[0:NO, t * C1:(t + 1) * C1] = xo_ref[0, oh + ah, 0:NO, :]; t += 1
                p_ref[0:NO, t * C1:(t + 1) * C1] = xe_ref[0, oh + ah, 1:1 + NO, :]; t += 1
            yo = jnp.dot(p_ref[0:NO, 0:4 * C1], w1v, preferred_element_type=f32) + b1v
            a1o_ref[oh] = jnp.maximum(yo, 0.0)

        # conv2: k=4, s=2 -- stride-2 taps = contiguous slices of parity buffers.
        w2v, b2v = w2_ref[...], b2_ref[...]
        for oh in range(OH2):
            t = 0
            for kh in range(4):
                row = 2 * oh + kh
                for kw in range(4):
                    src = a1e_ref if kw % 2 == 0 else a1o_ref
                    m = kw // 2
                    p_ref[0:OW2, t * 32:(t + 1) * 32] = src[row, m:m + OW2, :]
                    t += 1
            y = jnp.dot(p_ref[0:OW2, 0:512], w2v, preferred_element_type=f32) + b2v
            a2_ref[oh] = jnp.maximum(y, 0.0)

        # conv3: k=3, s=1, fused with the flatten (NHWC order) into f_ref.
        w3v, b3v = w3_ref[...], b3_ref[...]
        for oh in range(OH3):
            t = 0
            for kh in range(3):
                for kw in range(3):
                    p_ref[0:OW3, t * 64:(t + 1) * 64] = a2_ref[oh + kh, kw:kw + OW3, :]
                    t += 1
            y = jnp.maximum(
                jnp.dot(p_ref[0:OW3, 0:576], w3v, preferred_element_type=f32) + b3v, 0.0)
            for ow in range(OW3):
                off = (oh * OW3 + ow) * 64
                f_ref[:, off:off + 64] = y[ow:ow + 1, :]

        # final linear + ReLU (single MXU GEMM against the VMEM-resident weight)
        feat = jnp.dot(f_ref[...], wl_ref[...], preferred_element_type=f32) + bl_ref[...]
        o_ref[0] = jnp.maximum(feat, 0.0)

    # ---- VMEM budget & cost hint --------------------------------------------
    def _pad(n, m):
        return ((n + m - 1) // m) * m

    weight_bytes = 4 * (w1f.size + b1.size + w2f.size + b2.size
                        + w3f.size + b3.size + wl.size + bl.size)
    io_bytes = 4 * 2 * (H4 * WE * C1 + H4 * WO * C1 + F)
    scratch_bytes = (4 * 128 * (OH1 * (_pad(NE, 8) + _pad(NO, 8)) + OH2 * _pad(OW2, 8))
                     + 4 * (_pad(PR, 8) * _pad(PK, 128) + 8 * _pad(conv_out, 128)))
    vmem_limit = int(min(max(2 * weight_bytes + io_bytes + scratch_bytes + (8 << 20),
                             16 << 20), 56 << 20))

    flops = 2 * B * (OH1 * OW1 * (4 * C1) * 32 + OH2 * OW2 * 512 * 64
                     + OH3 * OW3 * 576 * 64 + conv_out * F)
    bytes_accessed = 4 * (xe.size + xo.size + B * F) + weight_bytes

    out = pl.pallas_call(
        kernel,
        out_shape=jax.ShapeDtypeStruct((B, 1, F), f32),
        grid_spec=pltpu.PrefetchScalarGridSpec(
            num_scalar_prefetch=0,
            grid=(B,),
            in_specs=[
                pl.BlockSpec((1, H4, WE, C1), lambda b: (b, 0, 0, 0)),   # xe (per-sample)
                pl.BlockSpec((1, H4, WO, C1), lambda b: (b, 0, 0, 0)),   # xo (per-sample)
                pl.BlockSpec((4 * C1, 32), lambda b: (0, 0)),            # w1 (resident)
                pl.BlockSpec((1, 32), lambda b: (0, 0)),                 # b1
                pl.BlockSpec((512, 64), lambda b: (0, 0)),               # w2
                pl.BlockSpec((1, 64), lambda b: (0, 0)),                 # b2
                pl.BlockSpec((576, 64), lambda b: (0, 0)),               # w3
                pl.BlockSpec((1, 64), lambda b: (0, 0)),                 # b3
                pl.BlockSpec((conv_out, F), lambda b: (0, 0)),           # wl
                pl.BlockSpec((1, F), lambda b: (0, 0)),                  # bl
            ],
            out_specs=pl.BlockSpec((1, 1, F), lambda b: (b, 0, 0)),
            scratch_shapes=[
                pltpu.VMEM((OH1, NE, 32), f32),      # conv1 out, even columns
                pltpu.VMEM((OH1, NO, 32), f32),      # conv1 out, odd columns
                pltpu.VMEM((OH2, OW2, 64), f32),     # conv2 out
                pltpu.VMEM((PR, PK), f32),           # shared im2col patch buffer
                pltpu.VMEM((1, conv_out), f32),      # flattened conv3 output
            ],
        ),
        compiler_params=pltpu.CompilerParams(
            dimension_semantics=("parallel",),
            vmem_limit_bytes=vmem_limit,
        ),
        cost_estimate=pl.CostEstimate(flops=flops, transcendentals=0,
                                      bytes_accessed=bytes_accessed),
    )(xe, xo, w1f, b1, w2f, b2, w3f, b3, wl, bl)
    return out.reshape(B, F)


# ---------------------------------------------------------------------------
# Deterministic PyTorch-like init. Conv weights HWIO [kh, kw, cin, cout],
# linear weight [in, out] (NHWC flatten order), biases as [1, out] rows.
# ---------------------------------------------------------------------------
def init_params(key, input_shape, features_dim):
    if len(input_shape) != 3:
        raise ValueError("input_shape must be (channels, height, width)")
    c, h, w = input_shape

    def conv_init(k, kh, kw, cin, cout):
        kw_key, kb_key = jax.random.split(k)
        bound = 1.0 / jnp.sqrt(cin * kh * kw)
        w_ = jax.random.uniform(kw_key, (kh, kw, cin, cout), jnp.float32, -bound, bound)
        b_ = jax.random.uniform(kb_key, (1, cout), jnp.float32, -bound, bound)
        return w_, b_

    def linear_init(k, fin, fout):
        kw_key, kb_key = jax.random.split(k)
        bound = 1.0 / jnp.sqrt(fin)
        w_ = jax.random.uniform(kw_key, (fin, fout), jnp.float32, -bound, bound)
        b_ = jax.random.uniform(kb_key, (1, fout), jnp.float32, -bound, bound)
        return w_, b_

    k1, k2, k3, k4 = jax.random.split(key, 4)
    p1 = conv_init(k1, 8, 8, c, 32)
    p2 = conv_init(k2, 4, 4, 32, 64)
    p3 = conv_init(k3, 3, 3, 64, 64)

    oh, ow = (h - 8) // 4 + 1, (w - 8) // 4 + 1
    oh, ow = (oh - 4) // 2 + 1, (ow - 4) // 2 + 1
    oh, ow = (oh - 3) // 1 + 1, (ow - 3) // 1 + 1
    conv_out_dim = oh * ow * 64
    p4 = linear_init(k4, conv_out_dim, features_dim)
    return (p1, p2, p3, p4)


# Pure-JAX reference (real convs via lax.conv) for correctness checking.
def reference_forward(state, params):
    (w1, b1), (w2, b2), (w3, b3), (wl, bl) = params
    x = state
    if x.dtype == jnp.uint8:
        x = x.astype(jnp.float32) / 255.0
    else:
        x = x.astype(jnp.float32)
    x = jnp.transpose(x, (0, 2, 3, 1))
    dn = ("NHWC", "HWIO", "NHWC")
    hp = jax.lax.Precision.HIGHEST
    y = jax.lax.conv_general_dilated(x, w1, (4, 4), "VALID",
                                     dimension_numbers=dn, precision=hp)
    y = jax.nn.relu(y + b1.reshape(1, 1, 1, -1))
    y = jax.lax.conv_general_dilated(y, w2, (2, 2), "VALID",
                                     dimension_numbers=dn, precision=hp)
    y = jax.nn.relu(y + b2.reshape(1, 1, 1, -1))
    y = jax.lax.conv_general_dilated(y, w3, (1, 1), "VALID",
                                     dimension_numbers=dn, precision=hp)
    y = jax.nn.relu(y + b3.reshape(1, 1, 1, -1))
    y = y.reshape(y.shape[0], -1)
    return jax.nn.relu(jnp.dot(y, wl, precision=hp) + bl)


if __name__ == "__main__":
    batch = 2
    input_shape = (4, 44, 44)   # smallest-ish (C, H, W) that survives the conv stack
    features_dim = 128

    key = jax.random.PRNGKey(0)
    k_x, k_p = jax.random.split(key)

    state = jax.random.randint(
        k_x, (batch,) + input_shape, 0, 256, dtype=jnp.int32
    ).astype(jnp.uint8)
    params = init_params(k_p, input_shape, features_dim)

    feats = jax.jit(nature_cnn_forward)(state, params)
    feats = jax.block_until_ready(feats)

    ref = reference_forward(state, params)
    assert feats.shape == (batch, features_dim), feats.shape
    max_err = float(jnp.max(jnp.abs(feats - ref)))
    assert jnp.allclose(feats, ref, atol=5e-3, rtol=5e-3), \
        f"mismatch vs reference (max abs err {max_err})"

    print("KERNEL_OK")
</pallas_src>

<mosaic_0001>
module attributes {stable_mosaic.version = 11 : i64} {
  func.func @kernel(%arg0: i32, %arg1: memref<1x11x6x64xf32, #tpu.memory_space<vmem>>, %arg2: memref<1x11x5x64xf32, #tpu.memory_space<vmem>>, %arg3: memref<256x32xf32, #tpu.memory_space<vmem>>, %arg4: memref<1x32xf32, #tpu.memory_space<vmem>>, %arg5: memref<512x64xf32, #tpu.memory_space<vmem>>, %arg6: memref<1x64xf32, #tpu.memory_space<vmem>>, %arg7: memref<576x64xf32, #tpu.memory_space<vmem>>, %arg8: memref<1x64xf32, #tpu.memory_space<vmem>>, %arg9: memref<256x128xf32, #tpu.memory_space<vmem>>, %arg10: memref<1x128xf32, #tpu.memory_space<vmem>>, %arg11: memref<1x1x128xf32, #tpu.memory_space<vmem>>, %arg12: memref<10x5x32xf32, #tpu.memory_space<vmem>>, %arg13: memref<10x5x32xf32, #tpu.memory_space<vmem>>, %arg14: memref<4x4x64xf32, #tpu.memory_space<vmem>>, %arg15: memref<5x576xf32, #tpu.memory_space<vmem>>, %arg16: memref<1x256xf32, #tpu.memory_space<vmem>>) attributes {dimension_semantics = [#tpu.dimension_semantics<parallel>], iteration_bounds = array<i64: 2>, scalar_prefetch = 0 : i64, scratch_operands = 5 : i64, tpu.core_type = #tpu.core_type<tc>, window_params = [{transform_indices = @transform_0, window_bounds = array<i64: 1, 11, 6, 64>}, {transform_indices = @transform_1, window_bounds = array<i64: 1, 11, 5, 64>}, {pipeline_mode = #tpu.pipeline_mode<synchronous>, transform_indices = @transform_2, window_bounds = array<i64: 256, 32>}, {pipeline_mode = #tpu.pipeline_mode<synchronous>, transform_indices = @transform_3, window_bounds = array<i64: 1, 32>}, {pipeline_mode = #tpu.pipeline_mode<synchronous>, transform_indices = @transform_4, window_bounds = array<i64: 512, 64>}, {pipeline_mode = #tpu.pipeline_mode<synchronous>, transform_indices = @transform_5, window_bounds = array<i64: 1, 64>}, {pipeline_mode = #tpu.pipeline_mode<synchronous>, transform_indices = @transform_6, window_bounds = array<i64: 576, 64>}, {pipeline_mode = #tpu.pipeline_mode<synchronous>, transform_indices = @transform_7, window_bounds = array<i64: 1, 64>}, {pipeline_mode = #tpu.pipeline_mode<synchronous>, transform_indices = @transform_8, window_bounds = array<i64: 256, 128>}, {pipeline_mode = #tpu.pipeline_mode<synchronous>, transform_indices = @transform_9, window_bounds = array<i64: 1, 128>}, {transform_indices = @transform_10, window_bounds = array<i64: 1, 1, 128>}]} {
    %c0 = arith.constant 0 : index
    %c0_0 = arith.constant 0 : index
    %0 = vector.load %arg3[%c0, %c0_0] : memref<256x32xf32, #tpu.memory_space<vmem>>, vector<256x32xf32>
    %c0_1 = arith.constant 0 : index
    %c0_2 = arith.constant 0 : index
    %1 = vector.load %arg4[%c0_1, %c0_2] : memref<1x32xf32, #tpu.memory_space<vmem>>, vector<1x32xf32>
    %c0_3 = arith.constant 0 : index
    %c0_4 = arith.constant 0 : index
    %c0_5 = arith.constant 0 : index
    %c0_6 = arith.constant 0 : index
    %2 = vector.load %arg1[%c0_3, %c0_4, %c0_5, %c0_6] : memref<1x11x6x64xf32, #tpu.memory_space<vmem>>, vector<1x1x5x64xf32>
    %3 = vector.shape_cast %2 : vector<1x1x5x64xf32> to vector<5x64xf32>
    %c0_7 = arith.constant 0 : index
    %c0_8 = arith.constant 0 : index
    %4 = vector.load %arg15[%c0_7, %c0_8] : memref<5x576xf32, #tpu.memory_space<vmem>>, vector<5x64xf32>
    tpu.vector_store %arg15[%c0_7, %c0_8], %3 {strides = array<i32>} : memref<5x576xf32, #tpu.memory_space<vmem>>, vector<5x64xf32>,
    %c0_9 = arith.constant 0 : index
    %c0_10 = arith.constant 0 : index
    %c0_11 = arith.constant 0 : index
    %c0_12 = arith.constant 0 : index
    %5 = vector.load %arg2[%c0_9, %c0_10, %c0_11, %c0_12] : memref<1x11x5x64xf32, #tpu.memory_space<vmem>>, vector<1x1x5x64xf32>
    %6 = vector.shape_cast %5 : vector<1x1x5x64xf32> to vector<5x64xf32>
    %c0_13 = arith.constant 0 : index
    %c64 = arith.constant 64 : index
    %7 = vector.load %arg15[%c0_13, %c64] : memref<5x576xf32, #tpu.memory_space<vmem>>, vector<5x64xf32>
    tpu.vector_store %arg15[%c0_13, %c64], %6 {strides = array<i32>} : memref<5x576xf32, #tpu.memory_space<vmem>>, vector<5x64xf32>,
    %c0_14 = arith.constant 0 : index
    %c1 = arith.constant 1 : index
    %c0_15 = arith.constant 0 : index
    %c0_16 = arith.constant 0 : index
    %8 = vector.load %arg1[%c0_14, %c1, %c0_15, %c0_16] : memref<1x11x6x64xf32, #tpu.memory_space<vmem>>, vector<1x1x5x64xf32>
    %9 = vector.shape_cast %8 : vector<1x1x5x64xf32> to vector<5x64xf32>
    %c0_17 = arith.constant 0 : index
    %c128 = arith.constant 128 : index
    %10 = vector.load %arg15[%c0_17, %c128] : memref<5x576xf32, #tpu.memory_space<vmem>>, vector<5x64xf32>
    tpu.vector_store %arg15[%c0_17, %c128], %9 {strides = array<i32>} : memref<5x576xf32, #tpu.memory_space<vmem>>, vector<5x64xf32>,
    %c0_18 = arith.constant 0 : index
    %c1_19 = arith.constant 1 : index
    %c0_20 = arith.constant 0 : index
    %c0_21 = arith.constant 0 : index
    %11 = vector.load %arg2[%c0_18, %c1_19, %c0_20, %c0_21] : memref<1x11x5x64xf32, #tpu.memory_space<vmem>>, vector<1x1x5x64xf32>
    %12 = vector.shape_cast %11 : vector<1x1x5x64xf32> to vector<5x64xf32>
    %c0_22 = arith.constant 0 : index
    %c192 = arith.constant 192 : index
    %13 = vector.load %arg15[%c0_22, %c192] : memref<5x576xf32, #tpu.memory_space<vmem>>, vector<5x64xf32>
    tpu.vector_store %arg15[%c0_22, %c192], %12 {strides = array<i32>} : memref<5x576xf32, #tpu.memory_space<vmem>>, vector<5x64xf32>,
    %c0_23 = arith.constant 0 : index
    %c0_24 = arith.constant 0 : index
    %14 = vector.load %arg15[%c0_23, %c0_24] : memref<5x576xf32, #tpu.memory_space<vmem>>, vector<5x256xf32>
    %cst = arith.constant dense<0.000000e+00> : vector<5x32xf32>
    %15 = tpu.matmul %14, %0, %cst {dimension_numbers = #tpu.dot_dimension_numbers<[1], [0], [0], [1], [0, 0, 1, 1], [], []>} : vector<5x256xf32>, vector<256x32xf32>, vector<5x32xf32> -> vector<5x32xf32>
    %16 = vector.broadcast %1 : vector<1x32xf32> to vector<5x32xf32>
    %17 = arith.addf %15, %16 : vector<5x32xf32>
    %cst_25 = arith.constant 0.000000e+00 : f32
    %18 = vector.broadcast %cst_25 : f32 to vector<5x32xf32>
    %19 = arith.maximumf %17, %18 : vector<5x32xf32>
    %c0_26 = arith.constant 0 : index
    %c0_27 = arith.constant 0 : index
    %c0_28 = arith.constant 0 : index
    %20 = vector.load %arg12[%c0_26, %c0_27, %c0_28] : memref<10x5x32xf32, #tpu.memory_space<vmem>>, vector<1x5x32xf32>
    %21 = vector.shape_cast %20 : vector<1x5x32xf32> to vector<5x32xf32>
    %22 = vector.shape_cast %19 : vector<5x32xf32> to vector<1x5x32xf32>
    tpu.vector_store %arg12[%c0_26, %c0_27, %c0_28], %22 {strides = array<i32>} : memref<10x5x32xf32, #tpu.memory_space<vmem>>, vector<1x5x32xf32>,
    %c0_29 = arith.constant 0 : index
    %c0_30 = arith.constant 0 : index
    %c0_31 = arith.constant 0 : index
    %c0_32 = arith.constant 0 : index
    %23 = vector.load %arg2[%c0_29, %c0_30, %c0_31, %c0_32] : memref<1x11x5x64xf32, #tpu.memory_space<vmem>>, vector<1x1x5x64xf32>
    %24 = vector.shape_cast %23 : vector<1x1x5x64xf32> to vector<5x64xf32>
    %c0_33 = arith.constant 0 : index
    %c0_34 = arith.constant 0 : index
    %25 = vector.load %arg15[%c0_33, %c0_34] : memref<5x576xf32, #tpu.memory_space<vmem>>, vector<5x64xf32>
    tpu.vector_store %arg15[%c0_33, %c0_34], %24 {strides = array<i32>} : memref<5x576xf32, #tpu.memory_space<vmem>>, vector<5x64xf32>,
    %c0_35 = arith.constant 0 : index
    %c0_36 = arith.constant 0 : index
    %c1_37 = arith.constant 1 : index
    %c0_38 = arith.constant 0 : index
    %26 = vector.load %arg1[%c0_35, %c0_36, %c1_37, %c0_38] : memref<1x11x6x64xf32, #tpu.memory_space<vmem>>, vector<1x1x5x64xf32>
    %27 = vector.shape_cast %26 : vector<1x1x5x64xf32> to vector<5x64xf32>
    %c0_39 = arith.constant 0 : index
    %c64_40 = arith.constant 64 : index
    %28 = vector.load %arg15[%c0_39, %c64_40] : memref<5x576xf32, #tpu.memory_space<vmem>>, vector<5x64xf32>
    tpu.vector_store %arg15[%c0_39, %c64_40], %27 {strides = array<i32>} : memref<5x576xf32, #tpu.memory_space<vmem>>, vector<5x64xf32>,
    %c0_41 = arith.constant 0 : index
    %c1_42 = arith.constant 1 : index
    %c0_43 = arith.constant 0 : index
    %c0_44 = arith.constant 0 : index
    %29 = vector.load %arg2[%c0_41, %c1_42, %c0_43, %c0_44] : memref<1x11x5x64xf32, #tpu.memory_space<vmem>>, vector<1x1x5x64xf32>
    %30 = vector.shape_cast %29 : vector<1x1x5x64xf32> to vector<5x64xf32>
    %c0_45 = arith.constant 0 : index
    %c128_46 = arith.constant 128 : index
    %31 = vector.load %arg15[%c0_45, %c128_46] : memref<5x576xf32, #tpu.memory_space<vmem>>, vector<5x64xf32>
    tpu.vector_store %arg15[%c0_45, %c128_46], %30 {strides = array<i32>} : memref<5x576xf32, #tpu.memory_space<vmem>>, vector<5x64xf32>,
    %c0_47 = arith.constant 0 : index
    %c1_48 = arith.constant 1 : index
    %c1_49 = arith.constant 1 : index
    %c0_50 = arith.constant 0 : index
    %32 = vector.load %arg1[%c0_47, %c1_48, %c1_49, %c0_50] : memref<1x11x6x64xf32, #tpu.memory_space<vmem>>, vector<1x1x5x64xf32>
    %33 = vector.shape_cast %32 : vector<1x1x5x64xf32> to vector<5x64xf32>
    %c0_51 = arith.constant 0 : index
    %c192_52 = arith.constant 192 : index
    %34 = vector.load %arg15[%c0_51, %c192_52] : memref<5x576xf32, #tpu.memory_space<vmem>>, vector<5x64xf32>
    tpu.vector_store %arg15[%c0_51, %c192_52], %33 {strides = array<i32>} : memref<5x576xf32, #tpu.memory_space<vmem>>, vector<5x64xf32>,
    %c0_53 = arith.constant 0 : index
    %c0_54 = arith.constant 0 : index
    %35 = vector.load %arg15[%c0_53, %c0_54] : memref<5x576xf32, #tpu.memory_space<vmem>>, vector<5x256xf32>
    %cst_55 = arith.constant dense<0.000000e+00> : vector<5x32xf32>
    %36 = tpu.matmul %35, %0, %cst_55 {dimension_numbers = #tpu.dot_dimension_numbers<[1], [0], [0], [1], [0, 0, 1, 1], [], []>} : vector<5x256xf32>, vector<256x32xf32>, vector<5x32xf32> -> vector<5x32xf32>
    %37 = vector.broadcast %1 : vector<1x32xf32> to vector<5x32xf32>
    %38 = arith.addf %36, %37 : vector<5x32xf32>
    %cst_56 = arith.constant 0.000000e+00 : f32
    %39 = vector.broadcast %cst_56 : f32 to vector<5x32xf32>
    %40 = arith.maximumf %38, %39 : vector<5x32xf32>
    %c0_57 = arith.constant 0 : index
    %c0_58 = arith.constant 0 : index
    %c0_59 = arith.constant 0 : index
    %41 = vector.load %arg13[%c0_57, %c0_58, %c0_59] : memref<10x5x32xf32, #tpu.memory_space<vmem>>, vector<1x5x32xf32>
    %42 = vector.shape_cast %41 : vector<1x5x32xf32> to vector<5x32xf32>
    %43 = vector.shape_cast %40 : vector<5x32xf32> to vector<1x5x32xf32>
    tpu.vector_store %arg13[%c0_57, %c0_58, %c0_59], %43 {strides = array<i32>} : memref<10x5x32xf32, #tpu.memory_space<vmem>>, vector<1x5x32xf32>,
    %c0_60 = arith.constant 0 : index
    %c1_61 = arith.constant 1 : index
    %c0_62 = arith.constant 0 : index
    %c0_63 = arith.constant 0 : index
    %44 = vector.load %arg1[%c0_60, %c1_61, %c0_62, %c0_63] : memref<1x11x6x64xf32, #tpu.memory_space<vmem>>, vector<1x1x5x64xf32>
    %45 = vector.shape_cast %44 : vector<1x1x5x64xf32> to vector<5x64xf32>
    %c0_64 = arith.constant 0 : index
    %c0_65 = arith.constant 0 : index
    %46 = vector.load %arg15[%c0_64, %c0_65] : memref<5x576xf32, #tpu.memory_space<vmem>>, vector<5x64xf32>
    tpu.vector_store %arg15[%c0_64, %c0_65], %45 {strides = array<i32>} : memref<5x576xf32, #tpu.memory_space<vmem>>, vector<5x64xf32>,
    %c0_66 = arith.constant 0 : index
    %c1_67 = arith.constant 1 : index
    %c0_68 = arith.constant 0 : index
    %c0_69 = arith.constant 0 : index
    %47 = vector.load %arg2[%c0_66, %c1_67, %c0_68, %c0_69] : memref<1x11x5x64xf32, #tpu.memory_space<vmem>>, vector<1x1x5x64xf32>
    %48 = vector.shape_cast %47 : vector<1x1x5x64xf32> to vector<5x64xf32>
    %c0_70 = arith.constant 0 : index
    %c64_71 = arith.constant 64 : index
    %49 = vector.load %arg15[%c0_70, %c64_71] : memref<5x576xf32, #tpu.memory_space<vmem>>, vector<5x64xf32>
    tpu.vector_store %arg15[%c0_70, %c64_71], %48 {strides = array<i32>} : memref<5x576xf32, #tpu.memory_space<vmem>>, vector<5x64xf32>,
    %c0_72 = arith.constant 0 : index
    %c2 = arith.constant 2 : index
    %c0_73 = arith.constant 0 : index
    %c0_74 = arith.constant 0 : index
    %50 = vector.load %arg1[%c0_72, %c2, %c0_73, %c0_74] : memref<1x11x6x64xf32, #tpu.memory_space<vmem>>, vector<1x1x5x64xf32>
    %51 = vector.shape_cast %50 : vector<1x1x5x64xf32> to vector<5x64xf32>
    %c0_75 = arith.constant 0 : index
    %c128_76 = arith.constant 128 : index
    %52 = vector.load %arg15[%c0_75, %c128_76] : memref<5x576xf32, #tpu.memory_space<vmem>>, vector<5x64xf32>
    tpu.vector_store %arg15[%c0_75, %c128_76], %51 {strides = array<i32>} : memref<5x576xf32, #tpu.memory_space<vmem>>, vector<5x64xf32>,
    %c0_77 = arith.constant 0 : index
    %c2_78 = arith.constant 2 : index
    %c0_79 = arith.constant 0 : index
    %c0_80 = arith.constant 0 : index
    %53 = vector.load %arg2[%c0_77, %c2_78, %c0_79, %c0_80] : memref<1x11x5x64xf32, #tpu.memory_space<vmem>>, vector<1x1x5x64xf32>
    %54 = vector.shape_cast %53 : vector<1x1x5x64xf32> to vector<5x64xf32>
    %c0_81 = arith.constant 0 : index
    %c192_82 = arith.constant 192 : index
    %55 = vector.load %arg15[%c0_81, %c192_82] : memref<5x576xf32, #tpu.memory_space<vmem>>, vector<5x64xf32>
    tpu.vector_store %arg15[%c0_81, %c192_82], %54 {strides = array<i32>} : memref<5x576xf32, #tpu.memory_space<vmem>>, vector<5x64xf32>,
    %c0_83 = arith.constant 0 : index
    %c0_84 = arith.constant 0 : index
    %56 = vector.load %arg15[%c0_83, %c0_84] : memref<5x576xf32, #tpu.memory_space<vmem>>, vector<5x256xf32>
    %cst_85 = arith.constant dense<0.000000e+00> : vector<5x32xf32>
    %57 = tpu.matmul %56, %0, %cst_85 {dimension_numbers = #tpu.dot_dimension_numbers<[1], [0], [0], [1], [0, 0, 1, 1], [], []>} : vector<5x256xf32>, vector<256x32xf32>, vector<5x32xf32> -> vector<5x32xf32>
    %58 = vector.broadcast %1 : vector<1x32xf32> to vector<5x32xf32>
    %59 = arith.addf %57, %58 : vector<5x32xf32>
    %cst_86 = arith.constant 0.000000e+00 : f32
    %60 = vector.broadcast %cst_86 : f32 to vector<5x32xf32>
    %61 = arith.maximumf %59, %60 : vector<5x32xf32>
    %c1_87 = arith.constant 1 : index
    %c0_88 = arith.constant 0 : index
    %c0_89 = arith.constant 0 : index
    %62 = vector.load %arg12[%c1_87, %c0_88, %c0_89] : memref<10x5x32xf32, #tpu.memory_space<vmem>>, vector<1x5x32xf32>
    %63 = vector.shape_cast %62 : vector<1x5x32xf32> to vector<5x32xf32>
    %64 = vector.shape_cast %61 : vector<5x32xf32> to vector<1x5x32xf32>
    tpu.vector_store %arg12[%c1_87, %c0_88, %c0_89], %64 {strides = array<i32>} : memref<10x5x32xf32, #tpu.memory_space<vmem>>, vector<1x5x32xf32>,
    %c0_90 = arith.constant 0 : index
    %c1_91 = arith.constant 1 : index
    %c0_92 = arith.constant 0 : index
    %c0_93 = arith.constant 0 : index
    %65 = vector.load %arg2[%c0_90, %c1_91, %c0_92, %c0_93] : memref<1x11x5x64xf32, #tpu.memory_space<vmem>>, vector<1x1x5x64xf32>
    %66 = vector.shape_cast %65 : vector<1x1x5x64xf32> to vector<5x64xf32>
    %c0_94 = arith.constant 0 : index
    %c0_95 = arith.constant 0 : index
    %67 = vector.load %arg15[%c0_94, %c0_95] : memref<5x576xf32, #tpu.memory_space<vmem>>, vector<5x64xf32>
    tpu.vector_store %arg15[%c0_94, %c0_95], %66 {strides = array<i32>} : memref<5x576xf32, #tpu.memory_space<vmem>>, vector<5x64xf32>,
    %c0_96 = arith.constant 0 : index
    %c1_97 = arith.constant 1 : index
    %c1_98 = arith.constant 1 : index
    %c0_99 = arith.constant 0 : index
    %68 = vector.load %arg1[%c0_96, %c1_97, %c1_98, %c0_99] : memref<1x11x6x64xf32, #tpu.memory_space<vmem>>, vector<1x1x5x64xf32>
    %69 = vector.shape_cast %68 : vector<1x1x5x64xf32> to vector<5x64xf32>
    %c0_100 = arith.constant 0 : index
    %c64_101 = arith.constant 64 : index
    %70 = vector.load %arg15[%c0_100, %c64_101] : memref<5x576xf32, #tpu.memory_space<vmem>>, vector<5x64xf32>
    tpu.vector_store %arg15[%c0_100, %c64_101], %69 {strides = array<i32>} : memref<5x576xf32, #tpu.memory_space<vmem>>, vector<5x64xf32>,
    %c0_102 = arith.constant 0 : index
    %c2_103 = arith.constant 2 : index
    %c0_104 = arith.constant 0 : index
    %c0_105 = arith.constant 0 : index
    %71 = vector.load %arg2[%c0_102, %c2_103, %c0_104, %c0_105] : memref<1x11x5x64xf32, #tpu.memory_space<vmem>>, vector<1x1x5x64xf32>
    %72 = vector.shape_cast %71 : vector<1x1x5x64xf32> to vector<5x64xf32>
    %c0_106 = arith.constant 0 : index
    %c128_107 = arith.constant 128 : index
    %73 = vector.load %arg15[%c0_106, %c128_107] : memref<5x576xf32, #tpu.memory_space<vmem>>, vector<5x64xf32>
    tpu.vector_store %arg15[%c0_106, %c128_107], %72 {strides = array<i32>} : memref<5x576xf32, #tpu.memory_space<vmem>>, vector<5x64xf32>,
    %c0_108 = arith.constant 0 : index
    %c2_109 = arith.constant 2 : index
    %c1_110 = arith.constant 1 : index
    %c0_111 = arith.constant 0 : index
    %74 = vector.load %arg1[%c0_108, %c2_109, %c1_110, %c0_111] : memref<1x11x6x64xf32, #tpu.memory_space<vmem>>, vector<1x1x5x64xf32>
    %75 = vector.shape_cast %74 : vector<1x1x5x64xf32> to vector<5x64xf32>
    %c0_112 = arith.constant 0 : index
    %c192_113 = arith.constant 192 : index
    %76 = vector.load %arg15[%c0_112, %c192_113] : memref<5x576xf32, #tpu.memory_space<vmem>>, vector<5x64xf32>
    tpu.vector_store %arg15[%c0_112, %c192_113], %75 {strides = array<i32>} : memref<5x576xf32, #tpu.memory_space<vmem>>, vector<5x64xf32>,
    %c0_114 = arith.constant 0 : index
    %c0_115 = arith.constant 0 : index
    %77 = vector.load %arg15[%c0_114, %c0_115] : memref<5x576xf32, #tpu.memory_space<vmem>>, vector<5x256xf32>
    %cst_116 = arith.constant dense<0.000000e+00> : vector<5x32xf32>
    %78 = tpu.matmul %77, %0, %cst_116 {dimension_numbers = #tpu.dot_dimension_numbers<[1], [0], [0], [1], [0, 0, 1, 1], [], []>} : vector<5x256xf32>, vector<256x32xf32>, vector<5x32xf32> -> vector<5x32xf32>
    %79 = vector.broadcast %1 : vector<1x32xf32> to vector<5x32xf32>
    %80 = arith.addf %78, %79 : vector<5x32xf32>
    %cst_117 = arith.constant 0.000000e+00 : f32
    %81 = vector.broadcast %cst_117 : f32 to vector<5x32xf32>
    %82 = arith.maximumf %80, %81 : vector<5x32xf32>
    %c1_118 = arith.constant 1 : index
    %c0_119 = arith.constant 0 : index
    %c0_120 = arith.constant 0 : index
    %83 = vector.load %arg13[%c1_118, %c0_119, %c0_120] : memref<10x5x32xf32, #tpu.memory_space<vmem>>, vector<1x5x32xf32>
    %84 = vector.shape_cast %83 : vector<1x5x32xf32> to vector<5x32xf32>
    %85 = vector.shape_cast %82 : vector<5x32xf32> to vector<1x5x32xf32>
    tpu.vector_store %arg13[%c1_118, %c0_119, %c0_120], %85 {strides = array<i32>} : memref<10x5x32xf32, #tpu.memory_space<vmem>>, vector<1x5x32xf32>,
    %c0_121 = arith.constant 0 : index
    %c2_122 = arith.constant 2 : index
    %c0_123 = arith.constant 0 : index
    %c0_124 = arith.constant 0 : index
    %86 = vector.load %arg1[%c0_121, %c2_122, %c0_123, %c0_124] : memref<1x11x6x64xf32, #tpu.memory_space<vmem>>, vector<1x1x5x64xf32>
    %87 = vector.shape_cast %86 : vector<1x1x5x64xf32> to vector<5x64xf32>
    %c0_125 = arith.constant 0 : index
    %c0_126 = arith.constant 0 : index
    %88 = vector.load %arg15[%c0_125, %c0_126] : memref<5x576xf32, #tpu.memory_space<vmem>>, vector<5x64xf32>
    tpu.vector_store %arg15[%c0_125, %c0_126], %87 {strides = array<i32>} : memref<5x576xf32, #tpu.memory_space<vmem>>, vector<5x64xf32>,
    %c0_127 = arith.constant 0 : index
    %c2_128 = arith.constant 2 : index
    %c0_129 = arith.constant 0 : index
    %c0_130 = arith.constant 0 : index
    %89 = vector.load %arg2[%c0_127, %c2_128, %c0_129, %c0_130] : memref<1x11x5x64xf32, #tpu.memory_space<vmem>>, vector<1x1x5x64xf32>
    %90 = vector.shape_cast %89 : vector<1x1x5x64xf32> to vector<5x64xf32>
    %c0_131 = arith.constant 0 : index
    %c64_132 = arith.constant 64 : index
    %91 = vector.load %arg15[%c0_131, %c64_132] : memref<5x576xf32, #tpu.memory_space<vmem>>, vector<5x64xf32>
    tpu.vector_store %arg15[%c0_131, %c64_132], %90 {strides = array<i32>} : memref<5x576xf32, #tpu.memory_space<vmem>>, vector<5x64xf32>,
    %c0_133 = arith.constant 0 : index
    %c3 = arith.constant 3 : index
    %c0_134 = arith.constant 0 : index
    %c0_135 = arith.constant 0 : index
    %92 = vector.load %arg1[%c0_133, %c3, %c0_134, %c0_135] : memref<1x11x6x64xf32, #tpu.memory_space<vmem>>, vector<1x1x5x64xf32>
    %93 = vector.shape_cast %92 : vector<1x1x5x64xf32> to vector<5x64xf32>
    %c0_136 = arith.constant 0 : index
    %c128_137 = arith.constant 128 : index
    %94 = vector.load %arg15[%c0_136, %c128_137] : memref<5x576xf32, #tpu.memory_space<vmem>>, vector<5x64xf32>
    tpu.vector_store %arg15[%c0_136, %c128_137], %93 {strides = array<i32>} : memref<5x576xf32, #tpu.memory_space<vmem>>, vector<5x64xf32>,
    %c0_138 = arith.constant 0 : index
    %c3_139 = arith.constant 3 : index
    %c0_140 = arith.constant 0 : index
    %c0_141 = arith.constant 0 : index
    %95 = vector.load %arg2[%c0_138, %c3_139, %c0_140, %c0_141] : memref<1x11x5x64xf32, #tpu.memory_space<vmem>>, vector<1x1x5x64xf32>
    %96 = vector.shape_cast %95 : vector<1x1x5x64xf32> to vector<5x64xf32>
    %c0_142 = arith.constant 0 : index
    %c192_143 = arith.constant 192 : index
    %97 = vector.load %arg15[%c0_142, %c192_143] : memref<5x576xf32, #tpu.memory_space<vmem>>, vector<5x64xf32>
    tpu.vector_store %arg15[%c0_142, %c192_143], %96 {strides = array<i32>} : memref<5x576xf32, #tpu.memory_space<vmem>>, vector<5x64xf32>,
    %c0_144 = arith.constant 0 : index
    %c0_145 = arith.constant 0 : index
    %98 = vector.load %arg15[%c0_144, %c0_145] : memref<5x576xf32, #tpu.memory_space<vmem>>, vector<5x256xf32>
    %cst_146 = arith.constant dense<0.000000e+00> : vector<5x32xf32>
    %99 = tpu.matmul %98, %0, %cst_146 {dimension_numbers = #tpu.dot_dimension_numbers<[1], [0], [0], [1], [0, 0, 1, 1], [], []>} : vector<5x256xf32>, vector<256x32xf32>, vector<5x32xf32> -> vector<5x32xf32>
    %100 = vector.broadcast %1 : vector<1x32xf32> to vector<5x32xf32>
    %101 = arith.addf %99, %100 : vector<5x32xf32>
    %cst_147 = arith.constant 0.000000e+00 : f32
    %102 = vector.broadcast %cst_147 : f32 to vector<5x32xf32>
    %103 = arith.maximumf %101, %102 : vector<5x32xf32>
    %c2_148 = arith.constant 2 : index
    %c0_149 = arith.constant 0 : index
    %c0_150 = arith.constant 0 : index
    %104 = vector.load %arg12[%c2_148, %c0_149, %c0_150] : memref<10x5x32xf32, #tpu.memory_space<vmem>>, vector<1x5x32xf32>
    %105 = vector.shape_cast %104 : vector<1x5x32xf32> to vector<5x32xf32>
    %106 = vector.shape_cast %103 : vector<5x32xf32> to vector<1x5x32xf32>
    tpu.vector_store %arg12[%c2_148, %c0_149, %c0_150], %106 {strides = array<i32>} : memref<10x5x32xf32, #tpu.memory_space<vmem>>, vector<1x5x32xf32>,
    %c0_151 = arith.constant 0 : index
    %c2_152 = arith.constant 2 : index
    %c0_153 = arith.constant 0 : index
    %c0_154 = arith.constant 0 : index
    %107 = vector.load %arg2[%c0_151, %c2_152, %c0_153, %c0_154] : memref<1x11x5x64xf32, #tpu.memory_space<vmem>>, vector<1x1x5x64xf32>
    %108 = vector.shape_cast %107 : vector<1x1x5x64xf32> to vector<5x64xf32>
    %c0_155 = arith.constant 0 : index
    %c0_156 = arith.constant 0 : index
    %109 = vector.load %arg15[%c0_155, %c0_156] : memref<5x576xf32, #tpu.memory_space<vmem>>, vector<5x64xf32>
    tpu.vector_store %arg15[%c0_155, %c0_156], %108 {strides = array<i32>} : memref<5x576xf32, #tpu.memory_space<vmem>>, vector<5x64xf32>,
    %c0_157 = arith.constant 0 : index
    %c2_158 = arith.constant 2 : index
    %c1_159 = arith.constant 1 : index
    %c0_160 = arith.constant 0 : index
    %110 = vector.load %arg1[%c0_157, %c2_158, %c1_159, %c0_160] : memref<1x11x6x64xf32, #tpu.memory_space<vmem>>, vector<1x1x5x64xf32>
    %111 = vector.shape_cast %110 : vector<1x1x5x64xf32> to vector<5x64xf32>
    %c0_161 = arith.constant 0 : index
    %c64_162 = arith.constant 64 : index
    %112 = vector.load %arg15[%c0_161, %c64_162] : memref<5x576xf32, #tpu.memory_space<vmem>>, vector<5x64xf32>
    tpu.vector_store %arg15[%c0_161, %c64_162], %111 {strides = array<i32>} : memref<5x576xf32, #tpu.memory_space<vmem>>, vector<5x64xf32>,
    %c0_163 = arith.constant 0 : index
    %c3_164 = arith.constant 3 : index
    %c0_165 = arith.constant 0 : index
    %c0_166 = arith.constant 0 : index
    %113 = vector.load %arg2[%c0_163, %c3_164, %c0_165, %c0_166] : memref<1x11x5x64xf32, #tpu.memory_space<vmem>>, vector<1x1x5x64xf32>
    %114 = vector.shape_cast %113 : vector<1x1x5x64xf32> to vector<5x64xf32>
    %c0_167 = arith.constant 0 : index
    %c128_168 = arith.constant 128 : index
    %115 = vector.load %arg15[%c0_167, %c128_168] : memref<5x576xf32, #tpu.memory_space<vmem>>, vector<5x64xf32>
    tpu.vector_store %arg15[%c0_167, %c128_168], %114 {strides = array<i32>} : memref<5x576xf32, #tpu.memory_space<vmem>>, vector<5x64xf32>,
    %c0_169 = arith.constant 0 : index
    %c3_170 = arith.constant 3 : index
    %c1_171 = arith.constant 1 : index
    %c0_172 = arith.constant 0 : index
    %116 = vector.load %arg1[%c0_169, %c3_170, %c1_171, %c0_172] : memref<1x11x6x64xf32, #tpu.memory_space<vmem>>, vector<1x1x5x64xf32>
    %117 = vector.shape_cast %116 : vector<1x1x5x64xf32> to vector<5x64xf32>
    %c0_173 = arith.constant 0 : index
    %c192_174 = arith.constant 192 : index
    %118 = vector.load %arg15[%c0_173, %c192_174] : memref<5x576xf32, #tpu.memory_space<vmem>>, vector<5x64xf32>
    tpu.vector_store %arg15[%c0_173, %c192_174], %117 {strides = array<i32>} : memref<5x576xf32, #tpu.memory_space<vmem>>, vector<5x64xf32>,
    %c0_175 = arith.constant 0 : index
    %c0_176 = arith.constant 0 : index
    %119 = vector.load %arg15[%c0_175, %c0_176] : memref<5x576xf32, #tpu.memory_space<vmem>>, vector<5x256xf32>
    %cst_177 = arith.constant dense<0.000000e+00> : vector<5x32xf32>
    %120 = tpu.matmul %119, %0, %cst_177 {dimension_numbers = #tpu.dot_dimension_numbers<[1], [0], [0], [1], [0, 0, 1, 1], [], []>} : vector<5x256xf32>, vector<256x32xf32>, vector<5x32xf32> -> vector<5x32xf32>
    %121 = vector.broadcast %1 : vector<1x32xf32> to vector<5x32xf32>
    %122 = arith.addf %120, %121 : vector<5x32xf32>
    %cst_178 = arith.constant 0.000000e+00 : f32
    %123 = vector.broadcast %cst_178 : f32 to vector<5x32xf32>
    %124 = arith.maximumf %122, %123 : vector<5x32xf32>
    %c2_179 = arith.constant 2 : index
    %c0_180 = arith.constant 0 : index
    %c0_181 = arith.constant 0 : index
    %125 = vector.load %arg13[%c2_179, %c0_180, %c0_181] : memref<10x5x32xf32, #tpu.memory_space<vmem>>, vector<1x5x32xf32>
    %126 = vector.shape_cast %125 : vector<1x5x32xf32> to vector<5x32xf32>
    %127 = vector.shape_cast %124 : vector<5x32xf32> to vector<1x5x32xf32>
    tpu.vector_store %arg13[%c2_179, %c0_180, %c0_181], %127 {strides = array<i32>} : memref<10x5x32xf32, #tpu.memory_space<vmem>>, vector<1x5x32xf32>,
    %c0_182 = arith.constant 0 : index
    %c3_183 = arith.constant 3 : index
    %c0_184 = arith.constant 0 : index
    %c0_185 = arith.constant 0 : index
    %128 = vector.load %arg1[%c0_182, %c3_183, %c0_184, %c0_185] : memref<1x11x6x64xf32, #tpu.memory_space<vmem>>, vector<1x1x5x64xf32>
    %129 = vector.shape_cast %128 : vector<1x1x5x64xf32> to vector<5x64xf32>
    %c0_186 = arith.constant 0 : index
    %c0_187 = arith.constant 0 : index
    %130 = vector.load %arg15[%c0_186, %c0_187] : memref<5x576xf32, #tpu.memory_space<vmem>>, vector<5x64xf32>
    tpu.vector_store %arg15[%c0_186, %c0_187], %129 {strides = array<i32>} : memref<5x576xf32, #tpu.memory_space<vmem>>, vector<5x64xf32>,
    %c0_188 = arith.constant 0 : index
    %c3_189 = arith.constant 3 : index
    %c0_190 = arith.constant 0 : index
    %c0_191 = arith.constant 0 : index
    %131 = vector.load %arg2[%c0_188, %c3_189, %c0_190, %c0_191] : memref<1x11x5x64xf32, #tpu.memory_space<vmem>>, vector<1x1x5x64xf32>
    %132 = vector.shape_cast %131 : vector<1x1x5x64xf32> to vector<5x64xf32>
    %c0_192 = arith.constant 0 : index
    %c64_193 = arith.constant 64 : index
    %133 = vector.load %arg15[%c0_192, %c64_193] : memref<5x576xf32, #tpu.memory_space<vmem>>, vector<5x64xf32>
    tpu.vector_store %arg15[%c0_192, %c64_193], %132 {strides = array<i32>} : memref<5x576xf32, #tpu.memory_space<vmem>>, vector<5x64xf32>,
    %c0_194 = arith.constant 0 : index
    %c4 = arith.constant 4 : index
    %c0_195 = arith.constant 0 : index
    %c0_196 = arith.constant 0 : index
    %134 = vector.load %arg1[%c0_194, %c4, %c0_195, %c0_196] : memref<1x11x6x64xf32, #tpu.memory_space<vmem>>, vector<1x1x5x64xf32>
    %135 = vector.shape_cast %134 : vector<1x1x5x64xf32> to vector<5x64xf32>
    %c0_197 = arith.constant 0 : index
    %c128_198 = arith.constant 128 : index
    %136 = vector.load %arg15[%c0_197, %c128_198] : memref<5x576xf32, #tpu.memory_space<vmem>>, vector<5x64xf32>
    tpu.vector_store %arg15[%c0_197, %c128_198], %135 {strides = array<i32>} : memref<5x576xf32, #tpu.memory_space<vmem>>, vector<5x64xf32>,
    %c0_199 = arith.constant 0 : index
    %c4_200 = arith.constant 4 : index
    %c0_201 = arith.constant 0 : index
    %c0_202 = arith.constant 0 : index
    %137 = vector.load %arg2[%c0_199, %c4_200, %c0_201, %c0_202] : memref<1x11x5x64xf32, #tpu.memory_space<vmem>>, vector<1x1x5x64xf32>
    %138 = vector.shape_cast %137 : vector<1x1x5x64xf32> to vector<5x64xf32>
    %c0_203 = arith.constant 0 : index
    %c192_204 = arith.constant 192 : index
    %139 = vector.load %arg15[%c0_203, %c192_204] : memref<5x576xf32, #tpu.memory_space<vmem>>, vector<5x64xf32>
    tpu.vector_store %arg15[%c0_203, %c192_204], %138 {strides = array<i32>} : memref<5x576xf32, #tpu.memory_space<vmem>>, vector<5x64xf32>,
    %c0_205 = arith.constant 0 : index
    %c0_206 = arith.constant 0 : index
    %140 = vector.load %arg15[%c0_205, %c0_206] : memref<5x576xf32, #tpu.memory_space<vmem>>, vector<5x256xf32>
    %cst_207 = arith.constant dense<0.000000e+00> : vector<5x32xf32>
    %141 = tpu.matmul %140, %0, %cst_207 {dimension_numbers = #tpu.dot_dimension_numbers<[1], [0], [0], [1], [0, 0, 1, 1], [], []>} : vector<5x256xf32>, vector<256x32xf32>, vector<5x32xf32> -> vector<5x32xf32>
    %142 = vector.broadcast %1 : vector<1x32xf32> to vector<5x32xf32>
    %143 = arith.addf %141, %142 : vector<5x32xf32>
    %cst_208 = arith.constant 0.000000e+00 : f32
    %144 = vector.broadcast %cst_208 : f32 to vector<5x32xf32>
    %145 = arith.maximumf %143, %144 : vector<5x32xf32>
    %c3_209 = arith.constant 3 : index
    %c0_210 = arith.constant 0 : index
    %c0_211 = arith.constant 0 : index
    %146 = vector.load %arg12[%c3_209, %c0_210, %c0_211] : memref<10x5x32xf32, #tpu.memory_space<vmem>>, vector<1x5x32xf32>
    %147 = vector.shape_cast %146 : vector<1x5x32xf32> to vector<5x32xf32>
    %148 = vector.shape_cast %145 : vector<5x32xf32> to vector<1x5x32xf32>
    tpu.vector_store %arg12[%c3_209, %c0_210, %c0_211], %148 {strides = array<i32>} : memref<10x5x32xf32, #tpu.memory_space<vmem>>, vector<1x5x32xf32>,
    %c0_212 = arith.constant 0 : index
    %c3_213 = arith.constant 3 : index
    %c0_214 = arith.constant 0 : index
    %c0_215 = arith.constant 0 : index
    %149 = vector.load %arg2[%c0_212, %c3_213, %c0_214, %c0_215] : memref<1x11x5x64xf32, #tpu.memory_space<vmem>>, vector<1x1x5x64xf32>
    %150 = vector.shape_cast %149 : vector<1x1x5x64xf32> to vector<5x64xf32>
    %c0_216 = arith.constant 0 : index
    %c0_217 = arith.constant 0 : index
    %151 = vector.load %arg15[%c0_216, %c0_217] : memref<5x576xf32, #tpu.memory_space<vmem>>, vector<5x64xf32>
    tpu.vector_store %arg15[%c0_216, %c0_217], %150 {strides = array<i32>} : memref<5x576xf32, #tpu.memory_space<vmem>>, vector<5x64xf32>,
    %c0_218 = arith.constant 0 : index
    %c3_219 = arith.constant 3 : index
    %c1_220 = arith.constant 1 : index
    %c0_221 = arith.constant 0 : index
    %152 = vector.load %arg1[%c0_218, %c3_219, %c1_220, %c0_221] : memref<1x11x6x64xf32, #tpu.memory_space<vmem>>, vector<1x1x5x64xf32>
    %153 = vector.shape_cast %152 : vector<1x1x5x64xf32> to vector<5x64xf32>
    %c0_222 = arith.constant 0 : index
    %c64_223 = arith.constant 64 : index
    %154 = vector.load %arg15[%c0_222, %c64_223] : memref<5x576xf32, #tpu.memory_space<vmem>>, vector<5x64xf32>
    tpu.vector_store %arg15[%c0_222, %c64_223], %153 {strides = array<i32>} : memref<5x576xf32, #tpu.memory_space<vmem>>, vector<5x64xf32>,
    %c0_224 = arith.constant 0 : index
    %c4_225 = arith.constant 4 : index
    %c0_226 = arith.constant 0 : index
    %c0_227 = arith.constant 0 : index
    %155 = vector.load %arg2[%c0_224, %c4_225, %c0_226, %c0_227] : memref<1x11x5x64xf32, #tpu.memory_space<vmem>>, vector<1x1x5x64xf32>
    %156 = vector.shape_cast %155 : vector<1x1x5x64xf32> to vector<5x64xf32>
    %c0_228 = arith.constant 0 : index
    %c128_229 = arith.constant 128 : index
    %157 = vector.load %arg15[%c0_228, %c128_229] : memref<5x576xf32, #tpu.memory_space<vmem>>, vector<5x64xf32>
    tpu.vector_store %arg15[%c0_228, %c128_229], %156 {strides = array<i32>} : memref<5x576xf32, #tpu.memory_space<vmem>>, vector<5x64xf32>,
    %c0_230 = arith.constant 0 : index
    %c4_231 = arith.constant 4 : index
    %c1_232 = arith.constant 1 : index
    %c0_233 = arith.constant 0 : index
    %158 = vector.load %arg1[%c0_230, %c4_231, %c1_232, %c0_233] : memref<1x11x6x64xf32, #tpu.memory_space<vmem>>, vector<1x1x5x64xf32>
    %159 = vector.shape_cast %158 : vector<1x1x5x64xf32> to vector<5x64xf32>
    %c0_234 = arith.constant 0 : index
    %c192_235 = arith.constant 192 : index
    %160 = vector.load %arg15[%c0_234, %c192_235] : memref<5x576xf32, #tpu.memory_space<vmem>>, vector<5x64xf32>
    tpu.vector_store %arg15[%c0_234, %c192_235], %159 {strides = array<i32>} : memref<5x576xf32, #tpu.memory_space<vmem>>, vector<5x64xf32>,
    %c0_236 = arith.constant 0 : index
    %c0_237 = arith.constant 0 : index
    %161 = vector.load %arg15[%c0_236, %c0_237] : memref<5x576xf32, #tpu.memory_space<vmem>>, vector<5x256xf32>
    %cst_238 = arith.constant dense<0.000000e+00> : vector<5x32xf32>
    %162 = tpu.matmul %161, %0, %cst_238 {dimension_numbers = #tpu.dot_dimension_numbers<[1], [0], [0], [1], [0, 0, 1, 1], [], []>} : vector<5x256xf32>, vector<256x32xf32>, vector<5x32xf32> -> vector<5x32xf32>
    %163 = vector.broadcast %1 : vector<1x32xf32> to vector<5x32xf32>
    %164 = arith.addf %162, %163 : vector<5x32xf32>
    %cst_239 = arith.constant 0.000000e+00 : f32
    %165 = vector.broadcast %cst_239 : f32 to vector<5x32xf32>
    %166 = arith.maximumf %164, %165 : vector<5x32xf32>
    %c3_240 = arith.constant 3 : index
    %c0_241 = arith.constant 0 : index
    %c0_242 = arith.constant 0 : index
    %167 = vector.load %arg13[%c3_240, %c0_241, %c0_242] : memref<10x5x32xf32, #tpu.memory_space<vmem>>, vector<1x5x32xf32>
    %168 = vector.shape_cast %167 : vector<1x5x32xf32> to vector<5x32xf32>
    %169 = vector.shape_cast %166 : vector<5x32xf32> to vector<1x5x32xf32>
    tpu.vector_store %arg13[%c3_240, %c0_241, %c0_242], %169 {strides = array<i32>} : memref<10x5x32xf32, #tpu.memory_space<vmem>>, vector<1x5x32xf32>,
    %c0_243 = arith.constant 0 : index
    %c4_244 = arith.constant 4 : index
    %c0_245 = arith.constant 0 : index
    %c0_246 = arith.constant 0 : index
    %170 = vector.load %arg1[%c0_243, %c4_244, %c0_245, %c0_246] : memref<1x11x6x64xf32, #tpu.memory_space<vmem>>, vector<1x1x5x64xf32>
    %171 = vector.shape_cast %170 : vector<1x1x5x64xf32> to vector<5x64xf32>
    %c0_247 = arith.constant 0 : index
    %c0_248 = arith.constant 0 : index
    %172 = vector.load %arg15[%c0_247, %c0_248] : memref<5x576xf32, #tpu.memory_space<vmem>>, vector<5x64xf32>
    tpu.vector_store %arg15[%c0_247, %c0_248], %171 {strides = array<i32>} : memref<5x576xf32, #tpu.memory_space<vmem>>, vector<5x64xf32>,
    %c0_249 = arith.constant 0 : index
    %c4_250 = arith.constant 4 : index
    %c0_251 = arith.constant 0 : index
    %c0_252 = arith.constant 0 : index
    %173 = vector.load %arg2[%c0_249, %c4_250, %c0_251, %c0_252] : memref<1x11x5x64xf32, #tpu.memory_space<vmem>>, vector<1x1x5x64xf32>
    %174 = vector.shape_cast %173 : vector<1x1x5x64xf32> to vector<5x64xf32>
    %c0_253 = arith.constant 0 : index
    %c64_254 = arith.constant 64 : index
    %175 = vector.load %arg15[%c0_253, %c64_254] : memref<5x576xf32, #tpu.memory_space<vmem>>, vector<5x64xf32>
    tpu.vector_store %arg15[%c0_253, %c64_254], %174 {strides = array<i32>} : memref<5x576xf32, #tpu.memory_space<vmem>>, vector<5x64xf32>,
    %c0_255 = arith.constant 0 : index
    %c5 = arith.constant 5 : index
    %c0_256 = arith.constant 0 : index
    %c0_257 = arith.constant 0 : index
    %176 = vector.load %arg1[%c0_255, %c5, %c0_256, %c0_257] : memref<1x11x6x64xf32, #tpu.memory_space<vmem>>, vector<1x1x5x64xf32>
    %177 = vector.shape_cast %176 : vector<1x1x5x64xf32> to vector<5x64xf32>
    %c0_258 = arith.constant 0 : index
    %c128_259 = arith.constant 128 : index
    %178 = vector.load %arg15[%c0_258, %c128_259] : memref<5x576xf32, #tpu.memory_space<vmem>>, vector<5x64xf32>
    tpu.vector_store %arg15[%c0_258, %c128_259], %177 {strides = array<i32>} : memref<5x576xf32, #tpu.memory_space<vmem>>, vector<5x64xf32>,
    %c0_260 = arith.constant 0 : index
    %c5_261 = arith.constant 5 : index
    %c0_262 = arith.constant 0 : index
    %c0_263 = arith.constant 0 : index
    %179 = vector.load %arg2[%c0_260, %c5_261, %c0_262, %c0_263] : memref<1x11x5x64xf32, #tpu.memory_space<vmem>>, vector<1x1x5x64xf32>
    %180 = vector.shape_cast %179 : vector<1x1x5x64xf32> to vector<5x64xf32>
    %c0_264 = arith.constant 0 : index
    %c192_265 = arith.constant 192 : index
    %181 = vector.load %arg15[%c0_264, %c192_265] : memref<5x576xf32, #tpu.memory_space<vmem>>, vector<5x64xf32>
    tpu.vector_store %arg15[%c0_264, %c192_265], %180 {strides = array<i32>} : memref<5x576xf32, #tpu.memory_space<vmem>>, vector<5x64xf32>,
    %c0_266 = arith.constant 0 : index
    %c0_267 = arith.constant 0 : index
    %182 = vector.load %arg15[%c0_266, %c0_267] : memref<5x576xf32, #tpu.memory_space<vmem>>, vector<5x256xf32>
    %cst_268 = arith.constant dense<0.000000e+00> : vector<5x32xf32>
    %183 = tpu.matmul %182, %0, %cst_268 {dimension_numbers = #tpu.dot_dimension_numbers<[1], [0], [0], [1], [0, 0, 1, 1], [], []>} : vector<5x256xf32>, vector<256x32xf32>, vector<5x32xf32> -> vector<5x32xf32>
    %184 = vector.broadcast %1 : vector<1x32xf32> to vector<5x32xf32>
    %185 = arith.addf %183, %184 : vector<5x32xf32>
    %cst_269 = arith.constant 0.000000e+00 : f32
    %186 = vector.broadcast %cst_269 : f32 to vector<5x32xf32>
    %187 = arith.maximumf %185, %186 : vector<5x32xf32>
    %c4_270 = arith.constant 4 : index
    %c0_271 = arith.constant 0 : index
    %c0_272 = arith.constant 0 : index
    %188 = vector.load %arg12[%c4_270, %c0_271, %c0_272] : memref<10x5x32xf32, #tpu.memory_space<vmem>>, vector<1x5x32xf32>
    %189 = vector.shape_cast %188 : vector<1x5x32xf32> to vector<5x32xf32>
    %190 = vector.shape_cast %187 : vector<5x32xf32> to vector<1x5x32xf32>
    tpu.vector_store %arg12[%c4_270, %c0_271, %c0_272], %190 {strides = array<i32>} : memref<10x5x32xf32, #tpu.memory_space<vmem>>, vector<1x5x32xf32>,
    %c0_273 = arith.constant 0 : index
    %c4_274 = arith.constant 4 : index
    %c0_275 = arith.constant 0 : index
    %c0_276 = arith.constant 0 : index
    %191 = vector.load %arg2[%c0_273, %c4_274, %c0_275, %c0_276] : memref<1x11x5x64xf32, #tpu.memory_space<vmem>>, vector<1x1x5x64xf32>
    %192 = vector.shape_cast %191 : vector<1x1x5x64xf32> to vector<5x64xf32>
    %c0_277 = arith.constant 0 : index
    %c0_278 = arith.constant 0 : index
    %193 = vector.load %arg15[%c0_277, %c0_278] : memref<5x576xf32, #tpu.memory_space<vmem>>, vector<5x64xf32>
    tpu.vector_store %arg15[%c0_277, %c0_278], %192 {strides = array<i32>} : memref<5x576xf32, #tpu.memory_space<vmem>>, vector<5x64xf32>,
    %c0_279 = arith.constant 0 : index
    %c4_280 = arith.constant 4 : index
    %c1_281 = arith.constant 1 : index
    %c0_282 = arith.constant 0 : index
    %194 = vector.load %arg1[%c0_279, %c4_280, %c1_281, %c0_282] : memref<1x11x6x64xf32, #tpu.memory_space<vmem>>, vector<1x1x5x64xf32>
    %195 = vector.shape_cast %194 : vector<1x1x5x64xf32> to vector<5x64xf32>
    %c0_283 = arith.constant 0 : index
    %c64_284 = arith.constant 64 : index
    %196 = vector.load %arg15[%c0_283, %c64_284] : memref<5x576xf32, #tpu.memory_space<vmem>>, vector<5x64xf32>
    tpu.vector_store %arg15[%c0_283, %c64_284], %195 {strides = array<i32>} : memref<5x576xf32, #tpu.memory_space<vmem>>, vector<5x64xf32>,
    %c0_285 = arith.constant 0 : index
    %c5_286 = arith.constant 5 : index
    %c0_287 = arith.constant 0 : index
    %c0_288 = arith.constant 0 : index
    %197 = vector.load %arg2[%c0_285, %c5_286, %c0_287, %c0_288] : memref<1x11x5x64xf32, #tpu.memory_space<vmem>>, vector<1x1x5x64xf32>
    %198 = vector.shape_cast %197 : vector<1x1x5x64xf32> to vector<5x64xf32>
    %c0_289 = arith.constant 0 : index
    %c128_290 = arith.constant 128 : index
    %199 = vector.load %arg15[%c0_289, %c128_290] : memref<5x576xf32, #tpu.memory_space<vmem>>, vector<5x64xf32>
    tpu.vector_store %arg15[%c0_289, %c128_290], %198 {strides = array<i32>} : memref<5x576xf32, #tpu.memory_space<vmem>>, vector<5x64xf32>,
    %c0_291 = arith.constant 0 : index
    %c5_292 = arith.constant 5 : index
    %c1_293 = arith.constant 1 : index
    %c0_294 = arith.constant 0 : index
    %200 = vector.load %arg1[%c0_291, %c5_292, %c1_293, %c0_294] : memref<1x11x6x64xf32, #tpu.memory_space<vmem>>, vector<1x1x5x64xf32>
    %201 = vector.shape_cast %200 : vector<1x1x5x64xf32> to vector<5x64xf32>
    %c0_295 = arith.constant 0 : index
    %c192_296 = arith.constant 192 : index
    %202 = vector.load %arg15[%c0_295, %c192_296] : memref<5x576xf32, #tpu.memory_space<vmem>>, vector<5x64xf32>
    tpu.vector_store %arg15[%c0_295, %c192_296], %201 {strides = array<i32>} : memref<5x576xf32, #tpu.memory_space<vmem>>, vector<5x64xf32>,
    %c0_297 = arith.constant 0 : index
    %c0_298 = arith.constant 0 : index
    %203 = vector.load %arg15[%c0_297, %c0_298] : memref<5x576xf32, #tpu.memory_space<vmem>>, vector<5x256xf32>
    %cst_299 = arith.constant dense<0.000000e+00> : vector<5x32xf32>
    %204 = tpu.matmul %203, %0, %cst_299 {dimension_numbers = #tpu.dot_dimension_numbers<[1], [0], [0], [1], [0, 0, 1, 1], [], []>} : vector<5x256xf32>, vector<256x32xf32>, vector<5x32xf32> -> vector<5x32xf32>
    %205 = vector.broadcast %1 : vector<1x32xf32> to vector<5x32xf32>
    %206 = arith.addf %204, %205 : vector<5x32xf32>
    %cst_300 = arith.constant 0.000000e+00 : f32
    %207 = vector.broadcast %cst_300 : f32 to vector<5x32xf32>
    %208 = arith.maximumf %206, %207 : vector<5x32xf32>
    %c4_301 = arith.constant 4 : index
    %c0_302 = arith.constant 0 : index
    %c0_303 = arith.constant 0 : index
    %209 = vector.load %arg13[%c4_301, %c0_302, %c0_303] : memref<10x5x32xf32, #tpu.memory_space<vmem>>, vector<1x5x32xf32>
    %210 = vector.shape_cast %209 : vector<1x5x32xf32> to vector<5x32xf32>
    %211 = vector.shape_cast %208 : vector<5x32xf32> to vector<1x5x32xf32>
    tpu.vector_store %arg13[%c4_301, %c0_302, %c0_303], %211 {strides = array<i32>} : memref<10x5x32xf32, #tpu.memory_space<vmem>>, vector<1x5x32xf32>,
    %c0_304 = arith.constant 0 : index
    %c5_305 = arith.constant 5 : index
    %c0_306 = arith.constant 0 : index
    %c0_307 = arith.constant 0 : index
    %212 = vector.load %arg1[%c0_304, %c5_305, %c0_306, %c0_307] : memref<1x11x6x64xf32, #tpu.memory_space<vmem>>, vector<1x1x5x64xf32>
    %213 = vector.shape_cast %212 : vector<1x1x5x64xf32> to vector<5x64xf32>
    %c0_308 = arith.constant 0 : index
    %c0_309 = arith.constant 0 : index
    %214 = vector.load %arg15[%c0_308, %c0_309] : memref<5x576xf32, #tpu.memory_space<vmem>>, vector<5x64xf32>
    tpu.vector_store %arg15[%c0_308, %c0_309], %213 {strides = array<i32>} : memref<5x576xf32, #tpu.memory_space<vmem>>, vector<5x64xf32>,
    %c0_310 = arith.constant 0 : index
    %c5_311 = arith.constant 5 : index
    %c0_312 = arith.constant 0 : index
    %c0_313 = arith.constant 0 : index
    %215 = vector.load %arg2[%c0_310, %c5_311, %c0_312, %c0_313] : memref<1x11x5x64xf32, #tpu.memory_space<vmem>>, vector<1x1x5x64xf32>
    %216 = vector.shape_cast %215 : vector<1x1x5x64xf32> to vector<5x64xf32>
    %c0_314 = arith.constant 0 : index
    %c64_315 = arith.constant 64 : index
    %217 = vector.load %arg15[%c0_314, %c64_315] : memref<5x576xf32, #tpu.memory_space<vmem>>, vector<5x64xf32>
    tpu.vector_store %arg15[%c0_314, %c64_315], %216 {strides = array<i32>} : memref<5x576xf32, #tpu.memory_space<vmem>>, vector<5x64xf32>,
    %c0_316 = arith.constant 0 : index
    %c6 = arith.constant 6 : index
    %c0_317 = arith.constant 0 : index
    %c0_318 = arith.constant 0 : index
    %218 = vector.load %arg1[%c0_316, %c6, %c0_317, %c0_318] : memref<1x11x6x64xf32, #tpu.memory_space<vmem>>, vector<1x1x5x64xf32>
    %219 = vector.shape_cast %218 : vector<1x1x5x64xf32> to vector<5x64xf32>
    %c0_319 = arith.constant 0 : index
    %c128_320 = arith.constant 128 : index
    %220 = vector.load %arg15[%c0_319, %c128_320] : memref<5x576xf32, #tpu.memory_space<vmem>>, vector<5x64xf32>
    tpu.vector_store %arg15[%c0_319, %c128_320], %219 {strides = array<i32>} : memref<5x576xf32, #tpu.memory_space<vmem>>, vector<5x64xf32>,
    %c0_321 = arith.constant 0 : index
    %c6_322 = arith.constant 6 : index
    %c0_323 = arith.constant 0 : index
    %c0_324 = arith.constant 0 : index
    %221 = vector.load %arg2[%c0_321, %c6_322, %c0_323, %c0_324] : memref<1x11x5x64xf32, #tpu.memory_space<vmem>>, vector<1x1x5x64xf32>
    %222 = vector.shape_cast %221 : vector<1x1x5x64xf32> to vector<5x64xf32>
    %c0_325 = arith.constant 0 : index
    %c192_326 = arith.constant 192 : index
    %223 = vector.load %arg15[%c0_325, %c192_326] : memref<5x576xf32, #tpu.memory_space<vmem>>, vector<5x64xf32>
    tpu.vector_store %arg15[%c0_325, %c192_326], %222 {strides = array<i32>} : memref<5x576xf32, #tpu.memory_space<vmem>>, vector<5x64xf32>,
    %c0_327 = arith.constant 0 : index
    %c0_328 = arith.constant 0 : index
    %224 = vector.load %arg15[%c0_327, %c0_328] : memref<5x576xf32, #tpu.memory_space<vmem>>, vector<5x256xf32>
    %cst_329 = arith.constant dense<0.000000e+00> : vector<5x32xf32>
    %225 = tpu.matmul %224, %0, %cst_329 {dimension_numbers = #tpu.dot_dimension_numbers<[1], [0], [0], [1], [0, 0, 1, 1], [], []>} : vector<5x256xf32>, vector<256x32xf32>, vector<5x32xf32> -> vector<5x32xf32>
    %226 = vector.broadcast %1 : vector<1x32xf32> to vector<5x32xf32>
    %227 = arith.addf %225, %226 : vector<5x32xf32>
    %cst_330 = arith.constant 0.000000e+00 : f32
    %228 = vector.broadcast %cst_330 : f32 to vector<5x32xf32>
    %229 = arith.maximumf %227, %228 : vector<5x32xf32>
    %c5_331 = arith.constant 5 : index
    %c0_332 = arith.constant 0 : index
    %c0_333 = arith.constant 0 : index
    %230 = vector.load %arg12[%c5_331, %c0_332, %c0_333] : memref<10x5x32xf32, #tpu.memory_space<vmem>>, vector<1x5x32xf32>
    %231 = vector.shape_cast %230 : vector<1x5x32xf32> to vector<5x32xf32>
    %232 = vector.shape_cast %229 : vector<5x32xf32> to vector<1x5x32xf32>
    tpu.vector_store %arg12[%c5_331, %c0_332, %c0_333], %232 {strides = array<i32>} : memref<10x5x32xf32, #tpu.memory_space<vmem>>, vector<1x5x32xf32>,
    %c0_334 = arith.constant 0 : index
    %c5_335 = arith.constant 5 : index
    %c0_336 = arith.constant 0 : index
    %c0_337 = arith.constant 0 : index
    %233 = vector.load %arg2[%c0_334, %c5_335, %c0_336, %c0_337] : memref<1x11x5x64xf32, #tpu.memory_space<vmem>>, vector<1x1x5x64xf32>
    %234 = vector.shape_cast %233 : vector<1x1x5x64xf32> to vector<5x64xf32>
    %c0_338 = arith.constant 0 : index
    %c0_339 = arith.constant 0 : index
    %235 = vector.load %arg15[%c0_338, %c0_339] : memref<5x576xf32, #tpu.memory_space<vmem>>, vector<5x64xf32>
    tpu.vector_store %arg15[%c0_338, %c0_339], %234 {strides = array<i32>} : memref<5x576xf32, #tpu.memory_space<vmem>>, vector<5x64xf32>,
    %c0_340 = arith.constant 0 : index
    %c5_341 = arith.constant 5 : index
    %c1_342 = arith.constant 1 : index
    %c0_343 = arith.constant 0 : index
    %236 = vector.load %arg1[%c0_340, %c5_341, %c1_342, %c0_343] : memref<1x11x6x64xf32, #tpu.memory_space<vmem>>, vector<1x1x5x64xf32>
    %237 = vector.shape_cast %236 : vector<1x1x5x64xf32> to vector<5x64xf32>
    %c0_344 = arith.constant 0 : index
    %c64_345 = arith.constant 64 : index
    %238 = vector.load %arg15[%c0_344, %c64_345] : memref<5x576xf32, #tpu.memory_space<vmem>>, vector<5x64xf32>
    tpu.vector_store %arg15[%c0_344, %c64_345], %237 {strides = array<i32>} : memref<5x576xf32, #tpu.memory_space<vmem>>, vector<5x64xf32>,
    %c0_346 = arith.constant 0 : index
    %c6_347 = arith.constant 6 : index
    %c0_348 = arith.constant 0 : index
    %c0_349 = arith.constant 0 : index
    %239 = vector.load %arg2[%c0_346, %c6_347, %c0_348, %c0_349] : memref<1x11x5x64xf32, #tpu.memory_space<vmem>>, vector<1x1x5x64xf32>
    %240 = vector.shape_cast %239 : vector<1x1x5x64xf32> to vector<5x64xf32>
    %c0_350 = arith.constant 0 : index
    %c128_351 = arith.constant 128 : index
    %241 = vector.load %arg15[%c0_350, %c128_351] : memref<5x576xf32, #tpu.memory_space<vmem>>, vector<5x64xf32>
    tpu.vector_store %arg15[%c0_350, %c128_351], %240 {strides = array<i32>} : memref<5x576xf32, #tpu.memory_space<vmem>>, vector<5x64xf32>,
    %c0_352 = arith.constant 0 : index
    %c6_353 = arith.constant 6 : index
    %c1_354 = arith.constant 1 : index
    %c0_355 = arith.constant 0 : index
    %242 = vector.load %arg1[%c0_352, %c6_353, %c1_354, %c0_355] : memref<1x11x6x64xf32, #tpu.memory_space<vmem>>, vector<1x1x5x64xf32>
    %243 = vector.shape_cast %242 : vector<1x1x5x64xf32> to vector<5x64xf32>
    %c0_356 = arith.constant 0 : index
    %c192_357 = arith.constant 192 : index
    %244 = vector.load %arg15[%c0_356, %c192_357] : memref<5x576xf32, #tpu.memory_space<vmem>>, vector<5x64xf32>
    tpu.vector_store %arg15[%c0_356, %c192_357], %243 {strides = array<i32>} : memref<5x576xf32, #tpu.memory_space<vmem>>, vector<5x64xf32>,
    %c0_358 = arith.constant 0 : index
    %c0_359 = arith.constant 0 : index
    %245 = vector.load %arg15[%c0_358, %c0_359] : memref<5x576xf32, #tpu.memory_space<vmem>>, vector<5x256xf32>
    %cst_360 = arith.constant dense<0.000000e+00> : vector<5x32xf32>
    %246 = tpu.matmul %245, %0, %cst_360 {dimension_numbers = #tpu.dot_dimension_numbers<[1], [0], [0], [1], [0, 0, 1, 1], [], []>} : vector<5x256xf32>, vector<256x32xf32>, vector<5x32xf32> -> vector<5x32xf32>
    %247 = vector.broadcast %1 : vector<1x32xf32> to vector<5x32xf32>
    %248 = arith.addf %246, %247 : vector<5x32xf32>
    %cst_361 = arith.constant 0.000000e+00 : f32
    %249 = vector.broadcast %cst_361 : f32 to vector<5x32xf32>
    %250 = arith.maximumf %248, %249 : vector<5x32xf32>
    %c5_362 = arith.constant 5 : index
    %c0_363 = arith.constant 0 : index
    %c0_364 = arith.constant 0 : index
    %251 = vector.load %arg13[%c5_362, %c0_363, %c0_364] : memref<10x5x32xf32, #tpu.memory_space<vmem>>, vector<1x5x32xf32>
    %252 = vector.shape_cast %251 : vector<1x5x32xf32> to vector<5x32xf32>
    %253 = vector.shape_cast %250 : vector<5x32xf32> to vector<1x5x32xf32>
    tpu.vector_store %arg13[%c5_362, %c0_363, %c0_364], %253 {strides = array<i32>} : memref<10x5x32xf32, #tpu.memory_space<vmem>>, vector<1x5x32xf32>,
    %c0_365 = arith.constant 0 : index
    %c6_366 = arith.constant 6 : index
    %c0_367 = arith.constant 0 : index
    %c0_368 = arith.constant 0 : index
    %254 = vector.load %arg1[%c0_365, %c6_366, %c0_367, %c0_368] : memref<1x11x6x64xf32, #tpu.memory_space<vmem>>, vector<1x1x5x64xf32>
    %255 = vector.shape_cast %254 : vector<1x1x5x64xf32> to vector<5x64xf32>
    %c0_369 = arith.constant 0 : index
    %c0_370 = arith.constant 0 : index
    %256 = vector.load %arg15[%c0_369, %c0_370] : memref<5x576xf32, #tpu.memory_space<vmem>>, vector<5x64xf32>
    tpu.vector_store %arg15[%c0_369, %c0_370], %255 {strides = array<i32>} : memref<5x576xf32, #tpu.memory_space<vmem>>, vector<5x64xf32>,
    %c0_371 = arith.constant 0 : index
    %c6_372 = arith.constant 6 : index
    %c0_373 = arith.constant 0 : index
    %c0_374 = arith.constant 0 : index
    %257 = vector.load %arg2[%c0_371, %c6_372, %c0_373, %c0_374] : memref<1x11x5x64xf32, #tpu.memory_space<vmem>>, vector<1x1x5x64xf32>
    %258 = vector.shape_cast %257 : vector<1x1x5x64xf32> to vector<5x64xf32>
    %c0_375 = arith.constant 0 : index
    %c64_376 = arith.constant 64 : index
    %259 = vector.load %arg15[%c0_375, %c64_376] : memref<5x576xf32, #tpu.memory_space<vmem>>, vector<5x64xf32>
    tpu.vector_store %arg15[%c0_375, %c64_376], %258 {strides = array<i32>} : memref<5x576xf32, #tpu.memory_space<vmem>>, vector<5x64xf32>,
    %c0_377 = arith.constant 0 : index
    %c7 = arith.constant 7 : index
    %c0_378 = arith.constant 0 : index
    %c0_379 = arith.constant 0 : index
    %260 = vector.load %arg1[%c0_377, %c7, %c0_378, %c0_379] : memref<1x11x6x64xf32, #tpu.memory_space<vmem>>, vector<1x1x5x64xf32>
    %261 = vector.shape_cast %260 : vector<1x1x5x64xf32> to vector<5x64xf32>
    %c0_380 = arith.constant 0 : index
    %c128_381 = arith.constant 128 : index
    %262 = vector.load %arg15[%c0_380, %c128_381] : memref<5x576xf32, #tpu.memory_space<vmem>>, vector<5x64xf32>
    tpu.vector_store %arg15[%c0_380, %c128_381], %261 {strides = array<i32>} : memref<5x576xf32, #tpu.memory_space<vmem>>, vector<5x64xf32>,
    %c0_382 = arith.constant 0 : index
    %c7_383 = arith.constant 7 : index
    %c0_384 = arith.constant 0 : index
    %c0_385 = arith.constant 0 : index
    %263 = vector.load %arg2[%c0_382, %c7_383, %c0_384, %c0_385] : memref<1x11x5x64xf32, #tpu.memory_space<vmem>>, vector<1x1x5x64xf32>
    %264 = vector.shape_cast %263 : vector<1x1x5x64xf32> to vector<5x64xf32>
    %c0_386 = arith.constant 0 : index
    %c192_387 = arith.constant 192 : index
    %265 = vector.load %arg15[%c0_386, %c192_387] : memref<5x576xf32, #tpu.memory_space<vmem>>, vector<5x64xf32>
    tpu.vector_store %arg15[%c0_386, %c192_387], %264 {strides = array<i32>} : memref<5x576xf32, #tpu.memory_space<vmem>>, vector<5x64xf32>,
    %c0_388 = arith.constant 0 : index
    %c0_389 = arith.constant 0 : index
    %266 = vector.load %arg15[%c0_388, %c0_389] : memref<5x576xf32, #tpu.memory_space<vmem>>, vector<5x256xf32>
    %cst_390 = arith.constant dense<0.000000e+00> : vector<5x32xf32>
    %267 = tpu.matmul %266, %0, %cst_390 {dimension_numbers = #tpu.dot_dimension_numbers<[1], [0], [0], [1], [0, 0, 1, 1], [], []>} : vector<5x256xf32>, vector<256x32xf32>, vector<5x32xf32> -> vector<5x32xf32>
    %268 = vector.broadcast %1 : vector<1x32xf32> to vector<5x32xf32>
    %269 = arith.addf %267, %268 : vector<5x32xf32>
    %cst_391 = arith.constant 0.000000e+00 : f32
    %270 = vector.broadcast %cst_391 : f32 to vector<5x32xf32>
    %271 = arith.maximumf %269, %270 : vector<5x32xf32>
    %c6_392 = arith.constant 6 : index
    %c0_393 = arith.constant 0 : index
    %c0_394 = arith.constant 0 : index
    %272 = vector.load %arg12[%c6_392, %c0_393, %c0_394] : memref<10x5x32xf32, #tpu.memory_space<vmem>>, vector<1x5x32xf32>
    %273 = vector.shape_cast %272 : vector<1x5x32xf32> to vector<5x32xf32>
    %274 = vector.shape_cast %271 : vector<5x32xf32> to vector<1x5x32xf32>
    tpu.vector_store %arg12[%c6_392, %c0_393, %c0_394], %274 {strides = array<i32>} : memref<10x5x32xf32, #tpu.memory_space<vmem>>, vector<1x5x32xf32>,
    %c0_395 = arith.constant 0 : index
    %c6_396 = arith.constant 6 : index
    %c0_397 = arith.constant 0 : index
    %c0_398 = arith.constant 0 : index
    %275 = vector.load %arg2[%c0_395, %c6_396, %c0_397, %c0_398] : memref<1x11x5x64xf32, #tpu.memory_space<vmem>>, vector<1x1x5x64xf32>
    %276 = vector.shape_cast %275 : vector<1x1x5x64xf32> to vector<5x64xf32>
    %c0_399 = arith.constant 0 : index
    %c0_400 = arith.constant 0 : index
    %277 = vector.load %arg15[%c0_399, %c0_400] : memref<5x576xf32, #tpu.memory_space<vmem>>, vector<5x64xf32>
    tpu.vector_store %arg15[%c0_399, %c0_400], %276 {strides = array<i32>} : memref<5x576xf32, #tpu.memory_space<vmem>>, vector<5x64xf32>,
    %c0_401 = arith.constant 0 : index
    %c6_402 = arith.constant 6 : index
    %c1_403 = arith.constant 1 : index
    %c0_404 = arith.constant 0 : index
    %278 = vector.load %arg1[%c0_401, %c6_402, %c1_403, %c0_404] : memref<1x11x6x64xf32, #tpu.memory_space<vmem>>, vector<1x1x5x64xf32>
    %279 = vector.shape_cast %278 : vector<1x1x5x64xf32> to vector<5x64xf32>
    %c0_405 = arith.constant 0 : index
    %c64_406 = arith.constant 64 : index
    %280 = vector.load %arg15[%c0_405, %c64_406] : memref<5x576xf32, #tpu.memory_space<vmem>>, vector<5x64xf32>
    tpu.vector_store %arg15[%c0_405, %c64_406], %279 {strides = array<i32>} : memref<5x576xf32, #tpu.memory_space<vmem>>, vector<5x64xf32>,
    %c0_407 = arith.constant 0 : index
    %c7_408 = arith.constant 7 : index
    %c0_409 = arith.constant 0 : index
    %c0_410 = arith.constant 0 : index
    %281 = vector.load %arg2[%c0_407, %c7_408, %c0_409, %c0_410] : memref<1x11x5x64xf32, #tpu.memory_space<vmem>>, vector<1x1x5x64xf32>
    %282 = vector.shape_cast %281 : vector<1x1x5x64xf32> to vector<5x64xf32>
    %c0_411 = arith.constant 0 : index
    %c128_412 = arith.constant 128 : index
    %283 = vector.load %arg15[%c0_411, %c128_412] : memref<5x576xf32, #tpu.memory_space<vmem>>, vector<5x64xf32>
    tpu.vector_store %arg15[%c0_411, %c128_412], %282 {strides = array<i32>} : memref<5x576xf32, #tpu.memory_space<vmem>>, vector<5x64xf32>,
    %c0_413 = arith.constant 0 : index
    %c7_414 = arith.constant 7 : index
    %c1_415 = arith.constant 1 : index
    %c0_416 = arith.constant 0 : index
    %284 = vector.load %arg1[%c0_413, %c7_414, %c1_415, %c0_416] : memref<1x11x6x64xf32, #tpu.memory_space<vmem>>, vector<1x1x5x64xf32>
    %285 = vector.shape_cast %284 : vector<1x1x5x64xf32> to vector<5x64xf32>
    %c0_417 = arith.constant 0 : index
    %c192_418 = arith.constant 192 : index
    %286 = vector.load %arg15[%c0_417, %c192_418] : memref<5x576xf32, #tpu.memory_space<vmem>>, vector<5x64xf32>
    tpu.vector_store %arg15[%c0_417, %c192_418], %285 {strides = array<i32>} : memref<5x576xf32, #tpu.memory_space<vmem>>, vector<5x64xf32>,
    %c0_419 = arith.constant 0 : index
    %c0_420 = arith.constant 0 : index
    %287 = vector.load %arg15[%c0_419, %c0_420] : memref<5x576xf32, #tpu.memory_space<vmem>>, vector<5x256xf32>
    %cst_421 = arith.constant dense<0.000000e+00> : vector<5x32xf32>
    %288 = tpu.matmul %287, %0, %cst_421 {dimension_numbers = #tpu.dot_dimension_numbers<[1], [0], [0], [1], [0, 0, 1, 1], [], []>} : vector<5x256xf32>, vector<256x32xf32>, vector<5x32xf32> -> vector<5x32xf32>
    %289 = vector.broadcast %1 : vector<1x32xf32> to vector<5x32xf32>
    %290 = arith.addf %288, %289 : vector<5x32xf32>
    %cst_422 = arith.constant 0.000000e+00 : f32
    %291 = vector.broadcast %cst_422 : f32 to vector<5x32xf32>
    %292 = arith.maximumf %290, %291 : vector<5x32xf32>
    %c6_423 = arith.constant 6 : index
    %c0_424 = arith.constant 0 : index
    %c0_425 = arith.constant 0 : index
    %293 = vector.load %arg13[%c6_423, %c0_424, %c0_425] : memref<10x5x32xf32, #tpu.memory_space<vmem>>, vector<1x5x32xf32>
    %294 = vector.shape_cast %293 : vector<1x5x32xf32> to vector<5x32xf32>
    %295 = vector.shape_cast %292 : vector<5x32xf32> to vector<1x5x32xf32>
    tpu.vector_store %arg13[%c6_423, %c0_424, %c0_425], %295 {strides = array<i32>} : memref<10x5x32xf32, #tpu.memory_space<vmem>>, vector<1x5x32xf32>,
    %c0_426 = arith.constant 0 : index
    %c7_427 = arith.constant 7 : index
    %c0_428 = arith.constant 0 : index
    %c0_429 = arith.constant 0 : index
    %296 = vector.load %arg1[%c0_426, %c7_427, %c0_428, %c0_429] : memref<1x11x6x64xf32, #tpu.memory_space<vmem>>, vector<1x1x5x64xf32>
    %297 = vector.shape_cast %296 : vector<1x1x5x64xf32> to vector<5x64xf32>
    %c0_430 = arith.constant 0 : index
    %c0_431 = arith.constant 0 : index
    %298 = vector.load %arg15[%c0_430, %c0_431] : memref<5x576xf32, #tpu.memory_space<vmem>>, vector<5x64xf32>
    tpu.vector_store %arg15[%c0_430, %c0_431], %297 {strides = array<i32>} : memref<5x576xf32, #tpu.memory_space<vmem>>, vector<5x64xf32>,
    %c0_432 = arith.constant 0 : index
    %c7_433 = arith.constant 7 : index
    %c0_434 = arith.constant 0 : index
    %c0_435 = arith.constant 0 : index
    %299 = vector.load %arg2[%c0_432, %c7_433, %c0_434, %c0_435] : memref<1x11x5x64xf32, #tpu.memory_space<vmem>>, vector<1x1x5x64xf32>
    %300 = vector.shape_cast %299 : vector<1x1x5x64xf32> to vector<5x64xf32>
    %c0_436 = arith.constant 0 : index
    %c64_437 = arith.constant 64 : index
    %301 = vector.load %arg15[%c0_436, %c64_437] : memref<5x576xf32, #tpu.memory_space<vmem>>, vector<5x64xf32>
    tpu.vector_store %arg15[%c0_436, %c64_437], %300 {strides = array<i32>} : memref<5x576xf32, #tpu.memory_space<vmem>>, vector<5x64xf32>,
    %c0_438 = arith.constant 0 : index
    %c8 = arith.constant 8 : index
    %c0_439 = arith.constant 0 : index
    %c0_440 = arith.constant 0 : index
    %302 = vector.load %arg1[%c0_438, %c8, %c0_439, %c0_440] : memref<1x11x6x64xf32, #tpu.memory_space<vmem>>, vector<1x1x5x64xf32>
    %303 = vector.shape_cast %302 : vector<1x1x5x64xf32> to vector<5x64xf32>
    %c0_441 = arith.constant 0 : index
    %c128_442 = arith.constant 128 : index
    %304 = vector.load %arg15[%c0_441, %c128_442] : memref<5x576xf32, #tpu.memory_space<vmem>>, vector<5x64xf32>
    tpu.vector_store %arg15[%c0_441, %c128_442], %303 {strides = array<i32>} : memref<5x576xf32, #tpu.memory_space<vmem>>, vector<5x64xf32>,
    %c0_443 = arith.constant 0 : index
    %c8_444 = arith.constant 8 : index
    %c0_445 = arith.constant 0 : index
    %c0_446 = arith.constant 0 : index
    %305 = vector.load %arg2[%c0_443, %c8_444, %c0_445, %c0_446] : memref<1x11x5x64xf32, #tpu.memory_space<vmem>>, vector<1x1x5x64xf32>
    %306 = vector.shape_cast %305 : vector<1x1x5x64xf32> to vector<5x64xf32>
    %c0_447 = arith.constant 0 : index
    %c192_448 = arith.constant 192 : index
    %307 = vector.load %arg15[%c0_447, %c192_448] : memref<5x576xf32, #tpu.memory_space<vmem>>, vector<5x64xf32>
    tpu.vector_store %arg15[%c0_447, %c192_448], %306 {strides = array<i32>} : memref<5x576xf32, #tpu.memory_space<vmem>>, vector<5x64xf32>,
    %c0_449 = arith.constant 0 : index
    %c0_450 = arith.constant 0 : index
    %308 = vector.load %arg15[%c0_449, %c0_450] : memref<5x576xf32, #tpu.memory_space<vmem>>, vector<5x256xf32>
    %cst_451 = arith.constant dense<0.000000e+00> : vector<5x32xf32>
    %309 = tpu.matmul %308, %0, %cst_451 {dimension_numbers = #tpu.dot_dimension_numbers<[1], [0], [0], [1], [0, 0, 1, 1], [], []>} : vector<5x256xf32>, vector<256x32xf32>, vector<5x32xf32> -> vector<5x32xf32>
    %310 = vector.broadcast %1 : vector<1x32xf32> to vector<5x32xf32>
    %311 = arith.addf %309, %310 : vector<5x32xf32>
    %cst_452 = arith.constant 0.000000e+00 : f32
    %312 = vector.broadcast %cst_452 : f32 to vector<5x32xf32>
    %313 = arith.maximumf %311, %312 : vector<5x32xf32>
    %c7_453 = arith.constant 7 : index
    %c0_454 = arith.constant 0 : index
    %c0_455 = arith.constant 0 : index
    %314 = vector.load %arg12[%c7_453, %c0_454, %c0_455] : memref<10x5x32xf32, #tpu.memory_space<vmem>>, vector<1x5x32xf32>
    %315 = vector.shape_cast %314 : vector<1x5x32xf32> to vector<5x32xf32>
    %316 = vector.shape_cast %313 : vector<5x32xf32> to vector<1x5x32xf32>
    tpu.vector_store %arg12[%c7_453, %c0_454, %c0_455], %316 {strides = array<i32>} : memref<10x5x32xf32, #tpu.memory_space<vmem>>, vector<1x5x32xf32>,
    %c0_456 = arith.constant 0 : index
    %c7_457 = arith.constant 7 : index
    %c0_458 = arith.constant 0 : index
    %c0_459 = arith.constant 0 : index
    %317 = vector.load %arg2[%c0_456, %c7_457, %c0_458, %c0_459] : memref<1x11x5x64xf32, #tpu.memory_space<vmem>>, vector<1x1x5x64xf32>
    %318 = vector.shape_cast %317 : vector<1x1x5x64xf32> to vector<5x64xf32>
    %c0_460 = arith.constant 0 : index
    %c0_461 = arith.constant 0 : index
    %319 = vector.load %arg15[%c0_460, %c0_461] : memref<5x576xf32, #tpu.memory_space<vmem>>, vector<5x64xf32>
    tpu.vector_store %arg15[%c0_460, %c0_461], %318 {strides = array<i32>} : memref<5x576xf32, #tpu.memory_space<vmem>>, vector<5x64xf32>,
    %c0_462 = arith.constant 0 : index
    %c7_463 = arith.constant 7 : index
    %c1_464 = arith.constant 1 : index
    %c0_465 = arith.constant 0 : index
    %320 = vector.load %arg1[%c0_462, %c7_463, %c1_464, %c0_465] : memref<1x11x6x64xf32, #tpu.memory_space<vmem>>, vector<1x1x5x64xf32>
    %321 = vector.shape_cast %320 : vector<1x1x5x64xf32> to vector<5x64xf32>
    %c0_466 = arith.constant 0 : index
    %c64_467 = arith.constant 64 : index
    %322 = vector.load %arg15[%c0_466, %c64_467] : memref<5x576xf32, #tpu.memory_space<vmem>>, vector<5x64xf32>
    tpu.vector_store %arg15[%c0_466, %c64_467], %321 {strides = array<i32>} : memref<5x576xf32, #tpu.memory_space<vmem>>, vector<5x64xf32>,
    %c0_468 = arith.constant 0 : index
    %c8_469 = arith.constant 8 : index
    %c0_470 = arith.constant 0 : index
    %c0_471 = arith.constant 0 : index
    %323 = vector.load %arg2[%c0_468, %c8_469, %c0_470, %c0_471] : memref<1x11x5x64xf32, #tpu.memory_space<vmem>>, vector<1x1x5x64xf32>
    %324 = vector.shape_cast %323 : vector<1x1x5x64xf32> to vector<5x64xf32>
    %c0_472 = arith.constant 0 : index
    %c128_473 = arith.constant 128 : index
    %325 = vector.load %arg15[%c0_472, %c128_473] : memref<5x576xf32, #tpu.memory_space<vmem>>, vector<5x64xf32>
    tpu.vector_store %arg15[%c0_472, %c128_473], %324 {strides = array<i32>} : memref<5x576xf32, #tpu.memory_space<vmem>>, vector<5x64xf32>,
    %c0_474 = arith.constant 0 : index
    %c8_475 = arith.constant 8 : index
    %c1_476 = arith.constant 1 : index
    %c0_477 = arith.constant 0 : index
    %326 = vector.load %arg1[%c0_474, %c8_475, %c1_476, %c0_477] : memref<1x11x6x64xf32, #tpu.memory_space<vmem>>, vector<1x1x5x64xf32>
    %327 = vector.shape_cast %326 : vector<1x1x5x64xf32> to vector<5x64xf32>
    %c0_478 = arith.constant 0 : index
    %c192_479 = arith.constant 192 : index
    %328 = vector.load %arg15[%c0_478, %c192_479] : memref<5x576xf32, #tpu.memory_space<vmem>>, vector<5x64xf32>
    tpu.vector_store %arg15[%c0_478, %c192_479], %327 {strides = array<i32>} : memref<5x576xf32, #tpu.memory_space<vmem>>, vector<5x64xf32>,
    %c0_480 = arith.constant 0 : index
    %c0_481 = arith.constant 0 : index
    %329 = vector.load %arg15[%c0_480, %c0_481] : memref<5x576xf32, #tpu.memory_space<vmem>>, vector<5x256xf32>
    %cst_482 = arith.constant dense<0.000000e+00> : vector<5x32xf32>
    %330 = tpu.matmul %329, %0, %cst_482 {dimension_numbers = #tpu.dot_dimension_numbers<[1], [0], [0], [1], [0, 0, 1, 1], [], []>} : vector<5x256xf32>, vector<256x32xf32>, vector<5x32xf32> -> vector<5x32xf32>
    %331 = vector.broadcast %1 : vector<1x32xf32> to vector<5x32xf32>
    %332 = arith.addf %330, %331 : vector<5x32xf32>
    %cst_483 = arith.constant 0.000000e+00 : f32
    %333 = vector.broadcast %cst_483 : f32 to vector<5x32xf32>
    %334 = arith.maximumf %332, %333 : vector<5x32xf32>
    %c7_484 = arith.constant 7 : index
    %c0_485 = arith.constant 0 : index
    %c0_486 = arith.constant 0 : index
    %335 = vector.load %arg13[%c7_484, %c0_485, %c0_486] : memref<10x5x32xf32, #tpu.memory_space<vmem>>, vector<1x5x32xf32>
    %336 = vector.shape_cast %335 : vector<1x5x32xf32> to vector<5x32xf32>
    %337 = vector.shape_cast %334 : vector<5x32xf32> to vector<1x5x32xf32>
    tpu.vector_store %arg13[%c7_484, %c0_485, %c0_486], %337 {strides = array<i32>} : memref<10x5x32xf32, #tpu.memory_space<vmem>>, vector<1x5x32xf32>,
    %c0_487 = arith.constant 0 : index
    %c8_488 = arith.constant 8 : index
    %c0_489 = arith.constant 0 : index
    %c0_490 = arith.constant 0 : index
    %338 = vector.load %arg1[%c0_487, %c8_488, %c0_489, %c0_490] : memref<1x11x6x64xf32, #tpu.memory_space<vmem>>, vector<1x1x5x64xf32>
    %339 = vector.shape_cast %338 : vector<1x1x5x64xf32> to vector<5x64xf32>
    %c0_491 = arith.constant 0 : index
    %c0_492 = arith.constant 0 : index
    %340 = vector.load %arg15[%c0_491, %c0_492] : memref<5x576xf32, #tpu.memory_space<vmem>>, vector<5x64xf32>
    tpu.vector_store %arg15[%c0_491, %c0_492], %339 {strides = array<i32>} : memref<5x576xf32, #tpu.memory_space<vmem>>, vector<5x64xf32>,
    %c0_493 = arith.constant 0 : index
    %c8_494 = arith.constant 8 : index
    %c0_495 = arith.constant 0 : index
    %c0_496 = arith.constant 0 : index
    %341 = vector.load %arg2[%c0_493, %c8_494, %c0_495, %c0_496] : memref<1x11x5x64xf32, #tpu.memory_space<vmem>>, vector<1x1x5x64xf32>
    %342 = vector.shape_cast %341 : vector<1x1x5x64xf32> to vector<5x64xf32>
    %c0_497 = arith.constant 0 : index
    %c64_498 = arith.constant 64 : index
    %343 = vector.load %arg15[%c0_497, %c64_498] : memref<5x576xf32, #tpu.memory_space<vmem>>, vector<5x64xf32>
    tpu.vector_store %arg15[%c0_497, %c64_498], %342 {strides = array<i32>} : memref<5x576xf32, #tpu.memory_space<vmem>>, vector<5x64xf32>,
    %c0_499 = arith.constant 0 : index
    %c9 = arith.constant 9 : index
    %c0_500 = arith.constant 0 : index
    %c0_501 = arith.constant 0 : index
    %344 = vector.load %arg1[%c0_499, %c9, %c0_500, %c0_501] : memref<1x11x6x64xf32, #tpu.memory_space<vmem>>, vector<1x1x5x64xf32>
    %345 = vector.shape_cast %344 : vector<1x1x5x64xf32> to vector<5x64xf32>
    %c0_502 = arith.constant 0 : index
    %c128_503 = arith.constant 128 : index
    %346 = vector.load %arg15[%c0_502, %c128_503] : memref<5x576xf32, #tpu.memory_space<vmem>>, vector<5x64xf32>
    tpu.vector_store %arg15[%c0_502, %c128_503], %345 {strides = array<i32>} : memref<5x576xf32, #tpu.memory_space<vmem>>, vector<5x64xf32>,
    %c0_504 = arith.constant 0 : index
    %c9_505 = arith.constant 9 : index
    %c0_506 = arith.constant 0 : index
    %c0_507 = arith.constant 0 : index
    %347 = vector.load %arg2[%c0_504, %c9_505, %c0_506, %c0_507] : memref<1x11x5x64xf32, #tpu.memory_space<vmem>>, vector<1x1x5x64xf32>
    %348 = vector.shape_cast %347 : vector<1x1x5x64xf32> to vector<5x64xf32>
    %c0_508 = arith.constant 0 : index
    %c192_509 = arith.constant 192 : index
    %349 = vector.load %arg15[%c0_508, %c192_509] : memref<5x576xf32, #tpu.memory_space<vmem>>, vector<5x64xf32>
    tpu.vector_store %arg15[%c0_508, %c192_509], %348 {strides = array<i32>} : memref<5x576xf32, #tpu.memory_space<vmem>>, vector<5x64xf32>,
    %c0_510 = arith.constant 0 : index
    %c0_511 = arith.constant 0 : index
    %350 = vector.load %arg15[%c0_510, %c0_511] : memref<5x576xf32, #tpu.memory_space<vmem>>, vector<5x256xf32>
    %cst_512 = arith.constant dense<0.000000e+00> : vector<5x32xf32>
    %351 = tpu.matmul %350, %0, %cst_512 {dimension_numbers = #tpu.dot_dimension_numbers<[1], [0], [0], [1], [0, 0, 1, 1], [], []>} : vector<5x256xf32>, vector<256x32xf32>, vector<5x32xf32> -> vector<5x32xf32>
    %352 = vector.broadcast %1 : vector<1x32xf32> to vector<5x32xf32>
    %353 = arith.addf %351, %352 : vector<5x32xf32>
    %cst_513 = arith.constant 0.000000e+00 : f32
    %354 = vector.broadcast %cst_513 : f32 to vector<5x32xf32>
    %355 = arith.maximumf %353, %354 : vector<5x32xf32>
    %c8_514 = arith.constant 8 : index
    %c0_515 = arith.constant 0 : index
    %c0_516 = arith.constant 0 : index
    %356 = vector.load %arg12[%c8_514, %c0_515, %c0_516] : memref<10x5x32xf32, #tpu.memory_space<vmem>>, vector<1x5x32xf32>
    %357 = vector.shape_cast %356 : vector<1x5x32xf32> to vector<5x32xf32>
    %358 = vector.shape_cast %355 : vector<5x32xf32> to vector<1x5x32xf32>
    tpu.vector_store %arg12[%c8_514, %c0_515, %c0_516], %358 {strides = array<i32>} : memref<10x5x32xf32, #tpu.memory_space<vmem>>, vector<1x5x32xf32>,
    %c0_517 = arith.constant 0 : index
    %c8_518 = arith.constant 8 : index
    %c0_519 = arith.constant 0 : index
    %c0_520 = arith.constant 0 : index
    %359 = vector.load %arg2[%c0_517, %c8_518, %c0_519, %c0_520] : memref<1x11x5x64xf32, #tpu.memory_space<vmem>>, vector<1x1x5x64xf32>
    %360 = vector.shape_cast %359 : vector<1x1x5x64xf32> to vector<5x64xf32>
    %c0_521 = arith.constant 0 : index
    %c0_522 = arith.constant 0 : index
    %361 = vector.load %arg15[%c0_521, %c0_522] : memref<5x576xf32, #tpu.memory_space<vmem>>, vector<5x64xf32>
    tpu.vector_store %arg15[%c0_521, %c0_522], %360 {strides = array<i32>} : memref<5x576xf32, #tpu.memory_space<vmem>>, vector<5x64xf32>,
    %c0_523 = arith.constant 0 : index
    %c8_524 = arith.constant 8 : index
    %c1_525 = arith.constant 1 : index
    %c0_526 = arith.constant 0 : index
    %362 = vector.load %arg1[%c0_523, %c8_524, %c1_525, %c0_526] : memref<1x11x6x64xf32, #tpu.memory_space<vmem>>, vector<1x1x5x64xf32>
    %363 = vector.shape_cast %362 : vector<1x1x5x64xf32> to vector<5x64xf32>
    %c0_527 = arith.constant 0 : index
    %c64_528 = arith.constant 64 : index
    %364 = vector.load %arg15[%c0_527, %c64_528] : memref<5x576xf32, #tpu.memory_space<vmem>>, vector<5x64xf32>
    tpu.vector_store %arg15[%c0_527, %c64_528], %363 {strides = array<i32>} : memref<5x576xf32, #tpu.memory_space<vmem>>, vector<5x64xf32>,
    %c0_529 = arith.constant 0 : index
    %c9_530 = arith.constant 9 : index
    %c0_531 = arith.constant 0 : index
    %c0_532 = arith.constant 0 : index
    %365 = vector.load %arg2[%c0_529, %c9_530, %c0_531, %c0_532] : memref<1x11x5x64xf32, #tpu.memory_space<vmem>>, vector<1x1x5x64xf32>
    %366 = vector.shape_cast %365 : vector<1x1x5x64xf32> to vector<5x64xf32>
    %c0_533 = arith.constant 0 : index
    %c128_534 = arith.constant 128 : index
    %367 = vector.load %arg15[%c0_533, %c128_534] : memref<5x576xf32, #tpu.memory_space<vmem>>, vector<5x64xf32>
    tpu.vector_store %arg15[%c0_533, %c128_534], %366 {strides = array<i32>} : memref<5x576xf32, #tpu.memory_space<vmem>>, vector<5x64xf32>,
    %c0_535 = arith.constant 0 : index
    %c9_536 = arith.constant 9 : index
    %c1_537 = arith.constant 1 : index
    %c0_538 = arith.constant 0 : index
    %368 = vector.load %arg1[%c0_535, %c9_536, %c1_537, %c0_538] : memref<1x11x6x64xf32, #tpu.memory_space<vmem>>, vector<1x1x5x64xf32>
    %369 = vector.shape_cast %368 : vector<1x1x5x64xf32> to vector<5x64xf32>
    %c0_539 = arith.constant 0 : index
    %c192_540 = arith.constant 192 : index
    %370 = vector.load %arg15[%c0_539, %c192_540] : memref<5x576xf32, #tpu.memory_space<vmem>>, vector<5x64xf32>
    tpu.vector_store %arg15[%c0_539, %c192_540], %369 {strides = array<i32>} : memref<5x576xf32, #tpu.memory_space<vmem>>, vector<5x64xf32>,
    %c0_541 = arith.constant 0 : index
    %c0_542 = arith.constant 0 : index
    %371 = vector.load %arg15[%c0_541, %c0_542] : memref<5x576xf32, #tpu.memory_space<vmem>>, vector<5x256xf32>
    %cst_543 = arith.constant dense<0.000000e+00> : vector<5x32xf32>
    %372 = tpu.matmul %371, %0, %cst_543 {dimension_numbers = #tpu.dot_dimension_numbers<[1], [0], [0], [1], [0, 0, 1, 1], [], []>} : vector<5x256xf32>, vector<256x32xf32>, vector<5x32xf32> -> vector<5x32xf32>
    %373 = vector.broadcast %1 : vector<1x32xf32> to vector<5x32xf32>
    %374 = arith.addf %372, %373 : vector<5x32xf32>
    %cst_544 = arith.constant 0.000000e+00 : f32
    %375 = vector.broadcast %cst_544 : f32 to vector<5x32xf32>
    %376 = arith.maximumf %374, %375 : vector<5x32xf32>
    %c8_545 = arith.constant 8 : index
    %c0_546 = arith.constant 0 : index
    %c0_547 = arith.constant 0 : index
    %377 = vector.load %arg13[%c8_545, %c0_546, %c0_547] : memref<10x5x32xf32, #tpu.memory_space<vmem>>, vector<1x5x32xf32>
    %378 = vector.shape_cast %377 : vector<1x5x32xf32> to vector<5x32xf32>
    %379 = vector.shape_cast %376 : vector<5x32xf32> to vector<1x5x32xf32>
    tpu.vector_store %arg13[%c8_545, %c0_546, %c0_547], %379 {strides = array<i32>} : memref<10x5x32xf32, #tpu.memory_space<vmem>>, vector<1x5x32xf32>,
    %c0_548 = arith.constant 0 : index
    %c9_549 = arith.constant 9 : index
    %c0_550 = arith.constant 0 : index
    %c0_551 = arith.constant 0 : index
    %380 = vector.load %arg1[%c0_548, %c9_549, %c0_550, %c0_551] : memref<1x11x6x64xf32, #tpu.memory_space<vmem>>, vector<1x1x5x64xf32>
    %381 = vector.shape_cast %380 : vector<1x1x5x64xf32> to vector<5x64xf32>
    %c0_552 = arith.constant 0 : index
    %c0_553 = arith.constant 0 : index
    %382 = vector.load %arg15[%c0_552, %c0_553] : memref<5x576xf32, #tpu.memory_space<vmem>>, vector<5x64xf32>
    tpu.vector_store %arg15[%c0_552, %c0_553], %381 {strides = array<i32>} : memref<5x576xf32, #tpu.memory_space<vmem>>, vector<5x64xf32>,
    %c0_554 = arith.constant 0 : index
    %c9_555 = arith.constant 9 : index
    %c0_556 = arith.constant 0 : index
    %c0_557 = arith.constant 0 : index
    %383 = vector.load %arg2[%c0_554, %c9_555, %c0_556, %c0_557] : memref<1x11x5x64xf32, #tpu.memory_space<vmem>>, vector<1x1x5x64xf32>
    %384 = vector.shape_cast %383 : vector<1x1x5x64xf32> to vector<5x64xf32>
    %c0_558 = arith.constant 0 : index
    %c64_559 = arith.constant 64 : index
    %385 = vector.load %arg15[%c0_558, %c64_559] : memref<5x576xf32, #tpu.memory_space<vmem>>, vector<5x64xf32>
    tpu.vector_store %arg15[%c0_558, %c64_559], %384 {strides = array<i32>} : memref<5x576xf32, #tpu.memory_space<vmem>>, vector<5x64xf32>,
    %c0_560 = arith.constant 0 : index
    %c10 = arith.constant 10 : index
    %c0_561 = arith.constant 0 : index
    %c0_562 = arith.constant 0 : index
    %386 = vector.load %arg1[%c0_560, %c10, %c0_561, %c0_562] : memref<1x11x6x64xf32, #tpu.memory_space<vmem>>, vector<1x1x5x64xf32>
    %387 = vector.shape_cast %386 : vector<1x1x5x64xf32> to vector<5x64xf32>
    %c0_563 = arith.constant 0 : index
    %c128_564 = arith.constant 128 : index
    %388 = vector.load %arg15[%c0_563, %c128_564] : memref<5x576xf32, #tpu.memory_space<vmem>>, vector<5x64xf32>
    tpu.vector_store %arg15[%c0_563, %c128_564], %387 {strides = array<i32>} : memref<5x576xf32, #tpu.memory_space<vmem>>, vector<5x64xf32>,
    %c0_565 = arith.constant 0 : index
    %c10_566 = arith.constant 10 : index
    %c0_567 = arith.constant 0 : index
    %c0_568 = arith.constant 0 : index
    %389 = vector.load %arg2[%c0_565, %c10_566, %c0_567, %c0_568] : memref<1x11x5x64xf32, #tpu.memory_space<vmem>>, vector<1x1x5x64xf32>
    %390 = vector.shape_cast %389 : vector<1x1x5x64xf32> to vector<5x64xf32>
    %c0_569 = arith.constant 0 : index
    %c192_570 = arith.constant 192 : index
    %391 = vector.load %arg15[%c0_569, %c192_570] : memref<5x576xf32, #tpu.memory_space<vmem>>, vector<5x64xf32>
    tpu.vector_store %arg15[%c0_569, %c192_570], %390 {strides = array<i32>} : memref<5x576xf32, #tpu.memory_space<vmem>>, vector<5x64xf32>,
    %c0_571 = arith.constant 0 : index
    %c0_572 = arith.constant 0 : index
    %392 = vector.load %arg15[%c0_571, %c0_572] : memref<5x576xf32, #tpu.memory_space<vmem>>, vector<5x256xf32>
    %cst_573 = arith.constant dense<0.000000e+00> : vector<5x32xf32>
    %393 = tpu.matmul %392, %0, %cst_573 {dimension_numbers = #tpu.dot_dimension_numbers<[1], [0], [0], [1], [0, 0, 1, 1], [], []>} : vector<5x256xf32>, vector<256x32xf32>, vector<5x32xf32> -> vector<5x32xf32>
    %394 = vector.broadcast %1 : vector<1x32xf32> to vector<5x32xf32>
    %395 = arith.addf %393, %394 : vector<5x32xf32>
    %cst_574 = arith.constant 0.000000e+00 : f32
    %396 = vector.broadcast %cst_574 : f32 to vector<5x32xf32>
    %397 = arith.maximumf %395, %396 : vector<5x32xf32>
    %c9_575 = arith.constant 9 : index
    %c0_576 = arith.constant 0 : index
    %c0_577 = arith.constant 0 : index
    %398 = vector.load %arg12[%c9_575, %c0_576, %c0_577] : memref<10x5x32xf32, #tpu.memory_space<vmem>>, vector<1x5x32xf32>
    %399 = vector.shape_cast %398 : vector<1x5x32xf32> to vector<5x32xf32>
    %400 = vector.shape_cast %397 : vector<5x32xf32> to vector<1x5x32xf32>
    tpu.vector_store %arg12[%c9_575, %c0_576, %c0_577], %400 {strides = array<i32>} : memref<10x5x32xf32, #tpu.memory_space<vmem>>, vector<1x5x32xf32>,
    %c0_578 = arith.constant 0 : index
    %c9_579 = arith.constant 9 : index
    %c0_580 = arith.constant 0 : index
    %c0_581 = arith.constant 0 : index
    %401 = vector.load %arg2[%c0_578, %c9_579, %c0_580, %c0_581] : memref<1x11x5x64xf32, #tpu.memory_space<vmem>>, vector<1x1x5x64xf32>
    %402 = vector.shape_cast %401 : vector<1x1x5x64xf32> to vector<5x64xf32>
    %c0_582 = arith.constant 0 : index
    %c0_583 = arith.constant 0 : index
    %403 = vector.load %arg15[%c0_582, %c0_583] : memref<5x576xf32, #tpu.memory_space<vmem>>, vector<5x64xf32>
    tpu.vector_store %arg15[%c0_582, %c0_583], %402 {strides = array<i32>} : memref<5x576xf32, #tpu.memory_space<vmem>>, vector<5x64xf32>,
    %c0_584 = arith.constant 0 : index
    %c9_585 = arith.constant 9 : index
    %c1_586 = arith.constant 1 : index
    %c0_587 = arith.constant 0 : index
    %404 = vector.load %arg1[%c0_584, %c9_585, %c1_586, %c0_587] : memref<1x11x6x64xf32, #tpu.memory_space<vmem>>, vector<1x1x5x64xf32>
    %405 = vector.shape_cast %404 : vector<1x1x5x64xf32> to vector<5x64xf32>
    %c0_588 = arith.constant 0 : index
    %c64_589 = arith.constant 64 : index
    %406 = vector.load %arg15[%c0_588, %c64_589] : memref<5x576xf32, #tpu.memory_space<vmem>>, vector<5x64xf32>
    tpu.vector_store %arg15[%c0_588, %c64_589], %405 {strides = array<i32>} : memref<5x576xf32, #tpu.memory_space<vmem>>, vector<5x64xf32>,
    %c0_590 = arith.constant 0 : index
    %c10_591 = arith.constant 10 : index
    %c0_592 = arith.constant 0 : index
    %c0_593 = arith.constant 0 : index
    %407 = vector.load %arg2[%c0_590, %c10_591, %c0_592, %c0_593] : memref<1x11x5x64xf32, #tpu.memory_space<vmem>>, vector<1x1x5x64xf32>
    %408 = vector.shape_cast %407 : vector<1x1x5x64xf32> to vector<5x64xf32>
    %c0_594 = arith.constant 0 : index
    %c128_595 = arith.constant 128 : index
    %409 = vector.load %arg15[%c0_594, %c128_595] : memref<5x576xf32, #tpu.memory_space<vmem>>, vector<5x64xf32>
    tpu.vector_store %arg15[%c0_594, %c128_595], %408 {strides = array<i32>} : memref<5x576xf32, #tpu.memory_space<vmem>>, vector<5x64xf32>,
    %c0_596 = arith.constant 0 : index
    %c10_597 = arith.constant 10 : index
    %c1_598 = arith.constant 1 : index
    %c0_599 = arith.constant 0 : index
    %410 = vector.load %arg1[%c0_596, %c10_597, %c1_598, %c0_599] : memref<1x11x6x64xf32, #tpu.memory_space<vmem>>, vector<1x1x5x64xf32>
    %411 = vector.shape_cast %410 : vector<1x1x5x64xf32> to vector<5x64xf32>
    %c0_600 = arith.constant 0 : index
    %c192_601 = arith.constant 192 : index
    %412 = vector.load %arg15[%c0_600, %c192_601] : memref<5x576xf32, #tpu.memory_space<vmem>>, vector<5x64xf32>
    tpu.vector_store %arg15[%c0_600, %c192_601], %411 {strides = array<i32>} : memref<5x576xf32, #tpu.memory_space<vmem>>, vector<5x64xf32>,
    %c0_602 = arith.constant 0 : index
    %c0_603 = arith.constant 0 : index
    %413 = vector.load %arg15[%c0_602, %c0_603] : memref<5x576xf32, #tpu.memory_space<vmem>>, vector<5x256xf32>
    %cst_604 = arith.constant dense<0.000000e+00> : vector<5x32xf32>
    %414 = tpu.matmul %413, %0, %cst_604 {dimension_numbers = #tpu.dot_dimension_numbers<[1], [0], [0], [1], [0, 0, 1, 1], [], []>} : vector<5x256xf32>, vector<256x32xf32>, vector<5x32xf32> -> vector<5x32xf32>
    %415 = vector.broadcast %1 : vector<1x32xf32> to vector<5x32xf32>
    %416 = arith.addf %414, %415 : vector<5x32xf32>
    %cst_605 = arith.constant 0.000000e+00 : f32
    %417 = vector.broadcast %cst_605 : f32 to vector<5x32xf32>
    %418 = arith.maximumf %416, %417 : vector<5x32xf32>
    %c9_606 = arith.constant 9 : index
    %c0_607 = arith.constant 0 : index
    %c0_608 = arith.constant 0 : index
    %419 = vector.load %arg13[%c9_606, %c0_607, %c0_608] : memref<10x5x32xf32, #tpu.memory_space<vmem>>, vector<1x5x32xf32>
    %420 = vector.shape_cast %419 : vector<1x5x32xf32> to vector<5x32xf32>
    %421 = vector.shape_cast %418 : vector<5x32xf32> to vector<1x5x32xf32>
    tpu.vector_store %arg13[%c9_606, %c0_607, %c0_608], %421 {strides = array<i32>} : memref<10x5x32xf32, #tpu.memory_space<vmem>>, vector<1x5x32xf32>,
    %c0_609 = arith.constant 0 : index
    %c0_610 = arith.constant 0 : index
    %422 = vector.load %arg5[%c0_609, %c0_610] : memref<512x64xf32, #tpu.memory_space<vmem>>, vector<512x64xf32>
    %c0_611 = arith.constant 0 : index
    %c0_612 = arith.constant 0 : index
    %423 = vector.load %arg6[%c0_611, %c0_612] : memref<1x64xf32, #tpu.memory_space<vmem>>, vector<1x64xf32>
    %c0_613 = arith.constant 0 : index
    %c0_614 = arith.constant 0 : index
    %c0_615 = arith.constant 0 : index
    %424 = vector.load %arg12[%c0_613, %c0_614, %c0_615] : memref<10x5x32xf32, #tpu.memory_space<vmem>>, vector<1x4x32xf32>
    %425 = vector.shape_cast %424 : vector<1x4x32xf32> to vector<4x32xf32>
    %c0_616 = arith.constant 0 : index
    %c0_617 = arith.constant 0 : index
    %426 = vector.load %arg15[%c0_616, %c0_617] : memref<5x576xf32, #tpu.memory_space<vmem>>, vector<4x32xf32>
    tpu.vector_store %arg15[%c0_616, %c0_617], %425 {strides = array<i32>} : memref<5x576xf32, #tpu.memory_space<vmem>>, vector<4x32xf32>,
    %c0_618 = arith.constant 0 : index
    %c0_619 = arith.constant 0 : index
    %c0_620 = arith.constant 0 : index
    %427 = vector.load %arg13[%c0_618, %c0_619, %c0_620] : memref<10x5x32xf32, #tpu.memory_space<vmem>>, vector<1x4x32xf32>
    %428 = vector.shape_cast %427 : vector<1x4x32xf32> to vector<4x32xf32>
    %c0_621 = arith.constant 0 : index
    %c32 = arith.constant 32 : index
    %429 = vector.load %arg15[%c0_621, %c32] : memref<5x576xf32, #tpu.memory_space<vmem>>, vector<4x32xf32>
    tpu.vector_store %arg15[%c0_621, %c32], %428 {strides = array<i32>} : memref<5x576xf32, #tpu.memory_space<vmem>>, vector<4x32xf32>,
    %c0_622 = arith.constant 0 : index
    %c1_623 = arith.constant 1 : index
    %c0_624 = arith.constant 0 : index
    %430 = vector.load %arg12[%c0_622, %c1_623, %c0_624] : memref<10x5x32xf32, #tpu.memory_space<vmem>>, vector<1x4x32xf32>
    %431 = vector.shape_cast %430 : vector<1x4x32xf32> to vector<4x32xf32>
    %c0_625 = arith.constant 0 : index
    %c64_626 = arith.constant 64 : index
    %432 = vector.load %arg15[%c0_625, %c64_626] : memref<5x576xf32, #tpu.memory_space<vmem>>, vector<4x32xf32>
    tpu.vector_store %arg15[%c0_625, %c64_626], %431 {strides = array<i32>} : memref<5x576xf32, #tpu.memory_space<vmem>>, vector<4x32xf32>,
    %c0_627 = arith.constant 0 : index
    %c1_628 = arith.constant 1 : index
    %c0_629 = arith.constant 0 : index
    %433 = vector.load %arg13[%c0_627, %c1_628, %c0_629] : memref<10x5x32xf32, #tpu.memory_space<vmem>>, vector<1x4x32xf32>
    %434 = vector.shape_cast %433 : vector<1x4x32xf32> to vector<4x32xf32>
    %c0_630 = arith.constant 0 : index
    %c96 = arith.constant 96 : index
    %435 = vector.load %arg15[%c0_630, %c96] : memref<5x576xf32, #tpu.memory_space<vmem>>, vector<4x32xf32>
    tpu.vector_store %arg15[%c0_630, %c96], %434 {strides = array<i32>} : memref<5x576xf32, #tpu.memory_space<vmem>>, vector<4x32xf32>,
    %c1_631 = arith.constant 1 : index
    %c0_632 = arith.constant 0 : index
    %c0_633 = arith.constant 0 : index
    %436 = vector.load %arg12[%c1_631, %c0_632, %c0_633] : memref<10x5x32xf32, #tpu.memory_space<vmem>>, vector<1x4x32xf32>
    %437 = vector.shape_cast %436 : vector<1x4x32xf32> to vector<4x32xf32>
    %c0_634 = arith.constant 0 : index
    %c128_635 = arith.constant 128 : index
    %438 = vector.load %arg15[%c0_634, %c128_635] : memref<5x576xf32, #tpu.memory_space<vmem>>, vector<4x32xf32>
    tpu.vector_store %arg15[%c0_634, %c128_635], %437 {strides = array<i32>} : memref<5x576xf32, #tpu.memory_space<vmem>>, vector<4x32xf32>,
    %c1_636 = arith.constant 1 : index
    %c0_637 = arith.constant 0 : index
    %c0_638 = arith.constant 0 : index
    %439 = vector.load %arg13[%c1_636, %c0_637, %c0_638] : memref<10x5x32xf32, #tpu.memory_space<vmem>>, vector<1x4x32xf32>
    %440 = vector.shape_cast %439 : vector<1x4x32xf32> to vector<4x32xf32>
    %c0_639 = arith.constant 0 : index
    %c160 = arith.constant 160 : index
    %441 = vector.load %arg15[%c0_639, %c160] : memref<5x576xf32, #tpu.memory_space<vmem>>, vector<4x32xf32>
    tpu.vector_store %arg15[%c0_639, %c160], %440 {strides = array<i32>} : memref<5x576xf32, #tpu.memory_space<vmem>>, vector<4x32xf32>,
    %c1_640 = arith.constant 1 : index
    %c1_641 = arith.constant 1 : index
    %c0_642 = arith.constant 0 : index
    %442 = vector.load %arg12[%c1_640, %c1_641, %c0_642] : memref<10x5x32xf32, #tpu.memory_space<vmem>>, vector<1x4x32xf32>
    %443 = vector.shape_cast %442 : vector<1x4x32xf32> to vector<4x32xf32>
    %c0_643 = arith.constant 0 : index
    %c192_644 = arith.constant 192 : index
    %444 = vector.load %arg15[%c0_643, %c192_644] : memref<5x576xf32, #tpu.memory_space<vmem>>, vector<4x32xf32>
    tpu.vector_store %arg15[%c0_643, %c192_644], %443 {strides = array<i32>} : memref<5x576xf32, #tpu.memory_space<vmem>>, vector<4x32xf32>,
    %c1_645 = arith.constant 1 : index
    %c1_646 = arith.constant 1 : index
    %c0_647 = arith.constant 0 : index
    %445 = vector.load %arg13[%c1_645, %c1_646, %c0_647] : memref<10x5x32xf32, #tpu.memory_space<vmem>>, vector<1x4x32xf32>
    %446 = vector.shape_cast %445 : vector<1x4x32xf32> to vector<4x32xf32>
    %c0_648 = arith.constant 0 : index
    %c224 = arith.constant 224 : index
    %447 = vector.load %arg15[%c0_648, %c224] : memref<5x576xf32, #tpu.memory_space<vmem>>, vector<4x32xf32>
    tpu.vector_store %arg15[%c0_648, %c224], %446 {strides = array<i32>} : memref<5x576xf32, #tpu.memory_space<vmem>>, vector<4x32xf32>,
    %c2_649 = arith.constant 2 : index
    %c0_650 = arith.constant 0 : index
    %c0_651 = arith.constant 0 : index
    %448 = vector.load %arg12[%c2_649, %c0_650, %c0_651] : memref<10x5x32xf32, #tpu.memory_space<vmem>>, vector<1x4x32xf32>
    %449 = vector.shape_cast %448 : vector<1x4x32xf32> to vector<4x32xf32>
    %c0_652 = arith.constant 0 : index
    %c256 = arith.constant 256 : index
    %450 = vector.load %arg15[%c0_652, %c256] : memref<5x576xf32, #tpu.memory_space<vmem>>, vector<4x32xf32>
    tpu.vector_store %arg15[%c0_652, %c256], %449 {strides = array<i32>} : memref<5x576xf32, #tpu.memory_space<vmem>>, vector<4x32xf32>,
    %c2_653 = arith.constant 2 : index
    %c0_654 = arith.constant 0 : index
    %c0_655 = arith.constant 0 : index
    %451 = vector.load %arg13[%c2_653, %c0_654, %c0_655] : memref<10x5x32xf32, #tpu.memory_space<vmem>>, vector<1x4x32xf32>
    %452 = vector.shape_cast %451 : vector<1x4x32xf32> to vector<4x32xf32>
    %c0_656 = arith.constant 0 : index
    %c288 = arith.constant 288 : index
    %453 = vector.load %arg15[%c0_656, %c288] : memref<5x576xf32, #tpu.memory_space<vmem>>, vector<4x32xf32>
    tpu.vector_store %arg15[%c0_656, %c288], %452 {strides = array<i32>} : memref<5x576xf32, #tpu.memory_space<vmem>>, vector<4x32xf32>,
    %c2_657 = arith.constant 2 : index
    %c1_658 = arith.constant 1 : index
    %c0_659 = arith.constant 0 : index
    %454 = vector.load %arg12[%c2_657, %c1_658, %c0_659] : memref<10x5x32xf32, #tpu.memory_space<vmem>>, vector<1x4x32xf32>
    %455 = vector.shape_cast %454 : vector<1x4x32xf32> to vector<4x32xf32>
    %c0_660 = arith.constant 0 : index
    %c320 = arith.constant 320 : index
    %456 = vector.load %arg15[%c0_660, %c320] : memref<5x576xf32, #tpu.memory_space<vmem>>, vector<4x32xf32>
    tpu.vector_store %arg15[%c0_660, %c320], %455 {strides = array<i32>} : memref<5x576xf32, #tpu.memory_space<vmem>>, vector<4x32xf32>,
    %c2_661 = arith.constant 2 : index
    %c1_662 = arith.constant 1 : index
    %c0_663 = arith.constant 0 : index
    %457 = vector.load %arg13[%c2_661, %c1_662, %c0_663] : memref<10x5x32xf32, #tpu.memory_space<vmem>>, vector<1x4x32xf32>
    %458 = vector.shape_cast %457 : vector<1x4x32xf32> to vector<4x32xf32>
    %c0_664 = arith.constant 0 : index
    %c352 = arith.constant 352 : index
    %459 = vector.load %arg15[%c0_664, %c352] : memref<5x576xf32, #tpu.memory_space<vmem>>, vector<4x32xf32>
    tpu.vector_store %arg15[%c0_664, %c352], %458 {strides = array<i32>} : memref<5x576xf32, #tpu.memory_space<vmem>>, vector<4x32xf32>,
    %c3_665 = arith.constant 3 : index
    %c0_666 = arith.constant 0 : index
    %c0_667 = arith.constant 0 : index
    %460 = vector.load %arg12[%c3_665, %c0_666, %c0_667] : memref<10x5x32xf32, #tpu.memory_space<vmem>>, vector<1x4x32xf32>
    %461 = vector.shape_cast %460 : vector<1x4x32xf32> to vector<4x32xf32>
    %c0_668 = arith.constant 0 : index
    %c384 = arith.constant 384 : index
    %462 = vector.load %arg15[%c0_668, %c384] : memref<5x576xf32, #tpu.memory_space<vmem>>, vector<4x32xf32>
    tpu.vector_store %arg15[%c0_668, %c384], %461 {strides = array<i32>} : memref<5x576xf32, #tpu.memory_space<vmem>>, vector<4x32xf32>,
    %c3_669 = arith.constant 3 : index
    %c0_670 = arith.constant 0 : index
    %c0_671 = arith.constant 0 : index
    %463 = vector.load %arg13[%c3_669, %c0_670, %c0_671] : memref<10x5x32xf32, #tpu.memory_space<vmem>>, vector<1x4x32xf32>
    %464 = vector.shape_cast %463 : vector<1x4x32xf32> to vector<4x32xf32>
    %c0_672 = arith.constant 0 : index
    %c416 = arith.constant 416 : index
    %465 = vector.load %arg15[%c0_672, %c416] : memref<5x576xf32, #tpu.memory_space<vmem>>, vector<4x32xf32>
    tpu.vector_store %arg15[%c0_672, %c416], %464 {strides = array<i32>} : memref<5x576xf32, #tpu.memory_space<vmem>>, vector<4x32xf32>,
    %c3_673 = arith.constant 3 : index
    %c1_674 = arith.constant 1 : index
    %c0_675 = arith.constant 0 : index
    %466 = vector.load %arg12[%c3_673, %c1_674, %c0_675] : memref<10x5x32xf32, #tpu.memory_space<vmem>>, vector<1x4x32xf32>
    %467 = vector.shape_cast %466 : vector<1x4x32xf32> to vector<4x32xf32>
    %c0_676 = arith.constant 0 : index
    %c448 = arith.constant 448 : index
    %468 = vector.load %arg15[%c0_676, %c448] : memref<5x576xf32, #tpu.memory_space<vmem>>, vector<4x32xf32>
    tpu.vector_store %arg15[%c0_676, %c448], %467 {strides = array<i32>} : memref<5x576xf32, #tpu.memory_space<vmem>>, vector<4x32xf32>,
    %c3_677 = arith.constant 3 : index
    %c1_678 = arith.constant 1 : index
    %c0_679 = arith.constant 0 : index
    %469 = vector.load %arg13[%c3_677, %c1_678, %c0_679] : memref<10x5x32xf32, #tpu.memory_space<vmem>>, vector<1x4x32xf32>
    %470 = vector.shape_cast %469 : vector<1x4x32xf32> to vector<4x32xf32>
    %c0_680 = arith.constant 0 : index
    %c480 = arith.constant 480 : index
    %471 = vector.load %arg15[%c0_680, %c480] : memref<5x576xf32, #tpu.memory_space<vmem>>, vector<4x32xf32>
    tpu.vector_store %arg15[%c0_680, %c480], %470 {strides = array<i32>} : memref<5x576xf32, #tpu.memory_space<vmem>>, vector<4x32xf32>,
    %c0_681 = arith.constant 0 : index
    %c0_682 = arith.constant 0 : index
    %472 = vector.load %arg15[%c0_681, %c0_682] : memref<5x576xf32, #tpu.memory_space<vmem>>, vector<4x512xf32>
    %cst_683 = arith.constant dense<0.000000e+00> : vector<4x64xf32>
    %473 = tpu.matmul %472, %422, %cst_683 {dimension_numbers = #tpu.dot_dimension_numbers<[1], [0], [0], [1], [0, 0, 1, 1], [], []>} : vector<4x512xf32>, vector<512x64xf32>, vector<4x64xf32> -> vector<4x64xf32>
    %474 = vector.broadcast %423 : vector<1x64xf32> to vector<4x64xf32>
    %475 = arith.addf %473, %474 : vector<4x64xf32>
    %cst_684 = arith.constant 0.000000e+00 : f32
    %476 = vector.broadcast %cst_684 : f32 to vector<4x64xf32>
    %477 = arith.maximumf %475, %476 : vector<4x64xf32>
    %c0_685 = arith.constant 0 : index
    %c0_686 = arith.constant 0 : index
    %c0_687 = arith.constant 0 : index
    %478 = vector.load %arg14[%c0_685, %c0_686, %c0_687] : memref<4x4x64xf32, #tpu.memory_space<vmem>>, vector<1x4x64xf32>
    %479 = vector.shape_cast %478 : vector<1x4x64xf32> to vector<4x64xf32>
    %480 = vector.shape_cast %477 : vector<4x64xf32> to vector<1x4x64xf32>
    tpu.vector_store %arg14[%c0_685, %c0_686, %c0_687], %480 {strides = array<i32>} : memref<4x4x64xf32, #tpu.memory_space<vmem>>, vector<1x4x64xf32>,
    %c2_688 = arith.constant 2 : index
    %c0_689 = arith.constant 0 : index
    %c0_690 = arith.constant 0 : index
    %481 = vector.load %arg12[%c2_688, %c0_689, %c0_690] : memref<10x5x32xf32, #tpu.memory_space<vmem>>, vector<1x4x32xf32>
    %482 = vector.shape_cast %481 : vector<1x4x32xf32> to vector<4x32xf32>
    %c0_691 = arith.constant 0 : index
    %c0_692 = arith.constant 0 : index
    %483 = vector.load %arg15[%c0_691, %c0_692] : memref<5x576xf32, #tpu.memory_space<vmem>>, vector<4x32xf32>
    tpu.vector_store %arg15[%c0_691, %c0_692], %482 {strides = array<i32>} : memref<5x576xf32, #tpu.memory_space<vmem>>, vector<4x32xf32>,
    %c2_693 = arith.constant 2 : index
    %c0_694 = arith.constant 0 : index
    %c0_695 = arith.constant 0 : index
    %484 = vector.load %arg13[%c2_693, %c0_694, %c0_695] : memref<10x5x32xf32, #tpu.memory_space<vmem>>, vector<1x4x32xf32>
    %485 = vector.shape_cast %484 : vector<1x4x32xf32> to vector<4x32xf32>
    %c0_696 = arith.constant 0 : index
    %c32_697 = arith.constant 32 : index
    %486 = vector.load %arg15[%c0_696, %c32_697] : memref<5x576xf32, #tpu.memory_space<vmem>>, vector<4x32xf32>
    tpu.vector_store %arg15[%c0_696, %c32_697], %485 {strides = array<i32>} : memref<5x576xf32, #tpu.memory_space<vmem>>, vector<4x32xf32>,
    %c2_698 = arith.constant 2 : index
    %c1_699 = arith.constant 1 : index
    %c0_700 = arith.constant 0 : index
    %487 = vector.load %arg12[%c2_698, %c1_699, %c0_700] : memref<10x5x32xf32, #tpu.memory_space<vmem>>, vector<1x4x32xf32>
    %488 = vector.shape_cast %487 : vector<1x4x32xf32> to vector<4x32xf32>
    %c0_701 = arith.constant 0 : index
    %c64_702 = arith.constant 64 : index
    %489 = vector.load %arg15[%c0_701, %c64_702] : memref<5x576xf32, #tpu.memory_space<vmem>>, vector<4x32xf32>
    tpu.vector_store %arg15[%c0_701, %c64_702], %488 {strides = array<i32>} : memref<5x576xf32, #tpu.memory_space<vmem>>, vector<4x32xf32>,
    %c2_703 = arith.constant 2 : index
    %c1_704 = arith.constant 1 : index
    %c0_705 = arith.constant 0 : index
    %490 = vector.load %arg13[%c2_703, %c1_704, %c0_705] : memref<10x5x32xf32, #tpu.memory_space<vmem>>, vector<1x4x32xf32>
    %491 = vector.shape_cast %490 : vector<1x4x32xf32> to vector<4x32xf32>
    %c0_706 = arith.constant 0 : index
    %c96_707 = arith.constant 96 : index
    %492 = vector.load %arg15[%c0_706, %c96_707] : memref<5x576xf32, #tpu.memory_space<vmem>>, vector<4x32xf32>
    tpu.vector_store %arg15[%c0_706, %c96_707], %491 {strides = array<i32>} : memref<5x576xf32, #tpu.memory_space<vmem>>, vector<4x32xf32>,
    %c3_708 = arith.constant 3 : index
    %c0_709 = arith.constant 0 : index
    %c0_710 = arith.constant 0 : index
    %493 = vector.load %arg12[%c3_708, %c0_709, %c0_710] : memref<10x5x32xf32, #tpu.memory_space<vmem>>, vector<1x4x32xf32>
    %494 = vector.shape_cast %493 : vector<1x4x32xf32> to vector<4x32xf32>
    %c0_711 = arith.constant 0 : index
    %c128_712 = arith.constant 128 : index
    %495 = vector.load %arg15[%c0_711, %c128_712] : memref<5x576xf32, #tpu.memory_space<vmem>>, vector<4x32xf32>
    tpu.vector_store %arg15[%c0_711, %c128_712], %494 {strides = array<i32>} : memref<5x576xf32, #tpu.memory_space<vmem>>, vector<4x32xf32>,
    %c3_713 = arith.constant 3 : index
    %c0_714 = arith.constant 0 : index
    %c0_715 = arith.constant 0 : index
    %496 = vector.load %arg13[%c3_713, %c0_714, %c0_715] : memref<10x5x32xf32, #tpu.memory_space<vmem>>, vector<1x4x32xf32>
    %497 = vector.shape_cast %496 : vector<1x4x32xf32> to vector<4x32xf32>
    %c0_716 = arith.constant 0 : index
    %c160_717 = arith.constant 160 : index
    %498 = vector.load %arg15[%c0_716, %c160_717] : memref<5x576xf32, #tpu.memory_space<vmem>>, vector<4x32xf32>
    tpu.vector_store %arg15[%c0_716, %c160_717], %497 {strides = array<i32>} : memref<5x576xf32, #tpu.memory_space<vmem>>, vector<4x32xf32>,
    %c3_718 = arith.constant 3 : index
    %c1_719 = arith.constant 1 : index
    %c0_720 = arith.constant 0 : index
    %499 = vector.load %arg12[%c3_718, %c1_719, %c0_720] : memref<10x5x32xf32, #tpu.memory_space<vmem>>, vector<1x4x32xf32>
    %500 = vector.shape_cast %499 : vector<1x4x32xf32> to vector<4x32xf32>
    %c0_721 = arith.constant 0 : index
    %c192_722 = arith.constant 192 : index
    %501 = vector.load %arg15[%c0_721, %c192_722] : memref<5x576xf32, #tpu.memory_space<vmem>>, vector<4x32xf32>
    tpu.vector_store %arg15[%c0_721, %c192_722], %500 {strides = array<i32>} : memref<5x576xf32, #tpu.memory_space<vmem>>, vector<4x32xf32>,
    %c3_723 = arith.constant 3 : index
    %c1_724 = arith.constant 1 : index
    %c0_725 = arith.constant 0 : index
    %502 = vector.load %arg13[%c3_723, %c1_724, %c0_725] : memref<10x5x32xf32, #tpu.memory_space<vmem>>, vector<1x4x32xf32>
    %503 = vector.shape_cast %502 : vector<1x4x32xf32> to vector<4x32xf32>
    %c0_726 = arith.constant 0 : index
    %c224_727 = arith.constant 224 : index
    %504 = vector.load %arg15[%c0_726, %c224_727] : memref<5x576xf32, #tpu.memory_space<vmem>>, vector<4x32xf32>
    tpu.vector_store %arg15[%c0_726, %c224_727], %503 {strides = array<i32>} : memref<5x576xf32, #tpu.memory_space<vmem>>, vector<4x32xf32>,
    %c4_728 = arith.constant 4 : index
    %c0_729 = arith.constant 0 : index
    %c0_730 = arith.constant 0 : index
    %505 = vector.load %arg12[%c4_728, %c0_729, %c0_730] : memref<10x5x32xf32, #tpu.memory_space<vmem>>, vector<1x4x32xf32>
    %506 = vector.shape_cast %505 : vector<1x4x32xf32> to vector<4x32xf32>
    %c0_731 = arith.constant 0 : index
    %c256_732 = arith.constant 256 : index
    %507 = vector.load %arg15[%c0_731, %c256_732] : memref<5x576xf32, #tpu.memory_space<vmem>>, vector<4x32xf32>
    tpu.vector_store %arg15[%c0_731, %c256_732], %506 {strides = array<i32>} : memref<5x576xf32, #tpu.memory_space<vmem>>, vector<4x32xf32>,
    %c4_733 = arith.constant 4 : index
    %c0_734 = arith.constant 0 : index
    %c0_735 = arith.constant 0 : index
    %508 = vector.load %arg13[%c4_733, %c0_734, %c0_735] : memref<10x5x32xf32, #tpu.memory_space<vmem>>, vector<1x4x32xf32>
    %509 = vector.shape_cast %508 : vector<1x4x32xf32> to vector<4x32xf32>
    %c0_736 = arith.constant 0 : index
    %c288_737 = arith.constant 288 : index
    %510 = vector.load %arg15[%c0_736, %c288_737] : memref<5x576xf32, #tpu.memory_space<vmem>>, vector<4x32xf32>
    tpu.vector_store %arg15[%c0_736, %c288_737], %509 {strides = array<i32>} : memref<5x576xf32, #tpu.memory_space<vmem>>, vector<4x32xf32>,
    %c4_738 = arith.constant 4 : index
    %c1_739 = arith.constant 1 : index
    %c0_740 = arith.constant 0 : index
    %511 = vector.load %arg12[%c4_738, %c1_739, %c0_740] : memref<10x5x32xf32, #tpu.memory_space<vmem>>, vector<1x4x32xf32>
    %512 = vector.shape_cast %511 : vector<1x4x32xf32> to vector<4x32xf32>
    %c0_741 = arith.constant 0 : index
    %c320_742 = arith.constant 320 : index
    %513 = vector.load %arg15[%c0_741, %c320_742] : memref<5x576xf32, #tpu.memory_space<vmem>>, vector<4x32xf32>
    tpu.vector_store %arg15[%c0_741, %c320_742], %512 {strides = array<i32>} : memref<5x576xf32, #tpu.memory_space<vmem>>, vector<4x32xf32>,
    %c4_743 = arith.constant 4 : index
    %c1_744 = arith.constant 1 : index
    %c0_745 = arith.constant 0 : index
    %514 = vector.load %arg13[%c4_743, %c1_744, %c0_745] : memref<10x5x32xf32, #tpu.memory_space<vmem>>, vector<1x4x32xf32>
    %515 = vector.shape_cast %514 : vector<1x4x32xf32> to vector<4x32xf32>
    %c0_746 = arith.constant 0 : index
    %c352_747 = arith.constant 352 : index
    %516 = vector.load %arg15[%c0_746, %c352_747] : memref<5x576xf32, #tpu.memory_space<vmem>>, vector<4x32xf32>
    tpu.vector_store %arg15[%c0_746, %c352_747], %515 {strides = array<i32>} : memref<5x576xf32, #tpu.memory_space<vmem>>, vector<4x32xf32>,
    %c5_748 = arith.constant 5 : index
    %c0_749 = arith.constant 0 : index
    %c0_750 = arith.constant 0 : index
    %517 = vector.load %arg12[%c5_748, %c0_749, %c0_750] : memref<10x5x32xf32, #tpu.memory_space<vmem>>, vector<1x4x32xf32>
    %518 = vector.shape_cast %517 : vector<1x4x32xf32> to vector<4x32xf32>
    %c0_751 = arith.constant 0 : index
    %c384_752 = arith.constant 384 : index
    %519 = vector.load %arg15[%c0_751, %c384_752] : memref<5x576xf32, #tpu.memory_space<vmem>>, vector<4x32xf32>
    tpu.vector_store %arg15[%c0_751, %c384_752], %518 {strides = array<i32>} : memref<5x576xf32, #tpu.memory_space<vmem>>, vector<4x32xf32>,
    %c5_753 = arith.constant 5 : index
    %c0_754 = arith.constant 0 : index
    %c0_755 = arith.constant 0 : index
    %520 = vector.load %arg13[%c5_753, %c0_754, %c0_755] : memref<10x5x32xf32, #tpu.memory_space<vmem>>, vector<1x4x32xf32>
    %521 = vector.shape_cast %520 : vector<1x4x32xf32> to vector<4x32xf32>
    %c0_756 = arith.constant 0 : index
    %c416_757 = arith.constant 416 : index
    %522 = vector.load %arg15[%c0_756, %c416_757] : memref<5x576xf32, #tpu.memory_space<vmem>>, vector<4x32xf32>
    tpu.vector_store %arg15[%c0_756, %c416_757], %521 {strides = array<i32>} : memref<5x576xf32, #tpu.memory_space<vmem>>, vector<4x32xf32>,
    %c5_758 = arith.constant 5 : index
    %c1_759 = arith.constant 1 : index
    %c0_760 = arith.constant 0 : index
    %523 = vector.load %arg12[%c5_758, %c1_759, %c0_760] : memref<10x5x32xf32, #tpu.memory_space<vmem>>, vector<1x4x32xf32>
    %524 = vector.shape_cast %523 : vector<1x4x32xf32> to vector<4x32xf32>
    %c0_761 = arith.constant 0 : index
    %c448_762 = arith.constant 448 : index
    %525 = vector.load %arg15[%c0_761, %c448_762] : memref<5x576xf32, #tpu.memory_space<vmem>>, vector<4x32xf32>
    tpu.vector_store %arg15[%c0_761, %c448_762], %524 {strides = array<i32>} : memref<5x576xf32, #tpu.memory_space<vmem>>, vector<4x32xf32>,
    %c5_763 = arith.constant 5 : index
    %c1_764 = arith.constant 1 : index
    %c0_765 = arith.constant 0 : index
    %526 = vector.load %arg13[%c5_763, %c1_764, %c0_765] : memref<10x5x32xf32, #tpu.memory_space<vmem>>, vector<1x4x32xf32>
    %527 = vector.shape_cast %526 : vector<1x4x32xf32> to vector<4x32xf32>
    %c0_766 = arith.constant 0 : index
    %c480_767 = arith.constant 480 : index
    %528 = vector.load %arg15[%c0_766, %c480_767] : memref<5x576xf32, #tpu.memory_space<vmem>>, vector<4x32xf32>
    tpu.vector_store %arg15[%c0_766, %c480_767], %527 {strides = array<i32>} : memref<5x576xf32, #tpu.memory_space<vmem>>, vector<4x32xf32>,
    %c0_768 = arith.constant 0 : index
    %c0_769 = arith.constant 0 : index
    %529 = vector.load %arg15[%c0_768, %c0_769] : memref<5x576xf32, #tpu.memory_space<vmem>>, vector<4x512xf32>
    %cst_770 = arith.constant dense<0.000000e+00> : vector<4x64xf32>
    %530 = tpu.matmul %529, %422, %cst_770 {dimension_numbers = #tpu.dot_dimension_numbers<[1], [0], [0], [1], [0, 0, 1, 1], [], []>} : vector<4x512xf32>, vector<512x64xf32>, vector<4x64xf32> -> vector<4x64xf32>
    %531 = vector.broadcast %423 : vector<1x64xf32> to vector<4x64xf32>
    %532 = arith.addf %530, %531 : vector<4x64xf32>
    %cst_771 = arith.constant 0.000000e+00 : f32
    %533 = vector.broadcast %cst_771 : f32 to vector<4x64xf32>
    %534 = arith.maximumf %532, %533 : vector<4x64xf32>
    %c1_772 = arith.constant 1 : index
    %c0_773 = arith.constant 0 : index
    %c0_774 = arith.constant 0 : index
    %535 = vector.load %arg14[%c1_772, %c0_773, %c0_774] : memref<4x4x64xf32, #tpu.memory_space<vmem>>, vector<1x4x64xf32>
    %536 = vector.shape_cast %535 : vector<1x4x64xf32> to vector<4x64xf32>
    %537 = vector.shape_cast %534 : vector<4x64xf32> to vector<1x4x64xf32>
    tpu.vector_store %arg14[%c1_772, %c0_773, %c0_774], %537 {strides = array<i32>} : memref<4x4x64xf32, #tpu.memory_space<vmem>>, vector<1x4x64xf32>,
    %c4_775 = arith.constant 4 : index
    %c0_776 = arith.constant 0 : index
    %c0_777 = arith.constant 0 : index
    %538 = vector.load %arg12[%c4_775, %c0_776, %c0_777] : memref<10x5x32xf32, #tpu.memory_space<vmem>>, vector<1x4x32xf32>
    %539 = vector.shape_cast %538 : vector<1x4x32xf32> to vector<4x32xf32>
    %c0_778 = arith.constant 0 : index
    %c0_779 = arith.constant 0 : index
    %540 = vector.load %arg15[%c0_778, %c0_779] : memref<5x576xf32, #tpu.memory_space<vmem>>, vector<4x32xf32>
    tpu.vector_store %arg15[%c0_778, %c0_779], %539 {strides = array<i32>} : memref<5x576xf32, #tpu.memory_space<vmem>>, vector<4x32xf32>,
    %c4_780 = arith.constant 4 : index
    %c0_781 = arith.constant 0 : index
    %c0_782 = arith.constant 0 : index
    %541 = vector.load %arg13[%c4_780, %c0_781, %c0_782] : memref<10x5x32xf32, #tpu.memory_space<vmem>>, vector<1x4x32xf32>
    %542 = vector.shape_cast %541 : vector<1x4x32xf32> to vector<4x32xf32>
    %c0_783 = arith.constant 0 : index
    %c32_784 = arith.constant 32 : index
    %543 = vector.load %arg15[%c0_783, %c32_784] : memref<5x576xf32, #tpu.memory_space<vmem>>, vector<4x32xf32>
    tpu.vector_store %arg15[%c0_783, %c32_784], %542 {strides = array<i32>} : memref<5x576xf32, #tpu.memory_space<vmem>>, vector<4x32xf32>,
    %c4_785 = arith.constant 4 : index
    %c1_786 = arith.constant 1 : index
    %c0_787 = arith.constant 0 : index
    %544 = vector.load %arg12[%c4_785, %c1_786, %c0_787] : memref<10x5x32xf32, #tpu.memory_space<vmem>>, vector<1x4x32xf32>
    %545 = vector.shape_cast %544 : vector<1x4x32xf32> to vector<4x32xf32>
    %c0_788 = arith.constant 0 : index
    %c64_789 = arith.constant 64 : index
    %546 = vector.load %arg15[%c0_788, %c64_789] : memref<5x576xf32, #tpu.memory_space<vmem>>, vector<4x32xf32>
    tpu.vector_store %arg15[%c0_788, %c64_789], %545 {strides = array<i32>} : memref<5x576xf32, #tpu.memory_space<vmem>>, vector<4x32xf32>,
    %c4_790 = arith.constant 4 : index
    %c1_791 = arith.constant 1 : index
    %c0_792 = arith.constant 0 : index
    %547 = vector.load %arg13[%c4_790, %c1_791, %c0_792] : memref<10x5x32xf32, #tpu.memory_space<vmem>>, vector<1x4x32xf32>
    %548 = vector.shape_cast %547 : vector<1x4x32xf32> to vector<4x32xf32>
    %c0_793 = arith.constant 0 : index
    %c96_794 = arith.constant 96 : index
    %549 = vector.load %arg15[%c0_793, %c96_794] : memref<5x576xf32, #tpu.memory_space<vmem>>, vector<4x32xf32>
    tpu.vector_store %arg15[%c0_793, %c96_794], %548 {strides = array<i32>} : memref<5x576xf32, #tpu.memory_space<vmem>>, vector<4x32xf32>,
    %c5_795 = arith.constant 5 : index
    %c0_796 = arith.constant 0 : index
    %c0_797 = arith.constant 0 : index
    %550 = vector.load %arg12[%c5_795, %c0_796, %c0_797] : memref<10x5x32xf32, #tpu.memory_space<vmem>>, vector<1x4x32xf32>
    %551 = vector.shape_cast %550 : vector<1x4x32xf32> to vector<4x32xf32>
    %c0_798 = arith.constant 0 : index
    %c128_799 = arith.constant 128 : index
    %552 = vector.load %arg15[%c0_798, %c128_799] : memref<5x576xf32, #tpu.memory_space<vmem>>, vector<4x32xf32>
    tpu.vector_store %arg15[%c0_798, %c128_799], %551 {strides = array<i32>} : memref<5x576xf32, #tpu.memory_space<vmem>>, vector<4x32xf32>,
    %c5_800 = arith.constant 5 : index
    %c0_801 = arith.constant 0 : index
    %c0_802 = arith.constant 0 : index
    %553 = vector.load %arg13[%c5_800, %c0_801, %c0_802] : memref<10x5x32xf32, #tpu.memory_space<vmem>>, vector<1x4x32xf32>
    %554 = vector.shape_cast %553 : vector<1x4x32xf32> to vector<4x32xf32>
    %c0_803 = arith.constant 0 : index
    %c160_804 = arith.constant 160 : index
    %555 = vector.load %arg15[%c0_803, %c160_804] : memref<5x576xf32, #tpu.memory_space<vmem>>, vector<4x32xf32>
    tpu.vector_store %arg15[%c0_803, %c160_804], %554 {strides = array<i32>} : memref<5x576xf32, #tpu.memory_space<vmem>>, vector<4x32xf32>,
    %c5_805 = arith.constant 5 : index
    %c1_806 = arith.constant 1 : index
    %c0_807 = arith.constant 0 : index
    %556 = vector.load %arg12[%c5_805, %c1_806, %c0_807] : memref<10x5x32xf32, #tpu.memory_space<vmem>>, vector<1x4x32xf32>
    %557 = vector.shape_cast %556 : vector<1x4x32xf32> to vector<4x32xf32>
    %c0_808 = arith.constant 0 : index
    %c192_809 = arith.constant 192 : index
    %558 = vector.load %arg15[%c0_808, %c192_809] : memref<5x576xf32, #tpu.memory_space<vmem>>, vector<4x32xf32>
    tpu.vector_store %arg15[%c0_808, %c192_809], %557 {strides = array<i32>} : memref<5x576xf32, #tpu.memory_space<vmem>>, vector<4x32xf32>,
    %c5_810 = arith.constant 5 : index
    %c1_811 = arith.constant 1 : index
    %c0_812 = arith.constant 0 : index
    %559 = vector.load %arg13[%c5_810, %c1_811, %c0_812] : memref<10x5x32xf32, #tpu.memory_space<vmem>>, vector<1x4x32xf32>
    %560 = vector.shape_cast %559 : vector<1x4x32xf32> to vector<4x32xf32>
    %c0_813 = arith.constant 0 : index
    %c224_814 = arith.constant 224 : index
    %561 = vector.load %arg15[%c0_813, %c224_814] : memref<5x576xf32, #tpu.memory_space<vmem>>, vector<4x32xf32>
    tpu.vector_store %arg15[%c0_813, %c224_814], %560 {strides = array<i32>} : memref<5x576xf32, #tpu.memory_space<vmem>>, vector<4x32xf32>,
    %c6_815 = arith.constant 6 : index
    %c0_816 = arith.constant 0 : index
    %c0_817 = arith.constant 0 : index
    %562 = vector.load %arg12[%c6_815, %c0_816, %c0_817] : memref<10x5x32xf32, #tpu.memory_space<vmem>>, vector<1x4x32xf32>
    %563 = vector.shape_cast %562 : vector<1x4x32xf32> to vector<4x32xf32>
    %c0_818 = arith.constant 0 : index
    %c256_819 = arith.constant 256 : index
    %564 = vector.load %arg15[%c0_818, %c256_819] : memref<5x576xf32, #tpu.memory_space<vmem>>, vector<4x32xf32>
    tpu.vector_store %arg15[%c0_818, %c256_819], %563 {strides = array<i32>} : memref<5x576xf32, #tpu.memory_space<vmem>>, vector<4x32xf32>,
    %c6_820 = arith.constant 6 : index
    %c0_821 = arith.constant 0 : index
    %c0_822 = arith.constant 0 : index
    %565 = vector.load %arg13[%c6_820, %c0_821, %c0_822] : memref<10x5x32xf32, #tpu.memory_space<vmem>>, vector<1x4x32xf32>
    %566 = vector.shape_cast %565 : vector<1x4x32xf32> to vector<4x32xf32>
    %c0_823 = arith.constant 0 : index
    %c288_824 = arith.constant 288 : index
    %567 = vector.load %arg15[%c0_823, %c288_824] : memref<5x576xf32, #tpu.memory_space<vmem>>, vector<4x32xf32>
    tpu.vector_store %arg15[%c0_823, %c288_824], %566 {strides = array<i32>} : memref<5x576xf32, #tpu.memory_space<vmem>>, vector<4x32xf32>,
    %c6_825 = arith.constant 6 : index
    %c1_826 = arith.constant 1 : index
    %c0_827 = arith.constant 0 : index
    %568 = vector.load %arg12[%c6_825, %c1_826, %c0_827] : memref<10x5x32xf32, #tpu.memory_space<vmem>>, vector<1x4x32xf32>
    %569 = vector.shape_cast %568 : vector<1x4x32xf32> to vector<4x32xf32>
    %c0_828 = arith.constant 0 : index
    %c320_829 = arith.constant 320 : index
    %570 = vector.load %arg15[%c0_828, %c320_829] : memref<5x576xf32, #tpu.memory_space<vmem>>, vector<4x32xf32>
    tpu.vector_store %arg15[%c0_828, %c320_829], %569 {strides = array<i32>} : memref<5x576xf32, #tpu.memory_space<vmem>>, vector<4x32xf32>,
    %c6_830 = arith.constant 6 : index
    %c1_831 = arith.constant 1 : index
    %c0_832 = arith.constant 0 : index
    %571 = vector.load %arg13[%c6_830, %c1_831, %c0_832] : memref<10x5x32xf32, #tpu.memory_space<vmem>>, vector<1x4x32xf32>
    %572 = vector.shape_cast %571 : vector<1x4x32xf32> to vector<4x32xf32>
    %c0_833 = arith.constant 0 : index
    %c352_834 = arith.constant 352 : index
    %573 = vector.load %arg15[%c0_833, %c352_834] : memref<5x576xf32, #tpu.memory_space<vmem>>, vector<4x32xf32>
    tpu.vector_store %arg15[%c0_833, %c352_834], %572 {strides = array<i32>} : memref<5x576xf32, #tpu.memory_space<vmem>>, vector<4x32xf32>,
    %c7_835 = arith.constant 7 : index
    %c0_836 = arith.constant 0 : index
    %c0_837 = arith.constant 0 : index
    %574 = vector.load %arg12[%c7_835, %c0_836, %c0_837] : memref<10x5x32xf32, #tpu.memory_space<vmem>>, vector<1x4x32xf32>
    %575 = vector.shape_cast %574 : vector<1x4x32xf32> to vector<4x32xf32>
    %c0_838 = arith.constant 0 : index
    %c384_839 = arith.constant 384 : index
    %576 = vector.load %arg15[%c0_838, %c384_839] : memref<5x576xf32, #tpu.memory_space<vmem>>, vector<4x32xf32>
    tpu.vector_store %arg15[%c0_838, %c384_839], %575 {strides = array<i32>} : memref<5x576xf32, #tpu.memory_space<vmem>>, vector<4x32xf32>,
    %c7_840 = arith.constant 7 : index
    %c0_841 = arith.constant 0 : index
    %c0_842 = arith.constant 0 : index
    %577 = vector.load %arg13[%c7_840, %c0_841, %c0_842] : memref<10x5x32xf32, #tpu.memory_space<vmem>>, vector<1x4x32xf32>
    %578 = vector.shape_cast %577 : vector<1x4x32xf32> to vector<4x32xf32>
    %c0_843 = arith.constant 0 : index
    %c416_844 = arith.constant 416 : index
    %579 = vector.load %arg15[%c0_843, %c416_844] : memref<5x576xf32, #tpu.memory_space<vmem>>, vector<4x32xf32>
    tpu.vector_store %arg15[%c0_843, %c416_844], %578 {strides = array<i32>} : memref<5x576xf32, #tpu.memory_space<vmem>>, vector<4x32xf32>,
    %c7_845 = arith.constant 7 : index
    %c1_846 = arith.constant 1 : index
    %c0_847 = arith.constant 0 : index
    %580 = vector.load %arg12[%c7_845, %c1_846, %c0_847] : memref<10x5x32xf32, #tpu.memory_space<vmem>>, vector<1x4x32xf32>
    %581 = vector.shape_cast %580 : vector<1x4x32xf32> to vector<4x32xf32>
    %c0_848 = arith.constant 0 : index
    %c448_849 = arith.constant 448 : index
    %582 = vector.load %arg15[%c0_848, %c448_849] : memref<5x576xf32, #tpu.memory_space<vmem>>, vector<4x32xf32>
    tpu.vector_store %arg15[%c0_848, %c448_849], %581 {strides = array<i32>} : memref<5x576xf32, #tpu.memory_space<vmem>>, vector<4x32xf32>,
    %c7_850 = arith.constant 7 : index
    %c1_851 = arith.constant 1 : index
    %c0_852 = arith.constant 0 : index
    %583 = vector.load %arg13[%c7_850, %c1_851, %c0_852] : memref<10x5x32xf32, #tpu.memory_space<vmem>>, vector<1x4x32xf32>
    %584 = vector.shape_cast %583 : vector<1x4x32xf32> to vector<4x32xf32>
    %c0_853 = arith.constant 0 : index
    %c480_854 = arith.constant 480 : index
    %585 = vector.load %arg15[%c0_853, %c480_854] : memref<5x576xf32, #tpu.memory_space<vmem>>, vector<4x32xf32>
    tpu.vector_store %arg15[%c0_853, %c480_854], %584 {strides = array<i32>} : memref<5x576xf32, #tpu.memory_space<vmem>>, vector<4x32xf32>,
    %c0_855 = arith.constant 0 : index
    %c0_856 = arith.constant 0 : index
    %586 = vector.load %arg15[%c0_855, %c0_856] : memref<5x576xf32, #tpu.memory_space<vmem>>, vector<4x512xf32>
    %cst_857 = arith.constant dense<0.000000e+00> : vector<4x64xf32>
    %587 = tpu.matmul %586, %422, %cst_857 {dimension_numbers = #tpu.dot_dimension_numbers<[1], [0], [0], [1], [0, 0, 1, 1], [], []>} : vector<4x512xf32>, vector<512x64xf32>, vector<4x64xf32> -> vector<4x64xf32>
    %588 = vector.broadcast %423 : vector<1x64xf32> to vector<4x64xf32>
    %589 = arith.addf %587, %588 : vector<4x64xf32>
    %cst_858 = arith.constant 0.000000e+00 : f32
    %590 = vector.broadcast %cst_858 : f32 to vector<4x64xf32>
    %591 = arith.maximumf %589, %590 : vector<4x64xf32>
    %c2_859 = arith.constant 2 : index
    %c0_860 = arith.constant 0 : index
    %c0_861 = arith.constant 0 : index
    %592 = vector.load %arg14[%c2_859, %c0_860, %c0_861] : memref<4x4x64xf32, #tpu.memory_space<vmem>>, vector<1x4x64xf32>
    %593 = vector.shape_cast %592 : vector<1x4x64xf32> to vector<4x64xf32>
    %594 = vector.shape_cast %591 : vector<4x64xf32> to vector<1x4x64xf32>
    tpu.vector_store %arg14[%c2_859, %c0_860, %c0_861], %594 {strides = array<i32>} : memref<4x4x64xf32, #tpu.memory_space<vmem>>, vector<1x4x64xf32>,
    %c6_862 = arith.constant 6 : index
    %c0_863 = arith.constant 0 : index
    %c0_864 = arith.constant 0 : index
    %595 = vector.load %arg12[%c6_862, %c0_863, %c0_864] : memref<10x5x32xf32, #tpu.memory_space<vmem>>, vector<1x4x32xf32>
    %596 = vector.shape_cast %595 : vector<1x4x32xf32> to vector<4x32xf32>
    %c0_865 = arith.constant 0 : index
    %c0_866 = arith.constant 0 : index
    %597 = vector.load %arg15[%c0_865, %c0_866] : memref<5x576xf32, #tpu.memory_space<vmem>>, vector<4x32xf32>
    tpu.vector_store %arg15[%c0_865, %c0_866], %596 {strides = array<i32>} : memref<5x576xf32, #tpu.memory_space<vmem>>, vector<4x32xf32>,
    %c6_867 = arith.constant 6 : index
    %c0_868 = arith.constant 0 : index
    %c0_869 = arith.constant 0 : index
    %598 = vector.load %arg13[%c6_867, %c0_868, %c0_869] : memref<10x5x32xf32, #tpu.memory_space<vmem>>, vector<1x4x32xf32>
    %599 = vector.shape_cast %598 : vector<1x4x32xf32> to vector<4x32xf32>
    %c0_870 = arith.constant 0 : index
    %c32_871 = arith.constant 32 : index
    %600 = vector.load %arg15[%c0_870, %c32_871] : memref<5x576xf32, #tpu.memory_space<vmem>>, vector<4x32xf32>
    tpu.vector_store %arg15[%c0_870, %c32_871], %599 {strides = array<i32>} : memref<5x576xf32, #tpu.memory_space<vmem>>, vector<4x32xf32>,
    %c6_872 = arith.constant 6 : index
    %c1_873 = arith.constant 1 : index
    %c0_874 = arith.constant 0 : index
    %601 = vector.load %arg12[%c6_872, %c1_873, %c0_874] : memref<10x5x32xf32, #tpu.memory_space<vmem>>, vector<1x4x32xf32>
    %602 = vector.shape_cast %601 : vector<1x4x32xf32> to vector<4x32xf32>
    %c0_875 = arith.constant 0 : index
    %c64_876 = arith.constant 64 : index
    %603 = vector.load %arg15[%c0_875, %c64_876] : memref<5x576xf32, #tpu.memory_space<vmem>>, vector<4x32xf32>
    tpu.vector_store %arg15[%c0_875, %c64_876], %602 {strides = array<i32>} : memref<5x576xf32, #tpu.memory_space<vmem>>, vector<4x32xf32>,
    %c6_877 = arith.constant 6 : index
    %c1_878 = arith.constant 1 : index
    %c0_879 = arith.constant 0 : index
    %604 = vector.load %arg13[%c6_877, %c1_878, %c0_879] : memref<10x5x32xf32, #tpu.memory_space<vmem>>, vector<1x4x32xf32>
    %605 = vector.shape_cast %604 : vector<1x4x32xf32> to vector<4x32xf32>
    %c0_880 = arith.constant 0 : index
    %c96_881 = arith.constant 96 : index
    %606 = vector.load %arg15[%c0_880, %c96_881] : memref<5x576xf32, #tpu.memory_space<vmem>>, vector<4x32xf32>
    tpu.vector_store %arg15[%c0_880, %c96_881], %605 {strides = array<i32>} : memref<5x576xf32, #tpu.memory_space<vmem>>, vector<4x32xf32>,
    %c7_882 = arith.constant 7 : index
    %c0_883 = arith.constant 0 : index
    %c0_884 = arith.constant 0 : index
    %607 = vector.load %arg12[%c7_882, %c0_883, %c0_884] : memref<10x5x32xf32, #tpu.memory_space<vmem>>, vector<1x4x32xf32>
    %608 = vector.shape_cast %607 : vector<1x4x32xf32> to vector<4x32xf32>
    %c0_885 = arith.constant 0 : index
    %c128_886 = arith.constant 128 : index
    %609 = vector.load %arg15[%c0_885, %c128_886] : memref<5x576xf32, #tpu.memory_space<vmem>>, vector<4x32xf32>
    tpu.vector_store %arg15[%c0_885, %c128_886], %608 {strides = array<i32>} : memref<5x576xf32, #tpu.memory_space<vmem>>, vector<4x32xf32>,
    %c7_887 = arith.constant 7 : index
    %c0_888 = arith.constant 0 : index
    %c0_889 = arith.constant 0 : index
    %610 = vector.load %arg13[%c7_887, %c0_888, %c0_889] : memref<10x5x32xf32, #tpu.memory_space<vmem>>, vector<1x4x32xf32>
    %611 = vector.shape_cast %610 : vector<1x4x32xf32> to vector<4x32xf32>
    %c0_890 = arith.constant 0 : index
    %c160_891 = arith.constant 160 : index
    %612 = vector.load %arg15[%c0_890, %c160_891] : memref<5x576xf32, #tpu.memory_space<vmem>>, vector<4x32xf32>
    tpu.vector_store %arg15[%c0_890, %c160_891], %611 {strides = array<i32>} : memref<5x576xf32, #tpu.memory_space<vmem>>, vector<4x32xf32>,
    %c7_892 = arith.constant 7 : index
    %c1_893 = arith.constant 1 : index
    %c0_894 = arith.constant 0 : index
    %613 = vector.load %arg12[%c7_892, %c1_893, %c0_894] : memref<10x5x32xf32, #tpu.memory_space<vmem>>, vector<1x4x32xf32>
    %614 = vector.shape_cast %613 : vector<1x4x32xf32> to vector<4x32xf32>
    %c0_895 = arith.constant 0 : index
    %c192_896 = arith.constant 192 : index
    %615 = vector.load %arg15[%c0_895, %c192_896] : memref<5x576xf32, #tpu.memory_space<vmem>>, vector<4x32xf32>
    tpu.vector_store %arg15[%c0_895, %c192_896], %614 {strides = array<i32>} : memref<5x576xf32, #tpu.memory_space<vmem>>, vector<4x32xf32>,
    %c7_897 = arith.constant 7 : index
    %c1_898 = arith.constant 1 : index
    %c0_899 = arith.constant 0 : index
    %616 = vector.load %arg13[%c7_897, %c1_898, %c0_899] : memref<10x5x32xf32, #tpu.memory_space<vmem>>, vector<1x4x32xf32>
    %617 = vector.shape_cast %616 : vector<1x4x32xf32> to vector<4x32xf32>
    %c0_900 = arith.constant 0 : index
    %c224_901 = arith.constant 224 : index
    %618 = vector.load %arg15[%c0_900, %c224_901] : memref<5x576xf32, #tpu.memory_space<vmem>>, vector<4x32xf32>
    tpu.vector_store %arg15[%c0_900, %c224_901], %617 {strides = array<i32>} : memref<5x576xf32, #tpu.memory_space<vmem>>, vector<4x32xf32>,
    %c8_902 = arith.constant 8 : index
    %c0_903 = arith.constant 0 : index
    %c0_904 = arith.constant 0 : index
    %619 = vector.load %arg12[%c8_902, %c0_903, %c0_904] : memref<10x5x32xf32, #tpu.memory_space<vmem>>, vector<1x4x32xf32>
    %620 = vector.shape_cast %619 : vector<1x4x32xf32> to vector<4x32xf32>
    %c0_905 = arith.constant 0 : index
    %c256_906 = arith.constant 256 : index
    %621 = vector.load %arg15[%c0_905, %c256_906] : memref<5x576xf32, #tpu.memory_space<vmem>>, vector<4x32xf32>
    tpu.vector_store %arg15[%c0_905, %c256_906], %620 {strides = array<i32>} : memref<5x576xf32, #tpu.memory_space<vmem>>, vector<4x32xf32>,
    %c8_907 = arith.constant 8 : index
    %c0_908 = arith.constant 0 : index
    %c0_909 = arith.constant 0 : index
    %622 = vector.load %arg13[%c8_907, %c0_908, %c0_909] : memref<10x5x32xf32, #tpu.memory_space<vmem>>, vector<1x4x32xf32>
    %623 = vector.shape_cast %622 : vector<1x4x32xf32> to vector<4x32xf32>
    %c0_910 = arith.constant 0 : index
    %c288_911 = arith.constant 288 : index
    %624 = vector.load %arg15[%c0_910, %c288_911] : memref<5x576xf32, #tpu.memory_space<vmem>>, vector<4x32xf32>
    tpu.vector_store %arg15[%c0_910, %c288_911], %623 {strides = array<i32>} : memref<5x576xf32, #tpu.memory_space<vmem>>, vector<4x32xf32>,
    %c8_912 = arith.constant 8 : index
    %c1_913 = arith.constant 1 : index
    %c0_914 = arith.constant 0 : index
    %625 = vector.load %arg12[%c8_912, %c1_913, %c0_914] : memref<10x5x32xf32, #tpu.memory_space<vmem>>, vector<1x4x32xf32>
    %626 = vector.shape_cast %625 : vector<1x4x32xf32> to vector<4x32xf32>
    %c0_915 = arith.constant 0 : index
    %c320_916 = arith.constant 320 : index
    %627 = vector.load %arg15[%c0_915, %c320_916] : memref<5x576xf32, #tpu.memory_space<vmem>>, vector<4x32xf32>
    tpu.vector_store %arg15[%c0_915, %c320_916], %626 {strides = array<i32>} : memref<5x576xf32, #tpu.memory_space<vmem>>, vector<4x32xf32>,
    %c8_917 = arith.constant 8 : index
    %c1_918 = arith.constant 1 : index
    %c0_919 = arith.constant 0 : index
    %628 = vector.load %arg13[%c8_917, %c1_918, %c0_919] : memref<10x5x32xf32, #tpu.memory_space<vmem>>, vector<1x4x32xf32>
    %629 = vector.shape_cast %628 : vector<1x4x32xf32> to vector<4x32xf32>
    %c0_920 = arith.constant 0 : index
    %c352_921 = arith.constant 352 : index
    %630 = vector.load %arg15[%c0_920, %c352_921] : memref<5x576xf32, #tpu.memory_space<vmem>>, vector<4x32xf32>
    tpu.vector_store %arg15[%c0_920, %c352_921], %629 {strides = array<i32>} : memref<5x576xf32, #tpu.memory_space<vmem>>, vector<4x32xf32>,
    %c9_922 = arith.constant 9 : index
    %c0_923 = arith.constant 0 : index
    %c0_924 = arith.constant 0 : index
    %631 = vector.load %arg12[%c9_922, %c0_923, %c0_924] : memref<10x5x32xf32, #tpu.memory_space<vmem>>, vector<1x4x32xf32>
    %632 = vector.shape_cast %631 : vector<1x4x32xf32> to vector<4x32xf32>
    %c0_925 = arith.constant 0 : index
    %c384_926 = arith.constant 384 : index
    %633 = vector.load %arg15[%c0_925, %c384_926] : memref<5x576xf32, #tpu.memory_space<vmem>>, vector<4x32xf32>
    tpu.vector_store %arg15[%c0_925, %c384_926], %632 {strides = array<i32>} : memref<5x576xf32, #tpu.memory_space<vmem>>, vector<4x32xf32>,
    %c9_927 = arith.constant 9 : index
    %c0_928 = arith.constant 0 : index
    %c0_929 = arith.constant 0 : index
    %634 = vector.load %arg13[%c9_927, %c0_928, %c0_929] : memref<10x5x32xf32, #tpu.memory_space<vmem>>, vector<1x4x32xf32>
    %635 = vector.shape_cast %634 : vector<1x4x32xf32> to vector<4x32xf32>
    %c0_930 = arith.constant 0 : index
    %c416_931 = arith.constant 416 : index
    %636 = vector.load %arg15[%c0_930, %c416_931] : memref<5x576xf32, #tpu.memory_space<vmem>>, vector<4x32xf32>
    tpu.vector_store %arg15[%c0_930, %c416_931], %635 {strides = array<i32>} : memref<5x576xf32, #tpu.memory_space<vmem>>, vector<4x32xf32>,
    %c9_932 = arith.constant 9 : index
    %c1_933 = arith.constant 1 : index
    %c0_934 = arith.constant 0 : index
    %637 = vector.load %arg12[%c9_932, %c1_933, %c0_934] : memref<10x5x32xf32, #tpu.memory_space<vmem>>, vector<1x4x32xf32>
    %638 = vector.shape_cast %637 : vector<1x4x32xf32> to vector<4x32xf32>
    %c0_935 = arith.constant 0 : index
    %c448_936 = arith.constant 448 : index
    %639 = vector.load %arg15[%c0_935, %c448_936] : memref<5x576xf32, #tpu.memory_space<vmem>>, vector<4x32xf32>
    tpu.vector_store %arg15[%c0_935, %c448_936], %638 {strides = array<i32>} : memref<5x576xf32, #tpu.memory_space<vmem>>, vector<4x32xf32>,
    %c9_937 = arith.constant 9 : index
    %c1_938 = arith.constant 1 : index
    %c0_939 = arith.constant 0 : index
    %640 = vector.load %arg13[%c9_937, %c1_938, %c0_939] : memref<10x5x32xf32, #tpu.memory_space<vmem>>, vector<1x4x32xf32>
    %641 = vector.shape_cast %640 : vector<1x4x32xf32> to vector<4x32xf32>
    %c0_940 = arith.constant 0 : index
    %c480_941 = arith.constant 480 : index
    %642 = vector.load %arg15[%c0_940, %c480_941] : memref<5x576xf32, #tpu.memory_space<vmem>>, vector<4x32xf32>
    tpu.vector_store %arg15[%c0_940, %c480_941], %641 {strides = array<i32>} : memref<5x576xf32, #tpu.memory_space<vmem>>, vector<4x32xf32>,
    %c0_942 = arith.constant 0 : index
    %c0_943 = arith.constant 0 : index
    %643 = vector.load %arg15[%c0_942, %c0_943] : memref<5x576xf32, #tpu.memory_space<vmem>>, vector<4x512xf32>
    %cst_944 = arith.constant dense<0.000000e+00> : vector<4x64xf32>
    %644 = tpu.matmul %643, %422, %cst_944 {dimension_numbers = #tpu.dot_dimension_numbers<[1], [0], [0], [1], [0, 0, 1, 1], [], []>} : vector<4x512xf32>, vector<512x64xf32>, vector<4x64xf32> -> vector<4x64xf32>
    %645 = vector.broadcast %423 : vector<1x64xf32> to vector<4x64xf32>
    %646 = arith.addf %644, %645 : vector<4x64xf32>
    %cst_945 = arith.constant 0.000000e+00 : f32
    %647 = vector.broadcast %cst_945 : f32 to vector<4x64xf32>
    %648 = arith.maximumf %646, %647 : vector<4x64xf32>
    %c3_946 = arith.constant 3 : index
    %c0_947 = arith.constant 0 : index
    %c0_948 = arith.constant 0 : index
    %649 = vector.load %arg14[%c3_946, %c0_947, %c0_948] : memref<4x4x64xf32, #tpu.memory_space<vmem>>, vector<1x4x64xf32>
    %650 = vector.shape_cast %649 : vector<1x4x64xf32> to vector<4x64xf32>
    %651 = vector.shape_cast %648 : vector<4x64xf32> to vector<1x4x64xf32>
    tpu.vector_store %arg14[%c3_946, %c0_947, %c0_948], %651 {strides = array<i32>} : memref<4x4x64xf32, #tpu.memory_space<vmem>>, vector<1x4x64xf32>,
    %c0_949 = arith.constant 0 : index
    %c0_950 = arith.constant 0 : index
    %652 = vector.load %arg7[%c0_949, %c0_950] : memref<576x64xf32, #tpu.memory_space<vmem>>, vector<576x64xf32>
    %c0_951 = arith.constant 0 : index
    %c0_952 = arith.constant 0 : index
    %653 = vector.load %arg8[%c0_951, %c0_952] : memref<1x64xf32, #tpu.memory_space<vmem>>, vector<1x64xf32>
    %c0_953 = arith.constant 0 : index
    %c0_954 = arith.constant 0 : index
    %c0_955 = arith.constant 0 : index
    %654 = vector.load %arg14[%c0_953, %c0_954, %c0_955] : memref<4x4x64xf32, #tpu.memory_space<vmem>>, vector<1x2x64xf32>
    %655 = vector.shape_cast %654 : vector<1x2x64xf32> to vector<2x64xf32>
    %c0_956 = arith.constant 0 : index
    %c0_957 = arith.constant 0 : index
    %656 = vector.load %arg15[%c0_956, %c0_957] : memref<5x576xf32, #tpu.memory_space<vmem>>, vector<2x64xf32>
    tpu.vector_store %arg15[%c0_956, %c0_957], %655 {strides = array<i32>} : memref<5x576xf32, #tpu.memory_space<vmem>>, vector<2x64xf32>,
    %c0_958 = arith.constant 0 : index
    %c1_959 = arith.constant 1 : index
    %c0_960 = arith.constant 0 : index
    %657 = vector.load %arg14[%c0_958, %c1_959, %c0_960] : memref<4x4x64xf32, #tpu.memory_space<vmem>>, vector<1x2x64xf32>
    %658 = vector.shape_cast %657 : vector<1x2x64xf32> to vector<2x64xf32>
    %c0_961 = arith.constant 0 : index
    %c64_962 = arith.constant 64 : index
    %659 = vector.load %arg15[%c0_961, %c64_962] : memref<5x576xf32, #tpu.memory_space<vmem>>, vector<2x64xf32>
    tpu.vector_store %arg15[%c0_961, %c64_962], %658 {strides = array<i32>} : memref<5x576xf32, #tpu.memory_space<vmem>>, vector<2x64xf32>,
    %c0_963 = arith.constant 0 : index
    %c2_964 = arith.constant 2 : index
    %c0_965 = arith.constant 0 : index
    %660 = vector.load %arg14[%c0_963, %c2_964, %c0_965] : memref<4x4x64xf32, #tpu.memory_space<vmem>>, vector<1x2x64xf32>
    %661 = vector.shape_cast %660 : vector<1x2x64xf32> to vector<2x64xf32>
    %c0_966 = arith.constant 0 : index
    %c128_967 = arith.constant 128 : index
    %662 = vector.load %arg15[%c0_966, %c128_967] : memref<5x576xf32, #tpu.memory_space<vmem>>, vector<2x64xf32>
    tpu.vector_store %arg15[%c0_966, %c128_967], %661 {strides = array<i32>} : memref<5x576xf32, #tpu.memory_space<vmem>>, vector<2x64xf32>,
    %c1_968 = arith.constant 1 : index
    %c0_969 = arith.constant 0 : index
    %c0_970 = arith.constant 0 : index
    %663 = vector.load %arg14[%c1_968, %c0_969, %c0_970] : memref<4x4x64xf32, #tpu.memory_space<vmem>>, vector<1x2x64xf32>
    %664 = vector.shape_cast %663 : vector<1x2x64xf32> to vector<2x64xf32>
    %c0_971 = arith.constant 0 : index
    %c192_972 = arith.constant 192 : index
    %665 = vector.load %arg15[%c0_971, %c192_972] : memref<5x576xf32, #tpu.memory_space<vmem>>, vector<2x64xf32>
    tpu.vector_store %arg15[%c0_971, %c192_972], %664 {strides = array<i32>} : memref<5x576xf32, #tpu.memory_space<vmem>>, vector<2x64xf32>,
    %c1_973 = arith.constant 1 : index
    %c1_974 = arith.constant 1 : index
    %c0_975 = arith.constant 0 : index
    %666 = vector.load %arg14[%c1_973, %c1_974, %c0_975] : memref<4x4x64xf32, #tpu.memory_space<vmem>>, vector<1x2x64xf32>
    %667 = vector.shape_cast %666 : vector<1x2x64xf32> to vector<2x64xf32>
    %c0_976 = arith.constant 0 : index
    %c256_977 = arith.constant 256 : index
    %668 = vector.load %arg15[%c0_976, %c256_977] : memref<5x576xf32, #tpu.memory_space<vmem>>, vector<2x64xf32>
    tpu.vector_store %arg15[%c0_976, %c256_977], %667 {strides = array<i32>} : memref<5x576xf32, #tpu.memory_space<vmem>>, vector<2x64xf32>,
    %c1_978 = arith.constant 1 : index
    %c2_979 = arith.constant 2 : index
    %c0_980 = arith.constant 0 : index
    %669 = vector.load %arg14[%c1_978, %c2_979, %c0_980] : memref<4x4x64xf32, #tpu.memory_space<vmem>>, vector<1x2x64xf32>
    %670 = vector.shape_cast %669 : vector<1x2x64xf32> to vector<2x64xf32>
    %c0_981 = arith.constant 0 : index
    %c320_982 = arith.constant 320 : index
    %671 = vector.load %arg15[%c0_981, %c320_982] : memref<5x576xf32, #tpu.memory_space<vmem>>, vector<2x64xf32>
    tpu.vector_store %arg15[%c0_981, %c320_982], %670 {strides = array<i32>} : memref<5x576xf32, #tpu.memory_space<vmem>>, vector<2x64xf32>,
    %c2_983 = arith.constant 2 : index
    %c0_984 = arith.constant 0 : index
    %c0_985 = arith.constant 0 : index
    %672 = vector.load %arg14[%c2_983, %c0_984, %c0_985] : memref<4x4x64xf32, #tpu.memory_space<vmem>>, vector<1x2x64xf32>
    %673 = vector.shape_cast %672 : vector<1x2x64xf32> to vector<2x64xf32>
    %c0_986 = arith.constant 0 : index
    %c384_987 = arith.constant 384 : index
    %674 = vector.load %arg15[%c0_986, %c384_987] : memref<5x576xf32, #tpu.memory_space<vmem>>, vector<2x64xf32>
    tpu.vector_store %arg15[%c0_986, %c384_987], %673 {strides = array<i32>} : memref<5x576xf32, #tpu.memory_space<vmem>>, vector<2x64xf32>,
    %c2_988 = arith.constant 2 : index
    %c1_989 = arith.constant 1 : index
    %c0_990 = arith.constant 0 : index
    %675 = vector.load %arg14[%c2_988, %c1_989, %c0_990] : memref<4x4x64xf32, #tpu.memory_space<vmem>>, vector<1x2x64xf32>
    %676 = vector.shape_cast %675 : vector<1x2x64xf32> to vector<2x64xf32>
    %c0_991 = arith.constant 0 : index
    %c448_992 = arith.constant 448 : index
    %677 = vector.load %arg15[%c0_991, %c448_992] : memref<5x576xf32, #tpu.memory_space<vmem>>, vector<2x64xf32>
    tpu.vector_store %arg15[%c0_991, %c448_992], %676 {strides = array<i32>} : memref<5x576xf32, #tpu.memory_space<vmem>>, vector<2x64xf32>,
    %c2_993 = arith.constant 2 : index
    %c2_994 = arith.constant 2 : index
    %c0_995 = arith.constant 0 : index
    %678 = vector.load %arg14[%c2_993, %c2_994, %c0_995] : memref<4x4x64xf32, #tpu.memory_space<vmem>>, vector<1x2x64xf32>
    %679 = vector.shape_cast %678 : vector<1x2x64xf32> to vector<2x64xf32>
    %c0_996 = arith.constant 0 : index
    %c512 = arith.constant 512 : index
    %680 = vector.load %arg15[%c0_996, %c512] : memref<5x576xf32, #tpu.memory_space<vmem>>, vector<2x64xf32>
    tpu.vector_store %arg15[%c0_996, %c512], %679 {strides = array<i32>} : memref<5x576xf32, #tpu.memory_space<vmem>>, vector<2x64xf32>,
    %c0_997 = arith.constant 0 : index
    %c0_998 = arith.constant 0 : index
    %681 = vector.load %arg15[%c0_997, %c0_998] : memref<5x576xf32, #tpu.memory_space<vmem>>, vector<2x576xf32>
    %cst_999 = arith.constant dense<0.000000e+00> : vector<2x64xf32>
    %682 = tpu.matmul %681, %652, %cst_999 {dimension_numbers = #tpu.dot_dimension_numbers<[1], [0], [0], [1], [0, 0, 1, 1], [], []>} : vector<2x576xf32>, vector<576x64xf32>, vector<2x64xf32> -> vector<2x64xf32>
    %683 = vector.broadcast %653 : vector<1x64xf32> to vector<2x64xf32>
    %684 = arith.addf %682, %683 : vector<2x64xf32>
    %cst_1000 = arith.constant 0.000000e+00 : f32
    %685 = vector.broadcast %cst_1000 : f32 to vector<2x64xf32>
    %686 = arith.maximumf %684, %685 : vector<2x64xf32>
    %687 = vector.extract_strided_slice %686 {offsets = [0, 0], sizes = [1, 64], strides = [1, 1]} : vector<2x64xf32> to vector<1x64xf32>
    %c0_1001 = arith.constant 0 : index
    %c0_1002 = arith.constant 0 : index
    %688 = vector.load %arg16[%c0_1001, %c0_1002] : memref<1x256xf32, #tpu.memory_space<vmem>>, vector<1x64xf32>
    tpu.vector_store %arg16[%c0_1001, %c0_1002], %687 {strides = array<i32>} : memref<1x256xf32, #tpu.memory_space<vmem>>, vector<1x64xf32>,
    %689 = vector.extract_strided_slice %686 {offsets = [1, 0], sizes = [1, 64], strides = [1, 1]} : vector<2x64xf32> to vector<1x64xf32>
    %c0_1003 = arith.constant 0 : index
    %c64_1004 = arith.constant 64 : index
    %690 = vector.load %arg16[%c0_1003, %c64_1004] : memref<1x256xf32, #tpu.memory_space<vmem>>, vector<1x64xf32>
    tpu.vector_store %arg16[%c0_1003, %c64_1004], %689 {strides = array<i32>} : memref<1x256xf32, #tpu.memory_space<vmem>>, vector<1x64xf32>,
    %c1_1005 = arith.constant 1 : index
    %c0_1006 = arith.constant 0 : index
    %c0_1007 = arith.constant 0 : index
    %691 = vector.load %arg14[%c1_1005, %c0_1006, %c0_1007] : memref<4x4x64xf32, #tpu.memory_space<vmem>>, vector<1x2x64xf32>
    %692 = vector.shape_cast %691 : vector<1x2x64xf32> to vector<2x64xf32>
    %c0_1008 = arith.constant 0 : index
    %c0_1009 = arith.constant 0 : index
    %693 = vector.load %arg15[%c0_1008, %c0_1009] : memref<5x576xf32, #tpu.memory_space<vmem>>, vector<2x64xf32>
    tpu.vector_store %arg15[%c0_1008, %c0_1009], %692 {strides = array<i32>} : memref<5x576xf32, #tpu.memory_space<vmem>>, vector<2x64xf32>,
    %c1_1010 = arith.constant 1 : index
    %c1_1011 = arith.constant 1 : index
    %c0_1012 = arith.constant 0 : index
    %694 = vector.load %arg14[%c1_1010, %c1_1011, %c0_1012] : memref<4x4x64xf32, #tpu.memory_space<vmem>>, vector<1x2x64xf32>
    %695 = vector.shape_cast %694 : vector<1x2x64xf32> to vector<2x64xf32>
    %c0_1013 = arith.constant 0 : index
    %c64_1014 = arith.constant 64 : index
    %696 = vector.load %arg15[%c0_1013, %c64_1014] : memref<5x576xf32, #tpu.memory_space<vmem>>, vector<2x64xf32>
    tpu.vector_store %arg15[%c0_1013, %c64_1014], %695 {strides = array<i32>} : memref<5x576xf32, #tpu.memory_space<vmem>>, vector<2x64xf32>,
    %c1_1015 = arith.constant 1 : index
    %c2_1016 = arith.constant 2 : index
    %c0_1017 = arith.constant 0 : index
    %697 = vector.load %arg14[%c1_1015, %c2_1016, %c0_1017] : memref<4x4x64xf32, #tpu.memory_space<vmem>>, vector<1x2x64xf32>
    %698 = vector.shape_cast %697 : vector<1x2x64xf32> to vector<2x64xf32>
    %c0_1018 = arith.constant 0 : index
    %c128_1019 = arith.constant 128 : index
    %699 = vector.load %arg15[%c0_1018, %c128_1019] : memref<5x576xf32, #tpu.memory_space<vmem>>, vector<2x64xf32>
    tpu.vector_store %arg15[%c0_1018, %c128_1019], %698 {strides = array<i32>} : memref<5x576xf32, #tpu.memory_space<vmem>>, vector<2x64xf32>,
    %c2_1020 = arith.constant 2 : index
    %c0_1021 = arith.constant 0 : index
    %c0_1022 = arith.constant 0 : index
    %700 = vector.load %arg14[%c2_1020, %c0_1021, %c0_1022] : memref<4x4x64xf32, #tpu.memory_space<vmem>>, vector<1x2x64xf32>
    %701 = vector.shape_cast %700 : vector<1x2x64xf32> to vector<2x64xf32>
    %c0_1023 = arith.constant 0 : index
    %c192_1024 = arith.constant 192 : index
    %702 = vector.load %arg15[%c0_1023, %c192_1024] : memref<5x576xf32, #tpu.memory_space<vmem>>, vector<2x64xf32>
    tpu.vector_store %arg15[%c0_1023, %c192_1024], %701 {strides = array<i32>} : memref<5x576xf32, #tpu.memory_space<vmem>>, vector<2x64xf32>,
    %c2_1025 = arith.constant 2 : index
    %c1_1026 = arith.constant 1 : index
    %c0_1027 = arith.constant 0 : index
    %703 = vector.load %arg14[%c2_1025, %c1_1026, %c0_1027] : memref<4x4x64xf32, #tpu.memory_space<vmem>>, vector<1x2x64xf32>
    %704 = vector.shape_cast %703 : vector<1x2x64xf32> to vector<2x64xf32>
    %c0_1028 = arith.constant 0 : index
    %c256_1029 = arith.constant 256 : index
    %705 = vector.load %arg15[%c0_1028, %c256_1029] : memref<5x576xf32, #tpu.memory_space<vmem>>, vector<2x64xf32>
    tpu.vector_store %arg15[%c0_1028, %c256_1029], %704 {strides = array<i32>} : memref<5x576xf32, #tpu.memory_space<vmem>>, vector<2x64xf32>,
    %c2_1030 = arith.constant 2 : index
    %c2_1031 = arith.constant 2 : index
    %c0_1032 = arith.constant 0 : index
    %706 = vector.load %arg14[%c2_1030, %c2_1031, %c0_1032] : memref<4x4x64xf32, #tpu.memory_space<vmem>>, vector<1x2x64xf32>
    %707 = vector.shape_cast %706 : vector<1x2x64xf32> to vector<2x64xf32>
    %c0_1033 = arith.constant 0 : index
    %c320_1034 = arith.constant 320 : index
    %708 = vector.load %arg15[%c0_1033, %c320_1034] : memref<5x576xf32, #tpu.memory_space<vmem>>, vector<2x64xf32>
    tpu.vector_store %arg15[%c0_1033, %c320_1034], %707 {strides = array<i32>} : memref<5x576xf32, #tpu.memory_space<vmem>>, vector<2x64xf32>,
    %c3_1035 = arith.constant 3 : index
    %c0_1036 = arith.constant 0 : index
    %c0_1037 = arith.constant 0 : index
    %709 = vector.load %arg14[%c3_1035, %c0_1036, %c0_1037] : memref<4x4x64xf32, #tpu.memory_space<vmem>>, vector<1x2x64xf32>
    %710 = vector.shape_cast %709 : vector<1x2x64xf32> to vector<2x64xf32>
    %c0_1038 = arith.constant 0 : index
    %c384_1039 = arith.constant 384 : index
    %711 = vector.load %arg15[%c0_1038, %c384_1039] : memref<5x576xf32, #tpu.memory_space<vmem>>, vector<2x64xf32>
    tpu.vector_store %arg15[%c0_1038, %c384_1039], %710 {strides = array<i32>} : memref<5x576xf32, #tpu.memory_space<vmem>>, vector<2x64xf32>,
    %c3_1040 = arith.constant 3 : index
    %c1_1041 = arith.constant 1 : index
    %c0_1042 = arith.constant 0 : index
    %712 = vector.load %arg14[%c3_1040, %c1_1041, %c0_1042] : memref<4x4x64xf32, #tpu.memory_space<vmem>>, vector<1x2x64xf32>
    %713 = vector.shape_cast %712 : vector<1x2x64xf32> to vector<2x64xf32>
    %c0_1043 = arith.constant 0 : index
    %c448_1044 = arith.constant 448 : index
    %714 = vector.load %arg15[%c0_1043, %c448_1044] : memref<5x576xf32, #tpu.memory_space<vmem>>, vector<2x64xf32>
    tpu.vector_store %arg15[%c0_1043, %c448_1044], %713 {strides = array<i32>} : memref<5x576xf32, #tpu.memory_space<vmem>>, vector<2x64xf32>,
    %c3_1045 = arith.constant 3 : index
    %c2_1046 = arith.constant 2 : index
    %c0_1047 = arith.constant 0 : index
    %715 = vector.load %arg14[%c3_1045, %c2_1046, %c0_1047] : memref<4x4x64xf32, #tpu.memory_space<vmem>>, vector<1x2x64xf32>
    %716 = vector.shape_cast %715 : vector<1x2x64xf32> to vector<2x64xf32>
    %c0_1048 = arith.constant 0 : index
    %c512_1049 = arith.constant 512 : index
    %717 = vector.load %arg15[%c0_1048, %c512_1049] : memref<5x576xf32, #tpu.memory_space<vmem>>, vector<2x64xf32>
    tpu.vector_store %arg15[%c0_1048, %c512_1049], %716 {strides = array<i32>} : memref<5x576xf32, #tpu.memory_space<vmem>>, vector<2x64xf32>,
    %c0_1050 = arith.constant 0 : index
    %c0_1051 = arith.constant 0 : index
    %718 = vector.load %arg15[%c0_1050, %c0_1051] : memref<5x576xf32, #tpu.memory_space<vmem>>, vector<2x576xf32>
    %cst_1052 = arith.constant dense<0.000000e+00> : vector<2x64xf32>
    %719 = tpu.matmul %718, %652, %cst_1052 {dimension_numbers = #tpu.dot_dimension_numbers<[1], [0], [0], [1], [0, 0, 1, 1], [], []>} : vector<2x576xf32>, vector<576x64xf32>, vector<2x64xf32> -> vector<2x64xf32>
    %720 = vector.broadcast %653 : vector<1x64xf32> to vector<2x64xf32>
    %721 = arith.addf %719, %720 : vector<2x64xf32>
    %cst_1053 = arith.constant 0.000000e+00 : f32
    %722 = vector.broadcast %cst_1053 : f32 to vector<2x64xf32>
    %723 = arith.maximumf %721, %722 : vector<2x64xf32>
    %724 = vector.extract_strided_slice %723 {offsets = [0, 0], sizes = [1, 64], strides = [1, 1]} : vector<2x64xf32> to vector<1x64xf32>
    %c0_1054 = arith.constant 0 : index
    %c128_1055 = arith.constant 128 : index
    %725 = vector.load %arg16[%c0_1054, %c128_1055] : memref<1x256xf32, #tpu.memory_space<vmem>>, vector<1x64xf32>
    tpu.vector_store %arg16[%c0_1054, %c128_1055], %724 {strides = array<i32>} : memref<1x256xf32, #tpu.memory_space<vmem>>, vector<1x64xf32>,
    %726 = vector.extract_strided_slice %723 {offsets = [1, 0], sizes = [1, 64], strides = [1, 1]} : vector<2x64xf32> to vector<1x64xf32>
    %c0_1056 = arith.constant 0 : index
    %c192_1057 = arith.constant 192 : index
    %727 = vector.load %arg16[%c0_1056, %c192_1057] : memref<1x256xf32, #tpu.memory_space<vmem>>, vector<1x64xf32>
    tpu.vector_store %arg16[%c0_1056, %c192_1057], %726 {strides = array<i32>} : memref<1x256xf32, #tpu.memory_space<vmem>>, vector<1x64xf32>,
    %c0_1058 = arith.constant 0 : index
    %c0_1059 = arith.constant 0 : index
    %728 = vector.load %arg16[%c0_1058, %c0_1059] : memref<1x256xf32, #tpu.memory_space<vmem>>, vector<1x256xf32>
    %c0_1060 = arith.constant 0 : index
    %c0_1061 = arith.constant 0 : index
    %729 = vector.load %arg9[%c0_1060, %c0_1061] : memref<256x128xf32, #tpu.memory_space<vmem>>, vector<256x128xf32>
    %cst_1062 = arith.constant dense<0.000000e+00> : vector<1x128xf32>
    %730 = tpu.matmul %728, %729, %cst_1062 {dimension_numbers = #tpu.dot_dimension_numbers<[1], [0], [0], [1], [0, 0, 1, 1], [], []>} : vector<1x256xf32>, vector<256x128xf32>, vector<1x128xf32> -> vector<1x128xf32>
    %c0_1063 = arith.constant 0 : index
    %c0_1064 = arith.constant 0 : index
    %731 = vector.load %arg10[%c0_1063, %c0_1064] : memref<1x128xf32, #tpu.memory_space<vmem>>, vector<1x128xf32>
    %732 = arith.addf %730, %731 : vector<1x128xf32>
    %cst_1065 = arith.constant 0.000000e+00 : f32
    %733 = vector.broadcast %cst_1065 : f32 to vector<1x128xf32>
    %734 = arith.maximumf %732, %733 : vector<1x128xf32>
    %c0_1066 = arith.constant 0 : index
    %c0_1067 = arith.constant 0 : index
    %c0_1068 = arith.constant 0 : index
    %735 = vector.load %arg11[%c0_1066, %c0_1067, %c0_1068] : memref<1x1x128xf32, #tpu.memory_space<vmem>>, vector<1x1x128xf32>
    %736 = vector.shape_cast %735 : vector<1x1x128xf32> to vector<1x128xf32>
    %737 = vector.shape_cast %734 : vector<1x128xf32> to vector<1x1x128xf32>
    tpu.vector_store %arg11[%c0_1066, %c0_1067, %c0_1068], %737 {strides = array<i32>} : memref<1x1x128xf32, #tpu.memory_space<vmem>>, vector<1x1x128xf32>,
    return
  }
  func.func @transform_0(%arg0: i32) -> (i32, i32, i32, i32) {
    %c0_i32 = arith.constant 0 : i32
    %c0_i32_0 = arith.constant 0 : i32
    %c0_i32_1 = arith.constant 0 : i32
    %c0_i32_2 = arith.constant 0 : i32
    return %arg0, %c0_i32, %c0_i32_0, %c0_i32_1 : i32, i32, i32, i32
  }
  func.func @transform_1(%arg0: i32) -> (i32, i32, i32, i32) {
    %c0_i32 = arith.constant 0 : i32
    %c0_i32_0 = arith.constant 0 : i32
    %c0_i32_1 = arith.constant 0 : i32
    %c0_i32_2 = arith.constant 0 : i32
    return %arg0, %c0_i32, %c0_i32_0, %c0_i32_1 : i32, i32, i32, i32
  }
  func.func @transform_2(%arg0: i32) -> (i32, i32) {
    %c0_i32 = arith.constant 0 : i32
    %c0_i32_0 = arith.constant 0 : i32
    %c0_i32_1 = arith.constant 0 : i32
    return %c0_i32, %c0_i32_0 : i32, i32
  }
  func.func @transform_3(%arg0: i32) -> (i32, i32) {
    %c0_i32 = arith.constant 0 : i32
    %c0_i32_0 = arith.constant 0 : i32
    %c0_i32_1 = arith.constant 0 : i32
    return %c0_i32, %c0_i32_0 : i32, i32
  }
  func.func @transform_4(%arg0: i32) -> (i32, i32) {
    %c0_i32 = arith.constant 0 : i32
    %c0_i32_0 = arith.constant 0 : i32
    %c0_i32_1 = arith.constant 0 : i32
    return %c0_i32, %c0_i32_0 : i32, i32
  }
  func.func @transform_5(%arg0: i32) -> (i32, i32) {
    %c0_i32 = arith.constant 0 : i32
    %c0_i32_0 = arith.constant 0 : i32
    %c0_i32_1 = arith.constant 0 : i32
    return %c0_i32, %c0_i32_0 : i32, i32
  }
  func.func @transform_6(%arg0: i32) -> (i32, i32) {
    %c0_i32 = arith.constant 0 : i32
    %c0_i32_0 = arith.constant 0 : i32
    %c0_i32_1 = arith.constant 0 : i32
    return %c0_i32, %c0_i32_0 : i32, i32
  }
  func.func @transform_7(%arg0: i32) -> (i32, i32) {
    %c0_i32 = arith.constant 0 : i32
    %c0_i32_0 = arith.constant 0 : i32
    %c0_i32_1 = arith.constant 0 : i32
    return %c0_i32, %c0_i32_0 : i32, i32
  }
  func.func @transform_8(%arg0: i32) -> (i32, i32) {
    %c0_i32 = arith.constant 0 : i32
    %c0_i32_0 = arith.constant 0 : i32
    %c0_i32_1 = arith.constant 0 : i32
    return %c0_i32, %c0_i32_0 : i32, i32
  }
  func.func @transform_9(%arg0: i32) -> (i32, i32) {
    %c0_i32 = arith.constant 0 : i32
    %c0_i32_0 = arith.constant 0 : i32
    %c0_i32_1 = arith.constant 0 : i32
    return %c0_i32, %c0_i32_0 : i32, i32
  }
  func.func @transform_10(%arg0: i32) -> (i32, i32, i32) {
    %c0_i32 = arith.constant 0 : i32
    %c0_i32_0 = arith.constant 0 : i32
    %c0_i32_1 = arith.constant 0 : i32
    return %arg0, %c0_i32, %c0_i32_0 : i32, i32, i32
  }
}

</mosaic_0001>

<llo_original>
// kernel: nature_cnn_forward.1
$region0: #{nature_cnn_forward.1}
  #allocation0 [shape = 'u32[]', space=smem, size = 0x4, offset = 0x4, fixed_abs, tag = 'smem constant byte address 0x4 - core index']
  #allocation1 [shape = 'u32[144,128]{1,0:T(1,128)}', space=vmem, size = 0x12000, scoped, tag = 'internal scratch']
  #allocation2 [shape = 'f32[10,5,32]{2,1,0:T(8,128)}', space=vmem, size = 0xa000, scoped, tag = 'scratch operand']
  #allocation3 [shape = 'f32[10,5,32]{2,1,0:T(8,128)}', space=vmem, size = 0xa000, scoped, tag = 'scratch operand']
  #allocation4 [shape = 'f32[4,4,64]{2,1,0:T(4,128)}', space=vmem, size = 0x2000, scoped, tag = 'scratch operand']
  #allocation5 [shape = 'f32[5,576]{1,0:T(8,128)}', space=vmem, size = 0x5000, scoped, tag = 'scratch operand']
  #allocation6 [shape = 'f32[1,256]{1,0:T(1,128)}', space=vmem, size = 0x400, scoped, tag = 'scratch operand']
  %s0 = inlined_call_operand.vmem [shape: f32[2,11,6,64], index: 0, kind: input, shape index: {}]
  %s1 = inlined_call_operand.vmem [shape: f32[2,11,5,64], index: 1, kind: input, shape index: {}]
  %s2 = inlined_call_operand.vmem [shape: f32[256,32], index: 2, kind: input, shape index: {}]
  %s3 = inlined_call_operand.vmem [shape: f32[1,32], index: 3, kind: input, shape index: {}]
  %s4 = inlined_call_operand.vmem [shape: f32[512,64], index: 4, kind: input, shape index: {}]
  %s5 = inlined_call_operand.vmem [shape: f32[1,64], index: 5, kind: input, shape index: {}]
  %s6 = inlined_call_operand.vmem [shape: f32[576,64], index: 6, kind: input, shape index: {}]
  %s7 = inlined_call_operand.vmem [shape: f32[1,64], index: 7, kind: input, shape index: {}]
  %s8 = inlined_call_operand.vmem [shape: f32[256,128], index: 8, kind: input, shape index: {}]
  %s9 = inlined_call_operand.vmem [shape: f32[1,128], index: 9, kind: input, shape index: {}]
  %s10 = inlined_call_operand.hbm [shape: f32[2,1,128], index: 10, kind: output, shape index: {}]
  %s11 = sld [smem:[#allocation0]]
  $region73: #{nature_cnn_forward.1} parent=0
    _
  %s13 = ssub.s32 1, %s11
  %s14 = scalar_select 0, %s13, %s11
  $region1: #{nature_cnn_forward.1} parent=0
    #allocation7 [shape = 'u8[1024]{0}', space=vmem, size = 0x400, scoped, tag = 'output window, operand 0']
    #allocation8 [shape = 's32[2]{0}', space=sflag, size = 0x8, scoped, tag = 'scoped memory for nature_cnn_forward.1']
    %15 = vsyncpa [#allocation8], 0
    %s16 = scalar_lea.sflag [#allocation8], 1
    %17 = vsyncpa %s16, 0
    loop: start=0, step=1, limit=4
    $region2: #{nature_cnn_forward.1} parent=1 // loop_pre_header
      _
    $region3: #{nature_cnn_forward.1} parent=1 // loop_header
      %s19 = sphi 0, %s23
      %p20 = scmp.ge.s32.totalorder %s19, 4
      %s29 = sphi 0, %s31
      %s32 = sphi 0, %s29
      %s33 = sphi 0, %s32
      %s49 = sphi 0, %s33
      %s55 = sphi 0, %s57
      %s58 = sphi 0, %s55
      %s59 = sphi 0, %s58
      %s75 = sphi 0, %s59
      %s79 = sphi 0, %s79
      %s81 = sphi 0, %s79
      %s82 = sphi 0, %s81
      %s96 = sphi 0, %s82
      %s100 = sphi 0, %s100
      %s102 = sphi 0, %s100
      %s103 = sphi 0, %s102
      %s117 = sphi 0, %s103
      %s121 = sphi 0, %s121
      %s123 = sphi 0, %s121
      %s124 = sphi 0, %s123
      %s138 = sphi 0, %s124
      %s142 = sphi 0, %s142
      %s144 = sphi 0, %s142
      %s145 = sphi 0, %s144
      %s159 = sphi 0, %s145
      %s163 = sphi 0, %s163
      %s165 = sphi 0, %s163
      %s166 = sphi 0, %s165
      %s180 = sphi 0, %s166
      %s184 = sphi 0, %s184
      %s186 = sphi 0, %s184
      %s187 = sphi 0, %s186
      %s201 = sphi 0, %s187
      %s205 = sphi 0, %s205
      %s207 = sphi 0, %s205
      %s208 = sphi 0, %s207
      %s222 = sphi 0, %s208
      %s226 = sphi 0, %s226
      %s228 = sphi 0, %s226
      %s229 = sphi 0, %s228
      %s243 = sphi 0, %s229
      %s249 = sphi 0, %s251
      %s252 = sphi 0, %s249
      %s253 = sphi 0, %s252
      %s269 = sphi 0, %s253
    $region4: #{nature_cnn_forward.1} parent=1 // loop_header_branch
      %22 = sbr.rel (%p20) target = $region8
    $region5: #{nature_cnn_forward.1} parent=1 // loop_body
      %s24 = ssub.s32 %s19, 1
      %s25 = ssub.s32 %s19, 2
      %s26 = sadd.s32 %s19, 1
      %s27 = ssub.s32 %s19, %s26
      %p28 = scmp.eq.s32.totalorder %s27, 0
      %s30 = sadd.s32 %s29, 1
      %s31 = scalar_select %p28, %s29, %s30
      %p34 = pneg %p28
      %p35 = scmp.eq.s32.totalorder %s19, 1
      %p36 = por %p34, %p35
      %p37 = scmp.ne.s32.totalorder %s29, %s32
      %p38 = scmp.eq.s32.totalorder %s19, 0
      %p39 = por %p37, %p38
      %p40 = scmp.ne.s32.totalorder %s29, %s32
      %p41 = scmp.eq.s32.totalorder %s24, 1
      %p42 = por %p40, %p41
      %p43 = scmp.ne.s32.totalorder %s32, %s33
      %p44 = scmp.eq.s32.totalorder %s24, 0
      %p45 = por %p43, %p44
      %p46 = scmp.ne.s32.totalorder %s32, %s33
      %p47 = scmp.eq.s32.totalorder %s25, 1
      %p48 = por %p46, %p47
      %p50 = scmp.ne.s32.totalorder %s33, %s49
      %p51 = scmp.eq.s32.totalorder %s25, 0
      %p52 = por %p50, %p51
      %s53 = ssub.s32 %s19, %s26
      %p54 = scmp.eq.s32.totalorder %s53, 0
      %s56 = sadd.s32 %s55, 1
      %s57 = scalar_select %p54, %s55, %s56
      %p60 = pneg %p54
      %p61 = scmp.eq.s32.totalorder %s19, 1
      %p62 = por %p60, %p61
      %p63 = scmp.ne.s32.totalorder %s55, %s58
      %p64 = scmp.eq.s32.totalorder %s19, 0
      %p65 = por %p63, %p64
      %p66 = scmp.ne.s32.totalorder %s55, %s58
      %p67 = scmp.eq.s32.totalorder %s24, 1
      %p68 = por %p66, %p67
      %p69 = scmp.ne.s32.totalorder %s58, %s59
      %p70 = scmp.eq.s32.totalorder %s24, 0
      %p71 = por %p69, %p70
      %p72 = scmp.ne.s32.totalorder %s58, %s59
      %p73 = scmp.eq.s32.totalorder %s25, 1
      %p74 = por %p72, %p73
      %p76 = scmp.ne.s32.totalorder %s59, %s75
      %p77 = scmp.eq.s32.totalorder %s25, 0
      %p78 = por %p76, %p77
      %s80 = sadd.s32 %s79, 1
      %p83 = scmp.eq.s32.totalorder %s19, 1
      %p84 = scmp.ne.s32.totalorder %s79, %s81
      %p85 = scmp.eq.s32.totalorder %s19, 0
      %p86 = por %p84, %p85
      %p87 = scmp.ne.s32.totalorder %s79, %s81
      %p88 = scmp.eq.s32.totalorder %s24, 1
      %p89 = por %p87, %p88
      %p90 = scmp.ne.s32.totalorder %s81, %s82
      %p91 = scmp.eq.s32.totalorder %s24, 0
      %p92 = por %p90, %p91
      %p93 = scmp.ne.s32.totalorder %s81, %s82
      %p94 = scmp.eq.s32.totalorder %s25, 1
      %p95 = por %p93, %p94
      %p97 = scmp.ne.s32.totalorder %s82, %s96
      %p98 = scmp.eq.s32.totalorder %s25, 0
      %p99 = por %p97, %p98
      %s101 = sadd.s32 %s100, 1
      %p104 = scmp.eq.s32.totalorder %s19, 1
      %p105 = scmp.ne.s32.totalorder %s100, %s102
      %p106 = scmp.eq.s32.totalorder %s19, 0
      %p107 = por %p105, %p106
      %p108 = scmp.ne.s32.totalorder %s100, %s102
      %p109 = scmp.eq.s32.totalorder %s24, 1
      %p110 = por %p108, %p109
      %p111 = scmp.ne.s32.totalorder %s102, %s103
      %p112 = scmp.eq.s32.totalorder %s24, 0
      %p113 = por %p111, %p112
      %p114 = scmp.ne.s32.totalorder %s102, %s103
      %p115 = scmp.eq.s32.totalorder %s25, 1
      %p116 = por %p114, %p115
      %p118 = scmp.ne.s32.totalorder %s103, %s117
      %p119 = scmp.eq.s32.totalorder %s25, 0
      %p120 = por %p118, %p119
      %s122 = sadd.s32 %s121, 1
      %p125 = scmp.eq.s32.totalorder %s19, 1
      %p126 = scmp.ne.s32.totalorder %s121, %s123
      %p127 = scmp.eq.s32.totalorder %s19, 0
      %p128 = por %p126, %p127
      %p129 = scmp.ne.s32.totalorder %s121, %s123
      %p130 = scmp.eq.s32.totalorder %s24, 1
      %p131 = por %p129, %p130
      %p132 = scmp.ne.s32.totalorder %s123, %s124
      %p133 = scmp.eq.s32.totalorder %s24, 0
      %p134 = por %p132, %p133
      %p135 = scmp.ne.s32.totalorder %s123, %s124
      %p136 = scmp.eq.s32.totalorder %s25, 1
      %p137 = por %p135, %p136
      %p139 = scmp.ne.s32.totalorder %s124, %s138
      %p140 = scmp.eq.s32.totalorder %s25, 0
      %p141 = por %p139, %p140
      %s143 = sadd.s32 %s142, 1
      %p146 = scmp.eq.s32.totalorder %s19, 1
      %p147 = scmp.ne.s32.totalorder %s142, %s144
      %p148 = scmp.eq.s32.totalorder %s19, 0
      %p149 = por %p147, %p148
      %p150 = scmp.ne.s32.totalorder %s142, %s144
      %p151 = scmp.eq.s32.totalorder %s24, 1
      %p152 = por %p150, %p151
      %p153 = scmp.ne.s32.totalorder %s144, %s145
      %p154 = scmp.eq.s32.totalorder %s24, 0
      %p155 = por %p153, %p154
      %p156 = scmp.ne.s32.totalorder %s144, %s145
      %p157 = scmp.eq.s32.totalorder %s25, 1
      %p158 = por %p156, %p157
      %p160 = scmp.ne.s32.totalorder %s145, %s159
      %p161 = scmp.eq.s32.totalorder %s25, 0
      %p162 = por %p160, %p161
      %s164 = sadd.s32 %s163, 1
      %p167 = scmp.eq.s32.totalorder %s19, 1
      %p168 = scmp.ne.s32.totalorder %s163, %s165
      %p169 = scmp.eq.s32.totalorder %s19, 0
      %p170 = por %p168, %p169
      %p171 = scmp.ne.s32.totalorder %s163, %s165
      %p172 = scmp.eq.s32.totalorder %s24, 1
      %p173 = por %p171, %p172
      %p174 = scmp.ne.s32.totalorder %s165, %s166
      %p175 = scmp.eq.s32.totalorder %s24, 0
      %p176 = por %p174, %p175
      %p177 = scmp.ne.s32.totalorder %s165, %s166
      %p178 = scmp.eq.s32.totalorder %s25, 1
      %p179 = por %p177, %p178
      %p181 = scmp.ne.s32.totalorder %s166, %s180
      %p182 = scmp.eq.s32.totalorder %s25, 0
      %p183 = por %p181, %p182
      %s185 = sadd.s32 %s184, 1
      %p188 = scmp.eq.s32.totalorder %s19, 1
      %p189 = scmp.ne.s32.totalorder %s184, %s186
      %p190 = scmp.eq.s32.totalorder %s19, 0
      %p191 = por %p189, %p190
      %p192 = scmp.ne.s32.totalorder %s184, %s186
      %p193 = scmp.eq.s32.totalorder %s24, 1
      %p194 = por %p192, %p193
      %p195 = scmp.ne.s32.totalorder %s186, %s187
      %p196 = scmp.eq.s32.totalorder %s24, 0
      %p197 = por %p195, %p196
      %p198 = scmp.ne.s32.totalorder %s186, %s187
      %p199 = scmp.eq.s32.totalorder %s25, 1
      %p200 = por %p198, %p199
      %p202 = scmp.ne.s32.totalorder %s187, %s201
      %p203 = scmp.eq.s32.totalorder %s25, 0
      %p204 = por %p202, %p203
      %s206 = sadd.s32 %s205, 1
      %p209 = scmp.eq.s32.totalorder %s19, 1
      %p210 = scmp.ne.s32.totalorder %s205, %s207
      %p211 = scmp.eq.s32.totalorder %s19, 0
      %p212 = por %p210, %p211
      %p213 = scmp.ne.s32.totalorder %s205, %s207
      %p214 = scmp.eq.s32.totalorder %s24, 1
      %p215 = por %p213, %p214
      %p216 = scmp.ne.s32.totalorder %s207, %s208
      %p217 = scmp.eq.s32.totalorder %s24, 0
      %p218 = por %p216, %p217
      %p219 = scmp.ne.s32.totalorder %s207, %s208
      %p220 = scmp.eq.s32.totalorder %s25, 1
      %p221 = por %p219, %p220
      %p223 = scmp.ne.s32.totalorder %s208, %s222
      %p224 = scmp.eq.s32.totalorder %s25, 0
      %p225 = por %p223, %p224
      %s227 = sadd.s32 %s226, 1
      %p230 = scmp.eq.s32.totalorder %s19, 1
      %p231 = scmp.ne.s32.totalorder %s226, %s228
      %p232 = scmp.eq.s32.totalorder %s19, 0
      %p233 = por %p231, %p232
      %p234 = scmp.ne.s32.totalorder %s226, %s228
      %p235 = scmp.eq.s32.totalorder %s24, 1
      %p236 = por %p234, %p235
      %p237 = scmp.ne.s32.totalorder %s228, %s229
      %p238 = scmp.eq.s32.totalorder %s24, 0
      %p239 = por %p237, %p238
      %p240 = scmp.ne.s32.totalorder %s228, %s229
      %p241 = scmp.eq.s32.totalorder %s25, 1
      %p242 = por %p240, %p241
      %p244 = scmp.ne.s32.totalorder %s229, %s243
      %p245 = scmp.eq.s32.totalorder %s25, 0
      %p246 = por %p244, %p245
      %s247 = ssub.s32 %s19, %s26
      %p248 = scmp.eq.s32.totalorder %s247, 0
      %s250 = sadd.s32 %s249, 1
      %s251 = scalar_select %p248, %s249, %s250
      %p254 = pneg %p248
      %p255 = scmp.eq.s32.totalorder %s19, 1
      %p256 = por %p254, %p255
      %p257 = scmp.ne.s32.totalorder %s249, %s252
      %p258 = scmp.eq.s32.totalorder %s19, 0
      %p259 = por %p257, %p258
      %p260 = scmp.ne.s32.totalorder %s249, %s252
      %p261 = scmp.eq.s32.totalorder %s24, 1
      %p262 = por %p260, %p261
      %p263 = scmp.ne.s32.totalorder %s252, %s253
      %p264 = scmp.eq.s32.totalorder %s24, 0
      %p265 = por %p263, %p264
      %p266 = scmp.ne.s32.totalorder %s252, %s253
      %p267 = scmp.eq.s32.totalorder %s25, 1
      %p268 = por %p266, %p267
      %p270 = scmp.ne.s32.totalorder %s253, %s269
      %p271 = scmp.eq.s32.totalorder %s25, 0
      %p272 = por %p270, %p271
      %p273 = scmp.le.s32.totalorder 1, %s19
      %p274 = scmp.lt.s32.totalorder %s19, 3
      %p275 = pnand %p273, %p274
      %p276 = pneg %p275
      // Predicated region
      $region9: #{nature_cnn_forward.1} parent=5 // pred_check
        _
      $region10: #{nature_cnn_forward.1} parent=5 // pred_check_branch
        %278 = sbr.rel (%p275) target = $region12
      $region11: #{nature_cnn_forward.1} parent=5 // pred_region
        %s279 = ssub.s32 %s19, 1
        // Predicated region
        $region13: #{nature_cnn_forward.1} parent=11 // pred_check
          %p280 = pneg %p92
        $region14: #{nature_cnn_forward.1} parent=11 // pred_check_branch
          %282 = sbr.rel (%p280) target = $region16
        $region15: #{nature_cnn_forward.1} parent=11 // pred_region
          _
        $region16: #{nature_cnn_forward.1} parent=11 // pred_fallthru
          _
        // Predicated region
        $region17: #{nature_cnn_forward.1} parent=11 // pred_check
          %p283 = pneg %p113
        $region18: #{nature_cnn_forward.1} parent=11 // pred_check_branch
          %285 = sbr.rel (%p283) target = $region20
        $region19: #{nature_cnn_forward.1} parent=11 // pred_region
          _
        $region20: #{nature_cnn_forward.1} parent=11 // pred_fallthru
          _
        // Predicated region
        $region21: #{nature_cnn_forward.1} parent=11 // pred_check
          %p286 = pneg %p134
        $region22: #{nature_cnn_forward.1} parent=11 // pred_check_branch
          %288 = sbr.rel (%p286) target = $region24
        $region23: #{nature_cnn_forward.1} parent=11 // pred_region
          _
        $region24: #{nature_cnn_forward.1} parent=11 // pred_fallthru
          _
        // Predicated region
        $region25: #{nature_cnn_forward.1} parent=11 // pred_check
          %p289 = pneg %p155
        $region26: #{nature_cnn_forward.1} parent=11 // pred_check_branch
          %291 = sbr.rel (%p289) target = $region28
        $region27: #{nature_cnn_forward.1} parent=11 // pred_region
          _
        $region28: #{nature_cnn_forward.1} parent=11 // pred_fallthru
          _
        // Predicated region
        $region29: #{nature_cnn_forward.1} parent=11 // pred_check
          %p292 = pneg %p176
        $region30: #{nature_cnn_forward.1} parent=11 // pred_check_branch
          %294 = sbr.rel (%p292) target = $region32
        $region31: #{nature_cnn_forward.1} parent=11 // pred_region
          _
        $region32: #{nature_cnn_forward.1} parent=11 // pred_fallthru
          _
        // Predicated region
        $region33: #{nature_cnn_forward.1} parent=11 // pred_check
          %p295 = pneg %p197
        $region34: #{nature_cnn_forward.1} parent=11 // pred_check_branch
          %297 = sbr.rel (%p295) target = $region36
        $region35: #{nature_cnn_forward.1} parent=11 // pred_region
          _
        $region36: #{nature_cnn_forward.1} parent=11 // pred_fallthru
          _
        // Predicated region
        $region37: #{nature_cnn_forward.1} parent=11 // pred_check
          %p298 = pneg %p218
        $region38: #{nature_cnn_forward.1} parent=11 // pred_check_branch
          %300 = sbr.rel (%p298) target = $region40
        $region39: #{nature_cnn_forward.1} parent=11 // pred_region
          _
        $region40: #{nature_cnn_forward.1} parent=11 // pred_fallthru
          _
        // Predicated region
        $region41: #{nature_cnn_forward.1} parent=11 // pred_check
          %p301 = pneg %p239
        $region42: #{nature_cnn_forward.1} parent=11 // pred_check_branch
          %303 = sbr.rel (%p301) target = $region44
        $region43: #{nature_cnn_forward.1} parent=11 // pred_region
          _
        $region44: #{nature_cnn_forward.1} parent=11 // pred_fallthru
          _
      $region12: #{nature_cnn_forward.1} parent=5 // pred_fallthru
        _
      %p304 = scmp.lt.s32.totalorder %s19, 2
      // Predicated region
      $region45: #{nature_cnn_forward.1} parent=5 // pred_check
        %p305 = pneg %p304
      $region46: #{nature_cnn_forward.1} parent=5 // pred_check_branch
        %307 = sbr.rel (%p305) target = $region48
      $region47: #{nature_cnn_forward.1} parent=5 // pred_region
        // Predicated region
        $region49: #{nature_cnn_forward.1} parent=47 // pred_check
          %p308 = pneg %p39
        $region50: #{nature_cnn_forward.1} parent=47 // pred_check_branch
          %310 = sbr.rel (%p308) target = $region52
        $region51: #{nature_cnn_forward.1} parent=47 // pred_region
          %p311 = scmp.lt.s32.totalorder %s19, 1
          %s312 = scalar_select %p311, %s19, 1
          %s313 = smul.addr %s312, 11
          %s314 = smul.addr %s313, 8
          %s315 = scalar_lea.vmem %s0, %s314
        $region52: #{nature_cnn_forward.1} parent=47 // pred_fallthru
          _
        // Predicated region
        $region53: #{nature_cnn_forward.1} parent=47 // pred_check
          %p316 = pneg %p65
        $region54: #{nature_cnn_forward.1} parent=47 // pred_check_branch
          %318 = sbr.rel (%p316) target = $region56
        $region55: #{nature_cnn_forward.1} parent=47 // pred_region
          %p319 = scmp.lt.s32.totalorder %s19, 1
          %s320 = scalar_select %p319, %s19, 1
          %s321 = smul.addr %s320, 11
          %s322 = smul.addr %s321, 8
          %s323 = scalar_lea.vmem %s1, %s322
        $region56: #{nature_cnn_forward.1} parent=47 // pred_fallthru
          _
      $region48: #{nature_cnn_forward.1} parent=5 // pred_fallthru
        _
      %p324 = scmp.le.s32.totalorder 1, %s19
      %p325 = scmp.lt.s32.totalorder %s19, 3
      %p326 = pnand %p324, %p325
      %p327 = pneg %p326
      // Predicated region
      $region57: #{nature_cnn_forward.1} parent=5 // pred_check
        _
      $region58: #{nature_cnn_forward.1} parent=5 // pred_check_branch
        %329 = sbr.rel (%p326) target = $region60
      $region59: #{nature_cnn_forward.1} parent=5 // pred_region
        %s330 = ssub.s32 %s19, 1
        %p331 = scmp.lt.s32.totalorder %s24, 1
        %s332 = scalar_select %p331, %s24, 1
        %s333 = smul.addr %s332, 11
        %s334 = smul.addr %s333, 8
        %s335 = scalar_lea.vmem %s0, %s334
        %p336 = pneg %p45
        %p337 = pneg %p42
        %p338 = scmp.lt.s32.totalorder %s24, 1
        %s339 = scalar_select %p338, %s24, 1
        %s340 = smul.addr %s339, 11
        %s341 = smul.addr %s340, 8
        %s342 = scalar_lea.vmem %s1, %s341
        %p343 = pneg %p71
        %p344 = pneg %p68
        %p345 = pneg %p92
        %p346 = pneg %p89
        %p347 = pneg %p113
        %p348 = pneg %p110
        %p349 = pneg %p134
        %p350 = pneg %p131
        %p351 = pneg %p155
        %p352 = pneg %p152
        %p353 = pneg %p176
        %p354 = pneg %p173
        %p355 = pneg %p197
        %p356 = pneg %p194
        %p357 = pneg %p218
        %p358 = pneg %p215
        %p359 = pneg %p239
        %p360 = pneg %p236
        %p361 = pneg %p265
        %p362 = pneg %p262
        %s363 = sand.u32 %s252, 1
        %s364 = scalar_lea.sflag [#allocation8], %s363
        %s365 = sand.u32 %s252, 1
        %s366 = scalar_lea.vmem [#allocation7], %s365
        %p367 = scmp.lt.s32.totalorder %s24, 1
        %s368 = scalar_select %p367, %s24, 1
        %s369 = smul.addr %s368, 11
        %s370 = smul.addr %s369, 8
        %s371 = scalar_lea.vmem %s0, %s370
        %p372 = scmp.lt.s32.totalorder %s24, 1
        %s373 = scalar_select %p372, %s24, 1
        %s374 = smul.addr %s373, 11
        %s375 = smul.addr %s374, 8
        %s376 = scalar_lea.vmem %s1, %s375
        %v377 = vld [vmem:[%s2] sm:$0xff]
        %v378 = vld [vmem:[%s2 + $0x8] sm:$0xff]
        %v379 = vld [vmem:[%s2 + $0x10] sm:$0xff]
        %v380 = vld [vmem:[%s2 + $0x18] sm:$0xff]
        %v381 = vld [vmem:[%s2 + $0x20] sm:$0xff]
        %v382 = vld [vmem:[%s2 + $0x28] sm:$0xff]
        %v383 = vld [vmem:[%s2 + $0x30] sm:$0xff]
        %v384 = vld [vmem:[%s2 + $0x38] sm:$0xff]
        %v385 = vld [vmem:[%s2 + $0x40] sm:$0xff]
        %v386 = vld [vmem:[%s2 + $0x48] sm:$0xff]
        %v387 = vld [vmem:[%s2 + $0x50] sm:$0xff]
        %v388 = vld [vmem:[%s2 + $0x58] sm:$0xff]
        %v389 = vld [vmem:[%s2 + $0x60] sm:$0xff]
        %v390 = vld [vmem:[%s2 + $0x68] sm:$0xff]
        %v391 = vld [vmem:[%s2 + $0x70] sm:$0xff]
        %v392 = vld [vmem:[%s2 + $0x78] sm:$0xff]
        %v393 = vld [vmem:[%s2 + $0x80] sm:$0xff]
        %v394 = vld [vmem:[%s2 + $0x88] sm:$0xff]
        %v395 = vld [vmem:[%s2 + $0x90] sm:$0xff]
        %v396 = vld [vmem:[%s2 + $0x98] sm:$0xff]
        %v397 = vld [vmem:[%s2 + $0xa0] sm:$0xff]
        %v398 = vld [vmem:[%s2 + $0xa8] sm:$0xff]
        %v399 = vld [vmem:[%s2 + $0xb0] sm:$0xff]
        %v400 = vld [vmem:[%s2 + $0xb8] sm:$0xff]
        %v401 = vld [vmem:[%s2 + $0xc0] sm:$0xff]
        %v402 = vld [vmem:[%s2 + $0xc8] sm:$0xff]
        %v403 = vld [vmem:[%s2 + $0xd0] sm:$0xff]
        %v404 = vld [vmem:[%s2 + $0xd8] sm:$0xff]
        %v405 = vld [vmem:[%s2 + $0xe0] sm:$0xff]
        %v406 = vld [vmem:[%s2 + $0xe8] sm:$0xff]
        %v407 = vld [vmem:[%s2 + $0xf0] sm:$0xff]
        %v408 = vld [vmem:[%s2 + $0xf8] sm:$0xff]
        %v409 = vld [vmem:[%s3] sm:$0x1]
        %v410 = vld [vmem:[%s371] sm:$0x1f]
        %vm411 = vcmask 520192
        %412 = vst.msk [vmem:[#allocation5] sm:$0x1f] %vm411, %v410
        %v413 = vld [vmem:[%s376] sm:$0x1f]
        %415 = vrot.lane.b32.xlu0 %v413, 64
        %v416 = vpop.permute.xlu0 %415
        %vm418 = vcmask 1044992
        %419 = vst.msk [vmem:[#allocation5] sm:$0x1f] %vm418, %v416
        %s420 = scalar_lea.vmem %s371, 8
        %v421 = vld [vmem:[%s420] sm:$0x1f]
        %422 = vst.msk [vmem:[#allocation5 + $0x8] sm:$0x1f] %vm411, %v421
        %s423 = scalar_lea.vmem %s376, 8
        %v424 = vld [vmem:[%s423] sm:$0x1f]
        %426 = vrot.lane.b32.xlu0 %v424, 64
        %v427 = vpop.permute.xlu0 %426
        %429 = vst.msk [vmem:[#allocation5 + $0x8] sm:$0x1f] %vm418, %v427
        %v430 = vld [vmem:[#allocation5] sm:$0x1f]
        %v431 = vld [vmem:[#allocation5 + $0x8] sm:$0x1f]
        %v433 = vlaneseq
        %v434 = vshrl.u32 %v433, 7
        %v435 = vsub.s32 0, %v434
        %v436 = vrot.slane %v409, %v435
        %438 = vmatprep.subr.mxu0 0.0
        %439 = vmatpush1.msra.mxu0 %v377
        %440 = vmatprep.subr.mxu0 0.0
        %441 = vmatpush1.msra.mxu0 %v378
        %442 = vmatprep.subr.mxu0 0.0
        %443 = vmatpush1.msra.mxu0 %v379
        %444 = vmatprep.subr.mxu0 0.0
        %445 = vmatpush1.msra.mxu0 %v380
        %446 = vmatprep.subr.mxu0 0.0
        %447 = vmatpush1.msra.mxu0 %v381
        %448 = vmatprep.subr.mxu0 0.0
        %449 = vmatpush1.msra.mxu0 %v382
        %450 = vmatprep.subr.mxu0 0.0
        %451 = vmatpush1.msra.mxu0 %v383
        %452 = vmatprep.subr.mxu0 0.0
        %453 = vmatpush1.msra.mxu0 %v384
        %454 = vmatprep.subr.mxu0 0.0
        %455 = vmatpush1.msra.mxu0 %v385
        %456 = vmatprep.subr.mxu0 0.0
        %457 = vmatpush1.msra.mxu0 %v386
        %458 = vmatprep.subr.mxu0 0.0
        %459 = vmatpush1.msra.mxu0 %v387
        %460 = vmatprep.subr.mxu0 0.0
        %461 = vmatpush1.msra.mxu0 %v388
        %462 = vmatprep.subr.mxu0 0.0
        %463 = vmatpush1.msra.mxu0 %v389
        %464 = vmatprep.subr.mxu0 0.0
        %465 = vmatpush1.msra.mxu0 %v390
        %466 = vmatprep.subr.mxu0 0.0
        %467 = vmatpush1.msra.mxu0 %v391
        %468 = vmatprep.subr.mxu0 0.0
        %469 = vmatpush1.msra.mxu0 %v392
        %470 = vmatprep.subr.mxu0 0.0
        %471 = vmatpush1.msra.mxu0 %v393
        %472 = vmatprep.subr.mxu0 0.0
        %473 = vmatpush1.msra.mxu0 %v394
        %474 = vmatprep.subr.mxu0 0.0
        %475 = vmatpush1.msra.mxu0 %v395
        %476 = vmatprep.subr.mxu0 0.0
        %477 = vmatpush1.msra.mxu0 %v396
        %478 = vmatprep.subr.mxu0 0.0
        %479 = vmatpush1.msra.mxu0 %v397
        %480 = vmatprep.subr.mxu0 0.0
        %481 = vmatpush1.msra.mxu0 %v398
        %482 = vmatprep.subr.mxu0 0.0
        %483 = vmatpush1.msra.mxu0 %v399
        %484 = vmatprep.subr.mxu0 0.0
        %485 = vmatpush1.msra.mxu0 %v400
        %486 = vmatprep.subr.mxu0 0.0
        %487 = vmatpush1.msra.mxu0 %v401
        %488 = vmatprep.subr.mxu0 0.0
        %489 = vmatpush1.msra.mxu0 %v402
        %490 = vmatprep.subr.mxu0 0.0
        %491 = vmatpush1.msra.mxu0 %v403
        %492 = vmatprep.subr.mxu0 0.0
        %493 = vmatpush1.msra.mxu0 %v404
        %494 = vmatprep.subr.mxu0 0.0
        %495 = vmatpush1.msra.mxu0 %v405
        %496 = vmatprep.subr.mxu0 0.0
        %497 = vmatpush1.msra.mxu0 %v406
        %498 = vmatprep.subr.mxu0 0.0
        %499 = vmatpush1.msra.mxu0 %v407
        %500 = vmatprep.subr.mxu0 0.0
        %501 = vmatpush1.msra.mxu0 %v408
        %502 = vmatprep.mubr.f32.mxu0 %v431
        %503 = vmatmul.mubr.f32.gmra.mrb[0].mxu0 %v430
        %v504 = vpop.f32.mrb[0].mxu0
        %v505 = vadd.f32 %v436, %v504
        %v506 = vpop.f32.mrb[0].mxu0
        %507 = vdwg.mxu0
        %v508 = vmax.f32 %v505, 0.0
        %vm509 = vcmask 258048
        %510 = vst.msk [vmem:[#allocation2] sm:$0x1f] %vm509, %v508
        %v511 = vld [vmem:[%s376] sm:$0x1f]
        %512 = vst.msk [vmem:[#allocation5] sm:$0x1f] %vm411, %v511
        %v513 = vld [vmem:[%s371 + $0x1] sm:$0x1f]
        %515 = vrot.lane.b32.xlu0 %v513, 64
        %v516 = vpop.permute.xlu0 %515
        %518 = vst.msk [vmem:[#allocation5] sm:$0x1f] %vm418, %v516
        %v519 = vld [vmem:[%s423] sm:$0x1f]
        %520 = vst.msk [vmem:[#allocation5 + $0x8] sm:$0x1f] %vm411, %v519
        %v521 = vld [vmem:[%s420 + $0x1] sm:$0x1f]
        %523 = vrot.lane.b32.xlu0 %v521, 64
        %v524 = vpop.permute.xlu0 %523
        %526 = vst.msk [vmem:[#allocation5 + $0x8] sm:$0x1f] %vm418, %v524
        %v527 = vld [vmem:[#allocation5] sm:$0x1f]
        %v528 = vld [vmem:[#allocation5 + $0x8] sm:$0x1f]
        %529 = vmatprep.subr.mxu0 0.0
        %530 = vmatpush1.msra.mxu0 %v377
        %531 = vmatprep.subr.mxu0 0.0
        %532 = vmatpush1.msra.mxu0 %v378
        %533 = vmatprep.subr.mxu0 0.0
        %534 = vmatpush1.msra.mxu0 %v379
        %535 = vmatprep.subr.mxu0 0.0
        %536 = vmatpush1.msra.mxu0 %v380
        %537 = vmatprep.subr.mxu0 0.0
        %538 = vmatpush1.msra.mxu0 %v381
        %539 = vmatprep.subr.mxu0 0.0
        %540 = vmatpush1.msra.mxu0 %v382
        %541 = vmatprep.subr.mxu0 0.0
        %542 = vmatpush1.msra.mxu0 %v383
        %543 = vmatprep.subr.mxu0 0.0
        %544 = vmatpush1.msra.mxu0 %v384
        %545 = vmatprep.subr.mxu0 0.0
        %546 = vmatpush1.msra.mxu0 %v385
        %547 = vmatprep.subr.mxu0 0.0
        %548 = vmatpush1.msra.mxu0 %v386
        %549 = vmatprep.subr.mxu0 0.0
        %550 = vmatpush1.msra.mxu0 %v387
        %551 = vmatprep.subr.mxu0 0.0
        %552 = vmatpush1.msra.mxu0 %v388
        %553 = vmatprep.subr.mxu0 0.0
        %554 = vmatpush1.msra.mxu0 %v389
        %555 = vmatprep.subr.mxu0 0.0
        %556 = vmatpush1.msra.mxu0 %v390
        %557 = vmatprep.subr.mxu0 0.0
        %558 = vmatpush1.msra.mxu0 %v391
        %559 = vmatprep.subr.mxu0 0.0
        %560 = vmatpush1.msra.mxu0 %v392
        %561 = vmatprep.subr.mxu0 0.0
        %562 = vmatpush1.msra.mxu0 %v393
        %563 = vmatprep.subr.mxu0 0.0
        %564 = vmatpush1.msra.mxu0 %v394
        %565 = vmatprep.subr.mxu0 0.0
        %566 = vmatpush1.msra.mxu0 %v395
        %567 = vmatprep.subr.mxu0 0.0
        %568 = vmatpush1.msra.mxu0 %v396
        %569 = vmatprep.subr.mxu0 0.0
        %570 = vmatpush1.msra.mxu0 %v397
        %571 = vmatprep.subr.mxu0 0.0
        %572 = vmatpush1.msra.mxu0 %v398
        %573 = vmatprep.subr.mxu0 0.0
        %574 = vmatpush1.msra.mxu0 %v399
        %575 = vmatprep.subr.mxu0 0.0
        %576 = vmatpush1.msra.mxu0 %v400
        %577 = vmatprep.subr.mxu0 0.0
        %578 = vmatpush1.msra.mxu0 %v401
        %579 = vmatprep.subr.mxu0 0.0
        %580 = vmatpush1.msra.mxu0 %v402
        %581 = vmatprep.subr.mxu0 0.0
        %582 = vmatpush1.msra.mxu0 %v403
        %583 = vmatprep.subr.mxu0 0.0
        %584 = vmatpush1.msra.mxu0 %v404
        %585 = vmatprep.subr.mxu0 0.0
        %586 = vmatpush1.msra.mxu0 %v405
        %587 = vmatprep.subr.mxu0 0.0
        %588 = vmatpush1.msra.mxu0 %v406
        %589 = vmatprep.subr.mxu0 0.0
        %590 = vmatpush1.msra.mxu0 %v407
        %591 = vmatprep.subr.mxu0 0.0
        %592 = vmatpush1.msra.mxu0 %v408
        %593 = vmatprep.mubr.f32.mxu0 %v528
        %594 = vmatmul.mubr.f32.gmra.mrb[0].mxu0 %v527
        %v595 = vpop.f32.mrb[0].mxu0
        %v596 = vadd.f32 %v436, %v595
        %v597 = vpop.f32.mrb[0].mxu0
        %598 = vdwg.mxu0
        %v599 = vmax.f32 %v596, 0.0
        %600 = vst.msk [vmem:[#allocation3] sm:$0x1f] %vm509, %v599
        %v601 = vld [vmem:[%s420] sm:$0x1f]
        %602 = vst.msk [vmem:[#allocation5] sm:$0x1f] %vm411, %v601
        %v603 = vld [vmem:[%s423] sm:$0x1f]
        %605 = vrot.lane.b32.xlu0 %v603, 64
        %v606 = vpop.permute.xlu0 %605
        %608 = vst.msk [vmem:[#allocation5] sm:$0x1f] %vm418, %v606
        %s609 = scalar_lea.vmem %s371, 16
        %v610 = vld [vmem:[%s609] sm:$0x1f]
        %611 = vst.msk [vmem:[#allocation5 + $0x8] sm:$0x1f] %vm411, %v610
        %s612 = scalar_lea.vmem %s376, 16
        %v613 = vld [vmem:[%s612] sm:$0x1f]
        %615 = vrot.lane.b32.xlu0 %v613, 64
        %v616 = vpop.permute.xlu0 %615
        %618 = vst.msk [vmem:[#allocation5 + $0x8] sm:$0x1f] %vm418, %v616
        %v619 = vld [vmem:[#allocation5] sm:$0x1f]
        %v620 = vld [vmem:[#allocation5 + $0x8] sm:$0x1f]
        %621 = vmatprep.subr.mxu0 0.0
        %622 = vmatpush1.msra.mxu0 %v377
        %623 = vmatprep.subr.mxu0 0.0
        %624 = vmatpush1.msra.mxu0 %v378
        %625 = vmatprep.subr.mxu0 0.0
        %626 = vmatpush1.msra.mxu0 %v379
        %627 = vmatprep.subr.mxu0 0.0
        %628 = vmatpush1.msra.mxu0 %v380
        %629 = vmatprep.subr.mxu0 0.0
        %630 = vmatpush1.msra.mxu0 %v381
        %631 = vmatprep.subr.mxu0 0.0
        %632 = vmatpush1.msra.mxu0 %v382
        %633 = vmatprep.subr.mxu0 0.0
        %634 = vmatpush1.msra.mxu0 %v383
        %635 = vmatprep.subr.mxu0 0.0
        %636 = vmatpush1.msra.mxu0 %v384
        %637 = vmatprep.subr.mxu0 0.0
        %638 = vmatpush1.msra.mxu0 %v385
        %639 = vmatprep.subr.mxu0 0.0
        %640 = vmatpush1.msra.mxu0 %v386
        %641 = vmatprep.subr.mxu0 0.0
        %642 = vmatpush1.msra.mxu0 %v387
        %643 = vmatprep.subr.mxu0 0.0
        %644 = vmatpush1.msra.mxu0 %v388
        %645 = vmatprep.subr.mxu0 0.0
        %646 = vmatpush1.msra.mxu0 %v389
        %647 = vmatprep.subr.mxu0 0.0
        %648 = vmatpush1.msra.mxu0 %v390
        %649 = vmatprep.subr.mxu0 0.0
        %650 = vmatpush1.msra.mxu0 %v391
        %651 = vmatprep.subr.mxu0 0.0
        %652 = vmatpush1.msra.mxu0 %v392
        %653 = vmatprep.subr.mxu0 0.0
        %654 = vmatpush1.msra.mxu0 %v393
        %655 = vmatprep.subr.mxu0 0.0
        %656 = vmatpush1.msra.mxu0 %v394
        %657 = vmatprep.subr.mxu0 0.0
        %658 = vmatpush1.msra.mxu0 %v395
        %659 = vmatprep.subr.mxu0 0.0
        %660 = vmatpush1.msra.mxu0 %v396
        %661 = vmatprep.subr.mxu0 0.0
        %662 = vmatpush1.msra.mxu0 %v397
        %663 = vmatprep.subr.mxu0 0.0
        %664 = vmatpush1.msra.mxu0 %v398
        %665 = vmatprep.subr.mxu0 0.0
        %666 = vmatpush1.msra.mxu0 %v399
        %667 = vmatprep.subr.mxu0 0.0
        %668 = vmatpush1.msra.mxu0 %v400
        %669 = vmatprep.subr.mxu0 0.0
        %670 = vmatpush1.msra.mxu0 %v401
        %671 = vmatprep.subr.mxu0 0.0
        %672 = vmatpush1.msra.mxu0 %v402
        %673 = vmatprep.subr.mxu0 0.0
        %674 = vmatpush1.msra.mxu0 %v403
        %675 = vmatprep.subr.mxu0 0.0
        %676 = vmatpush1.msra.mxu0 %v404
        %677 = vmatprep.subr.mxu0 0.0
        %678 = vmatpush1.msra.mxu0 %v405
        %679 = vmatprep.subr.mxu0 0.0
        %680 = vmatpush1.msra.mxu0 %v406
        %681 = vmatprep.subr.mxu0 0.0
        %682 = vmatpush1.msra.mxu0 %v407
        %683 = vmatprep.subr.mxu0 0.0
        %684 = vmatpush1.msra.mxu0 %v408
        %685 = vmatprep.mubr.f32.mxu0 %v620
        %686 = vmatmul.mubr.f32.gmra.mrb[0].mxu0 %v619
        %v687 = vpop.f32.mrb[0].mxu0
        %v688 = vadd.f32 %v436, %v687
        %v689 = vpop.f32.mrb[0].mxu0
        %690 = vdwg.mxu0
        %v691 = vmax.f32 %v688, 0.0
        %s692 = scalar_lea.vmem [#allocation2], 8
        %693 = vst.msk [vmem:[%s692] sm:$0x1f] %vm509, %v691
        %v694 = vld [vmem:[%s423] sm:$0x1f]
        %695 = vst.msk [vmem:[#allocation5] sm:$0x1f] %vm411, %v694
        %v696 = vld [vmem:[%s420 + $0x1] sm:$0x1f]
        %698 = vrot.lane.b32.xlu0 %v696, 64
        %v699 = vpop.permute.xlu0 %698
        %701 = vst.msk [vmem:[#allocation5] sm:$0x1f] %vm418, %v699
        %v702 = vld [vmem:[%s612] sm:$0x1f]
        %703 = vst.msk [vmem:[#allocation5 + $0x8] sm:$0x1f] %vm411, %v702
        %v704 = vld [vmem:[%s609 + $0x1] sm:$0x1f]
        %706 = vrot.lane.b32.xlu0 %v704, 64
        %v707 = vpop.permute.xlu0 %706
        %709 = vst.msk [vmem:[#allocation5 + $0x8] sm:$0x1f] %vm418, %v707
        %v710 = vld [vmem:[#allocation5] sm:$0x1f]
        %v711 = vld [vmem:[#allocation5 + $0x8] sm:$0x1f]
        %712 = vmatprep.subr.mxu0 0.0
        %713 = vmatpush1.msra.mxu0 %v377
        %714 = vmatprep.subr.mxu0 0.0
        %715 = vmatpush1.msra.mxu0 %v378
        %716 = vmatprep.subr.mxu0 0.0
        %717 = vmatpush1.msra.mxu0 %v379
        %718 = vmatprep.subr.mxu0 0.0
        %719 = vmatpush1.msra.mxu0 %v380
        %720 = vmatprep.subr.mxu0 0.0
        %721 = vmatpush1.msra.mxu0 %v381
        %722 = vmatprep.subr.mxu0 0.0
        %723 = vmatpush1.msra.mxu0 %v382
        %724 = vmatprep.subr.mxu0 0.0
        %725 = vmatpush1.msra.mxu0 %v383
        %726 = vmatprep.subr.mxu0 0.0
        %727 = vmatpush1.msra.mxu0 %v384
        %728 = vmatprep.subr.mxu0 0.0
        %729 = vmatpush1.msra.mxu0 %v385
        %730 = vmatprep.subr.mxu0 0.0
        %731 = vmatpush1.msra.mxu0 %v386
        %732 = vmatprep.subr.mxu0 0.0
        %733 = vmatpush1.msra.mxu0 %v387
        %734 = vmatprep.subr.mxu0 0.0
        %735 = vmatpush1.msra.mxu0 %v388
        %736 = vmatprep.subr.mxu0 0.0
        %737 = vmatpush1.msra.mxu0 %v389
        %738 = vmatprep.subr.mxu0 0.0
        %739 = vmatpush1.msra.mxu0 %v390
        %740 = vmatprep.subr.mxu0 0.0
        %741 = vmatpush1.msra.mxu0 %v391
        %742 = vmatprep.subr.mxu0 0.0
        %743 = vmatpush1.msra.mxu0 %v392
        %744 = vmatprep.subr.mxu0 0.0
        %745 = vmatpush1.msra.mxu0 %v393
        %746 = vmatprep.subr.mxu0 0.0
        %747 = vmatpush1.msra.mxu0 %v394
        %748 = vmatprep.subr.mxu0 0.0
        %749 = vmatpush1.msra.mxu0 %v395
        %750 = vmatprep.subr.mxu0 0.0
        %751 = vmatpush1.msra.mxu0 %v396
        %752 = vmatprep.subr.mxu0 0.0
        %753 = vmatpush1.msra.mxu0 %v397
        %754 = vmatprep.subr.mxu0 0.0
        %755 = vmatpush1.msra.mxu0 %v398
        %756 = vmatprep.subr.mxu0 0.0
        %757 = vmatpush1.msra.mxu0 %v399
        %758 = vmatprep.subr.mxu0 0.0
        %759 = vmatpush1.msra.mxu0 %v400
        %760 = vmatprep.subr.mxu0 0.0
        %761 = vmatpush1.msra.mxu0 %v401
        %762 = vmatprep.subr.mxu0 0.0
        %763 = vmatpush1.msra.mxu0 %v402
        %764 = vmatprep.subr.mxu0 0.0
        %765 = vmatpush1.msra.mxu0 %v403
        %766 = vmatprep.subr.mxu0 0.0
        %767 = vmatpush1.msra.mxu0 %v404
        %768 = vmatprep.subr.mxu0 0.0
        %769 = vmatpush1.msra.mxu0 %v405
        %770 = vmatprep.subr.mxu0 0.0
        %771 = vmatpush1.msra.mxu0 %v406
        %772 = vmatprep.subr.mxu0 0.0
        %773 = vmatpush1.msra.mxu0 %v407
        %774 = vmatprep.subr.mxu0 0.0
        %775 = vmatpush1.msra.mxu0 %v408
        %776 = vmatprep.mubr.f32.mxu0 %v711
        %777 = vmatmul.mubr.f32.gmra.mrb[0].mxu0 %v710
        %v778 = vpop.f32.mrb[0].mxu0
        %v779 = vadd.f32 %v436, %v778
        %v780 = vpop.f32.mrb[0].mxu0
        %781 = vdwg.mxu0
        %v782 = vmax.f32 %v779, 0.0
        %s783 = scalar_lea.vmem [#allocation3], 8
        %784 = vst.msk [vmem:[%s783] sm:$0x1f] %vm509, %v782
        %v785 = vld [vmem:[%s609] sm:$0x1f]
        %786 = vst.msk [vmem:[#allocation5] sm:$0x1f] %vm411, %v785
        %v787 = vld [vmem:[%s612] sm:$0x1f]
        %789 = vrot.lane.b32.xlu0 %v787, 64
        %v790 = vpop.permute.xlu0 %789
        %792 = vst.msk [vmem:[#allocation5] sm:$0x1f] %vm418, %v790
        %s793 = scalar_lea.vmem %s371, 24
        %v794 = vld [vmem:[%s793] sm:$0x1f]
        %795 = vst.msk [vmem:[#allocation5 + $0x8] sm:$0x1f] %vm411, %v794
        %s796 = scalar_lea.vmem %s376, 24
        %v797 = vld [vmem:[%s796] sm:$0x1f]
        %799 = vrot.lane.b32.xlu0 %v797, 64
        %v800 = vpop.permute.xlu0 %799
        %802 = vst.msk [vmem:[#allocation5 + $0x8] sm:$0x1f] %vm418, %v800
        %v803 = vld [vmem:[#allocation5] sm:$0x1f]
        %v804 = vld [vmem:[#allocation5 + $0x8] sm:$0x1f]
        %805 = vmatprep.subr.mxu0 0.0
        %806 = vmatpush1.msra.mxu0 %v377
        %807 = vmatprep.subr.mxu0 0.0
        %808 = vmatpush1.msra.mxu0 %v378
        %809 = vmatprep.subr.mxu0 0.0
        %810 = vmatpush1.msra.mxu0 %v379
        %811 = vmatprep.subr.mxu0 0.0
        %812 = vmatpush1.msra.mxu0 %v380
        %813 = vmatprep.subr.mxu0 0.0
        %814 = vmatpush1.msra.mxu0 %v381
        %815 = vmatprep.subr.mxu0 0.0
        %816 = vmatpush1.msra.mxu0 %v382
        %817 = vmatprep.subr.mxu0 0.0
        %818 = vmatpush1.msra.mxu0 %v383
        %819 = vmatprep.subr.mxu0 0.0
        %820 = vmatpush1.msra.mxu0 %v384
        %821 = vmatprep.subr.mxu0 0.0
        %822 = vmatpush1.msra.mxu0 %v385
        %823 = vmatprep.subr.mxu0 0.0
        %824 = vmatpush1.msra.mxu0 %v386
        %825 = vmatprep.subr.mxu0 0.0
        %826 = vmatpush1.msra.mxu0 %v387
        %827 = vmatprep.subr.mxu0 0.0
        %828 = vmatpush1.msra.mxu0 %v388
        %829 = vmatprep.subr.mxu0 0.0
        %830 = vmatpush1.msra.mxu0 %v389
        %831 = vmatprep.subr.mxu0 0.0
        %832 = vmatpush1.msra.mxu0 %v390
        %833 = vmatprep.subr.mxu0 0.0
        %834 = vmatpush1.msra.mxu0 %v391
        %835 = vmatprep.subr.mxu0 0.0
        %836 = vmatpush1.msra.mxu0 %v392
        %837 = vmatprep.subr.mxu0 0.0
        %838 = vmatpush1.msra.mxu0 %v393
        %839 = vmatprep.subr.mxu0 0.0
        %840 = vmatpush1.msra.mxu0 %v394
        %841 = vmatprep.subr.mxu0 0.0
        %842 = vmatpush1.msra.mxu0 %v395
        %843 = vmatprep.subr.mxu0 0.0
        %844 = vmatpush1.msra.mxu0 %v396
        %845 = vmatprep.subr.mxu0 0.0
        %846 = vmatpush1.msra.mxu0 %v397
        %847 = vmatprep.subr.mxu0 0.0
        %848 = vmatpush1.msra.mxu0 %v398
        %849 = vmatprep.subr.mxu0 0.0
        %850 = vmatpush1.msra.mxu0 %v399
        %851 = vmatprep.subr.mxu0 0.0
        %852 = vmatpush1.msra.mxu0 %v400
        %853 = vmatprep.subr.mxu0 0.0
        %854 = vmatpush1.msra.mxu0 %v401
        %855 = vmatprep.subr.mxu0 0.0
        %856 = vmatpush1.msra.mxu0 %v402
        %857 = vmatprep.subr.mxu0 0.0
        %858 = vmatpush1.msra.mxu0 %v403
        %859 = vmatprep.subr.mxu0 0.0
        %860 = vmatpush1.msra.mxu0 %v404
        %861 = vmatprep.subr.mxu0 0.0
        %862 = vmatpush1.msra.mxu0 %v405
        %863 = vmatprep.subr.mxu0 0.0
        %864 = vmatpush1.msra.mxu0 %v406
        %865 = vmatprep.subr.mxu0 0.0
        %866 = vmatpush1.msra.mxu0 %v407
        %867 = vmatprep.subr.mxu0 0.0
        %868 = vmatpush1.msra.mxu0 %v408
        %869 = vmatprep.mubr.f32.mxu0 %v804
        %870 = vmatmul.mubr.f32.gmra.mrb[0].mxu0 %v803
        %v871 = vpop.f32.mrb[0].mxu0
        %v872 = vadd.f32 %v436, %v871
        %v873 = vpop.f32.mrb[0].mxu0
        %874 = vdwg.mxu0
        %v875 = vmax.f32 %v872, 0.0
        %s876 = scalar_lea.vmem [#allocation2], 16
        %877 = vst.msk [vmem:[%s876] sm:$0x1f] %vm509, %v875
        %v878 = vld [vmem:[%s612] sm:$0x1f]
        %879 = vst.msk [vmem:[#allocation5] sm:$0x1f] %vm411, %v878
        %v880 = vld [vmem:[%s609 + $0x1] sm:$0x1f]
        %882 = vrot.lane.b32.xlu0 %v880, 64
        %v883 = vpop.permute.xlu0 %882
        %885 = vst.msk [vmem:[#allocation5] sm:$0x1f] %vm418, %v883
        %v886 = vld [vmem:[%s796] sm:$0x1f]
        %887 = vst.msk [vmem:[#allocation5 + $0x8] sm:$0x1f] %vm411, %v886
        %v888 = vld [vmem:[%s793 + $0x1] sm:$0x1f]
        %890 = vrot.lane.b32.xlu0 %v888, 64
        %v891 = vpop.permute.xlu0 %890
        %893 = vst.msk [vmem:[#allocation5 + $0x8] sm:$0x1f] %vm418, %v891
        %v894 = vld [vmem:[#allocation5] sm:$0x1f]
        %v895 = vld [vmem:[#allocation5 + $0x8] sm:$0x1f]
        %896 = vmatprep.subr.mxu0 0.0
        %897 = vmatpush1.msra.mxu0 %v377
        %898 = vmatprep.subr.mxu0 0.0
        %899 = vmatpush1.msra.mxu0 %v378
        %900 = vmatprep.subr.mxu0 0.0
        %901 = vmatpush1.msra.mxu0 %v379
        %902 = vmatprep.subr.mxu0 0.0
        %903 = vmatpush1.msra.mxu0 %v380
        %904 = vmatprep.subr.mxu0 0.0
        %905 = vmatpush1.msra.mxu0 %v381
        %906 = vmatprep.subr.mxu0 0.0
        %907 = vmatpush1.msra.mxu0 %v382
        %908 = vmatprep.subr.mxu0 0.0
        %909 = vmatpush1.msra.mxu0 %v383
        %910 = vmatprep.subr.mxu0 0.0
        %911 = vmatpush1.msra.mxu0 %v384
        %912 = vmatprep.subr.mxu0 0.0
        %913 = vmatpush1.msra.mxu0 %v385
        %914 = vmatprep.subr.mxu0 0.0
        %915 = vmatpush1.msra.mxu0 %v386
        %916 = vmatprep.subr.mxu0 0.0
        %917 = vmatpush1.msra.mxu0 %v387
        %918 = vmatprep.subr.mxu0 0.0
        %919 = vmatpush1.msra.mxu0 %v388
        %920 = vmatprep.subr.mxu0 0.0
        %921 = vmatpush1.msra.mxu0 %v389
        %922 = vmatprep.subr.mxu0 0.0
        %923 = vmatpush1.msra.mxu0 %v390
        %924 = vmatprep.subr.mxu0 0.0
        %925 = vmatpush1.msra.mxu0 %v391
        %926 = vmatprep.subr.mxu0 0.0
        %927 = vmatpush1.msra.mxu0 %v392
        %928 = vmatprep.subr.mxu0 0.0
        %929 = vmatpush1.msra.mxu0 %v393
        %930 = vmatprep.subr.mxu0 0.0
        %931 = vmatpush1.msra.mxu0 %v394
        %932 = vmatprep.subr.mxu0 0.0
        %933 = vmatpush1.msra.mxu0 %v395
        %934 = vmatprep.subr.mxu0 0.0
        %935 = vmatpush1.msra.mxu0 %v396
        %936 = vmatprep.subr.mxu0 0.0
        %937 = vmatpush1.msra.mxu0 %v397
        %938 = vmatprep.subr.mxu0 0.0
        %939 = vmatpush1.msra.mxu0 %v398
        %940 = vmatprep.subr.mxu0 0.0
        %941 = vmatpush1.msra.mxu0 %v399
        %942 = vmatprep.subr.mxu0 0.0
        %943 = vmatpush1.msra.mxu0 %v400
        %944 = vmatprep.subr.mxu0 0.0
        %945 = vmatpush1.msra.mxu0 %v401
        %946 = vmatprep.subr.mxu0 0.0
        %947 = vmatpush1.msra.mxu0 %v402
        %948 = vmatprep.subr.mxu0 0.0
        %949 = vmatpush1.msra.mxu0 %v403
        %950 = vmatprep.subr.mxu0 0.0
        %951 = vmatpush1.msra.mxu0 %v404
        %952 = vmatprep.subr.mxu0 0.0
        %953 = vmatpush1.msra.mxu0 %v405
        %954 = vmatprep.subr.mxu0 0.0
        %955 = vmatpush1.msra.mxu0 %v406
        %956 = vmatprep.subr.mxu0 0.0
        %957 = vmatpush1.msra.mxu0 %v407
        %958 = vmatprep.subr.mxu0 0.0
        %959 = vmatpush1.msra.mxu0 %v408
        %960 = vmatprep.mubr.f32.mxu0 %v895
        %961 = vmatmul.mubr.f32.gmra.mrb[0].mxu0 %v894
        %v962 = vpop.f32.mrb[0].mxu0
        %v963 = vadd.f32 %v436, %v962
        %v964 = vpop.f32.mrb[0].mxu0
        %965 = vdwg.mxu0
        %v966 = vmax.f32 %v963, 0.0
        %s967 = scalar_lea.vmem [#allocation3], 16
        %968 = vst.msk [vmem:[%s967] sm:$0x1f] %vm509, %v966
        %v969 = vld [vmem:[%s793] sm:$0x1f]
        %970 = vst.msk [vmem:[#allocation5] sm:$0x1f] %vm411, %v969
        %v971 = vld [vmem:[%s796] sm:$0x1f]
        %973 = vrot.lane.b32.xlu0 %v971, 64
        %v974 = vpop.permute.xlu0 %973
        %976 = vst.msk [vmem:[#allocation5] sm:$0x1f] %vm418, %v974
        %s977 = scalar_lea.vmem %s371, 32
        %v978 = vld [vmem:[%s977] sm:$0x1f]
        %979 = vst.msk [vmem:[#allocation5 + $0x8] sm:$0x1f] %vm411, %v978
        %s980 = scalar_lea.vmem %s376, 32
        %v981 = vld [vmem:[%s980] sm:$0x1f]
        %983 = vrot.lane.b32.xlu0 %v981, 64
        %v984 = vpop.permute.xlu0 %983
        %986 = vst.msk [vmem:[#allocation5 + $0x8] sm:$0x1f] %vm418, %v984
        %v987 = vld [vmem:[#allocation5] sm:$0x1f]
        %v988 = vld [vmem:[#allocation5 + $0x8] sm:$0x1f]
        %989 = vmatprep.subr.mxu0 0.0
        %990 = vmatpush1.msra.mxu0 %v377
        %991 = vmatprep.subr.mxu0 0.0
        %992 = vmatpush1.msra.mxu0 %v378
        %993 = vmatprep.subr.mxu0 0.0
        %994 = vmatpush1.msra.mxu0 %v379
        %995 = vmatprep.subr.mxu0 0.0
        %996 = vmatpush1.msra.mxu0 %v380
        %997 = vmatprep.subr.mxu0 0.0
        %998 = vmatpush1.msra.mxu0 %v381
        %999 = vmatprep.subr.mxu0 0.0
        %1000 = vmatpush1.msra.mxu0 %v382
        %1001 = vmatprep.subr.mxu0 0.0
        %1002 = vmatpush1.msra.mxu0 %v383
        %1003 = vmatprep.subr.mxu0 0.0
        %1004 = vmatpush1.msra.mxu0 %v384
        %1005 = vmatprep.subr.mxu0 0.0
        %1006 = vmatpush1.msra.mxu0 %v385
        %1007 = vmatprep.subr.mxu0 0.0
        %1008 = vmatpush1.msra.mxu0 %v386
        %1009 = vmatprep.subr.mxu0 0.0
        %1010 = vmatpush1.msra.mxu0 %v387
        %1011 = vmatprep.subr.mxu0 0.0
        %1012 = vmatpush1.msra.mxu0 %v388
        %1013 = vmatprep.subr.mxu0 0.0
        %1014 = vmatpush1.msra.mxu0 %v389
        %1015 = vmatprep.subr.mxu0 0.0
        %1016 = vmatpush1.msra.mxu0 %v390
        %1017 = vmatprep.subr.mxu0 0.0
        %1018 = vmatpush1.msra.mxu0 %v391
        %1019 = vmatprep.subr.mxu0 0.0
        %1020 = vmatpush1.msra.mxu0 %v392
        %1021 = vmatprep.subr.mxu0 0.0
        %1022 = vmatpush1.msra.mxu0 %v393
        %1023 = vmatprep.subr.mxu0 0.0
        %1024 = vmatpush1.msra.mxu0 %v394
        %1025 = vmatprep.subr.mxu0 0.0
        %1026 = vmatpush1.msra.mxu0 %v395
        %1027 = vmatprep.subr.mxu0 0.0
        %1028 = vmatpush1.msra.mxu0 %v396
        %1029 = vmatprep.subr.mxu0 0.0
        %1030 = vmatpush1.msra.mxu0 %v397
        %1031 = vmatprep.subr.mxu0 0.0
        %1032 = vmatpush1.msra.mxu0 %v398
        %1033 = vmatprep.subr.mxu0 0.0
        %1034 = vmatpush1.msra.mxu0 %v399
        %1035 = vmatprep.subr.mxu0 0.0
        %1036 = vmatpush1.msra.mxu0 %v400
        %1037 = vmatprep.subr.mxu0 0.0
        %1038 = vmatpush1.msra.mxu0 %v401
        %1039 = vmatprep.subr.mxu0 0.0
        %1040 = vmatpush1.msra.mxu0 %v402
        %1041 = vmatprep.subr.mxu0 0.0
        %1042 = vmatpush1.msra.mxu0 %v403
        %1043 = vmatprep.subr.mxu0 0.0
        %1044 = vmatpush1.msra.mxu0 %v404
        %1045 = vmatprep.subr.mxu0 0.0
        %1046 = vmatpush1.msra.mxu0 %v405
        %1047 = vmatprep.subr.mxu0 0.0
        %1048 = vmatpush1.msra.mxu0 %v406
        %1049 = vmatprep.subr.mxu0 0.0
        %1050 = vmatpush1.msra.mxu0 %v407
        %1051 = vmatprep.subr.mxu0 0.0
        %1052 = vmatpush1.msra.mxu0 %v408
        %1053 = vmatprep.mubr.f32.mxu0 %v988
        %1054 = vmatmul.mubr.f32.gmra.mrb[0].mxu0 %v987
        %v1055 = vpop.f32.mrb[0].mxu0
        %v1056 = vadd.f32 %v436, %v1055
        %v1057 = vpop.f32.mrb[0].mxu0
        %1058 = vdwg.mxu0
        %v1059 = vmax.f32 %v1056, 0.0
        %s1060 = scalar_lea.vmem [#allocation2], 24
        %1061 = vst.msk [vmem:[%s1060] sm:$0x1f] %vm509, %v1059
        %v1062 = vld [vmem:[%s796] sm:$0x1f]
        %1063 = vst.msk [vmem:[#allocation5] sm:$0x1f] %vm411, %v1062
        %v1064 = vld [vmem:[%s793 + $0x1] sm:$0x1f]
        %1066 = vrot.lane.b32.xlu0 %v1064, 64
        %v1067 = vpop.permute.xlu0 %1066
        %1069 = vst.msk [vmem:[#allocation5] sm:$0x1f] %vm418, %v1067
        %v1070 = vld [vmem:[%s980] sm:$0x1f]
        %1071 = vst.msk [vmem:[#allocation5 + $0x8] sm:$0x1f] %vm411, %v1070
        %v1072 = vld [vmem:[%s977 + $0x1] sm:$0x1f]
        %1074 = vrot.lane.b32.xlu0 %v1072, 64
        %v1075 = vpop.permute.xlu0 %1074
        %1077 = vst.msk [vmem:[#allocation5 + $0x8] sm:$0x1f] %vm418, %v1075
        %v1078 = vld [vmem:[#allocation5] sm:$0x1f]
        %v1079 = vld [vmem:[#allocation5 + $0x8] sm:$0x1f]
        %1080 = vmatprep.subr.mxu0 0.0
        %1081 = vmatpush1.msra.mxu0 %v377
        %1082 = vmatprep.subr.mxu0 0.0
        %1083 = vmatpush1.msra.mxu0 %v378
        %1084 = vmatprep.subr.mxu0 0.0
        %1085 = vmatpush1.msra.mxu0 %v379
        %1086 = vmatprep.subr.mxu0 0.0
        %1087 = vmatpush1.msra.mxu0 %v380
        %1088 = vmatprep.subr.mxu0 0.0
        %1089 = vmatpush1.msra.mxu0 %v381
        %1090 = vmatprep.subr.mxu0 0.0
        %1091 = vmatpush1.msra.mxu0 %v382
        %1092 = vmatprep.subr.mxu0 0.0
        %1093 = vmatpush1.msra.mxu0 %v383
        %1094 = vmatprep.subr.mxu0 0.0
        %1095 = vmatpush1.msra.mxu0 %v384
        %1096 = vmatprep.subr.mxu0 0.0
        %1097 = vmatpush1.msra.mxu0 %v385
        %1098 = vmatprep.subr.mxu0 0.0
        %1099 = vmatpush1.msra.mxu0 %v386
        %1100 = vmatprep.subr.mxu0 0.0
        %1101 = vmatpush1.msra.mxu0 %v387
        %1102 = vmatprep.subr.mxu0 0.0
        %1103 = vmatpush1.msra.mxu0 %v388
        %1104 = vmatprep.subr.mxu0 0.0
        %1105 = vmatpush1.msra.mxu0 %v389
        %1106 = vmatprep.subr.mxu0 0.0
        %1107 = vmatpush1.msra.mxu0 %v390
        %1108 = vmatprep.subr.mxu0 0.0
        %1109 = vmatpush1.msra.mxu0 %v391
        %1110 = vmatprep.subr.mxu0 0.0
        %1111 = vmatpush1.msra.mxu0 %v392
        %1112 = vmatprep.subr.mxu0 0.0
        %1113 = vmatpush1.msra.mxu0 %v393
        %1114 = vmatprep.subr.mxu0 0.0
        %1115 = vmatpush1.msra.mxu0 %v394
        %1116 = vmatprep.subr.mxu0 0.0
        %1117 = vmatpush1.msra.mxu0 %v395
        %1118 = vmatprep.subr.mxu0 0.0
        %1119 = vmatpush1.msra.mxu0 %v396
        %1120 = vmatprep.subr.mxu0 0.0
        %1121 = vmatpush1.msra.mxu0 %v397
        %1122 = vmatprep.subr.mxu0 0.0
        %1123 = vmatpush1.msra.mxu0 %v398
        %1124 = vmatprep.subr.mxu0 0.0
        %1125 = vmatpush1.msra.mxu0 %v399
        %1126 = vmatprep.subr.mxu0 0.0
        %1127 = vmatpush1.msra.mxu0 %v400
        %1128 = vmatprep.subr.mxu0 0.0
        %1129 = vmatpush1.msra.mxu0 %v401
        %1130 = vmatprep.subr.mxu0 0.0
        %1131 = vmatpush1.msra.mxu0 %v402
        %1132 = vmatprep.subr.mxu0 0.0
        %1133 = vmatpush1.msra.mxu0 %v403
        %1134 = vmatprep.subr.mxu0 0.0
        %1135 = vmatpush1.msra.mxu0 %v404
        %1136 = vmatprep.subr.mxu0 0.0
        %1137 = vmatpush1.msra.mxu0 %v405
        %1138 = vmatprep.subr.mxu0 0.0
        %1139 = vmatpush1.msra.mxu0 %v406
        %1140 = vmatprep.subr.mxu0 0.0
        %1141 = vmatpush1.msra.mxu0 %v407
        %1142 = vmatprep.subr.mxu0 0.0
        %1143 = vmatpush1.msra.mxu0 %v408
        %1144 = vmatprep.mubr.f32.mxu0 %v1079
        %1145 = vmatmul.mubr.f32.gmra.mrb[0].mxu0 %v1078
        %v1146 = vpop.f32.mrb[0].mxu0
        %v1147 = vadd.f32 %v436, %v1146
        %v1148 = vpop.f32.mrb[0].mxu0
        %1149 = vdwg.mxu0
        %v1150 = vmax.f32 %v1147, 0.0
        %s1151 = scalar_lea.vmem [#allocation3], 24
        %1152 = vst.msk [vmem:[%s1151] sm:$0x1f] %vm509, %v1150
        %v1153 = vld [vmem:[%s977] sm:$0x1f]
        %1154 = vst.msk [vmem:[#allocation5] sm:$0x1f] %vm411, %v1153
        %v1155 = vld [vmem:[%s980] sm:$0x1f]
        %1157 = vrot.lane.b32.xlu0 %v1155, 64
        %v1158 = vpop.permute.xlu0 %1157
        %1160 = vst.msk [vmem:[#allocation5] sm:$0x1f] %vm418, %v1158
        %s1161 = scalar_lea.vmem %s371, 40
        %v1162 = vld [vmem:[%s1161] sm:$0x1f]
        %1163 = vst.msk [vmem:[#allocation5 + $0x8] sm:$0x1f] %vm411, %v1162
        %s1164 = scalar_lea.vmem %s376, 40
        %v1165 = vld [vmem:[%s1164] sm:$0x1f]
        %1167 = vrot.lane.b32.xlu0 %v1165, 64
        %v1168 = vpop.permute.xlu0 %1167
        %1170 = vst.msk [vmem:[#allocation5 + $0x8] sm:$0x1f] %vm418, %v1168
        %v1171 = vld [vmem:[#allocation5] sm:$0x1f]
        %v1172 = vld [vmem:[#allocation5 + $0x8] sm:$0x1f]
        %1173 = vmatprep.subr.mxu0 0.0
        %1174 = vmatpush1.msra.mxu0 %v377
        %1175 = vmatprep.subr.mxu0 0.0
        %1176 = vmatpush1.msra.mxu0 %v378
        %1177 = vmatprep.subr.mxu0 0.0
        %1178 = vmatpush1.msra.mxu0 %v379
        %1179 = vmatprep.subr.mxu0 0.0
        %1180 = vmatpush1.msra.mxu0 %v380
        %1181 = vmatprep.subr.mxu0 0.0
        %1182 = vmatpush1.msra.mxu0 %v381
        %1183 = vmatprep.subr.mxu0 0.0
        %1184 = vmatpush1.msra.mxu0 %v382
        %1185 = vmatprep.subr.mxu0 0.0
        %1186 = vmatpush1.msra.mxu0 %v383
        %1187 = vmatprep.subr.mxu0 0.0
        %1188 = vmatpush1.msra.mxu0 %v384
        %1189 = vmatprep.subr.mxu0 0.0
        %1190 = vmatpush1.msra.mxu0 %v385
        %1191 = vmatprep.subr.mxu0 0.0
        %1192 = vmatpush1.msra.mxu0 %v386
        %1193 = vmatprep.subr.mxu0 0.0
        %1194 = vmatpush1.msra.mxu0 %v387
        %1195 = vmatprep.subr.mxu0 0.0
        %1196 = vmatpush1.msra.mxu0 %v388
        %1197 = vmatprep.subr.mxu0 0.0
        %1198 = vmatpush1.msra.mxu0 %v389
        %1199 = vmatprep.subr.mxu0 0.0
        %1200 = vmatpush1.msra.mxu0 %v390
        %1201 = vmatprep.subr.mxu0 0.0
        %1202 = vmatpush1.msra.mxu0 %v391
        %1203 = vmatprep.subr.mxu0 0.0
        %1204 = vmatpush1.msra.mxu0 %v392
        %1205 = vmatprep.subr.mxu0 0.0
        %1206 = vmatpush1.msra.mxu0 %v393
        %1207 = vmatprep.subr.mxu0 0.0
        %1208 = vmatpush1.msra.mxu0 %v394
        %1209 = vmatprep.subr.mxu0 0.0
        %1210 = vmatpush1.msra.mxu0 %v395
        %1211 = vmatprep.subr.mxu0 0.0
        %1212 = vmatpush1.msra.mxu0 %v396
        %1213 = vmatprep.subr.mxu0 0.0
        %1214 = vmatpush1.msra.mxu0 %v397
        %1215 = vmatprep.subr.mxu0 0.0
        %1216 = vmatpush1.msra.mxu0 %v398
        %1217 = vmatprep.subr.mxu0 0.0
        %1218 = vmatpush1.msra.mxu0 %v399
        %1219 = vmatprep.subr.mxu0 0.0
        %1220 = vmatpush1.msra.mxu0 %v400
        %1221 = vmatprep.subr.mxu0 0.0
        %1222 = vmatpush1.msra.mxu0 %v401
        %1223 = vmatprep.subr.mxu0 0.0
        %1224 = vmatpush1.msra.mxu0 %v402
        %1225 = vmatprep.subr.mxu0 0.0
        %1226 = vmatpush1.msra.mxu0 %v403
        %1227 = vmatprep.subr.mxu0 0.0
        %1228 = vmatpush1.msra.mxu0 %v404
        %1229 = vmatprep.subr.mxu0 0.0
        %1230 = vmatpush1.msra.mxu0 %v405
        %1231 = vmatprep.subr.mxu0 0.0
        %1232 = vmatpush1.msra.mxu0 %v406
        %1233 = vmatprep.subr.mxu0 0.0
        %1234 = vmatpush1.msra.mxu0 %v407
        %1235 = vmatprep.subr.mxu0 0.0
        %1236 = vmatpush1.msra.mxu0 %v408
        %1237 = vmatprep.mubr.f32.mxu0 %v1172
        %1238 = vmatmul.mubr.f32.gmra.mrb[0].mxu0 %v1171
        %v1239 = vpop.f32.mrb[0].mxu0
        %v1240 = vadd.f32 %v436, %v1239
        %v1241 = vpop.f32.mrb[0].mxu0
        %1242 = vdwg.mxu0
        %v1243 = vmax.f32 %v1240, 0.0
        %s1244 = scalar_lea.vmem [#allocation2], 32
        %1245 = vst.msk [vmem:[%s1244] sm:$0x1f] %vm509, %v1243
        %v1246 = vld [vmem:[%s980] sm:$0x1f]
        %1247 = vst.msk [vmem:[#allocation5] sm:$0x1f] %vm411, %v1246
        %v1248 = vld [vmem:[%s977 + $0x1] sm:$0x1f]
        %1250 = vrot.lane.b32.xlu0 %v1248, 64
        %v1251 = vpop.permute.xlu0 %1250
        %1253 = vst.msk [vmem:[#allocation5] sm:$0x1f] %vm418, %v1251
        %v1254 = vld [vmem:[%s1164] sm:$0x1f]
        %1255 = vst.msk [vmem:[#allocation5 + $0x8] sm:$0x1f] %vm411, %v1254
        %v1256 = vld [vmem:[%s1161 + $0x1] sm:$0x1f]
        %1258 = vrot.lane.b32.xlu0 %v1256, 64
        %v1259 = vpop.permute.xlu0 %1258
        %1261 = vst.msk [vmem:[#allocation5 + $0x8] sm:$0x1f] %vm418, %v1259
        %v1262 = vld [vmem:[#allocation5] sm:$0x1f]
        %v1263 = vld [vmem:[#allocation5 + $0x8] sm:$0x1f]
        %1264 = vmatprep.subr.mxu0 0.0
        %1265 = vmatpush1.msra.mxu0 %v377
        %1266 = vmatprep.subr.mxu0 0.0
        %1267 = vmatpush1.msra.mxu0 %v378
        %1268 = vmatprep.subr.mxu0 0.0
        %1269 = vmatpush1.msra.mxu0 %v379
        %1270 = vmatprep.subr.mxu0 0.0
        %1271 = vmatpush1.msra.mxu0 %v380
        %1272 = vmatprep.subr.mxu0 0.0
        %1273 = vmatpush1.msra.mxu0 %v381
        %1274 = vmatprep.subr.mxu0 0.0
        %1275 = vmatpush1.msra.mxu0 %v382
        %1276 = vmatprep.subr.mxu0 0.0
        %1277 = vmatpush1.msra.mxu0 %v383
        %1278 = vmatprep.subr.mxu0 0.0
        %1279 = vmatpush1.msra.mxu0 %v384
        %1280 = vmatprep.subr.mxu0 0.0
        %1281 = vmatpush1.msra.mxu0 %v385
        %1282 = vmatprep.subr.mxu0 0.0
        %1283 = vmatpush1.msra.mxu0 %v386
        %1284 = vmatprep.subr.mxu0 0.0
        %1285 = vmatpush1.msra.mxu0 %v387
        %1286 = vmatprep.subr.mxu0 0.0
        %1287 = vmatpush1.msra.mxu0 %v388
        %1288 = vmatprep.subr.mxu0 0.0
        %1289 = vmatpush1.msra.mxu0 %v389
        %1290 = vmatprep.subr.mxu0 0.0
        %1291 = vmatpush1.msra.mxu0 %v390
        %1292 = vmatprep.subr.mxu0 0.0
        %1293 = vmatpush1.msra.mxu0 %v391
        %1294 = vmatprep.subr.mxu0 0.0
        %1295 = vmatpush1.msra.mxu0 %v392
        %1296 = vmatprep.subr.mxu0 0.0
        %1297 = vmatpush1.msra.mxu0 %v393
        %1298 = vmatprep.subr.mxu0 0.0
        %1299 = vmatpush1.msra.mxu0 %v394
        %1300 = vmatprep.subr.mxu0 0.0
        %1301 = vmatpush1.msra.mxu0 %v395
        %1302 = vmatprep.subr.mxu0 0.0
        %1303 = vmatpush1.msra.mxu0 %v396
        %1304 = vmatprep.subr.mxu0 0.0
        %1305 = vmatpush1.msra.mxu0 %v397
        %1306 = vmatprep.subr.mxu0 0.0
        %1307 = vmatpush1.msra.mxu0 %v398
        %1308 = vmatprep.subr.mxu0 0.0
        %1309 = vmatpush1.msra.mxu0 %v399
        %1310 = vmatprep.subr.mxu0 0.0
        %1311 = vmatpush1.msra.mxu0 %v400
        %1312 = vmatprep.subr.mxu0 0.0
        %1313 = vmatpush1.msra.mxu0 %v401
        %1314 = vmatprep.subr.mxu0 0.0
        %1315 = vmatpush1.msra.mxu0 %v402
        %1316 = vmatprep.subr.mxu0 0.0
        %1317 = vmatpush1.msra.mxu0 %v403
        %1318 = vmatprep.subr.mxu0 0.0
        %1319 = vmatpush1.msra.mxu0 %v404
        %1320 = vmatprep.subr.mxu0 0.0
        %1321 = vmatpush1.msra.mxu0 %v405
        %1322 = vmatprep.subr.mxu0 0.0
        %1323 = vmatpush1.msra.mxu0 %v406
        %1324 = vmatprep.subr.mxu0 0.0
        %1325 = vmatpush1.msra.mxu0 %v407
        %1326 = vmatprep.subr.mxu0 0.0
        %1327 = vmatpush1.msra.mxu0 %v408
        %1328 = vmatprep.mubr.f32.mxu0 %v1263
        %1329 = vmatmul.mubr.f32.gmra.mrb[0].mxu0 %v1262
        %v1330 = vpop.f32.mrb[0].mxu0
        %v1331 = vadd.f32 %v436, %v1330
        %v1332 = vpop.f32.mrb[0].mxu0
        %1333 = vdwg.mxu0
        %v1334 = vmax.f32 %v1331, 0.0
        %s1335 = scalar_lea.vmem [#allocation3], 32
        %1336 = vst.msk [vmem:[%s1335] sm:$0x1f] %vm509, %v1334
        %v1337 = vld [vmem:[%s1161] sm:$0x1f]
        %1338 = vst.msk [vmem:[#allocation5] sm:$0x1f] %vm411, %v1337
        %v1339 = vld [vmem:[%s1164] sm:$0x1f]
        %1341 = vrot.lane.b32.xlu0 %v1339, 64
        %v1342 = vpop.permute.xlu0 %1341
        %1344 = vst.msk [vmem:[#allocation5] sm:$0x1f] %vm418, %v1342
        %s1345 = scalar_lea.vmem %s371, 48
        %v1346 = vld [vmem:[%s1345] sm:$0x1f]
        %1347 = vst.msk [vmem:[#allocation5 + $0x8] sm:$0x1f] %vm411, %v1346
        %s1348 = scalar_lea.vmem %s376, 48
        %v1349 = vld [vmem:[%s1348] sm:$0x1f]
        %1351 = vrot.lane.b32.xlu0 %v1349, 64
        %v1352 = vpop.permute.xlu0 %1351
        %1354 = vst.msk [vmem:[#allocation5 + $0x8] sm:$0x1f] %vm418, %v1352
        %v1355 = vld [vmem:[#allocation5] sm:$0x1f]
        %v1356 = vld [vmem:[#allocation5 + $0x8] sm:$0x1f]
        %1357 = vmatprep.subr.mxu0 0.0
        %1358 = vmatpush1.msra.mxu0 %v377
        %1359 = vmatprep.subr.mxu0 0.0
        %1360 = vmatpush1.msra.mxu0 %v378
        %1361 = vmatprep.subr.mxu0 0.0
        %1362 = vmatpush1.msra.mxu0 %v379
        %1363 = vmatprep.subr.mxu0 0.0
        %1364 = vmatpush1.msra.mxu0 %v380
        %1365 = vmatprep.subr.mxu0 0.0
        %1366 = vmatpush1.msra.mxu0 %v381
        %1367 = vmatprep.subr.mxu0 0.0
        %1368 = vmatpush1.msra.mxu0 %v382
        %1369 = vmatprep.subr.mxu0 0.0
        %1370 = vmatpush1.msra.mxu0 %v383
        %1371 = vmatprep.subr.mxu0 0.0
        %1372 = vmatpush1.msra.mxu0 %v384
        %1373 = vmatprep.subr.mxu0 0.0
        %1374 = vmatpush1.msra.mxu0 %v385
        %1375 = vmatprep.subr.mxu0 0.0
        %1376 = vmatpush1.msra.mxu0 %v386
        %1377 = vmatprep.subr.mxu0 0.0
        %1378 = vmatpush1.msra.mxu0 %v387
        %1379 = vmatprep.subr.mxu0 0.0
        %1380 = vmatpush1.msra.mxu0 %v388
        %1381 = vmatprep.subr.mxu0 0.0
        %1382 = vmatpush1.msra.mxu0 %v389
        %1383 = vmatprep.subr.mxu0 0.0
        %1384 = vmatpush1.msra.mxu0 %v390
        %1385 = vmatprep.subr.mxu0 0.0
        %1386 = vmatpush1.msra.mxu0 %v391
        %1387 = vmatprep.subr.mxu0 0.0
        %1388 = vmatpush1.msra.mxu0 %v392
        %1389 = vmatprep.subr.mxu0 0.0
        %1390 = vmatpush1.msra.mxu0 %v393
        %1391 = vmatprep.subr.mxu0 0.0
        %1392 = vmatpush1.msra.mxu0 %v394
        %1393 = vmatprep.subr.mxu0 0.0
        %1394 = vmatpush1.msra.mxu0 %v395
        %1395 = vmatprep.subr.mxu0 0.0
        %1396 = vmatpush1.msra.mxu0 %v396
        %1397 = vmatprep.subr.mxu0 0.0
        %1398 = vmatpush1.msra.mxu0 %v397
        %1399 = vmatprep.subr.mxu0 0.0
        %1400 = vmatpush1.msra.mxu0 %v398
        %1401 = vmatprep.subr.mxu0 0.0
        %1402 = vmatpush1.msra.mxu0 %v399
        %1403 = vmatprep.subr.mxu0 0.0
        %1404 = vmatpush1.msra.mxu0 %v400
        %1405 = vmatprep.subr.mxu0 0.0
        %1406 = vmatpush1.msra.mxu0 %v401
        %1407 = vmatprep.subr.mxu0 0.0
        %1408 = vmatpush1.msra.mxu0 %v402
        %1409 = vmatprep.subr.mxu0 0.0
        %1410 = vmatpush1.msra.mxu0 %v403
        %1411 = vmatprep.subr.mxu0 0.0
        %1412 = vmatpush1.msra.mxu0 %v404
        %1413 = vmatprep.subr.mxu0 0.0
        %1414 = vmatpush1.msra.mxu0 %v405
        %1415 = vmatprep.subr.mxu0 0.0
        %1416 = vmatpush1.msra.mxu0 %v406
        %1417 = vmatprep.subr.mxu0 0.0
        %1418 = vmatpush1.msra.mxu0 %v407
        %1419 = vmatprep.subr.mxu0 0.0
        %1420 = vmatpush1.msra.mxu0 %v408
        %1421 = vmatprep.mubr.f32.mxu0 %v1356
        %1422 = vmatmul.mubr.f32.gmra.mrb[0].mxu0 %v1355
        %v1423 = vpop.f32.mrb[0].mxu0
        %v1424 = vadd.f32 %v436, %v1423
        %v1425 = vpop.f32.mrb[0].mxu0
        %1426 = vdwg.mxu0
        %v1427 = vmax.f32 %v1424, 0.0
        %s1428 = scalar_lea.vmem [#allocation2], 40
        %1429 = vst.msk [vmem:[%s1428] sm:$0x1f] %vm509, %v1427
        %v1430 = vld [vmem:[%s1164] sm:$0x1f]
        %1431 = vst.msk [vmem:[#allocation5] sm:$0x1f] %vm411, %v1430
        %v1432 = vld [vmem:[%s1161 + $0x1] sm:$0x1f]
        %1434 = vrot.lane.b32.xlu0 %v1432, 64
        %v1435 = vpop.permute.xlu0 %1434
        %1437 = vst.msk [vmem:[#allocation5] sm:$0x1f] %vm418, %v1435
        %v1438 = vld [vmem:[%s1348] sm:$0x1f]
        %1439 = vst.msk [vmem:[#allocation5 + $0x8] sm:$0x1f] %vm411, %v1438
        %v1440 = vld [vmem:[%s1345 + $0x1] sm:$0x1f]
        %1442 = vrot.lane.b32.xlu0 %v1440, 64
        %v1443 = vpop.permute.xlu0 %1442
        %1445 = vst.msk [vmem:[#allocation5 + $0x8] sm:$0x1f] %vm418, %v1443
        %v1446 = vld [vmem:[#allocation5] sm:$0x1f]
        %v1447 = vld [vmem:[#allocation5 + $0x8] sm:$0x1f]
        %1448 = vmatprep.subr.mxu0 0.0
        %1449 = vmatpush1.msra.mxu0 %v377
        %1450 = vmatprep.subr.mxu0 0.0
        %1451 = vmatpush1.msra.mxu0 %v378
        %1452 = vmatprep.subr.mxu0 0.0
        %1453 = vmatpush1.msra.mxu0 %v379
        %1454 = vmatprep.subr.mxu0 0.0
        %1455 = vmatpush1.msra.mxu0 %v380
        %1456 = vmatprep.subr.mxu0 0.0
        %1457 = vmatpush1.msra.mxu0 %v381
        %1458 = vmatprep.subr.mxu0 0.0
        %1459 = vmatpush1.msra.mxu0 %v382
        %1460 = vmatprep.subr.mxu0 0.0
        %1461 = vmatpush1.msra.mxu0 %v383
        %1462 = vmatprep.subr.mxu0 0.0
        %1463 = vmatpush1.msra.mxu0 %v384
        %1464 = vmatprep.subr.mxu0 0.0
        %1465 = vmatpush1.msra.mxu0 %v385
        %1466 = vmatprep.subr.mxu0 0.0
        %1467 = vmatpush1.msra.mxu0 %v386
        %1468 = vmatprep.subr.mxu0 0.0
        %1469 = vmatpush1.msra.mxu0 %v387
        %1470 = vmatprep.subr.mxu0 0.0
        %1471 = vmatpush1.msra.mxu0 %v388
        %1472 = vmatprep.subr.mxu0 0.0
        %1473 = vmatpush1.msra.mxu0 %v389
        %1474 = vmatprep.subr.mxu0 0.0
        %1475 = vmatpush1.msra.mxu0 %v390
        %1476 = vmatprep.subr.mxu0 0.0
        %1477 = vmatpush1.msra.mxu0 %v391
        %1478 = vmatprep.subr.mxu0 0.0
        %1479 = vmatpush1.msra.mxu0 %v392
        %1480 = vmatprep.subr.mxu0 0.0
        %1481 = vmatpush1.msra.mxu0 %v393
        %1482 = vmatprep.subr.mxu0 0.0
        %1483 = vmatpush1.msra.mxu0 %v394
        %1484 = vmatprep.subr.mxu0 0.0
        %1485 = vmatpush1.msra.mxu0 %v395
        %1486 = vmatprep.subr.mxu0 0.0
        %1487 = vmatpush1.msra.mxu0 %v396
        %1488 = vmatprep.subr.mxu0 0.0
        %1489 = vmatpush1.msra.mxu0 %v397
        %1490 = vmatprep.subr.mxu0 0.0
        %1491 = vmatpush1.msra.mxu0 %v398
        %1492 = vmatprep.subr.mxu0 0.0
        %1493 = vmatpush1.msra.mxu0 %v399
        %1494 = vmatprep.subr.mxu0 0.0
        %1495 = vmatpush1.msra.mxu0 %v400
        %1496 = vmatprep.subr.mxu0 0.0
        %1497 = vmatpush1.msra.mxu0 %v401
        %1498 = vmatprep.subr.mxu0 0.0
        %1499 = vmatpush1.msra.mxu0 %v402
        %1500 = vmatprep.subr.mxu0 0.0
        %1501 = vmatpush1.msra.mxu0 %v403
        %1502 = vmatprep.subr.mxu0 0.0
        %1503 = vmatpush1.msra.mxu0 %v404
        %1504 = vmatprep.subr.mxu0 0.0
        %1505 = vmatpush1.msra.mxu0 %v405
        %1506 = vmatprep.subr.mxu0 0.0
        %1507 = vmatpush1.msra.mxu0 %v406
        %1508 = vmatprep.subr.mxu0 0.0
        %1509 = vmatpush1.msra.mxu0 %v407
        %1510 = vmatprep.subr.mxu0 0.0
        %1511 = vmatpush1.msra.mxu0 %v408
        %1512 = vmatprep.mubr.f32.mxu0 %v1447
        %1513 = vmatmul.mubr.f32.gmra.mrb[0].mxu0 %v1446
        %v1514 = vpop.f32.mrb[0].mxu0
        %v1515 = vadd.f32 %v436, %v1514
        %v1516 = vpop.f32.mrb[0].mxu0
        %1517 = vdwg.mxu0
        %v1518 = vmax.f32 %v1515, 0.0
        %s1519 = scalar_lea.vmem [#allocation3], 40
        %1520 = vst.msk [vmem:[%s1519] sm:$0x1f] %vm509, %v1518
        %v1521 = vld [vmem:[%s1345] sm:$0x1f]
        %1522 = vst.msk [vmem:[#allocation5] sm:$0x1f] %vm411, %v1521
        %v1523 = vld [vmem:[%s1348] sm:$0x1f]
        %1525 = vrot.lane.b32.xlu0 %v1523, 64
        %v1526 = vpop.permute.xlu0 %1525
        %1528 = vst.msk [vmem:[#allocation5] sm:$0x1f] %vm418, %v1526
        %s1529 = scalar_lea.vmem %s371, 56
        %v1530 = vld [vmem:[%s1529] sm:$0x1f]
        %1531 = vst.msk [vmem:[#allocation5 + $0x8] sm:$0x1f] %vm411, %v1530
        %s1532 = scalar_lea.vmem %s376, 56
        %v1533 = vld [vmem:[%s1532] sm:$0x1f]
        %1535 = vrot.lane.b32.xlu0 %v1533, 64
        %v1536 = vpop.permute.xlu0 %1535
        %1538 = vst.msk [vmem:[#allocation5 + $0x8] sm:$0x1f] %vm418, %v1536
        %v1539 = vld [vmem:[#allocation5] sm:$0x1f]
        %v1540 = vld [vmem:[#allocation5 + $0x8] sm:$0x1f]
        %1541 = vmatprep.subr.mxu0 0.0
        %1542 = vmatpush1.msra.mxu0 %v377
        %1543 = vmatprep.subr.mxu0 0.0
        %1544 = vmatpush1.msra.mxu0 %v378
        %1545 = vmatprep.subr.mxu0 0.0
        %1546 = vmatpush1.msra.mxu0 %v379
        %1547 = vmatprep.subr.mxu0 0.0
        %1548 = vmatpush1.msra.mxu0 %v380
        %1549 = vmatprep.subr.mxu0 0.0
        %1550 = vmatpush1.msra.mxu0 %v381
        %1551 = vmatprep.subr.mxu0 0.0
        %1552 = vmatpush1.msra.mxu0 %v382
        %1553 = vmatprep.subr.mxu0 0.0
        %1554 = vmatpush1.msra.mxu0 %v383
        %1555 = vmatprep.subr.mxu0 0.0
        %1556 = vmatpush1.msra.mxu0 %v384
        %1557 = vmatprep.subr.mxu0 0.0
        %1558 = vmatpush1.msra.mxu0 %v385
        %1559 = vmatprep.subr.mxu0 0.0
        %1560 = vmatpush1.msra.mxu0 %v386
        %1561 = vmatprep.subr.mxu0 0.0
        %1562 = vmatpush1.msra.mxu0 %v387
        %1563 = vmatprep.subr.mxu0 0.0
        %1564 = vmatpush1.msra.mxu0 %v388
        %1565 = vmatprep.subr.mxu0 0.0
        %1566 = vmatpush1.msra.mxu0 %v389
        %1567 = vmatprep.subr.mxu0 0.0
        %1568 = vmatpush1.msra.mxu0 %v390
        %1569 = vmatprep.subr.mxu0 0.0
        %1570 = vmatpush1.msra.mxu0 %v391
        %1571 = vmatprep.subr.mxu0 0.0
        %1572 = vmatpush1.msra.mxu0 %v392
        %1573 = vmatprep.subr.mxu0 0.0
        %1574 = vmatpush1.msra.mxu0 %v393
        %1575 = vmatprep.subr.mxu0 0.0
        %1576 = vmatpush1.msra.mxu0 %v394
        %1577 = vmatprep.subr.mxu0 0.0
        %1578 = vmatpush1.msra.mxu0 %v395
        %1579 = vmatprep.subr.mxu0 0.0
        %1580 = vmatpush1.msra.mxu0 %v396
        %1581 = vmatprep.subr.mxu0 0.0
        %1582 = vmatpush1.msra.mxu0 %v397
        %1583 = vmatprep.subr.mxu0 0.0
        %1584 = vmatpush1.msra.mxu0 %v398
        %1585 = vmatprep.subr.mxu0 0.0
        %1586 = vmatpush1.msra.mxu0 %v399
        %1587 = vmatprep.subr.mxu0 0.0
        %1588 = vmatpush1.msra.mxu0 %v400
        %1589 = vmatprep.subr.mxu0 0.0
        %1590 = vmatpush1.msra.mxu0 %v401
        %1591 = vmatprep.subr.mxu0 0.0
        %1592 = vmatpush1.msra.mxu0 %v402
        %1593 = vmatprep.subr.mxu0 0.0
        %1594 = vmatpush1.msra.mxu0 %v403
        %1595 = vmatprep.subr.mxu0 0.0
        %1596 = vmatpush1.msra.mxu0 %v404
        %1597 = vmatprep.subr.mxu0 0.0
        %1598 = vmatpush1.msra.mxu0 %v405
        %1599 = vmatprep.subr.mxu0 0.0
        %1600 = vmatpush1.msra.mxu0 %v406
        %1601 = vmatprep.subr.mxu0 0.0
        %1602 = vmatpush1.msra.mxu0 %v407
        %1603 = vmatprep.subr.mxu0 0.0
        %1604 = vmatpush1.msra.mxu0 %v408
        %1605 = vmatprep.mubr.f32.mxu0 %v1540
        %1606 = vmatmul.mubr.f32.gmra.mrb[0].mxu0 %v1539
        %v1607 = vpop.f32.mrb[0].mxu0
        %v1608 = vadd.f32 %v436, %v1607
        %v1609 = vpop.f32.mrb[0].mxu0
        %1610 = vdwg.mxu0
        %v1611 = vmax.f32 %v1608, 0.0
        %s1612 = scalar_lea.vmem [#allocation2], 48
        %1613 = vst.msk [vmem:[%s1612] sm:$0x1f] %vm509, %v1611
        %v1614 = vld [vmem:[%s1348] sm:$0x1f]
        %1615 = vst.msk [vmem:[#allocation5] sm:$0x1f] %vm411, %v1614
        %v1616 = vld [vmem:[%s1345 + $0x1] sm:$0x1f]
        %1618 = vrot.lane.b32.xlu0 %v1616, 64
        %v1619 = vpop.permute.xlu0 %1618
        %1621 = vst.msk [vmem:[#allocation5] sm:$0x1f] %vm418, %v1619
        %v1622 = vld [vmem:[%s1532] sm:$0x1f]
        %1623 = vst.msk [vmem:[#allocation5 + $0x8] sm:$0x1f] %vm411, %v1622
        %v1624 = vld [vmem:[%s1529 + $0x1] sm:$0x1f]
        %1626 = vrot.lane.b32.xlu0 %v1624, 64
        %v1627 = vpop.permute.xlu0 %1626
        %1629 = vst.msk [vmem:[#allocation5 + $0x8] sm:$0x1f] %vm418, %v1627
        %v1630 = vld [vmem:[#allocation5] sm:$0x1f]
        %v1631 = vld [vmem:[#allocation5 + $0x8] sm:$0x1f]
        %1632 = vmatprep.subr.mxu0 0.0
        %1633 = vmatpush1.msra.mxu0 %v377
        %1634 = vmatprep.subr.mxu0 0.0
        %1635 = vmatpush1.msra.mxu0 %v378
        %1636 = vmatprep.subr.mxu0 0.0
        %1637 = vmatpush1.msra.mxu0 %v379
        %1638 = vmatprep.subr.mxu0 0.0
        %1639 = vmatpush1.msra.mxu0 %v380
        %1640 = vmatprep.subr.mxu0 0.0
        %1641 = vmatpush1.msra.mxu0 %v381
        %1642 = vmatprep.subr.mxu0 0.0
        %1643 = vmatpush1.msra.mxu0 %v382
        %1644 = vmatprep.subr.mxu0 0.0
        %1645 = vmatpush1.msra.mxu0 %v383
        %1646 = vmatprep.subr.mxu0 0.0
        %1647 = vmatpush1.msra.mxu0 %v384
        %1648 = vmatprep.subr.mxu0 0.0
        %1649 = vmatpush1.msra.mxu0 %v385
        %1650 = vmatprep.subr.mxu0 0.0
        %1651 = vmatpush1.msra.mxu0 %v386
        %1652 = vmatprep.subr.mxu0 0.0
        %1653 = vmatpush1.msra.mxu0 %v387
        %1654 = vmatprep.subr.mxu0 0.0
        %1655 = vmatpush1.msra.mxu0 %v388
        %1656 = vmatprep.subr.mxu0 0.0
        %1657 = vmatpush1.msra.mxu0 %v389
        %1658 = vmatprep.subr.mxu0 0.0
        %1659 = vmatpush1.msra.mxu0 %v390
        %1660 = vmatprep.subr.mxu0 0.0
        %1661 = vmatpush1.msra.mxu0 %v391
        %1662 = vmatprep.subr.mxu0 0.0
        %1663 = vmatpush1.msra.mxu0 %v392
        %1664 = vmatprep.subr.mxu0 0.0
        %1665 = vmatpush1.msra.mxu0 %v393
        %1666 = vmatprep.subr.mxu0 0.0
        %1667 = vmatpush1.msra.mxu0 %v394
        %1668 = vmatprep.subr.mxu0 0.0
        %1669 = vmatpush1.msra.mxu0 %v395
        %1670 = vmatprep.subr.mxu0 0.0
        %1671 = vmatpush1.msra.mxu0 %v396
        %1672 = vmatprep.subr.mxu0 0.0
        %1673 = vmatpush1.msra.mxu0 %v397
        %1674 = vmatprep.subr.mxu0 0.0
        %1675 = vmatpush1.msra.mxu0 %v398
        %1676 = vmatprep.subr.mxu0 0.0
        %1677 = vmatpush1.msra.mxu0 %v399
        %1678 = vmatprep.subr.mxu0 0.0
        %1679 = vmatpush1.msra.mxu0 %v400
        %1680 = vmatprep.subr.mxu0 0.0
        %1681 = vmatpush1.msra.mxu0 %v401
        %1682 = vmatprep.subr.mxu0 0.0
        %1683 = vmatpush1.msra.mxu0 %v402
        %1684 = vmatprep.subr.mxu0 0.0
        %1685 = vmatpush1.msra.mxu0 %v403
        %1686 = vmatprep.subr.mxu0 0.0
        %1687 = vmatpush1.msra.mxu0 %v404
        %1688 = vmatprep.subr.mxu0 0.0
        %1689 = vmatpush1.msra.mxu0 %v405
        %1690 = vmatprep.subr.mxu0 0.0
        %1691 = vmatpush1.msra.mxu0 %v406
        %1692 = vmatprep.subr.mxu0 0.0
        %1693 = vmatpush1.msra.mxu0 %v407
        %1694 = vmatprep.subr.mxu0 0.0
        %1695 = vmatpush1.msra.mxu0 %v408
        %1696 = vmatprep.mubr.f32.mxu0 %v1631
        %1697 = vmatmul.mubr.f32.gmra.mrb[0].mxu0 %v1630
        %v1698 = vpop.f32.mrb[0].mxu0
        %v1699 = vadd.f32 %v436, %v1698
        %v1700 = vpop.f32.mrb[0].mxu0
        %1701 = vdwg.mxu0
        %v1702 = vmax.f32 %v1699, 0.0
        %s1703 = scalar_lea.vmem [#allocation3], 48
        %1704 = vst.msk [vmem:[%s1703] sm:$0x1f] %vm509, %v1702
        %v1705 = vld [vmem:[%s1529] sm:$0x1f]
        %1706 = vst.msk [vmem:[#allocation5] sm:$0x1f] %vm411, %v1705
        %v1707 = vld [vmem:[%s1532] sm:$0x1f]
        %1709 = vrot.lane.b32.xlu0 %v1707, 64
        %v1710 = vpop.permute.xlu0 %1709
        %1712 = vst.msk [vmem:[#allocation5] sm:$0x1f] %vm418, %v1710
        %s1713 = scalar_lea.vmem %s371, 64
        %v1714 = vld [vmem:[%s1713] sm:$0x1f]
        %1715 = vst.msk [vmem:[#allocation5 + $0x8] sm:$0x1f] %vm411, %v1714
        %s1716 = scalar_lea.vmem %s376, 64
        %v1717 = vld [vmem:[%s1716] sm:$0x1f]
        %1719 = vrot.lane.b32.xlu0 %v1717, 64
        %v1720 = vpop.permute.xlu0 %1719
        %1722 = vst.msk [vmem:[#allocation5 + $0x8] sm:$0x1f] %vm418, %v1720
        %v1723 = vld [vmem:[#allocation5] sm:$0x1f]
        %v1724 = vld [vmem:[#allocation5 + $0x8] sm:$0x1f]
        %1725 = vmatprep.subr.mxu0 0.0
        %1726 = vmatpush1.msra.mxu0 %v377
        %1727 = vmatprep.subr.mxu0 0.0
        %1728 = vmatpush1.msra.mxu0 %v378
        %1729 = vmatprep.subr.mxu0 0.0
        %1730 = vmatpush1.msra.mxu0 %v379
        %1731 = vmatprep.subr.mxu0 0.0
        %1732 = vmatpush1.msra.mxu0 %v380
        %1733 = vmatprep.subr.mxu0 0.0
        %1734 = vmatpush1.msra.mxu0 %v381
        %1735 = vmatprep.subr.mxu0 0.0
        %1736 = vmatpush1.msra.mxu0 %v382
        %1737 = vmatprep.subr.mxu0 0.0
        %1738 = vmatpush1.msra.mxu0 %v383
        %1739 = vmatprep.subr.mxu0 0.0
        %1740 = vmatpush1.msra.mxu0 %v384
        %1741 = vmatprep.subr.mxu0 0.0
        %1742 = vmatpush1.msra.mxu0 %v385
        %1743 = vmatprep.subr.mxu0 0.0
        %1744 = vmatpush1.msra.mxu0 %v386
        %1745 = vmatprep.subr.mxu0 0.0
        %1746 = vmatpush1.msra.mxu0 %v387
        %1747 = vmatprep.subr.mxu0 0.0
        %1748 = vmatpush1.msra.mxu0 %v388
        %1749 = vmatprep.subr.mxu0 0.0
        %1750 = vmatpush1.msra.mxu0 %v389
        %1751 = vmatprep.subr.mxu0 0.0
        %1752 = vmatpush1.msra.mxu0 %v390
        %1753 = vmatprep.subr.mxu0 0.0
        %1754 = vmatpush1.msra.mxu0 %v391
        %1755 = vmatprep.subr.mxu0 0.0
        %1756 = vmatpush1.msra.mxu0 %v392
        %1757 = vmatprep.subr.mxu0 0.0
        %1758 = vmatpush1.msra.mxu0 %v393
        %1759 = vmatprep.subr.mxu0 0.0
        %1760 = vmatpush1.msra.mxu0 %v394
        %1761 = vmatprep.subr.mxu0 0.0
        %1762 = vmatpush1.msra.mxu0 %v395
        %1763 = vmatprep.subr.mxu0 0.0
        %1764 = vmatpush1.msra.mxu0 %v396
        %1765 = vmatprep.subr.mxu0 0.0
        %1766 = vmatpush1.msra.mxu0 %v397
        %1767 = vmatprep.subr.mxu0 0.0
        %1768 = vmatpush1.msra.mxu0 %v398
        %1769 = vmatprep.subr.mxu0 0.0
        %1770 = vmatpush1.msra.mxu0 %v399
        %1771 = vmatprep.subr.mxu0 0.0
        %1772 = vmatpush1.msra.mxu0 %v400
        %1773 = vmatprep.subr.mxu0 0.0
        %1774 = vmatpush1.msra.mxu0 %v401
        %1775 = vmatprep.subr.mxu0 0.0
        %1776 = vmatpush1.msra.mxu0 %v402
        %1777 = vmatprep.subr.mxu0 0.0
        %1778 = vmatpush1.msra.mxu0 %v403
        %1779 = vmatprep.subr.mxu0 0.0
        %1780 = vmatpush1.msra.mxu0 %v404
        %1781 = vmatprep.subr.mxu0 0.0
        %1782 = vmatpush1.msra.mxu0 %v405
        %1783 = vmatprep.subr.mxu0 0.0
        %1784 = vmatpush1.msra.mxu0 %v406
        %1785 = vmatprep.subr.mxu0 0.0
        %1786 = vmatpush1.msra.mxu0 %v407
        %1787 = vmatprep.subr.mxu0 0.0
        %1788 = vmatpush1.msra.mxu0 %v408
        %1789 = vmatprep.mubr.f32.mxu0 %v1724
        %1790 = vmatmul.mubr.f32.gmra.mrb[0].mxu0 %v1723
        %v1791 = vpop.f32.mrb[0].mxu0
        %v1792 = vadd.f32 %v436, %v1791
        %v1793 = vpop.f32.mrb[0].mxu0
        %1794 = vdwg.mxu0
        %v1795 = vmax.f32 %v1792, 0.0
        %s1796 = scalar_lea.vmem [#allocation2], 56
        %1797 = vst.msk [vmem:[%s1796] sm:$0x1f] %vm509, %v1795
        %v1798 = vld [vmem:[%s1532] sm:$0x1f]
        %1799 = vst.msk [vmem:[#allocation5] sm:$0x1f] %vm411, %v1798
        %v1800 = vld [vmem:[%s1529 + $0x1] sm:$0x1f]
        %1802 = vrot.lane.b32.xlu0 %v1800, 64
        %v1803 = vpop.permute.xlu0 %1802
        %1805 = vst.msk [vmem:[#allocation5] sm:$0x1f] %vm418, %v1803
        %v1806 = vld [vmem:[%s1716] sm:$0x1f]
        %1807 = vst.msk [vmem:[#allocation5 + $0x8] sm:$0x1f] %vm411, %v1806
        %v1808 = vld [vmem:[%s1713 + $0x1] sm:$0x1f]
        %1810 = vrot.lane.b32.xlu0 %v1808, 64
        %v1811 = vpop.permute.xlu0 %1810
        %1813 = vst.msk [vmem:[#allocation5 + $0x8] sm:$0x1f] %vm418, %v1811
        %v1814 = vld [vmem:[#allocation5] sm:$0x1f]
        %v1815 = vld [vmem:[#allocation5 + $0x8] sm:$0x1f]
        %1816 = vmatprep.subr.mxu0 0.0
        %1817 = vmatpush1.msra.mxu0 %v377
        %1818 = vmatprep.subr.mxu0 0.0
        %1819 = vmatpush1.msra.mxu0 %v378
        %1820 = vmatprep.subr.mxu0 0.0
        %1821 = vmatpush1.msra.mxu0 %v379
        %1822 = vmatprep.subr.mxu0 0.0
        %1823 = vmatpush1.msra.mxu0 %v380
        %1824 = vmatprep.subr.mxu0 0.0
        %1825 = vmatpush1.msra.mxu0 %v381
        %1826 = vmatprep.subr.mxu0 0.0
        %1827 = vmatpush1.msra.mxu0 %v382
        %1828 = vmatprep.subr.mxu0 0.0
        %1829 = vmatpush1.msra.mxu0 %v383
        %1830 = vmatprep.subr.mxu0 0.0
        %1831 = vmatpush1.msra.mxu0 %v384
        %1832 = vmatprep.subr.mxu0 0.0
        %1833 = vmatpush1.msra.mxu0 %v385
        %1834 = vmatprep.subr.mxu0 0.0
        %1835 = vmatpush1.msra.mxu0 %v386
        %1836 = vmatprep.subr.mxu0 0.0
        %1837 = vmatpush1.msra.mxu0 %v387
        %1838 = vmatprep.subr.mxu0 0.0
        %1839 = vmatpush1.msra.mxu0 %v388
        %1840 = vmatprep.subr.mxu0 0.0
        %1841 = vmatpush1.msra.mxu0 %v389
        %1842 = vmatprep.subr.mxu0 0.0
        %1843 = vmatpush1.msra.mxu0 %v390
        %1844 = vmatprep.subr.mxu0 0.0
        %1845 = vmatpush1.msra.mxu0 %v391
        %1846 = vmatprep.subr.mxu0 0.0
        %1847 = vmatpush1.msra.mxu0 %v392
        %1848 = vmatprep.subr.mxu0 0.0
        %1849 = vmatpush1.msra.mxu0 %v393
        %1850 = vmatprep.subr.mxu0 0.0
        %1851 = vmatpush1.msra.mxu0 %v394
        %1852 = vmatprep.subr.mxu0 0.0
        %1853 = vmatpush1.msra.mxu0 %v395
        %1854 = vmatprep.subr.mxu0 0.0
        %1855 = vmatpush1.msra.mxu0 %v396
        %1856 = vmatprep.subr.mxu0 0.0
        %1857 = vmatpush1.msra.mxu0 %v397
        %1858 = vmatprep.subr.mxu0 0.0
        %1859 = vmatpush1.msra.mxu0 %v398
        %1860 = vmatprep.subr.mxu0 0.0
        %1861 = vmatpush1.msra.mxu0 %v399
        %1862 = vmatprep.subr.mxu0 0.0
        %1863 = vmatpush1.msra.mxu0 %v400
        %1864 = vmatprep.subr.mxu0 0.0
        %1865 = vmatpush1.msra.mxu0 %v401
        %1866 = vmatprep.subr.mxu0 0.0
        %1867 = vmatpush1.msra.mxu0 %v402
        %1868 = vmatprep.subr.mxu0 0.0
        %1869 = vmatpush1.msra.mxu0 %v403
        %1870 = vmatprep.subr.mxu0 0.0
        %1871 = vmatpush1.msra.mxu0 %v404
        %1872 = vmatprep.subr.mxu0 0.0
        %1873 = vmatpush1.msra.mxu0 %v405
        %1874 = vmatprep.subr.mxu0 0.0
        %1875 = vmatpush1.msra.mxu0 %v406
        %1876 = vmatprep.subr.mxu0 0.0
        %1877 = vmatpush1.msra.mxu0 %v407
        %1878 = vmatprep.subr.mxu0 0.0
        %1879 = vmatpush1.msra.mxu0 %v408
        %1880 = vmatprep.mubr.f32.mxu0 %v1815
        %1881 = vmatmul.mubr.f32.gmra.mrb[0].mxu0 %v1814
        %v1882 = vpop.f32.mrb[0].mxu0
        %v1883 = vadd.f32 %v436, %v1882
        %v1884 = vpop.f32.mrb[0].mxu0
        %1885 = vdwg.mxu0
        %v1886 = vmax.f32 %v1883, 0.0
        %s1887 = scalar_lea.vmem [#allocation3], 56
        %1888 = vst.msk [vmem:[%s1887] sm:$0x1f] %vm509, %v1886
        %v1889 = vld [vmem:[%s1713] sm:$0x1f]
        %1890 = vst.msk [vmem:[#allocation5] sm:$0x1f] %vm411, %v1889
        %v1891 = vld [vmem:[%s1716] sm:$0x1f]
        %1893 = vrot.lane.b32.xlu0 %v1891, 64
        %v1894 = vpop.permute.xlu0 %1893
        %1896 = vst.msk [vmem:[#allocation5] sm:$0x1f] %vm418, %v1894
        %s1897 = scalar_lea.vmem %s371, 72
        %v1898 = vld [vmem:[%s1897] sm:$0x1f]
        %1899 = vst.msk [vmem:[#allocation5 + $0x8] sm:$0x1f] %vm411, %v1898
        %s1900 = scalar_lea.vmem %s376, 72
        %v1901 = vld [vmem:[%s1900] sm:$0x1f]
        %1903 = vrot.lane.b32.xlu0 %v1901, 64
        %v1904 = vpop.permute.xlu0 %1903
        %1906 = vst.msk [vmem:[#allocation5 + $0x8] sm:$0x1f] %vm418, %v1904
        %v1907 = vld [vmem:[#allocation5] sm:$0x1f]
        %v1908 = vld [vmem:[#allocation5 + $0x8] sm:$0x1f]
        %1909 = vmatprep.subr.mxu0 0.0
        %1910 = vmatpush1.msra.mxu0 %v377
        %1911 = vmatprep.subr.mxu0 0.0
        %1912 = vmatpush1.msra.mxu0 %v378
        %1913 = vmatprep.subr.mxu0 0.0
        %1914 = vmatpush1.msra.mxu0 %v379
        %1915 = vmatprep.subr.mxu0 0.0
        %1916 = vmatpush1.msra.mxu0 %v380
        %1917 = vmatprep.subr.mxu0 0.0
        %1918 = vmatpush1.msra.mxu0 %v381
        %1919 = vmatprep.subr.mxu0 0.0
        %1920 = vmatpush1.msra.mxu0 %v382
        %1921 = vmatprep.subr.mxu0 0.0
        %1922 = vmatpush1.msra.mxu0 %v383
        %1923 = vmatprep.subr.mxu0 0.0
        %1924 = vmatpush1.msra.mxu0 %v384
        %1925 = vmatprep.subr.mxu0 0.0
        %1926 = vmatpush1.msra.mxu0 %v385
        %1927 = vmatprep.subr.mxu0 0.0
        %1928 = vmatpush1.msra.mxu0 %v386
        %1929 = vmatprep.subr.mxu0 0.0
        %1930 = vmatpush1.msra.mxu0 %v387
        %1931 = vmatprep.subr.mxu0 0.0
        %1932 = vmatpush1.msra.mxu0 %v388
        %1933 = vmatprep.subr.mxu0 0.0
        %1934 = vmatpush1.msra.mxu0 %v389
        %1935 = vmatprep.subr.mxu0 0.0
        %1936 = vmatpush1.msra.mxu0 %v390
        %1937 = vmatprep.subr.mxu0 0.0
        %1938 = vmatpush1.msra.mxu0 %v391
        %1939 = vmatprep.subr.mxu0 0.0
        %1940 = vmatpush1.msra.mxu0 %v392
        %1941 = vmatprep.subr.mxu0 0.0
        %1942 = vmatpush1.msra.mxu0 %v393
        %1943 = vmatprep.subr.mxu0 0.0
        %1944 = vmatpush1.msra.mxu0 %v394
        %1945 = vmatprep.subr.mxu0 0.0
        %1946 = vmatpush1.msra.mxu0 %v395
        %1947 = vmatprep.subr.mxu0 0.0
        %1948 = vmatpush1.msra.mxu0 %v396
        %1949 = vmatprep.subr.mxu0 0.0
        %1950 = vmatpush1.msra.mxu0 %v397
        %1951 = vmatprep.subr.mxu0 0.0
        %1952 = vmatpush1.msra.mxu0 %v398
        %1953 = vmatprep.subr.mxu0 0.0
        %1954 = vmatpush1.msra.mxu0 %v399
        %1955 = vmatprep.subr.mxu0 0.0
        %1956 = vmatpush1.msra.mxu0 %v400
        %1957 = vmatprep.subr.mxu0 0.0
        %1958 = vmatpush1.msra.mxu0 %v401
        %1959 = vmatprep.subr.mxu0 0.0
        %1960 = vmatpush1.msra.mxu0 %v402
        %1961 = vmatprep.subr.mxu0 0.0
        %1962 = vmatpush1.msra.mxu0 %v403
        %1963 = vmatprep.subr.mxu0 0.0
        %1964 = vmatpush1.msra.mxu0 %v404
        %1965 = vmatprep.subr.mxu0 0.0
        %1966 = vmatpush1.msra.mxu0 %v405
        %1967 = vmatprep.subr.mxu0 0.0
        %1968 = vmatpush1.msra.mxu0 %v406
        %1969 = vmatprep.subr.mxu0 0.0
        %1970 = vmatpush1.msra.mxu0 %v407
        %1971 = vmatprep.subr.mxu0 0.0
        %1972 = vmatpush1.msra.mxu0 %v408
        %1973 = vmatprep.mubr.f32.mxu0 %v1908
        %1974 = vmatmul.mubr.f32.gmra.mrb[0].mxu0 %v1907
        %v1975 = vpop.f32.mrb[0].mxu0
        %v1976 = vadd.f32 %v436, %v1975
        %v1977 = vpop.f32.mrb[0].mxu0
        %1978 = vdwg.mxu0
        %v1979 = vmax.f32 %v1976, 0.0
        %s1980 = scalar_lea.vmem [#allocation2], 64
        %1981 = vst.msk [vmem:[%s1980] sm:$0x1f] %vm509, %v1979
        %v1982 = vld [vmem:[%s1716] sm:$0x1f]
        %1983 = vst.msk [vmem:[#allocation5] sm:$0x1f] %vm411, %v1982
        %v1984 = vld [vmem:[%s1713 + $0x1] sm:$0x1f]
        %1986 = vrot.lane.b32.xlu0 %v1984, 64
        %v1987 = vpop.permute.xlu0 %1986
        %1989 = vst.msk [vmem:[#allocation5] sm:$0x1f] %vm418, %v1987
        %v1990 = vld [vmem:[%s1900] sm:$0x1f]
        %1991 = vst.msk [vmem:[#allocation5 + $0x8] sm:$0x1f] %vm411, %v1990
        %v1992 = vld [vmem:[%s1897 + $0x1] sm:$0x1f]
        %1994 = vrot.lane.b32.xlu0 %v1992, 64
        %v1995 = vpop.permute.xlu0 %1994
        %1997 = vst.msk [vmem:[#allocation5 + $0x8] sm:$0x1f] %vm418, %v1995
        %v1998 = vld [vmem:[#allocation5] sm:$0x1f]
        %v1999 = vld [vmem:[#allocation5 + $0x8] sm:$0x1f]
        %2000 = vmatprep.subr.mxu0 0.0
        %2001 = vmatpush1.msra.mxu0 %v377
        %2002 = vmatprep.subr.mxu0 0.0
        %2003 = vmatpush1.msra.mxu0 %v378
        %2004 = vmatprep.subr.mxu0 0.0
        %2005 = vmatpush1.msra.mxu0 %v379
        %2006 = vmatprep.subr.mxu0 0.0
        %2007 = vmatpush1.msra.mxu0 %v380
        %2008 = vmatprep.subr.mxu0 0.0
        %2009 = vmatpush1.msra.mxu0 %v381
        %2010 = vmatprep.subr.mxu0 0.0
        %2011 = vmatpush1.msra.mxu0 %v382
        %2012 = vmatprep.subr.mxu0 0.0
        %2013 = vmatpush1.msra.mxu0 %v383
        %2014 = vmatprep.subr.mxu0 0.0
        %2015 = vmatpush1.msra.mxu0 %v384
        %2016 = vmatprep.subr.mxu0 0.0
        %2017 = vmatpush1.msra.mxu0 %v385
        %2018 = vmatprep.subr.mxu0 0.0
        %2019 = vmatpush1.msra.mxu0 %v386
        %2020 = vmatprep.subr.mxu0 0.0
        %2021 = vmatpush1.msra.mxu0 %v387
        %2022 = vmatprep.subr.mxu0 0.0
        %2023 = vmatpush1.msra.mxu0 %v388
        %2024 = vmatprep.subr.mxu0 0.0
        %2025 = vmatpush1.msra.mxu0 %v389
        %2026 = vmatprep.subr.mxu0 0.0
        %2027 = vmatpush1.msra.mxu0 %v390
        %2028 = vmatprep.subr.mxu0 0.0
        %2029 = vmatpush1.msra.mxu0 %v391
        %2030 = vmatprep.subr.mxu0 0.0
        %2031 = vmatpush1.msra.mxu0 %v392
        %2032 = vmatprep.subr.mxu0 0.0
        %2033 = vmatpush1.msra.mxu0 %v393
        %2034 = vmatprep.subr.mxu0 0.0
        %2035 = vmatpush1.msra.mxu0 %v394
        %2036 = vmatprep.subr.mxu0 0.0
        %2037 = vmatpush1.msra.mxu0 %v395
        %2038 = vmatprep.subr.mxu0 0.0
        %2039 = vmatpush1.msra.mxu0 %v396
        %2040 = vmatprep.subr.mxu0 0.0
        %2041 = vmatpush1.msra.mxu0 %v397
        %2042 = vmatprep.subr.mxu0 0.0
        %2043 = vmatpush1.msra.mxu0 %v398
        %2044 = vmatprep.subr.mxu0 0.0
        %2045 = vmatpush1.msra.mxu0 %v399
        %2046 = vmatprep.subr.mxu0 0.0
        %2047 = vmatpush1.msra.mxu0 %v400
        %2048 = vmatprep.subr.mxu0 0.0
        %2049 = vmatpush1.msra.mxu0 %v401
        %2050 = vmatprep.subr.mxu0 0.0
        %2051 = vmatpush1.msra.mxu0 %v402
        %2052 = vmatprep.subr.mxu0 0.0
        %2053 = vmatpush1.msra.mxu0 %v403
        %2054 = vmatprep.subr.mxu0 0.0
        %2055 = vmatpush1.msra.mxu0 %v404
        %2056 = vmatprep.subr.mxu0 0.0
        %2057 = vmatpush1.msra.mxu0 %v405
        %2058 = vmatprep.subr.mxu0 0.0
        %2059 = vmatpush1.msra.mxu0 %v406
        %2060 = vmatprep.subr.mxu0 0.0
        %2061 = vmatpush1.msra.mxu0 %v407
        %2062 = vmatprep.subr.mxu0 0.0
        %2063 = vmatpush1.msra.mxu0 %v408
        %2064 = vmatprep.mubr.f32.mxu0 %v1999
        %2065 = vmatmul.mubr.f32.gmra.mrb[0].mxu0 %v1998
        %v2066 = vpop.f32.mrb[0].mxu0
        %v2067 = vadd.f32 %v436, %v2066
        %v2068 = vpop.f32.mrb[0].mxu0
        %2069 = vdwg.mxu0
        %v2070 = vmax.f32 %v2067, 0.0
        %s2071 = scalar_lea.vmem [#allocation3], 64
        %2072 = vst.msk [vmem:[%s2071] sm:$0x1f] %vm509, %v2070
        %v2073 = vld [vmem:[%s1897] sm:$0x1f]
        %2074 = vst.msk [vmem:[#allocation5] sm:$0x1f] %vm411, %v2073
        %v2075 = vld [vmem:[%s1900] sm:$0x1f]
        %2077 = vrot.lane.b32.xlu0 %v2075, 64
        %v2078 = vpop.permute.xlu0 %2077
        %2080 = vst.msk [vmem:[#allocation5] sm:$0x1f] %vm418, %v2078
        %s2081 = scalar_lea.vmem %s371, 80
        %v2082 = vld [vmem:[%s2081] sm:$0x1f]
        %2083 = vst.msk [vmem:[#allocation5 + $0x8] sm:$0x1f] %vm411, %v2082
        %s2084 = scalar_lea.vmem %s376, 80
        %v2085 = vld [vmem:[%s2084] sm:$0x1f]
        %2087 = vrot.lane.b32.xlu0 %v2085, 64
        %v2088 = vpop.permute.xlu0 %2087
        %2090 = vst.msk [vmem:[#allocation5 + $0x8] sm:$0x1f] %vm418, %v2088
        %v2091 = vld [vmem:[#allocation5] sm:$0x1f]
        %v2092 = vld [vmem:[#allocation5 + $0x8] sm:$0x1f]
        %2093 = vmatprep.subr.mxu0 0.0
        %2094 = vmatpush1.msra.mxu0 %v377
        %2095 = vmatprep.subr.mxu0 0.0
        %2096 = vmatpush1.msra.mxu0 %v378
        %2097 = vmatprep.subr.mxu0 0.0
        %2098 = vmatpush1.msra.mxu0 %v379
        %2099 = vmatprep.subr.mxu0 0.0
        %2100 = vmatpush1.msra.mxu0 %v380
        %2101 = vmatprep.subr.mxu0 0.0
        %2102 = vmatpush1.msra.mxu0 %v381
        %2103 = vmatprep.subr.mxu0 0.0
        %2104 = vmatpush1.msra.mxu0 %v382
        %2105 = vmatprep.subr.mxu0 0.0
        %2106 = vmatpush1.msra.mxu0 %v383
        %2107 = vmatprep.subr.mxu0 0.0
        %2108 = vmatpush1.msra.mxu0 %v384
        %2109 = vmatprep.subr.mxu0 0.0
        %2110 = vmatpush1.msra.mxu0 %v385
        %2111 = vmatprep.subr.mxu0 0.0
        %2112 = vmatpush1.msra.mxu0 %v386
        %2113 = vmatprep.subr.mxu0 0.0
        %2114 = vmatpush1.msra.mxu0 %v387
        %2115 = vmatprep.subr.mxu0 0.0
        %2116 = vmatpush1.msra.mxu0 %v388
        %2117 = vmatprep.subr.mxu0 0.0
        %2118 = vmatpush1.msra.mxu0 %v389
        %2119 = vmatprep.subr.mxu0 0.0
        %2120 = vmatpush1.msra.mxu0 %v390
        %2121 = vmatprep.subr.mxu0 0.0
        %2122 = vmatpush1.msra.mxu0 %v391
        %2123 = vmatprep.subr.mxu0 0.0
        %2124 = vmatpush1.msra.mxu0 %v392
        %2125 = vmatprep.subr.mxu0 0.0
        %2126 = vmatpush1.msra.mxu0 %v393
        %2127 = vmatprep.subr.mxu0 0.0
        %2128 = vmatpush1.msra.mxu0 %v394
        %2129 = vmatprep.subr.mxu0 0.0
        %2130 = vmatpush1.msra.mxu0 %v395
        %2131 = vmatprep.subr.mxu0 0.0
        %2132 = vmatpush1.msra.mxu0 %v396
        %2133 = vmatprep.subr.mxu0 0.0
        %2134 = vmatpush1.msra.mxu0 %v397
        %2135 = vmatprep.subr.mxu0 0.0
        %2136 = vmatpush1.msra.mxu0 %v398
        %2137 = vmatprep.subr.mxu0 0.0
        %2138 = vmatpush1.msra.mxu0 %v399
        %2139 = vmatprep.subr.mxu0 0.0
        %2140 = vmatpush1.msra.mxu0 %v400
        %2141 = vmatprep.subr.mxu0 0.0
        %2142 = vmatpush1.msra.mxu0 %v401
        %2143 = vmatprep.subr.mxu0 0.0
        %2144 = vmatpush1.msra.mxu0 %v402
        %2145 = vmatprep.subr.mxu0 0.0
        %2146 = vmatpush1.msra.mxu0 %v403
        %2147 = vmatprep.subr.mxu0 0.0
        %2148 = vmatpush1.msra.mxu0 %v404
        %2149 = vmatprep.subr.mxu0 0.0
        %2150 = vmatpush1.msra.mxu0 %v405
        %2151 = vmatprep.subr.mxu0 0.0
        %2152 = vmatpush1.msra.mxu0 %v406
        %2153 = vmatprep.subr.mxu0 0.0
        %2154 = vmatpush1.msra.mxu0 %v407
        %2155 = vmatprep.subr.mxu0 0.0
        %2156 = vmatpush1.msra.mxu0 %v408
        %2157 = vmatprep.mubr.f32.mxu0 %v2092
        %2158 = vmatmul.mubr.f32.gmra.mrb[0].mxu0 %v2091
        %v2159 = vpop.f32.mrb[0].mxu0
        %v2160 = vadd.f32 %v436, %v2159
        %v2161 = vpop.f32.mrb[0].mxu0
        %2162 = vdwg.mxu0
        %v2163 = vmax.f32 %v2160, 0.0
        %s2164 = scalar_lea.vmem [#allocation2], 72
        %2165 = vst.msk [vmem:[%s2164] sm:$0x1f] %vm509, %v2163
        %v2166 = vld [vmem:[%s1900] sm:$0x1f]
        %2167 = vst.msk [vmem:[#allocation5] sm:$0x1f] %vm411, %v2166
        %v2168 = vld [vmem:[%s1897 + $0x1] sm:$0x1f]
        %2170 = vrot.lane.b32.xlu0 %v2168, 64
        %v2171 = vpop.permute.xlu0 %2170
        %2173 = vst.msk [vmem:[#allocation5] sm:$0x1f] %vm418, %v2171
        %v2174 = vld [vmem:[%s2084] sm:$0x1f]
        %2175 = vst.msk [vmem:[#allocation5 + $0x8] sm:$0x1f] %vm411, %v2174
        %v2176 = vld [vmem:[%s2081 + $0x1] sm:$0x1f]
        %2178 = vrot.lane.b32.xlu0 %v2176, 64
        %v2179 = vpop.permute.xlu0 %2178
        %2181 = vst.msk [vmem:[#allocation5 + $0x8] sm:$0x1f] %vm418, %v2179
        %v2182 = vld [vmem:[#allocation5] sm:$0x1f]
        %v2183 = vld [vmem:[#allocation5 + $0x8] sm:$0x1f]
        %2184 = vmatprep.subr.mxu0 0.0
        %2185 = vmatpush1.msra.mxu0 %v377
        %2186 = vmatprep.subr.mxu0 0.0
        %2187 = vmatpush1.msra.mxu0 %v378
        %2188 = vmatprep.subr.mxu0 0.0
        %2189 = vmatpush1.msra.mxu0 %v379
        %2190 = vmatprep.subr.mxu0 0.0
        %2191 = vmatpush1.msra.mxu0 %v380
        %2192 = vmatprep.subr.mxu0 0.0
        %2193 = vmatpush1.msra.mxu0 %v381
        %2194 = vmatprep.subr.mxu0 0.0
        %2195 = vmatpush1.msra.mxu0 %v382
        %2196 = vmatprep.subr.mxu0 0.0
        %2197 = vmatpush1.msra.mxu0 %v383
        %2198 = vmatprep.subr.mxu0 0.0
        %2199 = vmatpush1.msra.mxu0 %v384
        %2200 = vmatprep.subr.mxu0 0.0
        %2201 = vmatpush1.msra.mxu0 %v385
        %2202 = vmatprep.subr.mxu0 0.0
        %2203 = vmatpush1.msra.mxu0 %v386
        %2204 = vmatprep.subr.mxu0 0.0
        %2205 = vmatpush1.msra.mxu0 %v387
        %2206 = vmatprep.subr.mxu0 0.0
        %2207 = vmatpush1.msra.mxu0 %v388
        %2208 = vmatprep.subr.mxu0 0.0
        %2209 = vmatpush1.msra.mxu0 %v389
        %2210 = vmatprep.subr.mxu0 0.0
        %2211 = vmatpush1.msra.mxu0 %v390
        %2212 = vmatprep.subr.mxu0 0.0
        %2213 = vmatpush1.msra.mxu0 %v391
        %2214 = vmatprep.subr.mxu0 0.0
        %2215 = vmatpush1.msra.mxu0 %v392
        %2216 = vmatprep.subr.mxu0 0.0
        %2217 = vmatpush1.msra.mxu0 %v393
        %2218 = vmatprep.subr.mxu0 0.0
        %2219 = vmatpush1.msra.mxu0 %v394
        %2220 = vmatprep.subr.mxu0 0.0
        %2221 = vmatpush1.msra.mxu0 %v395
        %2222 = vmatprep.subr.mxu0 0.0
        %2223 = vmatpush1.msra.mxu0 %v396
        %2224 = vmatprep.subr.mxu0 0.0
        %2225 = vmatpush1.msra.mxu0 %v397
        %2226 = vmatprep.subr.mxu0 0.0
        %2227 = vmatpush1.msra.mxu0 %v398
        %2228 = vmatprep.subr.mxu0 0.0
        %2229 = vmatpush1.msra.mxu0 %v399
        %2230 = vmatprep.subr.mxu0 0.0
        %2231 = vmatpush1.msra.mxu0 %v400
        %2232 = vmatprep.subr.mxu0 0.0
        %2233 = vmatpush1.msra.mxu0 %v401
        %2234 = vmatprep.subr.mxu0 0.0
        %2235 = vmatpush1.msra.mxu0 %v402
        %2236 = vmatprep.subr.mxu0 0.0
        %2237 = vmatpush1.msra.mxu0 %v403
        %2238 = vmatprep.subr.mxu0 0.0
        %2239 = vmatpush1.msra.mxu0 %v404
        %2240 = vmatprep.subr.mxu0 0.0
        %2241 = vmatpush1.msra.mxu0 %v405
        %2242 = vmatprep.subr.mxu0 0.0
        %2243 = vmatpush1.msra.mxu0 %v406
        %2244 = vmatprep.subr.mxu0 0.0
        %2245 = vmatpush1.msra.mxu0 %v407
        %2246 = vmatprep.subr.mxu0 0.0
        %2247 = vmatpush1.msra.mxu0 %v408
        %2248 = vmatprep.mubr.f32.mxu0 %v2183
        %2249 = vmatmul.mubr.f32.gmra.mrb[0].mxu0 %v2182
        %v2250 = vpop.f32.mrb[0].mxu0
        %v2251 = vadd.f32 %v436, %v2250
        %v2252 = vpop.f32.mrb[0].mxu0
        %2253 = vdwg.mxu0
        %v2254 = vmax.f32 %v2251, 0.0
        %s2255 = scalar_lea.vmem [#allocation3], 72
        %2256 = vst.msk [vmem:[%s2255] sm:$0x1f] %vm509, %v2254
        %v2257 = vld [vmem:[%s4] sm:$0xff]
        %v2258 = vld [vmem:[%s4 + $0x8] sm:$0xff]
        %v2259 = vld [vmem:[%s4 + $0x10] sm:$0xff]
        %v2260 = vld [vmem:[%s4 + $0x18] sm:$0xff]
        %v2261 = vld [vmem:[%s4 + $0x20] sm:$0xff]
        %v2262 = vld [vmem:[%s4 + $0x28] sm:$0xff]
        %v2263 = vld [vmem:[%s4 + $0x30] sm:$0xff]
        %v2264 = vld [vmem:[%s4 + $0x38] sm:$0xff]
        %v2265 = vld [vmem:[%s4 + $0x40] sm:$0xff]
        %v2266 = vld [vmem:[%s4 + $0x48] sm:$0xff]
        %v2267 = vld [vmem:[%s4 + $0x50] sm:$0xff]
        %v2268 = vld [vmem:[%s4 + $0x58] sm:$0xff]
        %v2269 = vld [vmem:[%s4 + $0x60] sm:$0xff]
        %v2270 = vld [vmem:[%s4 + $0x68] sm:$0xff]
        %v2271 = vld [vmem:[%s4 + $0x70] sm:$0xff]
        %v2272 = vld [vmem:[%s4 + $0x78] sm:$0xff]
        %v2273 = vld [vmem:[%s4 + $0x80] sm:$0xff]
        %v2274 = vld [vmem:[%s4 + $0x88] sm:$0xff]
        %v2275 = vld [vmem:[%s4 + $0x90] sm:$0xff]
        %v2276 = vld [vmem:[%s4 + $0x98] sm:$0xff]
        %v2277 = vld [vmem:[%s4 + $0xa0] sm:$0xff]
        %v2278 = vld [vmem:[%s4 + $0xa8] sm:$0xff]
        %v2279 = vld [vmem:[%s4 + $0xb0] sm:$0xff]
        %v2280 = vld [vmem:[%s4 + $0xb8] sm:$0xff]
        %v2281 = vld [vmem:[%s4 + $0xc0] sm:$0xff]
        %v2282 = vld [vmem:[%s4 + $0xc8] sm:$0xff]
        %v2283 = vld [vmem:[%s4 + $0xd0] sm:$0xff]
        %v2284 = vld [vmem:[%s4 + $0xd8] sm:$0xff]
        %v2285 = vld [vmem:[%s4 + $0xe0] sm:$0xff]
        %v2286 = vld [vmem:[%s4 + $0xe8] sm:$0xff]
        %v2287 = vld [vmem:[%s4 + $0xf0] sm:$0xff]
        %v2288 = vld [vmem:[%s4 + $0xf8] sm:$0xff]
        %v2289 = vld [vmem:[%s4 + $0x100] sm:$0xff]
        %v2290 = vld [vmem:[%s4 + $0x108] sm:$0xff]
        %v2291 = vld [vmem:[%s4 + $0x110] sm:$0xff]
        %v2292 = vld [vmem:[%s4 + $0x118] sm:$0xff]
        %v2293 = vld [vmem:[%s4 + $0x120] sm:$0xff]
        %v2294 = vld [vmem:[%s4 + $0x128] sm:$0xff]
        %v2295 = vld [vmem:[%s4 + $0x130] sm:$0xff]
        %v2296 = vld [vmem:[%s4 + $0x138] sm:$0xff]
        %v2297 = vld [vmem:[%s4 + $0x140] sm:$0xff]
        %v2298 = vld [vmem:[%s4 + $0x148] sm:$0xff]
        %v2299 = vld [vmem:[%s4 + $0x150] sm:$0xff]
        %v2300 = vld [vmem:[%s4 + $0x158] sm:$0xff]
        %v2301 = vld [vmem:[%s4 + $0x160] sm:$0xff]
        %v2302 = vld [vmem:[%s4 + $0x168] sm:$0xff]
        %v2303 = vld [vmem:[%s4 + $0x170] sm:$0xff]
        %v2304 = vld [vmem:[%s4 + $0x178] sm:$0xff]
        %v2305 = vld [vmem:[%s4 + $0x180] sm:$0xff]
        %v2306 = vld [vmem:[%s4 + $0x188] sm:$0xff]
        %v2307 = vld [vmem:[%s4 + $0x190] sm:$0xff]
        %v2308 = vld [vmem:[%s4 + $0x198] sm:$0xff]
        %v2309 = vld [vmem:[%s4 + $0x1a0] sm:$0xff]
        %v2310 = vld [vmem:[%s4 + $0x1a8] sm:$0xff]
        %v2311 = vld [vmem:[%s4 + $0x1b0] sm:$0xff]
        %v2312 = vld [vmem:[%s4 + $0x1b8] sm:$0xff]
        %v2313 = vld [vmem:[%s4 + $0x1c0] sm:$0xff]
        %v2314 = vld [vmem:[%s4 + $0x1c8] sm:$0xff]
        %v2315 = vld [vmem:[%s4 + $0x1d0] sm:$0xff]
        %v2316 = vld [vmem:[%s4 + $0x1d8] sm:$0xff]
        %v2317 = vld [vmem:[%s4 + $0x1e0] sm:$0xff]
        %v2318 = vld [vmem:[%s4 + $0x1e8] sm:$0xff]
        %v2319 = vld [vmem:[%s4 + $0x1f0] sm:$0xff]
        %v2320 = vld [vmem:[%s4 + $0x1f8] sm:$0xff]
        %v2321 = vld [vmem:[%s5] sm:$0x1]
        %v2322 = vld [vmem:[#allocation2] sm:$0xf]
        %vm2323 = vcmask 257024
        %2324 = vst.msk [vmem:[#allocation5] sm:$0xf] %vm2323, %v2322
        %v2325 = vld [vmem:[#allocation3] sm:$0xf]
        %2327 = vrot.lane.b32.xlu0 %v2325, 32
        %v2328 = vpop.permute.xlu0 %2327
        %vm2330 = vcmask 519424
        %2331 = vst.msk [vmem:[#allocation5] sm:$0xf] %vm2330, %v2328
        %v2332 = vld [vmem:[#allocation2 + $0x1] sm:$0xf]
        %2334 = vrot.lane.b32.xlu0 %v2332, 64
        %v2335 = vpop.permute.xlu0 %2334
        %vm2337 = vcmask 781824
        %2338 = vst.msk [vmem:[#allocation5] sm:$0xf] %vm2337, %v2335
        %v2339 = vld [vmem:[#allocation3 + $0x1] sm:$0xf]
        %2341 = vrot.lane.b32.xlu0 %v2339, 96
        %v2342 = vpop.permute.xlu0 %2341
        %vm2344 = vcmask 1044224
        %2345 = vst.msk [vmem:[#allocation5] sm:$0xf] %vm2344, %v2342
        %v2346 = vld [vmem:[%s692] sm:$0xf]
        %2347 = vst.msk [vmem:[#allocation5 + $0x8] sm:$0xf] %vm2323, %v2346
        %v2348 = vld [vmem:[%s783] sm:$0xf]
        %2350 = vrot.lane.b32.xlu0 %v2348, 32
        %v2351 = vpop.permute.xlu0 %2350
        %2353 = vst.msk [vmem:[#allocation5 + $0x8] sm:$0xf] %vm2330, %v2351
        %v2354 = vld [vmem:[%s692 + $0x1] sm:$0xf]
        %2356 = vrot.lane.b32.xlu0 %v2354, 64
        %v2357 = vpop.permute.xlu0 %2356
        %2359 = vst.msk [vmem:[#allocation5 + $0x8] sm:$0xf] %vm2337, %v2357
        %v2360 = vld [vmem:[%s783 + $0x1] sm:$0xf]
        %2362 = vrot.lane.b32.xlu0 %v2360, 96
        %v2363 = vpop.permute.xlu0 %2362
        %2365 = vst.msk [vmem:[#allocation5 + $0x8] sm:$0xf] %vm2344, %v2363
        %v2366 = vld [vmem:[%s876] sm:$0xf]
        %2367 = vst.msk [vmem:[#allocation5 + $0x10] sm:$0xf] %vm2323, %v2366
        %v2368 = vld [vmem:[%s967] sm:$0xf]
        %2370 = vrot.lane.b32.xlu0 %v2368, 32
        %v2371 = vpop.permute.xlu0 %2370
        %2373 = vst.msk [vmem:[#allocation5 + $0x10] sm:$0xf] %vm2330, %v2371
        %v2374 = vld [vmem:[%s876 + $0x1] sm:$0xf]
        %2376 = vrot.lane.b32.xlu0 %v2374, 64
        %v2377 = vpop.permute.xlu0 %2376
        %2379 = vst.msk [vmem:[#allocation5 + $0x10] sm:$0xf] %vm2337, %v2377
        %v2380 = vld [vmem:[%s967 + $0x1] sm:$0xf]
        %2382 = vrot.lane.b32.xlu0 %v2380, 96
        %v2383 = vpop.permute.xlu0 %2382
        %2385 = vst.msk [vmem:[#allocation5 + $0x10] sm:$0xf] %vm2344, %v2383
        %v2386 = vld [vmem:[%s1060] sm:$0xf]
        %2387 = vst.msk [vmem:[#allocation5 + $0x18] sm:$0xf] %vm2323, %v2386
        %v2388 = vld [vmem:[%s1151] sm:$0xf]
        %2390 = vrot.lane.b32.xlu0 %v2388, 32
        %v2391 = vpop.permute.xlu0 %2390
        %2393 = vst.msk [vmem:[#allocation5 + $0x18] sm:$0xf] %vm2330, %v2391
        %v2394 = vld [vmem:[%s1060 + $0x1] sm:$0xf]
        %2396 = vrot.lane.b32.xlu0 %v2394, 64
        %v2397 = vpop.permute.xlu0 %2396
        %2399 = vst.msk [vmem:[#allocation5 + $0x18] sm:$0xf] %vm2337, %v2397
        %v2400 = vld [vmem:[%s1151 + $0x1] sm:$0xf]
        %2402 = vrot.lane.b32.xlu0 %v2400, 96
        %v2403 = vpop.permute.xlu0 %2402
        %2405 = vst.msk [vmem:[#allocation5 + $0x18] sm:$0xf] %vm2344, %v2403
        %v2406 = vld [vmem:[#allocation5] sm:$0xf]
        %v2407 = vld [vmem:[#allocation5 + $0x8] sm:$0xf]
        %v2408 = vld [vmem:[#allocation5 + $0x10] sm:$0xf]
        %v2409 = vld [vmem:[#allocation5 + $0x18] sm:$0xf]
        %v2411 = vlaneseq
        %v2412 = vshrl.u32 %v2411, 7
        %v2413 = vsub.s32 0, %v2412
        %v2414 = vrot.slane %v2321, %v2413
        %2416 = vmatprep.subr.mxu0 0.0
        %2417 = vmatpush1.msra.mxu0 %v2257
        %2418 = vmatprep.subr.mxu0 0.0
        %2419 = vmatpush1.msra.mxu0 %v2258
        %2420 = vmatprep.subr.mxu0 0.0
        %2421 = vmatpush1.msra.mxu0 %v2259
        %2422 = vmatprep.subr.mxu0 0.0
        %2423 = vmatpush1.msra.mxu0 %v2260
        %2424 = vmatprep.subr.mxu0 0.0
        %2425 = vmatpush1.msra.mxu0 %v2261
        %2426 = vmatprep.subr.mxu0 0.0
        %2427 = vmatpush1.msra.mxu0 %v2262
        %2428 = vmatprep.subr.mxu0 0.0
        %2429 = vmatpush1.msra.mxu0 %v2263
        %2430 = vmatprep.subr.mxu0 0.0
        %2431 = vmatpush1.msra.mxu0 %v2264
        %2432 = vmatprep.subr.mxu0 0.0
        %2433 = vmatpush1.msra.mxu0 %v2265
        %2434 = vmatprep.subr.mxu0 0.0
        %2435 = vmatpush1.msra.mxu0 %v2266
        %2436 = vmatprep.subr.mxu0 0.0
        %2437 = vmatpush1.msra.mxu0 %v2267
        %2438 = vmatprep.subr.mxu0 0.0
        %2439 = vmatpush1.msra.mxu0 %v2268
        %2440 = vmatprep.subr.mxu0 0.0
        %2441 = vmatpush1.msra.mxu0 %v2269
        %2442 = vmatprep.subr.mxu0 0.0
        %2443 = vmatpush1.msra.mxu0 %v2270
        %2444 = vmatprep.subr.mxu0 0.0
        %2445 = vmatpush1.msra.mxu0 %v2271
        %2446 = vmatprep.subr.mxu0 0.0
        %2447 = vmatpush1.msra.mxu0 %v2272
        %2448 = vmatprep.subr.mxu0 0.0
        %2449 = vmatpush1.msra.mxu0 %v2273
        %2450 = vmatprep.subr.mxu0 0.0
        %2451 = vmatpush1.msra.mxu0 %v2274
        %2452 = vmatprep.subr.mxu0 0.0
        %2453 = vmatpush1.msra.mxu0 %v2275
        %2454 = vmatprep.subr.mxu0 0.0
        %2455 = vmatpush1.msra.mxu0 %v2276
        %2456 = vmatprep.subr.mxu0 0.0
        %2457 = vmatpush1.msra.mxu0 %v2277
        %2458 = vmatprep.subr.mxu0 0.0
        %2459 = vmatpush1.msra.mxu0 %v2278
        %2460 = vmatprep.subr.mxu0 0.0
        %2461 = vmatpush1.msra.mxu0 %v2279
        %2462 = vmatprep.subr.mxu0 0.0
        %2463 = vmatpush1.msra.mxu0 %v2280
        %2464 = vmatprep.subr.mxu0 0.0
        %2465 = vmatpush1.msra.mxu0 %v2281
        %2466 = vmatprep.subr.mxu0 0.0
        %2467 = vmatpush1.msra.mxu0 %v2282
        %2468 = vmatprep.subr.mxu0 0.0
        %2469 = vmatpush1.msra.mxu0 %v2283
        %2470 = vmatprep.subr.mxu0 0.0
        %2471 = vmatpush1.msra.mxu0 %v2284
        %2472 = vmatprep.subr.mxu0 0.0
        %2473 = vmatpush1.msra.mxu0 %v2285
        %2474 = vmatprep.subr.mxu0 0.0
        %2475 = vmatpush1.msra.mxu0 %v2286
        %2476 = vmatprep.subr.mxu0 0.0
        %2477 = vmatpush1.msra.mxu0 %v2287
        %2478 = vmatprep.subr.mxu0 0.0
        %2479 = vmatpush1.msra.mxu0 %v2288
        %2480 = vmatprep.mubr.f32.mxu0 %v2407
        %2481 = vmatmul.mubr.f32.gmra.mrb[0].mxu0 %v2406
        %v2482 = vpop.f32.mrb[0].mxu0
        %v2483 = vadd.f32 %v2414, %v2482
        %v2484 = vpop.f32.mrb[0].mxu0
        %2485 = vdwg.mxu0
        %2486 = vmatprep.subr.mxu0 0.0
        %2487 = vmatpush1.msra.mxu0 %v2289
        %2488 = vmatprep.subr.mxu0 0.0
        %2489 = vmatpush1.msra.mxu0 %v2290
        %2490 = vmatprep.subr.mxu0 0.0
        %2491 = vmatpush1.msra.mxu0 %v2291
        %2492 = vmatprep.subr.mxu0 0.0
        %2493 = vmatpush1.msra.mxu0 %v2292
        %2494 = vmatprep.subr.mxu0 0.0
        %2495 = vmatpush1.msra.mxu0 %v2293
        %2496 = vmatprep.subr.mxu0 0.0
        %2497 = vmatpush1.msra.mxu0 %v2294
        %2498 = vmatprep.subr.mxu0 0.0
        %2499 = vmatpush1.msra.mxu0 %v2295
        %2500 = vmatprep.subr.mxu0 0.0
        %2501 = vmatpush1.msra.mxu0 %v2296
        %2502 = vmatprep.subr.mxu0 0.0
        %2503 = vmatpush1.msra.mxu0 %v2297
        %2504 = vmatprep.subr.mxu0 0.0
        %2505 = vmatpush1.msra.mxu0 %v2298
        %2506 = vmatprep.subr.mxu0 0.0
        %2507 = vmatpush1.msra.mxu0 %v2299
        %2508 = vmatprep.subr.mxu0 0.0
        %2509 = vmatpush1.msra.mxu0 %v2300
        %2510 = vmatprep.subr.mxu0 0.0
        %2511 = vmatpush1.msra.mxu0 %v2301
        %2512 = vmatprep.subr.mxu0 0.0
        %2513 = vmatpush1.msra.mxu0 %v2302
        %2514 = vmatprep.subr.mxu0 0.0
        %2515 = vmatpush1.msra.mxu0 %v2303
        %2516 = vmatprep.subr.mxu0 0.0
        %2517 = vmatpush1.msra.mxu0 %v2304
        %2518 = vmatprep.subr.mxu0 0.0
        %2519 = vmatpush1.msra.mxu0 %v2305
        %2520 = vmatprep.subr.mxu0 0.0
        %2521 = vmatpush1.msra.mxu0 %v2306
        %2522 = vmatprep.subr.mxu0 0.0
        %2523 = vmatpush1.msra.mxu0 %v2307
        %2524 = vmatprep.subr.mxu0 0.0
        %2525 = vmatpush1.msra.mxu0 %v2308
        %2526 = vmatprep.subr.mxu0 0.0
        %2527 = vmatpush1.msra.mxu0 %v2309
        %2528 = vmatprep.subr.mxu0 0.0
        %2529 = vmatpush1.msra.mxu0 %v2310
        %2530 = vmatprep.subr.mxu0 0.0
        %2531 = vmatpush1.msra.mxu0 %v2311
        %2532 = vmatprep.subr.mxu0 0.0
        %2533 = vmatpush1.msra.mxu0 %v2312
        %2534 = vmatprep.subr.mxu0 0.0
        %2535 = vmatpush1.msra.mxu0 %v2313
        %2536 = vmatprep.subr.mxu0 0.0
        %2537 = vmatpush1.msra.mxu0 %v2314
        %2538 = vmatprep.subr.mxu0 0.0
        %2539 = vmatpush1.msra.mxu0 %v2315
        %2540 = vmatprep.subr.mxu0 0.0
        %2541 = vmatpush1.msra.mxu0 %v2316
        %2542 = vmatprep.subr.mxu0 0.0
        %2543 = vmatpush1.msra.mxu0 %v2317
        %2544 = vmatprep.subr.mxu0 0.0
        %2545 = vmatpush1.msra.mxu0 %v2318
        %2546 = vmatprep.subr.mxu0 0.0
        %2547 = vmatpush1.msra.mxu0 %v2319
        %2548 = vmatprep.subr.mxu0 0.0
        %2549 = vmatpush1.msra.mxu0 %v2320
        %2550 = vmatprep.mubr.f32.mxu0 %v2409
        %2551 = vmatmul.mubr.f32.gmra.mrb[0].mxu0 %v2408
        %v2552 = vpop.f32.mrb[0].mxu0
        %v2553 = vadd.f32 %v2483, %v2552
        %v2554 = vpop.f32.mrb[0].mxu0
        %2555 = vdwg.mxu0
        %v2556 = vmax.f32 %v2553, 0.0
        %vm2557 = vcmask 519168
        %2558 = vst.msk [vmem:[#allocation4] sm:$0xf] %vm2557, %v2556
        %v2559 = vld [vmem:[%s876] sm:$0xf]
        %2560 = vst.msk [vmem:[#allocation5] sm:$0xf] %vm2323, %v2559
        %v2561 = vld [vmem:[%s967] sm:$0xf]
        %2563 = vrot.lane.b32.xlu0 %v2561, 32
        %v2564 = vpop.permute.xlu0 %2563
        %2566 = vst.msk [vmem:[#allocation5] sm:$0xf] %vm2330, %v2564
        %v2567 = vld [vmem:[%s876 + $0x1] sm:$0xf]
        %2569 = vrot.lane.b32.xlu0 %v2567, 64
        %v2570 = vpop.permute.xlu0 %2569
        %2572 = vst.msk [vmem:[#allocation5] sm:$0xf] %vm2337, %v2570
        %v2573 = vld [vmem:[%s967 + $0x1] sm:$0xf]
        %2575 = vrot.lane.b32.xlu0 %v2573, 96
        %v2576 = vpop.permute.xlu0 %2575
        %2578 = vst.msk [vmem:[#allocation5] sm:$0xf] %vm2344, %v2576
        %v2579 = vld [vmem:[%s1060] sm:$0xf]
        %2580 = vst.msk [vmem:[#allocation5 + $0x8] sm:$0xf] %vm2323, %v2579
        %v2581 = vld [vmem:[%s1151] sm:$0xf]
        %2583 = vrot.lane.b32.xlu0 %v2581, 32
        %v2584 = vpop.permute.xlu0 %2583
        %2586 = vst.msk [vmem:[#allocation5 + $0x8] sm:$0xf] %vm2330, %v2584
        %v2587 = vld [vmem:[%s1060 + $0x1] sm:$0xf]
        %2589 = vrot.lane.b32.xlu0 %v2587, 64
        %v2590 = vpop.permute.xlu0 %2589
        %2592 = vst.msk [vmem:[#allocation5 + $0x8] sm:$0xf] %vm2337, %v2590
        %v2593 = vld [vmem:[%s1151 + $0x1] sm:$0xf]
        %2595 = vrot.lane.b32.xlu0 %v2593, 96
        %v2596 = vpop.permute.xlu0 %2595
        %2598 = vst.msk [vmem:[#allocation5 + $0x8] sm:$0xf] %vm2344, %v2596
        %v2599 = vld [vmem:[%s1244] sm:$0xf]
        %2600 = vst.msk [vmem:[#allocation5 + $0x10] sm:$0xf] %vm2323, %v2599
        %v2601 = vld [vmem:[%s1335] sm:$0xf]
        %2603 = vrot.lane.b32.xlu0 %v2601, 32
        %v2604 = vpop.permute.xlu0 %2603
        %2606 = vst.msk [vmem:[#allocation5 + $0x10] sm:$0xf] %vm2330, %v2604
        %v2607 = vld [vmem:[%s1244 + $0x1] sm:$0xf]
        %2609 = vrot.lane.b32.xlu0 %v2607, 64
        %v2610 = vpop.permute.xlu0 %2609
        %2612 = vst.msk [vmem:[#allocation5 + $0x10] sm:$0xf] %vm2337, %v2610
        %v2613 = vld [vmem:[%s1335 + $0x1] sm:$0xf]
        %2615 = vrot.lane.b32.xlu0 %v2613, 96
        %v2616 = vpop.permute.xlu0 %2615
        %2618 = vst.msk [vmem:[#allocation5 + $0x10] sm:$0xf] %vm2344, %v2616
        %v2619 = vld [vmem:[%s1428] sm:$0xf]
        %2620 = vst.msk [vmem:[#allocation5 + $0x18] sm:$0xf] %vm2323, %v2619
        %v2621 = vld [vmem:[%s1519] sm:$0xf]
        %2623 = vrot.lane.b32.xlu0 %v2621, 32
        %v2624 = vpop.permute.xlu0 %2623
        %2626 = vst.msk [vmem:[#allocation5 + $0x18] sm:$0xf] %vm2330, %v2624
        %v2627 = vld [vmem:[%s1428 + $0x1] sm:$0xf]
        %2629 = vrot.lane.b32.xlu0 %v2627, 64
        %v2630 = vpop.permute.xlu0 %2629
        %2632 = vst.msk [vmem:[#allocation5 + $0x18] sm:$0xf] %vm2337, %v2630
        %v2633 = vld [vmem:[%s1519 + $0x1] sm:$0xf]
        %2635 = vrot.lane.b32.xlu0 %v2633, 96
        %v2636 = vpop.permute.xlu0 %2635
        %2638 = vst.msk [vmem:[#allocation5 + $0x18] sm:$0xf] %vm2344, %v2636
        %v2639 = vld [vmem:[#allocation5] sm:$0xf]
        %v2640 = vld [vmem:[#allocation5 + $0x8] sm:$0xf]
        %v2641 = vld [vmem:[#allocation5 + $0x10] sm:$0xf]
        %v2642 = vld [vmem:[#allocation5 + $0x18] sm:$0xf]
        %2643 = vmatprep.subr.mxu0 0.0
        %2644 = vmatpush1.msra.mxu0 %v2257
        %2645 = vmatprep.subr.mxu0 0.0
        %2646 = vmatpush1.msra.mxu0 %v2258
        %2647 = vmatprep.subr.mxu0 0.0
        %2648 = vmatpush1.msra.mxu0 %v2259
        %2649 = vmatprep.subr.mxu0 0.0
        %2650 = vmatpush1.msra.mxu0 %v2260
        %2651 = vmatprep.subr.mxu0 0.0
        %2652 = vmatpush1.msra.mxu0 %v2261
        %2653 = vmatprep.subr.mxu0 0.0
        %2654 = vmatpush1.msra.mxu0 %v2262
        %2655 = vmatprep.subr.mxu0 0.0
        %2656 = vmatpush1.msra.mxu0 %v2263
        %2657 = vmatprep.subr.mxu0 0.0
        %2658 = vmatpush1.msra.mxu0 %v2264
        %2659 = vmatprep.subr.mxu0 0.0
        %2660 = vmatpush1.msra.mxu0 %v2265
        %2661 = vmatprep.subr.mxu0 0.0
        %2662 = vmatpush1.msra.mxu0 %v2266
        %2663 = vmatprep.subr.mxu0 0.0
        %2664 = vmatpush1.msra.mxu0 %v2267
        %2665 = vmatprep.subr.mxu0 0.0
        %2666 = vmatpush1.msra.mxu0 %v2268
        %2667 = vmatprep.subr.mxu0 0.0
        %2668 = vmatpush1.msra.mxu0 %v2269
        %2669 = vmatprep.subr.mxu0 0.0
        %2670 = vmatpush1.msra.mxu0 %v2270
        %2671 = vmatprep.subr.mxu0 0.0
        %2672 = vmatpush1.msra.mxu0 %v2271
        %2673 = vmatprep.subr.mxu0 0.0
        %2674 = vmatpush1.msra.mxu0 %v2272
        %2675 = vmatprep.subr.mxu0 0.0
        %2676 = vmatpush1.msra.mxu0 %v2273
        %2677 = vmatprep.subr.mxu0 0.0
        %2678 = vmatpush1.msra.mxu0 %v2274
        %2679 = vmatprep.subr.mxu0 0.0
        %2680 = vmatpush1.msra.mxu0 %v2275
        %2681 = vmatprep.subr.mxu0 0.0
        %2682 = vmatpush1.msra.mxu0 %v2276
        %2683 = vmatprep.subr.mxu0 0.0
        %2684 = vmatpush1.msra.mxu0 %v2277
        %2685 = vmatprep.subr.mxu0 0.0
        %2686 = vmatpush1.msra.mxu0 %v2278
        %2687 = vmatprep.subr.mxu0 0.0
        %2688 = vmatpush1.msra.mxu0 %v2279
        %2689 = vmatprep.subr.mxu0 0.0
        %2690 = vmatpush1.msra.mxu0 %v2280
        %2691 = vmatprep.subr.mxu0 0.0
        %2692 = vmatpush1.msra.mxu0 %v2281
        %2693 = vmatprep.subr.mxu0 0.0
        %2694 = vmatpush1.msra.mxu0 %v2282
        %2695 = vmatprep.subr.mxu0 0.0
        %2696 = vmatpush1.msra.mxu0 %v2283
        %2697 = vmatprep.subr.mxu0 0.0
        %2698 = vmatpush1.msra.mxu0 %v2284
        %2699 = vmatprep.subr.mxu0 0.0
        %2700 = vmatpush1.msra.mxu0 %v2285
        %2701 = vmatprep.subr.mxu0 0.0
        %2702 = vmatpush1.msra.mxu0 %v2286
        %2703 = vmatprep.subr.mxu0 0.0
        %2704 = vmatpush1.msra.mxu0 %v2287
        %2705 = vmatprep.subr.mxu0 0.0
        %2706 = vmatpush1.msra.mxu0 %v2288
        %2707 = vmatprep.mubr.f32.mxu0 %v2640
        %2708 = vmatmul.mubr.f32.gmra.mrb[0].mxu0 %v2639
        %v2709 = vpop.f32.mrb[0].mxu0
        %v2710 = vadd.f32 %v2414, %v2709
        %v2711 = vpop.f32.mrb[0].mxu0
        %2712 = vdwg.mxu0
        %2713 = vmatprep.subr.mxu0 0.0
        %2714 = vmatpush1.msra.mxu0 %v2289
        %2715 = vmatprep.subr.mxu0 0.0
        %2716 = vmatpush1.msra.mxu0 %v2290
        %2717 = vmatprep.subr.mxu0 0.0
        %2718 = vmatpush1.msra.mxu0 %v2291
        %2719 = vmatprep.subr.mxu0 0.0
        %2720 = vmatpush1.msra.mxu0 %v2292
        %2721 = vmatprep.subr.mxu0 0.0
        %2722 = vmatpush1.msra.mxu0 %v2293
        %2723 = vmatprep.subr.mxu0 0.0
        %2724 = vmatpush1.msra.mxu0 %v2294
        %2725 = vmatprep.subr.mxu0 0.0
        %2726 = vmatpush1.msra.mxu0 %v2295
        %2727 = vmatprep.subr.mxu0 0.0
        %2728 = vmatpush1.msra.mxu0 %v2296
        %2729 = vmatprep.subr.mxu0 0.0
        %2730 = vmatpush1.msra.mxu0 %v2297
        %2731 = vmatprep.subr.mxu0 0.0
        %2732 = vmatpush1.msra.mxu0 %v2298
        %2733 = vmatprep.subr.mxu0 0.0
        %2734 = vmatpush1.msra.mxu0 %v2299
        %2735 = vmatprep.subr.mxu0 0.0
        %2736 = vmatpush1.msra.mxu0 %v2300
        %2737 = vmatprep.subr.mxu0 0.0
        %2738 = vmatpush1.msra.mxu0 %v2301
        %2739 = vmatprep.subr.mxu0 0.0
        %2740 = vmatpush1.msra.mxu0 %v2302
        %2741 = vmatprep.subr.mxu0 0.0
        %2742 = vmatpush1.msra.mxu0 %v2303
        %2743 = vmatprep.subr.mxu0 0.0
        %2744 = vmatpush1.msra.mxu0 %v2304
        %2745 = vmatprep.subr.mxu0 0.0
        %2746 = vmatpush1.msra.mxu0 %v2305
        %2747 = vmatprep.subr.mxu0 0.0
        %2748 = vmatpush1.msra.mxu0 %v2306
        %2749 = vmatprep.subr.mxu0 0.0
        %2750 = vmatpush1.msra.mxu0 %v2307
        %2751 = vmatprep.subr.mxu0 0.0
        %2752 = vmatpush1.msra.mxu0 %v2308
        %2753 = vmatprep.subr.mxu0 0.0
        %2754 = vmatpush1.msra.mxu0 %v2309
        %2755 = vmatprep.subr.mxu0 0.0
        %2756 = vmatpush1.msra.mxu0 %v2310
        %2757 = vmatprep.subr.mxu0 0.0
        %2758 = vmatpush1.msra.mxu0 %v2311
        %2759 = vmatprep.subr.mxu0 0.0
        %2760 = vmatpush1.msra.mxu0 %v2312
        %2761 = vmatprep.subr.mxu0 0.0
        %2762 = vmatpush1.msra.mxu0 %v2313
        %2763 = vmatprep.subr.mxu0 0.0
        %2764 = vmatpush1.msra.mxu0 %v2314
        %2765 = vmatprep.subr.mxu0 0.0
        %2766 = vmatpush1.msra.mxu0 %v2315
        %2767 = vmatprep.subr.mxu0 0.0
        %2768 = vmatpush1.msra.mxu0 %v2316
        %2769 = vmatprep.subr.mxu0 0.0
        %2770 = vmatpush1.msra.mxu0 %v2317
        %2771 = vmatprep.subr.mxu0 0.0
        %2772 = vmatpush1.msra.mxu0 %v2318
        %2773 = vmatprep.subr.mxu0 0.0
        %2774 = vmatpush1.msra.mxu0 %v2319
        %2775 = vmatprep.subr.mxu0 0.0
        %2776 = vmatpush1.msra.mxu0 %v2320
        %2777 = vmatprep.mubr.f32.mxu0 %v2642
        %2778 = vmatmul.mubr.f32.gmra.mrb[0].mxu0 %v2641
        %v2779 = vpop.f32.mrb[0].mxu0
        %v2780 = vadd.f32 %v2710, %v2779
        %v2781 = vpop.f32.mrb[0].mxu0
        %2782 = vdwg.mxu0
        %v2783 = vmax.f32 %v2780, 0.0
        %s2784 = scalar_lea.vmem [#allocation4], 4
        %2785 = vst.msk [vmem:[%s2784] sm:$0xf] %vm2557, %v2783
        %v2786 = vld [vmem:[%s1244] sm:$0xf]
        %2787 = vst.msk [vmem:[#allocation5] sm:$0xf] %vm2323, %v2786
        %v2788 = vld [vmem:[%s1335] sm:$0xf]
        %2790 = vrot.lane.b32.xlu0 %v2788, 32
        %v2791 = vpop.permute.xlu0 %2790
        %2793 = vst.msk [vmem:[#allocation5] sm:$0xf] %vm2330, %v2791
        %v2794 = vld [vmem:[%s1244 + $0x1] sm:$0xf]
        %2796 = vrot.lane.b32.xlu0 %v2794, 64
        %v2797 = vpop.permute.xlu0 %2796
        %2799 = vst.msk [vmem:[#allocation5] sm:$0xf] %vm2337, %v2797
        %v2800 = vld [vmem:[%s1335 + $0x1] sm:$0xf]
        %2802 = vrot.lane.b32.xlu0 %v2800, 96
        %v2803 = vpop.permute.xlu0 %2802
        %2805 = vst.msk [vmem:[#allocation5] sm:$0xf] %vm2344, %v2803
        %v2806 = vld [vmem:[%s1428] sm:$0xf]
        %2807 = vst.msk [vmem:[#allocation5 + $0x8] sm:$0xf] %vm2323, %v2806
        %v2808 = vld [vmem:[%s1519] sm:$0xf]
        %2810 = vrot.lane.b32.xlu0 %v2808, 32
        %v2811 = vpop.permute.xlu0 %2810
        %2813 = vst.msk [vmem:[#allocation5 + $0x8] sm:$0xf] %vm2330, %v2811
        %v2814 = vld [vmem:[%s1428 + $0x1] sm:$0xf]
        %2816 = vrot.lane.b32.xlu0 %v2814, 64
        %v2817 = vpop.permute.xlu0 %2816
        %2819 = vst.msk [vmem:[#allocation5 + $0x8] sm:$0xf] %vm2337, %v2817
        %v2820 = vld [vmem:[%s1519 + $0x1] sm:$0xf]
        %2822 = vrot.lane.b32.xlu0 %v2820, 96
        %v2823 = vpop.permute.xlu0 %2822
        %2825 = vst.msk [vmem:[#allocation5 + $0x8] sm:$0xf] %vm2344, %v2823
        %v2826 = vld [vmem:[%s1612] sm:$0xf]
        %2827 = vst.msk [vmem:[#allocation5 + $0x10] sm:$0xf] %vm2323, %v2826
        %v2828 = vld [vmem:[%s1703] sm:$0xf]
        %2830 = vrot.lane.b32.xlu0 %v2828, 32
        %v2831 = vpop.permute.xlu0 %2830
        %2833 = vst.msk [vmem:[#allocation5 + $0x10] sm:$0xf] %vm2330, %v2831
        %v2834 = vld [vmem:[%s1612 + $0x1] sm:$0xf]
        %2836 = vrot.lane.b32.xlu0 %v2834, 64
        %v2837 = vpop.permute.xlu0 %2836
        %2839 = vst.msk [vmem:[#allocation5 + $0x10] sm:$0xf] %vm2337, %v2837
        %v2840 = vld [vmem:[%s1703 + $0x1] sm:$0xf]
        %2842 = vrot.lane.b32.xlu0 %v2840, 96
        %v2843 = vpop.permute.xlu0 %2842
        %2845 = vst.msk [vmem:[#allocation5 + $0x10] sm:$0xf] %vm2344, %v2843
        %v2846 = vld [vmem:[%s1796] sm:$0xf]
        %2847 = vst.msk [vmem:[#allocation5 + $0x18] sm:$0xf] %vm2323, %v2846
        %v2848 = vld [vmem:[%s1887] sm:$0xf]
        %2850 = vrot.lane.b32.xlu0 %v2848, 32
        %v2851 = vpop.permute.xlu0 %2850
        %2853 = vst.msk [vmem:[#allocation5 + $0x18] sm:$0xf] %vm2330, %v2851
        %v2854 = vld [vmem:[%s1796 + $0x1] sm:$0xf]
        %2856 = vrot.lane.b32.xlu0 %v2854, 64
        %v2857 = vpop.permute.xlu0 %2856
        %2859 = vst.msk [vmem:[#allocation5 + $0x18] sm:$0xf] %vm2337, %v2857
        %v2860 = vld [vmem:[%s1887 + $0x1] sm:$0xf]
        %2862 = vrot.lane.b32.xlu0 %v2860, 96
        %v2863 = vpop.permute.xlu0 %2862
        %2865 = vst.msk [vmem:[#allocation5 + $0x18] sm:$0xf] %vm2344, %v2863
        %v2866 = vld [vmem:[#allocation5] sm:$0xf]
        %v2867 = vld [vmem:[#allocation5 + $0x8] sm:$0xf]
        %v2868 = vld [vmem:[#allocation5 + $0x10] sm:$0xf]
        %v2869 = vld [vmem:[#allocation5 + $0x18] sm:$0xf]
        %2870 = vmatprep.subr.mxu0 0.0
        %2871 = vmatpush1.msra.mxu0 %v2257
        %2872 = vmatprep.subr.mxu0 0.0
        %2873 = vmatpush1.msra.mxu0 %v2258
        %2874 = vmatprep.subr.mxu0 0.0
        %2875 = vmatpush1.msra.mxu0 %v2259
        %2876 = vmatprep.subr.mxu0 0.0
        %2877 = vmatpush1.msra.mxu0 %v2260
        %2878 = vmatprep.subr.mxu0 0.0
        %2879 = vmatpush1.msra.mxu0 %v2261
        %2880 = vmatprep.subr.mxu0 0.0
        %2881 = vmatpush1.msra.mxu0 %v2262
        %2882 = vmatprep.subr.mxu0 0.0
        %2883 = vmatpush1.msra.mxu0 %v2263
        %2884 = vmatprep.subr.mxu0 0.0
        %2885 = vmatpush1.msra.mxu0 %v2264
        %2886 = vmatprep.subr.mxu0 0.0
        %2887 = vmatpush1.msra.mxu0 %v2265
        %2888 = vmatprep.subr.mxu0 0.0
        %2889 = vmatpush1.msra.mxu0 %v2266
        %2890 = vmatprep.subr.mxu0 0.0
        %2891 = vmatpush1.msra.mxu0 %v2267
        %2892 = vmatprep.subr.mxu0 0.0
        %2893 = vmatpush1.msra.mxu0 %v2268
        %2894 = vmatprep.subr.mxu0 0.0
        %2895 = vmatpush1.msra.mxu0 %v2269
        %2896 = vmatprep.subr.mxu0 0.0
        %2897 = vmatpush1.msra.mxu0 %v2270
        %2898 = vmatprep.subr.mxu0 0.0
        %2899 = vmatpush1.msra.mxu0 %v2271
        %2900 = vmatprep.subr.mxu0 0.0
        %2901 = vmatpush1.msra.mxu0 %v2272
        %2902 = vmatprep.subr.mxu0 0.0
        %2903 = vmatpush1.msra.mxu0 %v2273
        %2904 = vmatprep.subr.mxu0 0.0
        %2905 = vmatpush1.msra.mxu0 %v2274
        %2906 = vmatprep.subr.mxu0 0.0
        %2907 = vmatpush1.msra.mxu0 %v2275
        %2908 = vmatprep.subr.mxu0 0.0
        %2909 = vmatpush1.msra.mxu0 %v2276
        %2910 = vmatprep.subr.mxu0 0.0
        %2911 = vmatpush1.msra.mxu0 %v2277
        %2912 = vmatprep.subr.mxu0 0.0
        %2913 = vmatpush1.msra.mxu0 %v2278
        %2914 = vmatprep.subr.mxu0 0.0
        %2915 = vmatpush1.msra.mxu0 %v2279
        %2916 = vmatprep.subr.mxu0 0.0
        %2917 = vmatpush1.msra.mxu0 %v2280
        %2918 = vmatprep.subr.mxu0 0.0
        %2919 = vmatpush1.msra.mxu0 %v2281
        %2920 = vmatprep.subr.mxu0 0.0
        %2921 = vmatpush1.msra.mxu0 %v2282
        %2922 = vmatprep.subr.mxu0 0.0
        %2923 = vmatpush1.msra.mxu0 %v2283
        %2924 = vmatprep.subr.mxu0 0.0
        %2925 = vmatpush1.msra.mxu0 %v2284
        %2926 = vmatprep.subr.mxu0 0.0
        %2927 = vmatpush1.msra.mxu0 %v2285
        %2928 = vmatprep.subr.mxu0 0.0
        %2929 = vmatpush1.msra.mxu0 %v2286
        %2930 = vmatprep.subr.mxu0 0.0
        %2931 = vmatpush1.msra.mxu0 %v2287
        %2932 = vmatprep.subr.mxu0 0.0
        %2933 = vmatpush1.msra.mxu0 %v2288
        %2934 = vmatprep.mubr.f32.mxu0 %v2867
        %2935 = vmatmul.mubr.f32.gmra.mrb[0].mxu0 %v2866
        %v2936 = vpop.f32.mrb[0].mxu0
        %v2937 = vadd.f32 %v2414, %v2936
        %v2938 = vpop.f32.mrb[0].mxu0
        %2939 = vdwg.mxu0
        %2940 = vmatprep.subr.mxu0 0.0
        %2941 = vmatpush1.msra.mxu0 %v2289
        %2942 = vmatprep.subr.mxu0 0.0
        %2943 = vmatpush1.msra.mxu0 %v2290
        %2944 = vmatprep.subr.mxu0 0.0
        %2945 = vmatpush1.msra.mxu0 %v2291
        %2946 = vmatprep.subr.mxu0 0.0
        %2947 = vmatpush1.msra.mxu0 %v2292
        %2948 = vmatprep.subr.mxu0 0.0
        %2949 = vmatpush1.msra.mxu0 %v2293
        %2950 = vmatprep.subr.mxu0 0.0
        %2951 = vmatpush1.msra.mxu0 %v2294
        %2952 = vmatprep.subr.mxu0 0.0
        %2953 = vmatpush1.msra.mxu0 %v2295
        %2954 = vmatprep.subr.mxu0 0.0
        %2955 = vmatpush1.msra.mxu0 %v2296
        %2956 = vmatprep.subr.mxu0 0.0
        %2957 = vmatpush1.msra.mxu0 %v2297
        %2958 = vmatprep.subr.mxu0 0.0
        %2959 = vmatpush1.msra.mxu0 %v2298
        %2960 = vmatprep.subr.mxu0 0.0
        %2961 = vmatpush1.msra.mxu0 %v2299
        %2962 = vmatprep.subr.mxu0 0.0
        %2963 = vmatpush1.msra.mxu0 %v2300
        %2964 = vmatprep.subr.mxu0 0.0
        %2965 = vmatpush1.msra.mxu0 %v2301
        %2966 = vmatprep.subr.mxu0 0.0
        %2967 = vmatpush1.msra.mxu0 %v2302
        %2968 = vmatprep.subr.mxu0 0.0
        %2969 = vmatpush1.msra.mxu0 %v2303
        %2970 = vmatprep.subr.mxu0 0.0
        %2971 = vmatpush1.msra.mxu0 %v2304
        %2972 = vmatprep.subr.mxu0 0.0
        %2973 = vmatpush1.msra.mxu0 %v2305
        %2974 = vmatprep.subr.mxu0 0.0
        %2975 = vmatpush1.msra.mxu0 %v2306
        %2976 = vmatprep.subr.mxu0 0.0
        %2977 = vmatpush1.msra.mxu0 %v2307
        %2978 = vmatprep.subr.mxu0 0.0
        %2979 = vmatpush1.msra.mxu0 %v2308
        %2980 = vmatprep.subr.mxu0 0.0
        %2981 = vmatpush1.msra.mxu0 %v2309
        %2982 = vmatprep.subr.mxu0 0.0
        %2983 = vmatpush1.msra.mxu0 %v2310
        %2984 = vmatprep.subr.mxu0 0.0
        %2985 = vmatpush1.msra.mxu0 %v2311
        %2986 = vmatprep.subr.mxu0 0.0
        %2987 = vmatpush1.msra.mxu0 %v2312
        %2988 = vmatprep.subr.mxu0 0.0
        %2989 = vmatpush1.msra.mxu0 %v2313
        %2990 = vmatprep.subr.mxu0 0.0
        %2991 = vmatpush1.msra.mxu0 %v2314
        %2992 = vmatprep.subr.mxu0 0.0
        %2993 = vmatpush1.msra.mxu0 %v2315
        %2994 = vmatprep.subr.mxu0 0.0
        %2995 = vmatpush1.msra.mxu0 %v2316
        %2996 = vmatprep.subr.mxu0 0.0
        %2997 = vmatpush1.msra.mxu0 %v2317
        %2998 = vmatprep.subr.mxu0 0.0
        %2999 = vmatpush1.msra.mxu0 %v2318
        %3000 = vmatprep.subr.mxu0 0.0
        %3001 = vmatpush1.msra.mxu0 %v2319
        %3002 = vmatprep.subr.mxu0 0.0
        %3003 = vmatpush1.msra.mxu0 %v2320
        %3004 = vmatprep.mubr.f32.mxu0 %v2869
        %3005 = vmatmul.mubr.f32.gmra.mrb[0].mxu0 %v2868
        %v3006 = vpop.f32.mrb[0].mxu0
        %v3007 = vadd.f32 %v2937, %v3006
        %v3008 = vpop.f32.mrb[0].mxu0
        %3009 = vdwg.mxu0
        %v3010 = vmax.f32 %v3007, 0.0
        %s3011 = scalar_lea.vmem [#allocation4], 8
        %3012 = vst.msk [vmem:[%s3011] sm:$0xf] %vm2557, %v3010
        %v3013 = vld [vmem:[%s1612] sm:$0xf]
        %3014 = vst.msk [vmem:[#allocation5] sm:$0xf] %vm2323, %v3013
        %v3015 = vld [vmem:[%s1703] sm:$0xf]
        %3017 = vrot.lane.b32.xlu0 %v3015, 32
        %v3018 = vpop.permute.xlu0 %3017
        %3020 = vst.msk [vmem:[#allocation5] sm:$0xf] %vm2330, %v3018
        %v3021 = vld [vmem:[%s1612 + $0x1] sm:$0xf]
        %3023 = vrot.lane.b32.xlu0 %v3021, 64
        %v3024 = vpop.permute.xlu0 %3023
        %3026 = vst.msk [vmem:[#allocation5] sm:$0xf] %vm2337, %v3024
        %v3027 = vld [vmem:[%s1703 + $0x1] sm:$0xf]
        %3029 = vrot.lane.b32.xlu0 %v3027, 96
        %v3030 = vpop.permute.xlu0 %3029
        %3032 = vst.msk [vmem:[#allocation5] sm:$0xf] %vm2344, %v3030
        %v3033 = vld [vmem:[%s1796] sm:$0xf]
        %3034 = vst.msk [vmem:[#allocation5 + $0x8] sm:$0xf] %vm2323, %v3033
        %v3035 = vld [vmem:[%s1887] sm:$0xf]
        %3037 = vrot.lane.b32.xlu0 %v3035, 32
        %v3038 = vpop.permute.xlu0 %3037
        %3040 = vst.msk [vmem:[#allocation5 + $0x8] sm:$0xf] %vm2330, %v3038
        %v3041 = vld [vmem:[%s1796 + $0x1] sm:$0xf]
        %3043 = vrot.lane.b32.xlu0 %v3041, 64
        %v3044 = vpop.permute.xlu0 %3043
        %3046 = vst.msk [vmem:[#allocation5 + $0x8] sm:$0xf] %vm2337, %v3044
        %v3047 = vld [vmem:[%s1887 + $0x1] sm:$0xf]
        %3049 = vrot.lane.b32.xlu0 %v3047, 96
        %v3050 = vpop.permute.xlu0 %3049
        %3052 = vst.msk [vmem:[#allocation5 + $0x8] sm:$0xf] %vm2344, %v3050
        %v3053 = vld [vmem:[%s1980] sm:$0xf]
        %3054 = vst.msk [vmem:[#allocation5 + $0x10] sm:$0xf] %vm2323, %v3053
        %v3055 = vld [vmem:[%s2071] sm:$0xf]
        %3057 = vrot.lane.b32.xlu0 %v3055, 32
        %v3058 = vpop.permute.xlu0 %3057
        %3060 = vst.msk [vmem:[#allocation5 + $0x10] sm:$0xf] %vm2330, %v3058
        %v3061 = vld [vmem:[%s1980 + $0x1] sm:$0xf]
        %3063 = vrot.lane.b32.xlu0 %v3061, 64
        %v3064 = vpop.permute.xlu0 %3063
        %3066 = vst.msk [vmem:[#allocation5 + $0x10] sm:$0xf] %vm2337, %v3064
        %v3067 = vld [vmem:[%s2071 + $0x1] sm:$0xf]
        %3069 = vrot.lane.b32.xlu0 %v3067, 96
        %v3070 = vpop.permute.xlu0 %3069
        %3072 = vst.msk [vmem:[#allocation5 + $0x10] sm:$0xf] %vm2344, %v3070
        %v3073 = vld [vmem:[%s2164] sm:$0xf]
        %3074 = vst.msk [vmem:[#allocation5 + $0x18] sm:$0xf] %vm2323, %v3073
        %v3075 = vld [vmem:[%s2255] sm:$0xf]
        %3077 = vrot.lane.b32.xlu0 %v3075, 32
        %v3078 = vpop.permute.xlu0 %3077
        %3080 = vst.msk [vmem:[#allocation5 + $0x18] sm:$0xf] %vm2330, %v3078
        %v3081 = vld [vmem:[%s2164 + $0x1] sm:$0xf]
        %3083 = vrot.lane.b32.xlu0 %v3081, 64
        %v3084 = vpop.permute.xlu0 %3083
        %3086 = vst.msk [vmem:[#allocation5 + $0x18] sm:$0xf] %vm2337, %v3084
        %v3087 = vld [vmem:[%s2255 + $0x1] sm:$0xf]
        %3089 = vrot.lane.b32.xlu0 %v3087, 96
        %v3090 = vpop.permute.xlu0 %3089
        %3092 = vst.msk [vmem:[#allocation5 + $0x18] sm:$0xf] %vm2344, %v3090
        %v3093 = vld [vmem:[#allocation5] sm:$0xf]
        %v3094 = vld [vmem:[#allocation5 + $0x8] sm:$0xf]
        %v3095 = vld [vmem:[#allocation5 + $0x10] sm:$0xf]
        %v3096 = vld [vmem:[#allocation5 + $0x18] sm:$0xf]
        %3097 = vmatprep.subr.mxu0 0.0
        %3098 = vmatpush1.msra.mxu0 %v2257
        %3099 = vmatprep.subr.mxu0 0.0
        %3100 = vmatpush1.msra.mxu0 %v2258
        %3101 = vmatprep.subr.mxu0 0.0
        %3102 = vmatpush1.msra.mxu0 %v2259
        %3103 = vmatprep.subr.mxu0 0.0
        %3104 = vmatpush1.msra.mxu0 %v2260
        %3105 = vmatprep.subr.mxu0 0.0
        %3106 = vmatpush1.msra.mxu0 %v2261
        %3107 = vmatprep.subr.mxu0 0.0
        %3108 = vmatpush1.msra.mxu0 %v2262
        %3109 = vmatprep.subr.mxu0 0.0
        %3110 = vmatpush1.msra.mxu0 %v2263
        %3111 = vmatprep.subr.mxu0 0.0
        %3112 = vmatpush1.msra.mxu0 %v2264
        %3113 = vmatprep.subr.mxu0 0.0
        %3114 = vmatpush1.msra.mxu0 %v2265
        %3115 = vmatprep.subr.mxu0 0.0
        %3116 = vmatpush1.msra.mxu0 %v2266
        %3117 = vmatprep.subr.mxu0 0.0
        %3118 = vmatpush1.msra.mxu0 %v2267
        %3119 = vmatprep.subr.mxu0 0.0
        %3120 = vmatpush1.msra.mxu0 %v2268
        %3121 = vmatprep.subr.mxu0 0.0
        %3122 = vmatpush1.msra.mxu0 %v2269
        %3123 = vmatprep.subr.mxu0 0.0
        %3124 = vmatpush1.msra.mxu0 %v2270
        %3125 = vmatprep.subr.mxu0 0.0
        %3126 = vmatpush1.msra.mxu0 %v2271
        %3127 = vmatprep.subr.mxu0 0.0
        %3128 = vmatpush1.msra.mxu0 %v2272
        %3129 = vmatprep.subr.mxu0 0.0
        %3130 = vmatpush1.msra.mxu0 %v2273
        %3131 = vmatprep.subr.mxu0 0.0
        %3132 = vmatpush1.msra.mxu0 %v2274
        %3133 = vmatprep.subr.mxu0 0.0
        %3134 = vmatpush1.msra.mxu0 %v2275
        %3135 = vmatprep.subr.mxu0 0.0
        %3136 = vmatpush1.msra.mxu0 %v2276
        %3137 = vmatprep.subr.mxu0 0.0
        %3138 = vmatpush1.msra.mxu0 %v2277
        %3139 = vmatprep.subr.mxu0 0.0
        %3140 = vmatpush1.msra.mxu0 %v2278
        %3141 = vmatprep.subr.mxu0 0.0
        %3142 = vmatpush1.msra.mxu0 %v2279
        %3143 = vmatprep.subr.mxu0 0.0
        %3144 = vmatpush1.msra.mxu0 %v2280
        %3145 = vmatprep.subr.mxu0 0.0
        %3146 = vmatpush1.msra.mxu0 %v2281
        %3147 = vmatprep.subr.mxu0 0.0
        %3148 = vmatpush1.msra.mxu0 %v2282
        %3149 = vmatprep.subr.mxu0 0.0
        %3150 = vmatpush1.msra.mxu0 %v2283
        %3151 = vmatprep.subr.mxu0 0.0
        %3152 = vmatpush1.msra.mxu0 %v2284
        %3153 = vmatprep.subr.mxu0 0.0
        %3154 = vmatpush1.msra.mxu0 %v2285
        %3155 = vmatprep.subr.mxu0 0.0
        %3156 = vmatpush1.msra.mxu0 %v2286
        %3157 = vmatprep.subr.mxu0 0.0
        %3158 = vmatpush1.msra.mxu0 %v2287
        %3159 = vmatprep.subr.mxu0 0.0
        %3160 = vmatpush1.msra.mxu0 %v2288
        %3161 = vmatprep.mubr.f32.mxu0 %v3094
        %3162 = vmatmul.mubr.f32.gmra.mrb[0].mxu0 %v3093
        %v3163 = vpop.f32.mrb[0].mxu0
        %v3164 = vadd.f32 %v2414, %v3163
        %v3165 = vpop.f32.mrb[0].mxu0
        %3166 = vdwg.mxu0
        %3167 = vmatprep.subr.mxu0 0.0
        %3168 = vmatpush1.msra.mxu0 %v2289
        %3169 = vmatprep.subr.mxu0 0.0
        %3170 = vmatpush1.msra.mxu0 %v2290
        %3171 = vmatprep.subr.mxu0 0.0
        %3172 = vmatpush1.msra.mxu0 %v2291
        %3173 = vmatprep.subr.mxu0 0.0
        %3174 = vmatpush1.msra.mxu0 %v2292
        %3175 = vmatprep.subr.mxu0 0.0
        %3176 = vmatpush1.msra.mxu0 %v2293
        %3177 = vmatprep.subr.mxu0 0.0
        %3178 = vmatpush1.msra.mxu0 %v2294
        %3179 = vmatprep.subr.mxu0 0.0
        %3180 = vmatpush1.msra.mxu0 %v2295
        %3181 = vmatprep.subr.mxu0 0.0
        %3182 = vmatpush1.msra.mxu0 %v2296
        %3183 = vmatprep.subr.mxu0 0.0
        %3184 = vmatpush1.msra.mxu0 %v2297
        %3185 = vmatprep.subr.mxu0 0.0
        %3186 = vmatpush1.msra.mxu0 %v2298
        %3187 = vmatprep.subr.mxu0 0.0
        %3188 = vmatpush1.msra.mxu0 %v2299
        %3189 = vmatprep.subr.mxu0 0.0
        %3190 = vmatpush1.msra.mxu0 %v2300
        %3191 = vmatprep.subr.mxu0 0.0
        %3192 = vmatpush1.msra.mxu0 %v2301
        %3193 = vmatprep.subr.mxu0 0.0
        %3194 = vmatpush1.msra.mxu0 %v2302
        %3195 = vmatprep.subr.mxu0 0.0
        %3196 = vmatpush1.msra.mxu0 %v2303
        %3197 = vmatprep.subr.mxu0 0.0
        %3198 = vmatpush1.msra.mxu0 %v2304
        %3199 = vmatprep.subr.mxu0 0.0
        %3200 = vmatpush1.msra.mxu0 %v2305
        %3201 = vmatprep.subr.mxu0 0.0
        %3202 = vmatpush1.msra.mxu0 %v2306
        %3203 = vmatprep.subr.mxu0 0.0
        %3204 = vmatpush1.msra.mxu0 %v2307
        %3205 = vmatprep.subr.mxu0 0.0
        %3206 = vmatpush1.msra.mxu0 %v2308
        %3207 = vmatprep.subr.mxu0 0.0
        %3208 = vmatpush1.msra.mxu0 %v2309
        %3209 = vmatprep.subr.mxu0 0.0
        %3210 = vmatpush1.msra.mxu0 %v2310
        %3211 = vmatprep.subr.mxu0 0.0
        %3212 = vmatpush1.msra.mxu0 %v2311
        %3213 = vmatprep.subr.mxu0 0.0
        %3214 = vmatpush1.msra.mxu0 %v2312
        %3215 = vmatprep.subr.mxu0 0.0
        %3216 = vmatpush1.msra.mxu0 %v2313
        %3217 = vmatprep.subr.mxu0 0.0
        %3218 = vmatpush1.msra.mxu0 %v2314
        %3219 = vmatprep.subr.mxu0 0.0
        %3220 = vmatpush1.msra.mxu0 %v2315
        %3221 = vmatprep.subr.mxu0 0.0
        %3222 = vmatpush1.msra.mxu0 %v2316
        %3223 = vmatprep.subr.mxu0 0.0
        %3224 = vmatpush1.msra.mxu0 %v2317
        %3225 = vmatprep.subr.mxu0 0.0
        %3226 = vmatpush1.msra.mxu0 %v2318
        %3227 = vmatprep.subr.mxu0 0.0
        %3228 = vmatpush1.msra.mxu0 %v2319
        %3229 = vmatprep.subr.mxu0 0.0
        %3230 = vmatpush1.msra.mxu0 %v2320
        %3231 = vmatprep.mubr.f32.mxu0 %v3096
        %3232 = vmatmul.mubr.f32.gmra.mrb[0].mxu0 %v3095
        %v3233 = vpop.f32.mrb[0].mxu0
        %v3234 = vadd.f32 %v3164, %v3233
        %v3235 = vpop.f32.mrb[0].mxu0
        %3236 = vdwg.mxu0
        %v3237 = vmax.f32 %v3234, 0.0
        %s3238 = scalar_lea.vmem [#allocation4], 12
        %3239 = vst.msk [vmem:[%s3238] sm:$0xf] %vm2557, %v3237
        %v3240 = vld [vmem:[%s6] sm:$0xff]
        %v3241 = vld [vmem:[%s6 + $0x8] sm:$0xff]
        %v3242 = vld [vmem:[%s6 + $0x10] sm:$0xff]
        %v3243 = vld [vmem:[%s6 + $0x18] sm:$0xff]
        %v3244 = vld [vmem:[%s6 + $0x20] sm:$0xff]
        %v3245 = vld [vmem:[%s6 + $0x28] sm:$0xff]
        %v3246 = vld [vmem:[%s6 + $0x30] sm:$0xff]
        %v3247 = vld [vmem:[%s6 + $0x38] sm:$0xff]
        %v3248 = vld [vmem:[%s6 + $0x40] sm:$0xff]
        %v3249 = vld [vmem:[%s6 + $0x48] sm:$0xff]
        %v3250 = vld [vmem:[%s6 + $0x50] sm:$0xff]
        %v3251 = vld [vmem:[%s6 + $0x58] sm:$0xff]
        %v3252 = vld [vmem:[%s6 + $0x60] sm:$0xff]
        %v3253 = vld [vmem:[%s6 + $0x68] sm:$0xff]
        %v3254 = vld [vmem:[%s6 + $0x70] sm:$0xff]
        %v3255 = vld [vmem:[%s6 + $0x78] sm:$0xff]
        %v3256 = vld [vmem:[%s6 + $0x80] sm:$0xff]
        %v3257 = vld [vmem:[%s6 + $0x88] sm:$0xff]
        %v3258 = vld [vmem:[%s6 + $0x90] sm:$0xff]
        %v3259 = vld [vmem:[%s6 + $0x98] sm:$0xff]
        %v3260 = vld [vmem:[%s6 + $0xa0] sm:$0xff]
        %v3261 = vld [vmem:[%s6 + $0xa8] sm:$0xff]
        %v3262 = vld [vmem:[%s6 + $0xb0] sm:$0xff]
        %v3263 = vld [vmem:[%s6 + $0xb8] sm:$0xff]
        %v3264 = vld [vmem:[%s6 + $0xc0] sm:$0xff]
        %v3265 = vld [vmem:[%s6 + $0xc8] sm:$0xff]
        %v3266 = vld [vmem:[%s6 + $0xd0] sm:$0xff]
        %v3267 = vld [vmem:[%s6 + $0xd8] sm:$0xff]
        %v3268 = vld [vmem:[%s6 + $0xe0] sm:$0xff]
        %v3269 = vld [vmem:[%s6 + $0xe8] sm:$0xff]
        %v3270 = vld [vmem:[%s6 + $0xf0] sm:$0xff]
        %v3271 = vld [vmem:[%s6 + $0xf8] sm:$0xff]
        %v3272 = vld [vmem:[%s6 + $0x100] sm:$0xff]
        %v3273 = vld [vmem:[%s6 + $0x108] sm:$0xff]
        %v3274 = vld [vmem:[%s6 + $0x110] sm:$0xff]
        %v3275 = vld [vmem:[%s6 + $0x118] sm:$0xff]
        %v3276 = vld [vmem:[%s6 + $0x120] sm:$0xff]
        %v3277 = vld [vmem:[%s6 + $0x128] sm:$0xff]
        %v3278 = vld [vmem:[%s6 + $0x130] sm:$0xff]
        %v3279 = vld [vmem:[%s6 + $0x138] sm:$0xff]
        %v3280 = vld [vmem:[%s6 + $0x140] sm:$0xff]
        %v3281 = vld [vmem:[%s6 + $0x148] sm:$0xff]
        %v3282 = vld [vmem:[%s6 + $0x150] sm:$0xff]
        %v3283 = vld [vmem:[%s6 + $0x158] sm:$0xff]
        %v3284 = vld [vmem:[%s6 + $0x160] sm:$0xff]
        %v3285 = vld [vmem:[%s6 + $0x168] sm:$0xff]
        %v3286 = vld [vmem:[%s6 + $0x170] sm:$0xff]
        %v3287 = vld [vmem:[%s6 + $0x178] sm:$0xff]
        %v3288 = vld [vmem:[%s6 + $0x180] sm:$0xff]
        %v3289 = vld [vmem:[%s6 + $0x188] sm:$0xff]
        %v3290 = vld [vmem:[%s6 + $0x190] sm:$0xff]
        %v3291 = vld [vmem:[%s6 + $0x198] sm:$0xff]
        %v3292 = vld [vmem:[%s6 + $0x1a0] sm:$0xff]
        %v3293 = vld [vmem:[%s6 + $0x1a8] sm:$0xff]
        %v3294 = vld [vmem:[%s6 + $0x1b0] sm:$0xff]
        %v3295 = vld [vmem:[%s6 + $0x1b8] sm:$0xff]
        %v3296 = vld [vmem:[%s6 + $0x1c0] sm:$0xff]
        %v3297 = vld [vmem:[%s6 + $0x1c8] sm:$0xff]
        %v3298 = vld [vmem:[%s6 + $0x1d0] sm:$0xff]
        %v3299 = vld [vmem:[%s6 + $0x1d8] sm:$0xff]
        %v3300 = vld [vmem:[%s6 + $0x1e0] sm:$0xff]
        %v3301 = vld [vmem:[%s6 + $0x1e8] sm:$0xff]
        %v3302 = vld [vmem:[%s6 + $0x1f0] sm:$0xff]
        %v3303 = vld [vmem:[%s6 + $0x1f8] sm:$0xff]
        %v3304 = vld [vmem:[%s6 + $0x200] sm:$0xff]
        %v3305 = vld [vmem:[%s6 + $0x208] sm:$0xff]
        %v3306 = vld [vmem:[%s6 + $0x210] sm:$0xff]
        %v3307 = vld [vmem:[%s6 + $0x218] sm:$0xff]
        %v3308 = vld [vmem:[%s6 + $0x220] sm:$0xff]
        %v3309 = vld [vmem:[%s6 + $0x228] sm:$0xff]
        %v3310 = vld [vmem:[%s6 + $0x230] sm:$0xff]
        %v3311 = vld [vmem:[%s6 + $0x238] sm:$0xff]
        %v3312 = vld [vmem:[%s7] sm:$0x1]
        %v3313 = vld [vmem:[#allocation4] sm:$0x3]
        %vm3314 = vcmask 517120
        %3315 = vst.msk [vmem:[#allocation5] sm:$0x3] %vm3314, %v3313
        %v3316 = vld [vmem:[#allocation4 + $0x1] sm:$0x3]
        %3318 = vrot.lane.b32.xlu0 %v3316, 64
        %v3319 = vpop.permute.xlu0 %3318
        %vm3321 = vcmask 1041920
        %3322 = vst.msk [vmem:[#allocation5] sm:$0x3] %vm3321, %v3319
        %v3323 = vld [vmem:[#allocation4 + $0x2] sm:$0x3]
        %3324 = vst.msk [vmem:[#allocation5 + $0x8] sm:$0x3] %vm3314, %v3323
        %v3325 = vld [vmem:[%s2784] sm:$0x3]
        %3327 = vrot.lane.b32.xlu0 %v3325, 64
        %v3328 = vpop.permute.xlu0 %3327
        %3330 = vst.msk [vmem:[#allocation5 + $0x8] sm:$0x3] %vm3321, %v3328
        %v3331 = vld [vmem:[%s2784 + $0x1] sm:$0x3]
        %3332 = vst.msk [vmem:[#allocation5 + $0x10] sm:$0x3] %vm3314, %v3331
        %v3333 = vld [vmem:[%s2784 + $0x2] sm:$0x3]
        %3335 = vrot.lane.b32.xlu0 %v3333, 64
        %v3336 = vpop.permute.xlu0 %3335
        %3338 = vst.msk [vmem:[#allocation5 + $0x10] sm:$0x3] %vm3321, %v3336
        %v3339 = vld [vmem:[%s3011] sm:$0x3]
        %3340 = vst.msk [vmem:[#allocation5 + $0x18] sm:$0x3] %vm3314, %v3339
        %v3341 = vld [vmem:[%s3011 + $0x1] sm:$0x3]
        %3343 = vrot.lane.b32.xlu0 %v3341, 64
        %v3344 = vpop.permute.xlu0 %3343
        %3346 = vst.msk [vmem:[#allocation5 + $0x18] sm:$0x3] %vm3321, %v3344
        %v3347 = vld [vmem:[%s3011 + $0x2] sm:$0x3]
        %3348 = vst.msk [vmem:[#allocation5 + $0x20] sm:$0x3] %vm3314, %v3347
        %v3349 = vld [vmem:[#allocation5] sm:$0x3]
        %v3350 = vld [vmem:[#allocation5 + $0x8] sm:$0x3]
        %v3351 = vld [vmem:[#allocation5 + $0x10] sm:$0x3]
        %v3352 = vld [vmem:[#allocation5 + $0x18] sm:$0x3]
        %v3353 = vld [vmem:[#allocation5 + $0x20] sm:$0x3]
        %v3355 = vlaneseq
        %v3356 = vshrl.u32 %v3355, 7
        %v3357 = vsub.s32 0, %v3356
        %v3358 = vrot.slane %v3312, %v3357
        %vm3360 = vcmask 523264
        %v3362 = vsel %vm3360, %v3353, 0
        %3364 = vmatprep.subr.mxu0 0.0
        %3365 = vmatpush1.msra.mxu0 %v3240
        %3366 = vmatprep.subr.mxu0 0.0
        %3367 = vmatpush1.msra.mxu0 %v3241
        %3368 = vmatprep.subr.mxu0 0.0
        %3369 = vmatpush1.msra.mxu0 %v3242
        %3370 = vmatprep.subr.mxu0 0.0
        %3371 = vmatpush1.msra.mxu0 %v3243
        %3372 = vmatprep.subr.mxu0 0.0
        %3373 = vmatpush1.msra.mxu0 %v3244
        %3374 = vmatprep.subr.mxu0 0.0
        %3375 = vmatpush1.msra.mxu0 %v3245
        %3376 = vmatprep.subr.mxu0 0.0
        %3377 = vmatpush1.msra.mxu0 %v3246
        %3378 = vmatprep.subr.mxu0 0.0
        %3379 = vmatpush1.msra.mxu0 %v3247
        %3380 = vmatprep.subr.mxu0 0.0
        %3381 = vmatpush1.msra.mxu0 %v3248
        %3382 = vmatprep.subr.mxu0 0.0
        %3383 = vmatpush1.msra.mxu0 %v3249
        %3384 = vmatprep.subr.mxu0 0.0
        %3385 = vmatpush1.msra.mxu0 %v3250
        %3386 = vmatprep.subr.mxu0 0.0
        %3387 = vmatpush1.msra.mxu0 %v3251
        %3388 = vmatprep.subr.mxu0 0.0
        %3389 = vmatpush1.msra.mxu0 %v3252
        %3390 = vmatprep.subr.mxu0 0.0
        %3391 = vmatpush1.msra.mxu0 %v3253
        %3392 = vmatprep.subr.mxu0 0.0
        %3393 = vmatpush1.msra.mxu0 %v3254
        %3394 = vmatprep.subr.mxu0 0.0
        %3395 = vmatpush1.msra.mxu0 %v3255
        %3396 = vmatprep.subr.mxu0 0.0
        %3397 = vmatpush1.msra.mxu0 %v3256
        %3398 = vmatprep.subr.mxu0 0.0
        %3399 = vmatpush1.msra.mxu0 %v3257
        %3400 = vmatprep.subr.mxu0 0.0
        %3401 = vmatpush1.msra.mxu0 %v3258
        %3402 = vmatprep.subr.mxu0 0.0
        %3403 = vmatpush1.msra.mxu0 %v3259
        %3404 = vmatprep.subr.mxu0 0.0
        %3405 = vmatpush1.msra.mxu0 %v3260
        %3406 = vmatprep.subr.mxu0 0.0
        %3407 = vmatpush1.msra.mxu0 %v3261
        %3408 = vmatprep.subr.mxu0 0.0
        %3409 = vmatpush1.msra.mxu0 %v3262
        %3410 = vmatprep.subr.mxu0 0.0
        %3411 = vmatpush1.msra.mxu0 %v3263
        %3412 = vmatprep.subr.mxu0 0.0
        %3413 = vmatpush1.msra.mxu0 %v3264
        %3414 = vmatprep.subr.mxu0 0.0
        %3415 = vmatpush1.msra.mxu0 %v3265
        %3416 = vmatprep.subr.mxu0 0.0
        %3417 = vmatpush1.msra.mxu0 %v3266
        %3418 = vmatprep.subr.mxu0 0.0
        %3419 = vmatpush1.msra.mxu0 %v3267
        %3420 = vmatprep.subr.mxu0 0.0
        %3421 = vmatpush1.msra.mxu0 %v3268
        %3422 = vmatprep.subr.mxu0 0.0
        %3423 = vmatpush1.msra.mxu0 %v3269
        %3424 = vmatprep.subr.mxu0 0.0
        %3425 = vmatpush1.msra.mxu0 %v3270
        %3426 = vmatprep.subr.mxu0 0.0
        %3427 = vmatpush1.msra.mxu0 %v3271
        %3428 = vmatprep.mubr.f32.mxu0 %v3350
        %3429 = vmatmul.mubr.f32.gmra.mrb[0].mxu0 %v3349
        %v3430 = vpop.f32.mrb[0].mxu0
        %v3431 = vadd.f32 %v3358, %v3430
        %v3432 = vpop.f32.mrb[0].mxu0
        %3433 = vdwg.mxu0
        %3434 = vmatprep.subr.mxu0 0.0
        %3435 = vmatpush1.msra.mxu0 %v3272
        %3436 = vmatprep.subr.mxu0 0.0
        %3437 = vmatpush1.msra.mxu0 %v3273
        %3438 = vmatprep.subr.mxu0 0.0
        %3439 = vmatpush1.msra.mxu0 %v3274
        %3440 = vmatprep.subr.mxu0 0.0
        %3441 = vmatpush1.msra.mxu0 %v3275
        %3442 = vmatprep.subr.mxu0 0.0
        %3443 = vmatpush1.msra.mxu0 %v3276
        %3444 = vmatprep.subr.mxu0 0.0
        %3445 = vmatpush1.msra.mxu0 %v3277
        %3446 = vmatprep.subr.mxu0 0.0
        %3447 = vmatpush1.msra.mxu0 %v3278
        %3448 = vmatprep.subr.mxu0 0.0
        %3449 = vmatpush1.msra.mxu0 %v3279
        %3450 = vmatprep.subr.mxu0 0.0
        %3451 = vmatpush1.msra.mxu0 %v3280
        %3452 = vmatprep.subr.mxu0 0.0
        %3453 = vmatpush1.msra.mxu0 %v3281
        %3454 = vmatprep.subr.mxu0 0.0
        %3455 = vmatpush1.msra.mxu0 %v3282
        %3456 = vmatprep.subr.mxu0 0.0
        %3457 = vmatpush1.msra.mxu0 %v3283
        %3458 = vmatprep.subr.mxu0 0.0
        %3459 = vmatpush1.msra.mxu0 %v3284
        %3460 = vmatprep.subr.mxu0 0.0
        %3461 = vmatpush1.msra.mxu0 %v3285
        %3462 = vmatprep.subr.mxu0 0.0
        %3463 = vmatpush1.msra.mxu0 %v3286
        %3464 = vmatprep.subr.mxu0 0.0
        %3465 = vmatpush1.msra.mxu0 %v3287
        %3466 = vmatprep.subr.mxu0 0.0
        %3467 = vmatpush1.msra.mxu0 %v3288
        %3468 = vmatprep.subr.mxu0 0.0
        %3469 = vmatpush1.msra.mxu0 %v3289
        %3470 = vmatprep.subr.mxu0 0.0
        %3471 = vmatpush1.msra.mxu0 %v3290
        %3472 = vmatprep.subr.mxu0 0.0
        %3473 = vmatpush1.msra.mxu0 %v3291
        %3474 = vmatprep.subr.mxu0 0.0
        %3475 = vmatpush1.msra.mxu0 %v3292
        %3476 = vmatprep.subr.mxu0 0.0
        %3477 = vmatpush1.msra.mxu0 %v3293
        %3478 = vmatprep.subr.mxu0 0.0
        %3479 = vmatpush1.msra.mxu0 %v3294
        %3480 = vmatprep.subr.mxu0 0.0
        %3481 = vmatpush1.msra.mxu0 %v3295
        %3482 = vmatprep.subr.mxu0 0.0
        %3483 = vmatpush1.msra.mxu0 %v3296
        %3484 = vmatprep.subr.mxu0 0.0
        %3485 = vmatpush1.msra.mxu0 %v3297
        %3486 = vmatprep.subr.mxu0 0.0
        %3487 = vmatpush1.msra.mxu0 %v3298
        %3488 = vmatprep.subr.mxu0 0.0
        %3489 = vmatpush1.msra.mxu0 %v3299
        %3490 = vmatprep.subr.mxu0 0.0
        %3491 = vmatpush1.msra.mxu0 %v3300
        %3492 = vmatprep.subr.mxu0 0.0
        %3493 = vmatpush1.msra.mxu0 %v3301
        %3494 = vmatprep.subr.mxu0 0.0
        %3495 = vmatpush1.msra.mxu0 %v3302
        %3496 = vmatprep.subr.mxu0 0.0
        %3497 = vmatpush1.msra.mxu0 %v3303
        %3498 = vmatprep.mubr.f32.mxu0 %v3352
        %3499 = vmatmul.mubr.f32.gmra.mrb[0].mxu0 %v3351
        %v3500 = vpop.f32.mrb[0].mxu0
        %v3501 = vadd.f32 %v3431, %v3500
        %v3502 = vpop.f32.mrb[0].mxu0
        %3503 = vdwg.mxu0
        %3504 = vmatprep.subr.mxu0 0.0
        %3505 = vmatpush1.msra.mxu0 %v3304
        %3506 = vmatprep.subr.mxu0 0.0
        %3507 = vmatpush1.msra.mxu0 %v3305
        %3508 = vmatprep.subr.mxu0 0.0
        %3509 = vmatpush1.msra.mxu0 %v3306
        %3510 = vmatprep.subr.mxu0 0.0
        %3511 = vmatpush1.msra.mxu0 %v3307
        %3512 = vmatprep.subr.mxu0 0.0
        %3513 = vmatpush1.msra.mxu0 %v3308
        %3514 = vmatprep.subr.mxu0 0.0
        %3515 = vmatpush1.msra.mxu0 %v3309
        %3516 = vmatprep.subr.mxu0 0.0
        %3517 = vmatpush1.msra.mxu0 %v3310
        %3518 = vmatprep.subr.mxu0 0.0
        %3519 = vmatpush1.msra.mxu0 %v3311
        %3520 = vmatprep.subr.mxu0 0.0
        %3521 = vmatpush1.msra.mxu0 0.0
        %3522 = vmatprep.subr.mxu0 0.0
        %3523 = vmatpush1.msra.mxu0 0.0
        %3524 = vmatprep.subr.mxu0 0.0
        %3525 = vmatpush1.msra.mxu0 0.0
        %3526 = vmatprep.subr.mxu0 0.0
        %3527 = vmatpush1.msra.mxu0 0.0
        %3528 = vmatprep.subr.mxu0 0.0
        %3529 = vmatpush1.msra.mxu0 0.0
        %3530 = vmatprep.subr.mxu0 0.0
        %3531 = vmatpush1.msra.mxu0 0.0
        %3532 = vmatprep.subr.mxu0 0.0
        %3533 = vmatpush1.msra.mxu0 0.0
        %3534 = vmatprep.subr.mxu0 0.0
        %3535 = vmatpush1.msra.mxu0 0.0
        %3536 = vmatprep.subr.mxu0 0.0
        %3537 = vmatpush1.msra.mxu0 0.0
        %3538 = vmatprep.subr.mxu0 0.0
        %3539 = vmatpush1.msra.mxu0 0.0
        %3540 = vmatprep.subr.mxu0 0.0
        %3541 = vmatpush1.msra.mxu0 0.0
        %3542 = vmatprep.subr.mxu0 0.0
        %3543 = vmatpush1.msra.mxu0 0.0
        %3544 = vmatprep.subr.mxu0 0.0
        %3545 = vmatpush1.msra.mxu0 0.0
        %3546 = vmatprep.subr.mxu0 0.0
        %3547 = vmatpush1.msra.mxu0 0.0
        %3548 = vmatprep.subr.mxu0 0.0
        %3549 = vmatpush1.msra.mxu0 0.0
        %3550 = vmatprep.subr.mxu0 0.0
        %3551 = vmatpush1.msra.mxu0 0.0
        %3552 = vmatprep.subr.mxu0 0.0
        %3553 = vmatpush1.msra.mxu0 0.0
        %3554 = vmatprep.subr.mxu0 0.0
        %3555 = vmatpush1.msra.mxu0 0.0
        %3556 = vmatprep.subr.mxu0 0.0
        %3557 = vmatpush1.msra.mxu0 0.0
        %3558 = vmatprep.subr.mxu0 0.0
        %3559 = vmatpush1.msra.mxu0 0.0
        %3560 = vmatprep.subr.mxu0 0.0
        %3561 = vmatpush1.msra.mxu0 0.0
        %3562 = vmatprep.subr.mxu0 0.0
        %3563 = vmatpush1.msra.mxu0 0.0
        %3564 = vmatprep.subr.mxu0 0.0
        %3565 = vmatpush1.msra.mxu0 0.0
        %3566 = vmatprep.subr.mxu0 0.0
        %3567 = vmatpush1.msra.mxu0 0.0
        %3568 = vmatprep.mubr.f32.mxu0 0.0
        %3569 = vmatmul.mubr.f32.gmra.mrb[0].mxu0 %v3362
        %v3570 = vpop.f32.mrb[0].mxu0
        %v3571 = vadd.f32 %v3501, %v3570
        %v3572 = vpop.f32.mrb[0].mxu0
        %3573 = vdwg.mxu0
        %v3574 = vmax.f32 %v3571, 0.0
        %v3575 = vlaneseq
        %vm3576 = vcmp.ge.s32.totalorder %v3575, 0
        %vm3577 = vcmp.lt.s32.totalorder %v3575, 64
        %vm3578 = vmand %vm3576, %vm3577
        %3579 = vst.msk [vmem:[#allocation6] sm:$0x1] %vm3578, %v3574
        %v3582 = vunpack.c.l.s4 1966171168
        %v3583 = vunpack.c.0.s8 %v3582
        %v3584 = vlaneseq
        %v3585 = vshrl.u32 %v3584, 7
        %v3586 = vsub.s32 %v3583, %v3585
        %v3587 = vrot.slane %v3574, %v3586
        %v3588 = vcombine.high %v3587, %v3587
        %v3590 = vunpack.c.l.s4 1966171168
        %v3591 = vunpack.c.0.s8 %v3590
        %v3592 = vlaneseq
        %v3593 = vshrl.u32 %v3592, 7
        %v3594 = vsub.s32 %v3591, %v3593
        %v3595 = vrot.slane %v3588, %v3594
        %3596 = vrot.lane.b32.xlu0 %v3595, 64
        %v3597 = vpop.permute.xlu0 %3596
        %vm3599 = vcmp.ge.s32.totalorder %v3575, 64
        %vm3600 = vcmp.lt.s32.totalorder %v3575, 128
        %vm3601 = vmand %vm3599, %vm3600
        %3602 = vst.msk [vmem:[#allocation6] sm:$0x1] %vm3601, %v3597
        %v3603 = vld [vmem:[%s2784] sm:$0x3]
        %3604 = vst.msk [vmem:[#allocation5] sm:$0x3] %vm3314, %v3603
        %v3605 = vld [vmem:[%s2784 + $0x1] sm:$0x3]
        %3607 = vrot.lane.b32.xlu0 %v3605, 64
        %v3608 = vpop.permute.xlu0 %3607
        %3610 = vst.msk [vmem:[#allocation5] sm:$0x3] %vm3321, %v3608
        %v3611 = vld [vmem:[%s2784 + $0x2] sm:$0x3]
        %3612 = vst.msk [vmem:[#allocation5 + $0x8] sm:$0x3] %vm3314, %v3611
        %v3613 = vld [vmem:[%s3011] sm:$0x3]
        %3615 = vrot.lane.b32.xlu0 %v3613, 64
        %v3616 = vpop.permute.xlu0 %3615
        %3618 = vst.msk [vmem:[#allocation5 + $0x8] sm:$0x3] %vm3321, %v3616
        %v3619 = vld [vmem:[%s3011 + $0x1] sm:$0x3]
        %3620 = vst.msk [vmem:[#allocation5 + $0x10] sm:$0x3] %vm3314, %v3619
        %v3621 = vld [vmem:[%s3011 + $0x2] sm:$0x3]
        %3623 = vrot.lane.b32.xlu0 %v3621, 64
        %v3624 = vpop.permute.xlu0 %3623
        %3626 = vst.msk [vmem:[#allocation5 + $0x10] sm:$0x3] %vm3321, %v3624
        %v3627 = vld [vmem:[%s3238] sm:$0x3]
        %3628 = vst.msk [vmem:[#allocation5 + $0x18] sm:$0x3] %vm3314, %v3627
        %v3629 = vld [vmem:[%s3238 + $0x1] sm:$0x3]
        %3631 = vrot.lane.b32.xlu0 %v3629, 64
        %v3632 = vpop.permute.xlu0 %3631
        %3634 = vst.msk [vmem:[#allocation5 + $0x18] sm:$0x3] %vm3321, %v3632
        %v3635 = vld [vmem:[%s3238 + $0x2] sm:$0x3]
        %3636 = vst.msk [vmem:[#allocation5 + $0x20] sm:$0x3] %vm3314, %v3635
        %v3637 = vld [vmem:[#allocation5] sm:$0x3]
        %v3638 = vld [vmem:[#allocation5 + $0x8] sm:$0x3]
        %v3639 = vld [vmem:[#allocation5 + $0x10] sm:$0x3]
        %v3640 = vld [vmem:[#allocation5 + $0x18] sm:$0x3]
        %v3641 = vld [vmem:[#allocation5 + $0x20] sm:$0x3]
        %v3643 = vsel %vm3360, %v3641, 0
        %3645 = vmatprep.subr.mxu0 0.0
        %3646 = vmatpush1.msra.mxu0 %v3240
        %3647 = vmatprep.subr.mxu0 0.0
        %3648 = vmatpush1.msra.mxu0 %v3241
        %3649 = vmatprep.subr.mxu0 0.0
        %3650 = vmatpush1.msra.mxu0 %v3242
        %3651 = vmatprep.subr.mxu0 0.0
        %3652 = vmatpush1.msra.mxu0 %v3243
        %3653 = vmatprep.subr.mxu0 0.0
        %3654 = vmatpush1.msra.mxu0 %v3244
        %3655 = vmatprep.subr.mxu0 0.0
        %3656 = vmatpush1.msra.mxu0 %v3245
        %3657 = vmatprep.subr.mxu0 0.0
        %3658 = vmatpush1.msra.mxu0 %v3246
        %3659 = vmatprep.subr.mxu0 0.0
        %3660 = vmatpush1.msra.mxu0 %v3247
        %3661 = vmatprep.subr.mxu0 0.0
        %3662 = vmatpush1.msra.mxu0 %v3248
        %3663 = vmatprep.subr.mxu0 0.0
        %3664 = vmatpush1.msra.mxu0 %v3249
        %3665 = vmatprep.subr.mxu0 0.0
        %3666 = vmatpush1.msra.mxu0 %v3250
        %3667 = vmatprep.subr.mxu0 0.0
        %3668 = vmatpush1.msra.mxu0 %v3251
        %3669 = vmatprep.subr.mxu0 0.0
        %3670 = vmatpush1.msra.mxu0 %v3252
        %3671 = vmatprep.subr.mxu0 0.0
        %3672 = vmatpush1.msra.mxu0 %v3253
        %3673 = vmatprep.subr.mxu0 0.0
        %3674 = vmatpush1.msra.mxu0 %v3254
        %3675 = vmatprep.subr.mxu0 0.0
        %3676 = vmatpush1.msra.mxu0 %v3255
        %3677 = vmatprep.subr.mxu0 0.0
        %3678 = vmatpush1.msra.mxu0 %v3256
        %3679 = vmatprep.subr.mxu0 0.0
        %3680 = vmatpush1.msra.mxu0 %v3257
        %3681 = vmatprep.subr.mxu0 0.0
        %3682 = vmatpush1.msra.mxu0 %v3258
        %3683 = vmatprep.subr.mxu0 0.0
        %3684 = vmatpush1.msra.mxu0 %v3259
        %3685 = vmatprep.subr.mxu0 0.0
        %3686 = vmatpush1.msra.mxu0 %v3260
        %3687 = vmatprep.subr.mxu0 0.0
        %3688 = vmatpush1.msra.mxu0 %v3261
        %3689 = vmatprep.subr.mxu0 0.0
        %3690 = vmatpush1.msra.mxu0 %v3262
        %3691 = vmatprep.subr.mxu0 0.0
        %3692 = vmatpush1.msra.mxu0 %v3263
        %3693 = vmatprep.subr.mxu0 0.0
        %3694 = vmatpush1.msra.mxu0 %v3264
        %3695 = vmatprep.subr.mxu0 0.0
        %3696 = vmatpush1.msra.mxu0 %v3265
        %3697 = vmatprep.subr.mxu0 0.0
        %3698 = vmatpush1.msra.mxu0 %v3266
        %3699 = vmatprep.subr.mxu0 0.0
        %3700 = vmatpush1.msra.mxu0 %v3267
        %3701 = vmatprep.subr.mxu0 0.0
        %3702 = vmatpush1.msra.mxu0 %v3268
        %3703 = vmatprep.subr.mxu0 0.0
        %3704 = vmatpush1.msra.mxu0 %v3269
        %3705 = vmatprep.subr.mxu0 0.0
        %3706 = vmatpush1.msra.mxu0 %v3270
        %3707 = vmatprep.subr.mxu0 0.0
        %3708 = vmatpush1.msra.mxu0 %v3271
        %3709 = vmatprep.mubr.f32.mxu0 %v3638
        %3710 = vmatmul.mubr.f32.gmra.mrb[0].mxu0 %v3637
        %v3711 = vpop.f32.mrb[0].mxu0
        %v3712 = vadd.f32 %v3358, %v3711
        %v3713 = vpop.f32.mrb[0].mxu0
        %3714 = vdwg.mxu0
        %3715 = vmatprep.subr.mxu0 0.0
        %3716 = vmatpush1.msra.mxu0 %v3272
        %3717 = vmatprep.subr.mxu0 0.0
        %3718 = vmatpush1.msra.mxu0 %v3273
        %3719 = vmatprep.subr.mxu0 0.0
        %3720 = vmatpush1.msra.mxu0 %v3274
        %3721 = vmatprep.subr.mxu0 0.0
        %3722 = vmatpush1.msra.mxu0 %v3275
        %3723 = vmatprep.subr.mxu0 0.0
        %3724 = vmatpush1.msra.mxu0 %v3276
        %3725 = vmatprep.subr.mxu0 0.0
        %3726 = vmatpush1.msra.mxu0 %v3277
        %3727 = vmatprep.subr.mxu0 0.0
        %3728 = vmatpush1.msra.mxu0 %v3278
        %3729 = vmatprep.subr.mxu0 0.0
        %3730 = vmatpush1.msra.mxu0 %v3279
        %3731 = vmatprep.subr.mxu0 0.0
        %3732 = vmatpush1.msra.mxu0 %v3280
        %3733 = vmatprep.subr.mxu0 0.0
        %3734 = vmatpush1.msra.mxu0 %v3281
        %3735 = vmatprep.subr.mxu0 0.0
        %3736 = vmatpush1.msra.mxu0 %v3282
        %3737 = vmatprep.subr.mxu0 0.0
        %3738 = vmatpush1.msra.mxu0 %v3283
        %3739 = vmatprep.subr.mxu0 0.0
        %3740 = vmatpush1.msra.mxu0 %v3284
        %3741 = vmatprep.subr.mxu0 0.0
        %3742 = vmatpush1.msra.mxu0 %v3285
        %3743 = vmatprep.subr.mxu0 0.0
        %3744 = vmatpush1.msra.mxu0 %v3286
        %3745 = vmatprep.subr.mxu0 0.0
        %3746 = vmatpush1.msra.mxu0 %v3287
        %3747 = vmatprep.subr.mxu0 0.0
        %3748 = vmatpush1.msra.mxu0 %v3288
        %3749 = vmatprep.subr.mxu0 0.0
        %3750 = vmatpush1.msra.mxu0 %v3289
        %3751 = vmatprep.subr.mxu0 0.0
        %3752 = vmatpush1.msra.mxu0 %v3290
        %3753 = vmatprep.subr.mxu0 0.0
        %3754 = vmatpush1.msra.mxu0 %v3291
        %3755 = vmatprep.subr.mxu0 0.0
        %3756 = vmatpush1.msra.mxu0 %v3292
        %3757 = vmatprep.subr.mxu0 0.0
        %3758 = vmatpush1.msra.mxu0 %v3293
        %3759 = vmatprep.subr.mxu0 0.0
        %3760 = vmatpush1.msra.mxu0 %v3294
        %3761 = vmatprep.subr.mxu0 0.0
        %3762 = vmatpush1.msra.mxu0 %v3295
        %3763 = vmatprep.subr.mxu0 0.0
        %3764 = vmatpush1.msra.mxu0 %v3296
        %3765 = vmatprep.subr.mxu0 0.0
        %3766 = vmatpush1.msra.mxu0 %v3297
        %3767 = vmatprep.subr.mxu0 0.0
        %3768 = vmatpush1.msra.mxu0 %v3298
        %3769 = vmatprep.subr.mxu0 0.0
        %3770 = vmatpush1.msra.mxu0 %v3299
        %3771 = vmatprep.subr.mxu0 0.0
        %3772 = vmatpush1.msra.mxu0 %v3300
        %3773 = vmatprep.subr.mxu0 0.0
        %3774 = vmatpush1.msra.mxu0 %v3301
        %3775 = vmatprep.subr.mxu0 0.0
        %3776 = vmatpush1.msra.mxu0 %v3302
        %3777 = vmatprep.subr.mxu0 0.0
        %3778 = vmatpush1.msra.mxu0 %v3303
        %3779 = vmatprep.mubr.f32.mxu0 %v3640
        %3780 = vmatmul.mubr.f32.gmra.mrb[0].mxu0 %v3639
        %v3781 = vpop.f32.mrb[0].mxu0
        %v3782 = vadd.f32 %v3712, %v3781
        %v3783 = vpop.f32.mrb[0].mxu0
        %3784 = vdwg.mxu0
        %3785 = vmatprep.subr.mxu0 0.0
        %3786 = vmatpush1.msra.mxu0 %v3304
        %3787 = vmatprep.subr.mxu0 0.0
        %3788 = vmatpush1.msra.mxu0 %v3305
        %3789 = vmatprep.subr.mxu0 0.0
        %3790 = vmatpush1.msra.mxu0 %v3306
        %3791 = vmatprep.subr.mxu0 0.0
        %3792 = vmatpush1.msra.mxu0 %v3307
        %3793 = vmatprep.subr.mxu0 0.0
        %3794 = vmatpush1.msra.mxu0 %v3308
        %3795 = vmatprep.subr.mxu0 0.0
        %3796 = vmatpush1.msra.mxu0 %v3309
        %3797 = vmatprep.subr.mxu0 0.0
        %3798 = vmatpush1.msra.mxu0 %v3310
        %3799 = vmatprep.subr.mxu0 0.0
        %3800 = vmatpush1.msra.mxu0 %v3311
        %3801 = vmatprep.subr.mxu0 0.0
        %3802 = vmatpush1.msra.mxu0 0.0
        %3803 = vmatprep.subr.mxu0 0.0
        %3804 = vmatpush1.msra.mxu0 0.0
        %3805 = vmatprep.subr.mxu0 0.0
        %3806 = vmatpush1.msra.mxu0 0.0
        %3807 = vmatprep.subr.mxu0 0.0
        %3808 = vmatpush1.msra.mxu0 0.0
        %3809 = vmatprep.subr.mxu0 0.0
        %3810 = vmatpush1.msra.mxu0 0.0
        %3811 = vmatprep.subr.mxu0 0.0
        %3812 = vmatpush1.msra.mxu0 0.0
        %3813 = vmatprep.subr.mxu0 0.0
        %3814 = vmatpush1.msra.mxu0 0.0
        %3815 = vmatprep.subr.mxu0 0.0
        %3816 = vmatpush1.msra.mxu0 0.0
        %3817 = vmatprep.subr.mxu0 0.0
        %3818 = vmatpush1.msra.mxu0 0.0
        %3819 = vmatprep.subr.mxu0 0.0
        %3820 = vmatpush1.msra.mxu0 0.0
        %3821 = vmatprep.subr.mxu0 0.0
        %3822 = vmatpush1.msra.mxu0 0.0
        %3823 = vmatprep.subr.mxu0 0.0
        %3824 = vmatpush1.msra.mxu0 0.0
        %3825 = vmatprep.subr.mxu0 0.0
        %3826 = vmatpush1.msra.mxu0 0.0
        %3827 = vmatprep.subr.mxu0 0.0
        %3828 = vmatpush1.msra.mxu0 0.0
        %3829 = vmatprep.subr.mxu0 0.0
        %3830 = vmatpush1.msra.mxu0 0.0
        %3831 = vmatprep.subr.mxu0 0.0
        %3832 = vmatpush1.msra.mxu0 0.0
        %3833 = vmatprep.subr.mxu0 0.0
        %3834 = vmatpush1.msra.mxu0 0.0
        %3835 = vmatprep.subr.mxu0 0.0
        %3836 = vmatpush1.msra.mxu0 0.0
        %3837 = vmatprep.subr.mxu0 0.0
        %3838 = vmatpush1.msra.mxu0 0.0
        %3839 = vmatprep.subr.mxu0 0.0
        %3840 = vmatpush1.msra.mxu0 0.0
        %3841 = vmatprep.subr.mxu0 0.0
        %3842 = vmatpush1.msra.mxu0 0.0
        %3843 = vmatprep.subr.mxu0 0.0
        %3844 = vmatpush1.msra.mxu0 0.0
        %3845 = vmatprep.subr.mxu0 0.0
        %3846 = vmatpush1.msra.mxu0 0.0
        %3847 = vmatprep.subr.mxu0 0.0
        %3848 = vmatpush1.msra.mxu0 0.0
        %3849 = vmatprep.mubr.f32.mxu0 0.0
        %3850 = vmatmul.mubr.f32.gmra.mrb[0].mxu0 %v3643
        %v3851 = vpop.f32.mrb[0].mxu0
        %v3852 = vadd.f32 %v3782, %v3851
        %v3853 = vpop.f32.mrb[0].mxu0
        %3854 = vdwg.mxu0
        %v3855 = vmax.f32 %v3852, 0.0
        %3856 = vst.msk [vmem:[#allocation6 + $0x1] sm:$0x1] %vm3578, %v3855
        %v3859 = vunpack.c.l.s4 1966171168
        %v3860 = vunpack.c.0.s8 %v3859
        %v3861 = vlaneseq
        %v3862 = vshrl.u32 %v3861, 7
        %v3863 = vsub.s32 %v3860, %v3862
        %v3864 = vrot.slane %v3855, %v3863
        %v3865 = vcombine.high %v3864, %v3864
        %v3867 = vunpack.c.l.s4 1966171168
        %v3868 = vunpack.c.0.s8 %v3867
        %v3869 = vlaneseq
        %v3870 = vshrl.u32 %v3869, 7
        %v3871 = vsub.s32 %v3868, %v3870
        %v3872 = vrot.slane %v3865, %v3871
        %3873 = vrot.lane.b32.xlu0 %v3872, 64
        %v3874 = vpop.permute.xlu0 %3873
        %3876 = vst.msk [vmem:[#allocation6 + $0x1] sm:$0x1] %vm3601, %v3874
        %v3877 = vld [vmem:[#allocation6] sm:$0x3]
        %v3878 = vld [vmem:[%s8] sm:$0xff]
        %v3879 = vld [vmem:[%s8 + $0x8] sm:$0xff]
        %v3880 = vld [vmem:[%s8 + $0x10] sm:$0xff]
        %v3881 = vld [vmem:[%s8 + $0x18] sm:$0xff]
        %v3882 = vld [vmem:[%s8 + $0x20] sm:$0xff]
        %v3883 = vld [vmem:[%s8 + $0x28] sm:$0xff]
        %v3884 = vld [vmem:[%s8 + $0x30] sm:$0xff]
        %v3885 = vld [vmem:[%s8 + $0x38] sm:$0xff]
        %v3886 = vld [vmem:[%s8 + $0x40] sm:$0xff]
        %v3887 = vld [vmem:[%s8 + $0x48] sm:$0xff]
        %v3888 = vld [vmem:[%s8 + $0x50] sm:$0xff]
        %v3889 = vld [vmem:[%s8 + $0x58] sm:$0xff]
        %v3890 = vld [vmem:[%s8 + $0x60] sm:$0xff]
        %v3891 = vld [vmem:[%s8 + $0x68] sm:$0xff]
        %v3892 = vld [vmem:[%s8 + $0x70] sm:$0xff]
        %v3893 = vld [vmem:[%s8 + $0x78] sm:$0xff]
        %v3894 = vld [vmem:[%s8 + $0x80] sm:$0xff]
        %v3895 = vld [vmem:[%s8 + $0x88] sm:$0xff]
        %v3896 = vld [vmem:[%s8 + $0x90] sm:$0xff]
        %v3897 = vld [vmem:[%s8 + $0x98] sm:$0xff]
        %v3898 = vld [vmem:[%s8 + $0xa0] sm:$0xff]
        %v3899 = vld [vmem:[%s8 + $0xa8] sm:$0xff]
        %v3900 = vld [vmem:[%s8 + $0xb0] sm:$0xff]
        %v3901 = vld [vmem:[%s8 + $0xb8] sm:$0xff]
        %v3902 = vld [vmem:[%s8 + $0xc0] sm:$0xff]
        %v3903 = vld [vmem:[%s8 + $0xc8] sm:$0xff]
        %v3904 = vld [vmem:[%s8 + $0xd0] sm:$0xff]
        %v3905 = vld [vmem:[%s8 + $0xd8] sm:$0xff]
        %v3906 = vld [vmem:[%s8 + $0xe0] sm:$0xff]
        %v3907 = vld [vmem:[%s8 + $0xe8] sm:$0xff]
        %v3908 = vld [vmem:[%s8 + $0xf0] sm:$0xff]
        %v3909 = vld [vmem:[%s8 + $0xf8] sm:$0xff]
        %v3910 = vld [vmem:[%s9] sm:$0x1]
        %v3912 = vlaneseq
        %v3913 = vshrl.u32 %v3912, 7
        %v3914 = vsub.s32 0, %v3913
        %v3915 = vrot.slane %v3877, %v3914
        %v3916 = vlaneseq
        %v3917 = vshrl.u32 %v3916, 7
        %v3918 = vsub.s32 1, %v3917
        %v3919 = vrot.slane %v3877, %v3918
        %3922 = vmatprep.subr.mxu0 0.0
        %3923 = vmatpush1.msra.mxu0 %v3878
        %3924 = vmatprep.subr.mxu0 0.0
        %3925 = vmatpush1.msra.mxu0 %v3879
        %3926 = vmatprep.subr.mxu0 0.0
        %3927 = vmatpush1.msra.mxu0 %v3880
        %3928 = vmatprep.subr.mxu0 0.0
        %3929 = vmatpush1.msra.mxu0 %v3881
        %3930 = vmatprep.subr.mxu0 0.0
        %3931 = vmatpush1.msra.mxu0 %v3882
        %3932 = vmatprep.subr.mxu0 0.0
        %3933 = vmatpush1.msra.mxu0 %v3883
        %3934 = vmatprep.subr.mxu0 0.0
        %3935 = vmatpush1.msra.mxu0 %v3884
        %3936 = vmatprep.subr.mxu0 0.0
        %3937 = vmatpush1.msra.mxu0 %v3885
        %3938 = vmatprep.subr.mxu0 0.0
        %3939 = vmatpush1.msra.mxu0 %v3886
        %3940 = vmatprep.subr.mxu0 0.0
        %3941 = vmatpush1.msra.mxu0 %v3887
        %3942 = vmatprep.subr.mxu0 0.0
        %3943 = vmatpush1.msra.mxu0 %v3888
        %3944 = vmatprep.subr.mxu0 0.0
        %3945 = vmatpush1.msra.mxu0 %v3889
        %3946 = vmatprep.subr.mxu0 0.0
        %3947 = vmatpush1.msra.mxu0 %v3890
        %3948 = vmatprep.subr.mxu0 0.0
        %3949 = vmatpush1.msra.mxu0 %v3891
        %3950 = vmatprep.subr.mxu0 0.0
        %3951 = vmatpush1.msra.mxu0 %v3892
        %3952 = vmatprep.subr.mxu0 0.0
        %3953 = vmatpush1.msra.mxu0 %v3893
        %3954 = vmatprep.subr.mxu0 0.0
        %3955 = vmatpush1.msra.mxu0 %v3894
        %3956 = vmatprep.subr.mxu0 0.0
        %3957 = vmatpush1.msra.mxu0 %v3895
        %3958 = vmatprep.subr.mxu0 0.0
        %3959 = vmatpush1.msra.mxu0 %v3896
        %3960 = vmatprep.subr.mxu0 0.0
        %3961 = vmatpush1.msra.mxu0 %v3897
        %3962 = vmatprep.subr.mxu0 0.0
        %3963 = vmatpush1.msra.mxu0 %v3898
        %3964 = vmatprep.subr.mxu0 0.0
        %3965 = vmatpush1.msra.mxu0 %v3899
        %3966 = vmatprep.subr.mxu0 0.0
        %3967 = vmatpush1.msra.mxu0 %v3900
        %3968 = vmatprep.subr.mxu0 0.0
        %3969 = vmatpush1.msra.mxu0 %v3901
        %3970 = vmatprep.subr.mxu0 0.0
        %3971 = vmatpush1.msra.mxu0 %v3902
        %3972 = vmatprep.subr.mxu0 0.0
        %3973 = vmatpush1.msra.mxu0 %v3903
        %3974 = vmatprep.subr.mxu0 0.0
        %3975 = vmatpush1.msra.mxu0 %v3904
        %3976 = vmatprep.subr.mxu0 0.0
        %3977 = vmatpush1.msra.mxu0 %v3905
        %3978 = vmatprep.subr.mxu0 0.0
        %3979 = vmatpush1.msra.mxu0 %v3906
        %3980 = vmatprep.subr.mxu0 0.0
        %3981 = vmatpush1.msra.mxu0 %v3907
        %3982 = vmatprep.subr.mxu0 0.0
        %3983 = vmatpush1.msra.mxu0 %v3908
        %3984 = vmatprep.subr.mxu0 0.0
        %3985 = vmatpush1.msra.mxu0 %v3909
        %3986 = vmatprep.mubr.f32.mxu0 %v3919
        %3987 = vmatmul.mubr.f32.gmra.mrb[0].mxu0 %v3915
        %v3988 = vpop.f32.mrb[0].mxu0
        %v3989 = vadd.f32 %v3910, %v3988
        %v3990 = vpop.f32.mrb[0].mxu0
        %3991 = vdwg.mxu0
        %v3992 = vmax.f32 %v3989, 0.0
        %3993 = vst [vmem:[%s366] sm:$0x1] %v3992
        %s3994 = sand.u32 %s252, 1
        %s3995 = scalar_lea.sflag [#allocation8], %s3994
        %s3996 = sand.u32 %s252, 1
        %s3997 = scalar_lea.vmem [#allocation7], %s3996
        // Predicated region
        $region61: #{nature_cnn_forward.1} parent=59 // pred_check
          %p3998 = pneg %p262
        $region62: #{nature_cnn_forward.1} parent=59 // pred_check_branch
          %4000 = sbr.rel (%p3998) target = $region64
        $region63: #{nature_cnn_forward.1} parent=59 // pred_region
          %s4002 = ssub.s32 16, 16
          %4003 = vsyncadd %s3995, %s4002
          %s4004 = smul.addr %s24, 16
          %s4005 = scalar_lea.hbm %s10, %s4004
          %s4007 = sshll.u32 %s3997, 4
          %s4008 = int_to_ptr.vmem [resolvable:$true] %s4007
          %4010 = dma.vmem_to_hbm [thread:$0]  %s4008, 16, %s4005, %s3995
        $region64: #{nature_cnn_forward.1} parent=59 // pred_fallthru
          _
      $region60: #{nature_cnn_forward.1} parent=5 // pred_fallthru
        _
      %p4011 = scmp.le.s32.totalorder 2, %s19
      // Predicated region
      $region65: #{nature_cnn_forward.1} parent=5 // pred_check
        %p4012 = pneg %p4011
      $region66: #{nature_cnn_forward.1} parent=5 // pred_check_branch
        %4014 = sbr.rel (%p4012) target = $region68
      $region67: #{nature_cnn_forward.1} parent=5 // pred_region
        %s4015 = ssub.s32 %s19, 2
        // Predicated region
        $region69: #{nature_cnn_forward.1} parent=67 // pred_check
          %p4016 = pneg %p268
        $region70: #{nature_cnn_forward.1} parent=67 // pred_check_branch
          %4018 = sbr.rel (%p4016) target = $region72
        $region71: #{nature_cnn_forward.1} parent=67 // pred_region
          %s4019 = sand.u32 %s253, 1
          %s4020 = scalar_lea.sflag [#allocation8], %s4019
          %s4021 = sand.u32 %s253, 1
          %s4022 = scalar_lea.vmem [#allocation7], %s4021
          %4023 = dma.done %s4020, 16
        $region72: #{nature_cnn_forward.1} parent=67 // pred_fallthru
          _
      $region68: #{nature_cnn_forward.1} parent=5 // pred_fallthru
        _
    $region6: #{nature_cnn_forward.1} parent=1 // loop_footer
      %s23 = sadd.s32 1, %s19
    $region7: #{nature_cnn_forward.1} parent=1 // loop_footer_branch
      %18 = sbr.rel target = $region3
    $region8: #{nature_cnn_forward.1} parent=1 // loop_exit
      _
    %4024 = vsyncpa [#allocation8], 1
    %s4025 = scalar_lea.sflag [#allocation8], 1
    %4026 = vsyncpa %s4025, 1

</llo_original>
